<compile_context>
chip_gen: v5e
topology: v5e:2x2
jax: 0.10.0
libtpu: 0.0.40
codegen_flags: <defaults>
</compile_context>

<pallas_src>
from functools import partial

import jax
import jax.numpy as jnp
from jax.experimental import pallas as pl
from jax.experimental.pallas import tpu as pltpu


HALO_UNIT = 128          # lane granularity of halo blocks
CIN_ALIGN = 16           # canvas-channel padding (sublane/bf16 alignment)
ACT_DTYPE = jnp.bfloat16  # inter-layer activation canvases in HBM


def _round_up(n, m):
    return ((n + m - 1) // m) * m


def _sigmoid(x):
    return 0.5 * (jnp.tanh(0.5 * x) + 1.0)


# ----------------------------------------------------------------- fused 3x3-conv Pallas kernel

def _conv3x3_kernel(*refs, halo, tr, cin, shifts, mode):
    """One lane-tile of a stride-1 3x3 conv on a flattened padded canvas, fused epilogue.

    refs = (x_left_halo, x_centre, x_right_halo, w_packed, bias, [mode extras], outputs...,
            xpad_scratch, slab_scratch)
      x_left/right : (cin, halo) bf16 halo blocks, x_centre : (cin, tr) bf16.
      w_packed     : (cout, 9*cin) f32, columns grouped per tap t = di*3 + dj.
      mode         : "linear" | "gdn" | "igdn" | "eb".
    """
    xl_ref, xc_ref, xr_ref, w_ref, b_ref = refs[:5]
    xpad_ref, slab_ref = refs[-2:]
    rest = refs[5:-2]

    # Assemble the halo-padded lane tile once in VMEM (bf16 -> f32 cast happens here, so every
    # later unaligned lane slice runs on plain f32 and the MXU/VPU epilogue stays f32).
    xpad_ref[:, :halo] = xl_ref[...].astype(jnp.float32)
    xpad_ref[:, halo:halo + tr] = xc_ref[...].astype(jnp.float32)
    xpad_ref[:, halo + tr:] = xr_ref[...].astype(jnp.float32)

    # Build the (9*cin, tr) shifted slab: one lane-shifted window per 3x3 tap (static offsets).
    for t, s in enumerate(shifts):
        slab_ref[t * cin:(t + 1) * cin, :] = xpad_ref[:, halo + s:halo + s + tr]

    # ONE MXU matmul with K = 9*cin instead of 9 small per-tap dots.
    y = jnp.dot(w_ref[...], slab_ref[...], preferred_element_type=jnp.float32)
    y = y + b_ref[...]                                                   # (cout, tr) f32

    if mode == "linear":
        (out_ref,) = rest
        out_ref[...] = y.astype(out_ref.dtype)
    elif mode in ("gdn", "igdn"):
        gamma_ref, beta_ref, out_ref = rest
        # z_c = beta_c + sum_k gamma[c,k] * y_k^2  (channels live in sublanes)
        z = jnp.dot(gamma_ref[...], y * y, preferred_element_type=jnp.float32) + beta_ref[...]
        z = jnp.maximum(z, 1e-10)
        r = jnp.sqrt(z) if mode == "igdn" else jax.lax.rsqrt(z)
        out_ref[...] = (y * r).astype(out_ref.dtype)
    else:  # "eb": quantize + per-channel logistic likelihood (eval path, hard rounding)
        inv_ref, yhat_ref, lik_ref = rest
        y_hat = jnp.round(y)
        inv_s = inv_ref[...]                                             # precomputed 1/scale
        upper = _sigmoid((y_hat + 0.5) * inv_s)
        lower = _sigmoid((y_hat - 0.5) * inv_s)
        yhat_ref[...] = y_hat.astype(yhat_ref.dtype)
        lik_ref[...] = jnp.maximum(upper - lower, 1e-9).astype(lik_ref.dtype)


# ----------------------------------------------------------------------------- Pallas wrapper

def _pick_lane_tile(rc, halo, cap=2048):
    """Lane tile: multiple of the halo block (>= canvas_w + 2), grows toward `cap` while keeping
    >= 2 grid blocks (pipelining, and both TCs busy on v7x)."""
    tr = halo
    while 2 * tr <= cap and rc >= 4 * tr:
        tr *= 2
    return tr


def conv3x3_canvas(canvas, canvas_w, w_packed, bias, mode="linear", out_dtype=jnp.float32,
                   gamma=None, beta=None, eb_scale_inv=None):
    """Fused stride-1 3x3 conv (+ optional GDN / IGDN / entropy-bottleneck epilogue) on a
    flattened padded canvas.

    canvas   : (cin, rc) bf16, lanes = flattened (image, canvas_row, canvas_col).
    canvas_w : static canvas width (turns 2-D taps into lane shifts).
    w_packed : (cout, 9*cin) f32 pre-packed weights (columns grouped per tap).
    Returns a (cout, rc) canvas (pair for mode == "eb"); only interior cells are meaningful —
    borders are sliced off by the caller.
    """
    cin, rc = canvas.shape
    cout = w_packed.shape[0]
    assert w_packed.shape[1] == 9 * cin

    halo = _round_up(canvas_w + 2, HALO_UNIT)       # covers the max lane shift canvas_w + 1
    tr = _pick_lane_tile(rc, halo)
    ratio = tr // halo
    rc_pad = _round_up(rc, tr)
    nb = rc_pad // tr
    # one zero lane-tile on each side so halo / centre blocks always exist and stay block-aligned
    xp = jnp.pad(canvas, ((0, 0), (tr, rc_pad - rc + tr)))
    shifts = tuple((di - 1) * canvas_w + (dj - 1) for di in range(3) for dj in range(3))

    in_specs = [
        pl.BlockSpec((cin, halo), lambda i: (0, (i + 1) * ratio - 1)),   # left 128-lane halo
        pl.BlockSpec((cin, tr), lambda i: (0, i + 1)),                   # centre tile
        pl.BlockSpec((cin, halo), lambda i: (0, (i + 2) * ratio)),       # right 128-lane halo
        pl.BlockSpec((cout, 9 * cin), lambda i: (0, 0)),                 # packed weights
        pl.BlockSpec((cout, 1), lambda i: (0, 0)),                       # bias
    ]
    inputs = [xp, xp, xp, w_packed, bias]

    if mode in ("gdn", "igdn"):
        in_specs += [pl.BlockSpec((cout, cout), lambda i: (0, 0)),
                     pl.BlockSpec((cout, 1), lambda i: (0, 0))]
        inputs += [gamma, beta]
    elif mode == "eb":
        in_specs += [pl.BlockSpec((cout, 1), lambda i: (0, 0))]
        inputs += [eb_scale_inv]

    out_block = pl.BlockSpec((cout, tr), lambda i: (0, i))
    if mode == "eb":
        out_shape = (jax.ShapeDtypeStruct((cout, rc_pad), jnp.float32),
                     jax.ShapeDtypeStruct((cout, rc_pad), jnp.float32))
        out_specs = (out_block, out_block)
    else:
        out_shape = jax.ShapeDtypeStruct((cout, rc_pad), out_dtype)
        out_specs = out_block

    res = pl.pallas_call(
        partial(_conv3x3_kernel, halo=halo, tr=tr, cin=cin, shifts=shifts, mode=mode),
        out_shape=out_shape,
        grid=(nb,),
        in_specs=in_specs,
        out_specs=out_specs,
        scratch_shapes=[pltpu.VMEM((cin, tr + 2 * halo), jnp.float32),   # halo-padded tile
                        pltpu.VMEM((9 * cin, tr), jnp.float32)],         # shifted-window slab
        compiler_params=pltpu.CompilerParams(dimension_semantics=("parallel",)),
    )(*inputs)

    if mode == "eb":
        return res[0][:, :rc], res[1][:, :rc]
    return res[:, :rc]


# ----------------------------------------------------------------------- weight re-packing glue

def _conv5s2_to_taps(w):
    """Conv2d(k=5, s=2, p=2) weight (Co, Ci, 5, 5) -> per-tap (9, Co, 4*Ci) for the
    space-to-depth stride-1 3x3 formulation.  Input channel order is (ph, pw, ci)."""
    co, ci = w.shape[0], w.shape[1]
    wp = jnp.pad(w, ((0, 0), (0, 0), (0, 1), (0, 1)))          # (Co, Ci, 6, 6): index 5 = 0
    wp = wp.reshape(co, ci, 3, 2, 3, 2)                        # (co, ci, di, ph, dj, pw)
    return jnp.transpose(wp, (2, 4, 0, 3, 5, 1)).reshape(9, co, 4 * ci)


def _deconv5s2_to_taps(w):
    """ConvTranspose2d(k=5, s=2, p=2, op=1) weight (Ci, Co, 5, 5) -> per-tap (9, 4*Co, Ci) for
    the sub-pixel stride-1 3x3 formulation.  Output channel order is (po, qo, co)."""
    ci, co = w.shape[0], w.shape[1]
    wp = jnp.pad(w, ((0, 0), (0, 0), (0, 1), (0, 1)))          # (Ci, Co, 6, 6): index 5 = 0
    wp = wp.reshape(ci, co, 3, 2, 3, 2)                        # (ci, co, a2, po, b2, qo)
    wt = jnp.transpose(wp, (2, 4, 3, 5, 1, 0))                 # (a2, b2, po, qo, co, ci)
    wt = jnp.flip(wt, axis=(0, 1))                             # tap a = 2 - a2, b = 2 - b2
    return wt.reshape(9, 4 * co, ci)


def _pack_taps(taps, cin_pad):
    """(9, Co, Cin) per-tap weights -> (Co, 9*cin_pad) single-matmul layout (zero-padded Cin)."""
    _, co, cin = taps.shape
    taps = jnp.pad(taps, ((0, 0), (0, 0), (0, cin_pad - cin)))
    return jnp.transpose(taps, (1, 0, 2)).reshape(co, 9 * cin_pad)


# -------------------------------------------------------------------------------- layer glue

def encoder_layer(x, w_packed, bias, mode, gamma=None, beta=None, eb_scale_inv=None,
                  out_dtype=ACT_DTYPE):
    """x: (Ci, B, H, W) -> (Co, B, H//2, W//2).  Conv2d(5, s=2, p=2) with fused epilogue,
    implemented as a stride-1 3x3 conv on a space-to-depth canvas."""
    ci, b, h, w_ = x.shape
    ho, wo = h // 2, w_ // 2
    cin_pad = _round_up(4 * ci, CIN_ALIGN)
    # pad-2 + space-to-depth(2): the resulting grid IS the padded 3x3-conv canvas (Ho+2, Wo+2)
    xp = jnp.pad(x, ((0, 0), (0, 0), (2, 2), (2, 2)))
    xp = xp.reshape(ci, b, ho + 2, 2, wo + 2, 2)
    canvas = jnp.transpose(xp, (3, 5, 0, 1, 2, 4)).reshape(4 * ci, b * (ho + 2) * (wo + 2))
    canvas = jnp.pad(canvas, ((0, cin_pad - 4 * ci), (0, 0))).astype(ACT_DTYPE)
    out = conv3x3_canvas(canvas, wo + 2, w_packed, bias, mode=mode, out_dtype=out_dtype,
                         gamma=gamma, beta=beta, eb_scale_inv=eb_scale_inv)

    def interior(c):
        return c.reshape(-1, b, ho + 2, wo + 2)[:, :, 1:ho + 1, 1:wo + 1]

    if mode == "eb":
        return interior(out[0]), interior(out[1])
    return interior(out)


def decoder_layer(x, w_packed, bias, mode, gamma=None, beta=None, out_dtype=ACT_DTYPE):
    """x: (Ci, B, H, W) -> (Co, B, 2H, 2W).  ConvTranspose2d(5, s=2, p=2, op=1) via sub-pixel
    decomposition (stride-1 3x3 conv with 4*Co channels) with fused (block-diagonal) IGDN."""
    ci, b, h, w_ = x.shape
    co = w_packed.shape[0] // 4
    cin_pad = _round_up(ci, CIN_ALIGN)
    canvas = jnp.pad(x, ((0, 0), (0, 0), (1, 1), (1, 1))).reshape(ci, b * (h + 2) * (w_ + 2))
    canvas = jnp.pad(canvas, ((0, cin_pad - ci), (0, 0))).astype(ACT_DTYPE)
    out = conv3x3_canvas(canvas, w_ + 2, w_packed, bias, mode=mode, out_dtype=out_dtype,
                         gamma=gamma, beta=beta)
    out = out.reshape(4 * co, b, h + 2, w_ + 2)[:, :, 1:h + 1, 1:w_ + 1]   # (4Co, B, H, W)
    out = out.reshape(2, 2, co, b, h, w_)                                  # (po, qo, co, b, h, w)
    # TODO(synk): fold this depth-to-space transpose into the kernel via phase-strided outputs.
    return jnp.transpose(out, (2, 3, 4, 0, 5, 1)).reshape(co, b, 2 * h, 2 * w_)


# ----------------------------------------------------------------------------- parameters

def init_params(key, N, M):
    p = {}

    def conv_w(k, co, ci):
        return 0.1 * jax.random.normal(k, (co, ci, 5, 5), jnp.float32)

    def deconv_w(k, ci, co):
        return 0.1 * jax.random.normal(k, (ci, co, 5, 5), jnp.float32)

    keys = jax.random.split(key, 8)
    # g_a: conv(3,N) GDN conv(N,N) GDN conv(N,N) GDN conv(N,M)
    for li, (ci, co) in enumerate([(3, N), (N, N), (N, N), (N, M)]):
        p[f"ga{li}_w"] = conv_w(keys[li], co, ci)
        p[f"ga{li}_b"] = jnp.zeros((co,), jnp.float32)
    # g_s: deconv(M,N) IGDN deconv(N,N) IGDN deconv(N,N) IGDN deconv(N,3)
    for li, (ci, co) in enumerate([(M, N), (N, N), (N, N), (N, 3)]):
        p[f"gs{li}_w"] = deconv_w(keys[4 + li], ci, co)
        p[f"gs{li}_b"] = jnp.zeros((co,), jnp.float32)
    # GDN / IGDN params (standard init: beta = 1, gamma = 0.1 * I); gamma[c, k] mixes x_k^2
    for li in range(3):
        p[f"gdn{li}_gamma"] = 0.1 * jnp.eye(N, dtype=jnp.float32)
        p[f"gdn{li}_beta"] = jnp.ones((N,), jnp.float32)
        p[f"igdn{li}_gamma"] = 0.1 * jnp.eye(N, dtype=jnp.float32)
        p[f"igdn{li}_beta"] = jnp.ones((N,), jnp.float32)
    # entropy bottleneck: per-channel logistic scale
    p["eb_scale"] = jnp.ones((M,), jnp.float32)
    return p


def pack_params(p, N, M):
    """One-time repacking of torch-layout params into the kernel layout (hoisted out of jit)."""
    q = {}
    for li, (ci, co) in enumerate([(3, N), (N, N), (N, N), (N, M)]):
        cin_pad = _round_up(4 * ci, CIN_ALIGN)
        q[f"ga{li}_w"] = _pack_taps(_conv5s2_to_taps(p[f"ga{li}_w"]), cin_pad)
        q[f"ga{li}_b"] = p[f"ga{li}_b"].reshape(co, 1)
    for li, (ci, co) in enumerate([(M, N), (N, N), (N, N), (N, 3)]):
        cin_pad = _round_up(ci, CIN_ALIGN)
        q[f"gs{li}_w"] = _pack_taps(_deconv5s2_to_taps(p[f"gs{li}_w"]), cin_pad)
        q[f"gs{li}_b"] = jnp.tile(p[f"gs{li}_b"], 4).reshape(4 * co, 1)
    for li in range(3):
        q[f"gdn{li}_gamma"] = p[f"gdn{li}_gamma"]
        q[f"gdn{li}_beta"] = p[f"gdn{li}_beta"].reshape(N, 1)
        # per-output-pixel (block-diagonal) IGDN over the (po, qo, co) sub-pixel channel order
        q[f"igdn{li}_gamma"] = jnp.kron(jnp.eye(4, dtype=jnp.float32), p[f"igdn{li}_gamma"])
        q[f"igdn{li}_beta"] = jnp.tile(p[f"igdn{li}_beta"], 4).reshape(4 * N, 1)
    q["eb_scale"] = p["eb_scale"]
    q["eb_scale_inv"] = (1.0 / p["eb_scale"]).reshape(M, 1)
    return q


# ----------------------------------------------------------------------------- forward

def factorized_icme_forward(x_nchw, pp, extrema=30):
    # NCHW -> channel-first working layout (C, B, H, W)
    x = jnp.transpose(x_nchw, (1, 0, 2, 3)).astype(jnp.float32)

    # ---- g_a (analysis): conv + GDN fused; last conv fused with the entropy bottleneck ----
    y = encoder_layer(x, pp["ga0_w"], pp["ga0_b"], "gdn",
                      gamma=pp["gdn0_gamma"], beta=pp["gdn0_beta"])
    y = encoder_layer(y, pp["ga1_w"], pp["ga1_b"], "gdn",
                      gamma=pp["gdn1_gamma"], beta=pp["gdn1_beta"])
    y = encoder_layer(y, pp["ga2_w"], pp["ga2_b"], "gdn",
                      gamma=pp["gdn2_gamma"], beta=pp["gdn2_beta"])
    y_hat, lik = encoder_layer(y, pp["ga3_w"], pp["ga3_b"], "eb",
                               eb_scale_inv=pp["eb_scale_inv"])
    likelihoods = jnp.transpose(lik, (1, 0, 2, 3))                   # NCHW like torch

    # per-channel pmf over symbols [-extrema, extrema]   (tiny, plain-JAX glue)
    ks = jnp.arange(-extrema, extrema + 1, dtype=jnp.float32)
    s = pp["eb_scale"][:, None]
    pmf = _sigmoid((ks[None, :] + 0.5) / s) - _sigmoid((ks[None, :] - 0.5) / s)
    y_probability = pmf / jnp.sum(pmf, axis=-1, keepdims=True)

    # ---- g_s (synthesis): sub-pixel deconv + fused IGDN ----
    z = decoder_layer(y_hat, pp["gs0_w"], pp["gs0_b"], "igdn",
                      gamma=pp["igdn0_gamma"], beta=pp["igdn0_beta"])
    z = decoder_layer(z, pp["gs1_w"], pp["gs1_b"], "igdn",
                      gamma=pp["igdn1_gamma"], beta=pp["igdn1_beta"])
    z = decoder_layer(z, pp["gs2_w"], pp["gs2_b"], "igdn",
                      gamma=pp["igdn2_gamma"], beta=pp["igdn2_beta"])
    z = decoder_layer(z, pp["gs3_w"], pp["gs3_b"], "linear", out_dtype=jnp.float32)

    x_hat = jnp.transpose(z, (1, 0, 2, 3))                           # back to NCHW
    return {"x_hat": x_hat,
            "likelihoods": {"y": likelihoods},
            "probability": y_probability}


# ----------------------------------------------------------------------------- main

if __name__ == "__main__":
    N, M, extrema = 8, 16, 30
    key = jax.random.PRNGKey(0)
    k_param, k_x = jax.random.split(key)
    params = init_params(k_param, N, M)
    packed = pack_params(params, N, M)            # one-time weight repacking (outside jit)
    x = jax.random.uniform(k_x, (2, 3, 32, 32), jnp.float32)     # NCHW, like the PyTorch module

    fwd = jax.jit(lambda inp, prm: factorized_icme_forward(inp, prm, extrema=extrema))
    out = fwd(x, packed)
    jax.block_until_ready(out)

    assert out["x_hat"].shape == (2, 3, 32, 32)
    assert out["likelihoods"]["y"].shape == (2, M, 2, 2)
    assert out["probability"].shape == (M, 2 * extrema + 1)
    assert bool(jnp.all(jnp.isfinite(out["x_hat"])))
    assert bool(jnp.all(out["likelihoods"]["y"] > 0.0))
    print("KERNEL_OK")
</pallas_src>

<mosaic_0001>
module attributes {stable_mosaic.version = 11 : i64} {
  func.func @_conv3x3_kernel(%arg0: i32, %arg1: memref<16x128xbf16, #tpu.memory_space<vmem>>, %arg2: memref<16x256xbf16, #tpu.memory_space<vmem>>, %arg3: memref<16x128xbf16, #tpu.memory_space<vmem>>, %arg4: memref<8x144xf32, #tpu.memory_space<vmem>>, %arg5: memref<8x1xf32, #tpu.memory_space<vmem>>, %arg6: memref<8x8xf32, #tpu.memory_space<vmem>>, %arg7: memref<8x1xf32, #tpu.memory_space<vmem>>, %arg8: memref<8x256xbf16, #tpu.memory_space<vmem>>, %arg9: memref<16x512xf32, #tpu.memory_space<vmem>>, %arg10: memref<144x256xf32, #tpu.memory_space<vmem>>) attributes {dimension_semantics = [#tpu.dimension_semantics<parallel>], iteration_bounds = array<i64: 3>, scalar_prefetch = 0 : i64, scratch_operands = 2 : i64, tpu.core_type = #tpu.core_type<tc>, window_params = [{transform_indices = @transform_0, window_bounds = array<i64: 16, 128>}, {transform_indices = @transform_1, window_bounds = array<i64: 16, 256>}, {transform_indices = @transform_2, window_bounds = array<i64: 16, 128>}, {pipeline_mode = #tpu.pipeline_mode<synchronous>, transform_indices = @transform_3, window_bounds = array<i64: 8, 144>}, {pipeline_mode = #tpu.pipeline_mode<synchronous>, transform_indices = @transform_4, window_bounds = array<i64: 8, 1>}, {pipeline_mode = #tpu.pipeline_mode<synchronous>, transform_indices = @transform_5, window_bounds = array<i64: 8, 8>}, {pipeline_mode = #tpu.pipeline_mode<synchronous>, transform_indices = @transform_6, window_bounds = array<i64: 8, 1>}, {transform_indices = @transform_7, window_bounds = array<i64: 8, 256>}]} {
    %c0 = arith.constant 0 : index
    %c0_0 = arith.constant 0 : index
    %0 = vector.load %arg1[%c0, %c0_0] : memref<16x128xbf16, #tpu.memory_space<vmem>>, vector<16x128xbf16>
    %1 = arith.extf %0 : vector<16x128xbf16> to vector<16x128xf32>
    %c0_1 = arith.constant 0 : index
    %c0_2 = arith.constant 0 : index
    %2 = vector.load %arg9[%c0_1, %c0_2] : memref<16x512xf32, #tpu.memory_space<vmem>>, vector<16x128xf32>
    tpu.vector_store %arg9[%c0_1, %c0_2], %1 {strides = array<i32>} : memref<16x512xf32, #tpu.memory_space<vmem>>, vector<16x128xf32>,
    %c0_3 = arith.constant 0 : index
    %c0_4 = arith.constant 0 : index
    %3 = vector.load %arg2[%c0_3, %c0_4] : memref<16x256xbf16, #tpu.memory_space<vmem>>, vector<16x256xbf16>
    %4 = arith.extf %3 : vector<16x256xbf16> to vector<16x256xf32>
    %c0_5 = arith.constant 0 : index
    %c128 = arith.constant 128 : index
    %5 = vector.load %arg9[%c0_5, %c128] : memref<16x512xf32, #tpu.memory_space<vmem>>, vector<16x256xf32>
    tpu.vector_store %arg9[%c0_5, %c128], %4 {strides = array<i32>} : memref<16x512xf32, #tpu.memory_space<vmem>>, vector<16x256xf32>,
    %c0_6 = arith.constant 0 : index
    %c0_7 = arith.constant 0 : index
    %6 = vector.load %arg3[%c0_6, %c0_7] : memref<16x128xbf16, #tpu.memory_space<vmem>>, vector<16x128xbf16>
    %7 = arith.extf %6 : vector<16x128xbf16> to vector<16x128xf32>
    %c0_8 = arith.constant 0 : index
    %c384 = arith.constant 384 : index
    %8 = vector.load %arg9[%c0_8, %c384] : memref<16x512xf32, #tpu.memory_space<vmem>>, vector<16x128xf32>
    tpu.vector_store %arg9[%c0_8, %c384], %7 {strides = array<i32>} : memref<16x512xf32, #tpu.memory_space<vmem>>, vector<16x128xf32>,
    %c0_9 = arith.constant 0 : index
    %c109 = arith.constant 109 : index
    %9 = vector.load %arg9[%c0_9, %c109] : memref<16x512xf32, #tpu.memory_space<vmem>>, vector<16x256xf32>
    %c0_10 = arith.constant 0 : index
    %c0_11 = arith.constant 0 : index
    %10 = vector.load %arg10[%c0_10, %c0_11] : memref<144x256xf32, #tpu.memory_space<vmem>>, vector<16x256xf32>
    tpu.vector_store %arg10[%c0_10, %c0_11], %9 {strides = array<i32>} : memref<144x256xf32, #tpu.memory_space<vmem>>, vector<16x256xf32>,
    %c0_12 = arith.constant 0 : index
    %c110 = arith.constant 110 : index
    %11 = vector.load %arg9[%c0_12, %c110] : memref<16x512xf32, #tpu.memory_space<vmem>>, vector<16x256xf32>
    %c16 = arith.constant 16 : index
    %c0_13 = arith.constant 0 : index
    %12 = vector.load %arg10[%c16, %c0_13] : memref<144x256xf32, #tpu.memory_space<vmem>>, vector<16x256xf32>
    tpu.vector_store %arg10[%c16, %c0_13], %11 {strides = array<i32>} : memref<144x256xf32, #tpu.memory_space<vmem>>, vector<16x256xf32>,
    %c0_14 = arith.constant 0 : index
    %c111 = arith.constant 111 : index
    %13 = vector.load %arg9[%c0_14, %c111] : memref<16x512xf32, #tpu.memory_space<vmem>>, vector<16x256xf32>
    %c32 = arith.constant 32 : index
    %c0_15 = arith.constant 0 : index
    %14 = vector.load %arg10[%c32, %c0_15] : memref<144x256xf32, #tpu.memory_space<vmem>>, vector<16x256xf32>
    tpu.vector_store %arg10[%c32, %c0_15], %13 {strides = array<i32>} : memref<144x256xf32, #tpu.memory_space<vmem>>, vector<16x256xf32>,
    %c0_16 = arith.constant 0 : index
    %c127 = arith.constant 127 : index
    %15 = vector.load %arg9[%c0_16, %c127] : memref<16x512xf32, #tpu.memory_space<vmem>>, vector<16x256xf32>
    %c48 = arith.constant 48 : index
    %c0_17 = arith.constant 0 : index
    %16 = vector.load %arg10[%c48, %c0_17] : memref<144x256xf32, #tpu.memory_space<vmem>>, vector<16x256xf32>
    tpu.vector_store %arg10[%c48, %c0_17], %15 {strides = array<i32>} : memref<144x256xf32, #tpu.memory_space<vmem>>, vector<16x256xf32>,
    %c0_18 = arith.constant 0 : index
    %c128_19 = arith.constant 128 : index
    %17 = vector.load %arg9[%c0_18, %c128_19] : memref<16x512xf32, #tpu.memory_space<vmem>>, vector<16x256xf32>
    %c64 = arith.constant 64 : index
    %c0_20 = arith.constant 0 : index
    %18 = vector.load %arg10[%c64, %c0_20] : memref<144x256xf32, #tpu.memory_space<vmem>>, vector<16x256xf32>
    tpu.vector_store %arg10[%c64, %c0_20], %17 {strides = array<i32>} : memref<144x256xf32, #tpu.memory_space<vmem>>, vector<16x256xf32>,
    %c0_21 = arith.constant 0 : index
    %c129 = arith.constant 129 : index
    %19 = vector.load %arg9[%c0_21, %c129] : memref<16x512xf32, #tpu.memory_space<vmem>>, vector<16x256xf32>
    %c80 = arith.constant 80 : index
    %c0_22 = arith.constant 0 : index
    %20 = vector.load %arg10[%c80, %c0_22] : memref<144x256xf32, #tpu.memory_space<vmem>>, vector<16x256xf32>
    tpu.vector_store %arg10[%c80, %c0_22], %19 {strides = array<i32>} : memref<144x256xf32, #tpu.memory_space<vmem>>, vector<16x256xf32>,
    %c0_23 = arith.constant 0 : index
    %c145 = arith.constant 145 : index
    %21 = vector.load %arg9[%c0_23, %c145] : memref<16x512xf32, #tpu.memory_space<vmem>>, vector<16x256xf32>
    %c96 = arith.constant 96 : index
    %c0_24 = arith.constant 0 : index
    %22 = vector.load %arg10[%c96, %c0_24] : memref<144x256xf32, #tpu.memory_space<vmem>>, vector<16x256xf32>
    tpu.vector_store %arg10[%c96, %c0_24], %21 {strides = array<i32>} : memref<144x256xf32, #tpu.memory_space<vmem>>, vector<16x256xf32>,
    %c0_25 = arith.constant 0 : index
    %c146 = arith.constant 146 : index
    %23 = vector.load %arg9[%c0_25, %c146] : memref<16x512xf32, #tpu.memory_space<vmem>>, vector<16x256xf32>
    %c112 = arith.constant 112 : index
    %c0_26 = arith.constant 0 : index
    %24 = vector.load %arg10[%c112, %c0_26] : memref<144x256xf32, #tpu.memory_space<vmem>>, vector<16x256xf32>
    tpu.vector_store %arg10[%c112, %c0_26], %23 {strides = array<i32>} : memref<144x256xf32, #tpu.memory_space<vmem>>, vector<16x256xf32>,
    %c0_27 = arith.constant 0 : index
    %c147 = arith.constant 147 : index
    %25 = vector.load %arg9[%c0_27, %c147] : memref<16x512xf32, #tpu.memory_space<vmem>>, vector<16x256xf32>
    %c128_28 = arith.constant 128 : index
    %c0_29 = arith.constant 0 : index
    %26 = vector.load %arg10[%c128_28, %c0_29] : memref<144x256xf32, #tpu.memory_space<vmem>>, vector<16x256xf32>
    tpu.vector_store %arg10[%c128_28, %c0_29], %25 {strides = array<i32>} : memref<144x256xf32, #tpu.memory_space<vmem>>, vector<16x256xf32>,
    %c0_30 = arith.constant 0 : index
    %c0_31 = arith.constant 0 : index
    %27 = vector.load %arg4[%c0_30, %c0_31] : memref<8x144xf32, #tpu.memory_space<vmem>>, vector<8x144xf32>
    %c0_32 = arith.constant 0 : index
    %c0_33 = arith.constant 0 : index
    %28 = vector.load %arg10[%c0_32, %c0_33] : memref<144x256xf32, #tpu.memory_space<vmem>>, vector<144x256xf32>
    %cst = arith.constant dense<0.000000e+00> : vector<8x256xf32>
    %29 = tpu.matmul %27, %28, %cst {dimension_numbers = #tpu.dot_dimension_numbers<[1], [0], [0], [1], [0, 0, 1, 1], [], []>} : vector<8x144xf32>, vector<144x256xf32>, vector<8x256xf32> -> vector<8x256xf32>
    %c0_34 = arith.constant 0 : index
    %c0_35 = arith.constant 0 : index
    %30 = vector.load %arg5[%c0_34, %c0_35] : memref<8x1xf32, #tpu.memory_space<vmem>>, vector<8x1xf32>
    %31 = vector.broadcast %30 : vector<8x1xf32> to vector<8x256xf32>
    %32 = arith.addf %29, %31 : vector<8x256xf32>
    %c0_36 = arith.constant 0 : index
    %c0_37 = arith.constant 0 : index
    %33 = vector.load %arg6[%c0_36, %c0_37] : memref<8x8xf32, #tpu.memory_space<vmem>>, vector<8x8xf32>
    %34 = arith.mulf %32, %32 : vector<8x256xf32>
    %cst_38 = arith.constant dense<0.000000e+00> : vector<8x256xf32>
    %35 = tpu.matmul %33, %34, %cst_38 {dimension_numbers = #tpu.dot_dimension_numbers<[1], [0], [0], [1], [0, 0, 1, 1], [], []>} : vector<8x8xf32>, vector<8x256xf32>, vector<8x256xf32> -> vector<8x256xf32>
    %c0_39 = arith.constant 0 : index
    %c0_40 = arith.constant 0 : index
    %36 = vector.load %arg7[%c0_39, %c0_40] : memref<8x1xf32, #tpu.memory_space<vmem>>, vector<8x1xf32>
    %37 = vector.broadcast %36 : vector<8x1xf32> to vector<8x256xf32>
    %38 = arith.addf %35, %37 : vector<8x256xf32>
    %cst_41 = arith.constant 1.000000e-10 : f32
    %39 = vector.broadcast %cst_41 : f32 to vector<8x256xf32>
    %40 = arith.maximumf %38, %39 : vector<8x256xf32>
    %41 = math.rsqrt %40 : vector<8x256xf32>
    %42 = arith.mulf %32, %41 : vector<8x256xf32>
    %43 = arith.truncf %42 : vector<8x256xf32> to vector<8x256xbf16>
    %c0_42 = arith.constant 0 : index
    %c0_43 = arith.constant 0 : index
    %44 = vector.load %arg8[%c0_42, %c0_43] : memref<8x256xbf16, #tpu.memory_space<vmem>>, vector<8x256xbf16>
    tpu.vector_store %arg8[%c0_42, %c0_43], %43 {strides = array<i32>} : memref<8x256xbf16, #tpu.memory_space<vmem>>, vector<8x256xbf16>,
    return
  }
  func.func @transform_0(%arg0: i32) -> (i32, i32) {
    %c1_i32 = arith.constant 1 : i32
    %0 = arith.addi %arg0, %c1_i32 : i32
    %c2_i32 = arith.constant 2 : i32
    %1 = arith.muli %0, %c2_i32 : i32
    %c1_i32_0 = arith.constant 1 : i32
    %2 = arith.subi %1, %c1_i32_0 : i32
    %c0_i32 = arith.constant 0 : i32
    %c0_i32_1 = arith.constant 0 : i32
    return %c0_i32, %2 : i32, i32
  }
  func.func @transform_1(%arg0: i32) -> (i32, i32) {
    %c1_i32 = arith.constant 1 : i32
    %0 = arith.addi %arg0, %c1_i32 : i32
    %c0_i32 = arith.constant 0 : i32
    %c0_i32_0 = arith.constant 0 : i32
    return %c0_i32, %0 : i32, i32
  }
  func.func @transform_2(%arg0: i32) -> (i32, i32) {
    %c2_i32 = arith.constant 2 : i32
    %0 = arith.addi %arg0, %c2_i32 : i32
    %c2_i32_0 = arith.constant 2 : i32
    %1 = arith.muli %0, %c2_i32_0 : i32
    %c0_i32 = arith.constant 0 : i32
    %c0_i32_1 = arith.constant 0 : i32
    return %c0_i32, %1 : i32, i32
  }
  func.func @transform_3(%arg0: i32) -> (i32, i32) {
    %c0_i32 = arith.constant 0 : i32
    %c0_i32_0 = arith.constant 0 : i32
    %c0_i32_1 = arith.constant 0 : i32
    return %c0_i32, %c0_i32_0 : i32, i32
  }
  func.func @transform_4(%arg0: i32) -> (i32, i32) {
    %c0_i32 = arith.constant 0 : i32
    %c0_i32_0 = arith.constant 0 : i32
    %c0_i32_1 = arith.constant 0 : i32
    return %c0_i32, %c0_i32_0 : i32, i32
  }
  func.func @transform_5(%arg0: i32) -> (i32, i32) {
    %c0_i32 = arith.constant 0 : i32
    %c0_i32_0 = arith.constant 0 : i32
    %c0_i32_1 = arith.constant 0 : i32
    return %c0_i32, %c0_i32_0 : i32, i32
  }
  func.func @transform_6(%arg0: i32) -> (i32, i32) {
    %c0_i32 = arith.constant 0 : i32
    %c0_i32_0 = arith.constant 0 : i32
    %c0_i32_1 = arith.constant 0 : i32
    return %c0_i32, %c0_i32_0 : i32, i32
  }
  func.func @transform_7(%arg0: i32) -> (i32, i32) {
    %c0_i32 = arith.constant 0 : i32
    %c0_i32_0 = arith.constant 0 : i32
    return %c0_i32, %arg0 : i32, i32
  }
}

module attributes {stable_mosaic.version = 11 : i64} {
  func.func @_conv3x3_kernel(%arg0: i32, %arg1: memref<32x128xbf16, #tpu.memory_space<vmem>>, %arg2: memref<32x128xbf16, #tpu.memory_space<vmem>>, %arg3: memref<32x128xbf16, #tpu.memory_space<vmem>>, %arg4: memref<8x288xf32, #tpu.memory_space<vmem>>, %arg5: memref<8x1xf32, #tpu.memory_space<vmem>>, %arg6: memref<8x8xf32, #tpu.memory_space<vmem>>, %arg7: memref<8x1xf32, #tpu.memory_space<vmem>>, %arg8: memref<8x128xbf16, #tpu.memory_space<vmem>>, %arg9: memref<32x384xf32, #tpu.memory_space<vmem>>, %arg10: memref<288x128xf32, #tpu.memory_space<vmem>>) attributes {dimension_semantics = [#tpu.dimension_semantics<parallel>], iteration_bounds = array<i64: 2>, scalar_prefetch = 0 : i64, scratch_operands = 2 : i64, tpu.core_type = #tpu.core_type<tc>, window_params = [{transform_indices = @transform_0, window_bounds = array<i64: 32, 128>}, {transform_indices = @transform_1, window_bounds = array<i64: 32, 128>}, {transform_indices = @transform_2, window_bounds = array<i64: 32, 128>}, {pipeline_mode = #tpu.pipeline_mode<synchronous>, transform_indices = @transform_3, window_bounds = array<i64: 8, 288>}, {pipeline_mode = #tpu.pipeline_mode<synchronous>, transform_indices = @transform_4, window_bounds = array<i64: 8, 1>}, {pipeline_mode = #tpu.pipeline_mode<synchronous>, transform_indices = @transform_5, window_bounds = array<i64: 8, 8>}, {pipeline_mode = #tpu.pipeline_mode<synchronous>, transform_indices = @transform_6, window_bounds = array<i64: 8, 1>}, {transform_indices = @transform_7, window_bounds = array<i64: 8, 128>}]} {
    %c0 = arith.constant 0 : index
    %c0_0 = arith.constant 0 : index
    %0 = vector.load %arg1[%c0, %c0_0] : memref<32x128xbf16, #tpu.memory_space<vmem>>, vector<32x128xbf16>
    %1 = arith.extf %0 : vector<32x128xbf16> to vector<32x128xf32>
    %c0_1 = arith.constant 0 : index
    %c0_2 = arith.constant 0 : index
    %2 = vector.load %arg9[%c0_1, %c0_2] : memref<32x384xf32, #tpu.memory_space<vmem>>, vector<32x128xf32>
    tpu.vector_store %arg9[%c0_1, %c0_2], %1 {strides = array<i32>} : memref<32x384xf32, #tpu.memory_space<vmem>>, vector<32x128xf32>,
    %c0_3 = arith.constant 0 : index
    %c0_4 = arith.constant 0 : index
    %3 = vector.load %arg2[%c0_3, %c0_4] : memref<32x128xbf16, #tpu.memory_space<vmem>>, vector<32x128xbf16>
    %4 = arith.extf %3 : vector<32x128xbf16> to vector<32x128xf32>
    %c0_5 = arith.constant 0 : index
    %c128 = arith.constant 128 : index
    %5 = vector.load %arg9[%c0_5, %c128] : memref<32x384xf32, #tpu.memory_space<vmem>>, vector<32x128xf32>
    tpu.vector_store %arg9[%c0_5, %c128], %4 {strides = array<i32>} : memref<32x384xf32, #tpu.memory_space<vmem>>, vector<32x128xf32>,
    %c0_6 = arith.constant 0 : index
    %c0_7 = arith.constant 0 : index
    %6 = vector.load %arg3[%c0_6, %c0_7] : memref<32x128xbf16, #tpu.memory_space<vmem>>, vector<32x128xbf16>
    %7 = arith.extf %6 : vector<32x128xbf16> to vector<32x128xf32>
    %c0_8 = arith.constant 0 : index
    %c256 = arith.constant 256 : index
    %8 = vector.load %arg9[%c0_8, %c256] : memref<32x384xf32, #tpu.memory_space<vmem>>, vector<32x128xf32>
    tpu.vector_store %arg9[%c0_8, %c256], %7 {strides = array<i32>} : memref<32x384xf32, #tpu.memory_space<vmem>>, vector<32x128xf32>,
    %c0_9 = arith.constant 0 : index
    %c117 = arith.constant 117 : index
    %9 = vector.load %arg9[%c0_9, %c117] : memref<32x384xf32, #tpu.memory_space<vmem>>, vector<32x128xf32>
    %c0_10 = arith.constant 0 : index
    %c0_11 = arith.constant 0 : index
    %10 = vector.load %arg10[%c0_10, %c0_11] : memref<288x128xf32, #tpu.memory_space<vmem>>, vector<32x128xf32>
    tpu.vector_store %arg10[%c0_10, %c0_11], %9 {strides = array<i32>} : memref<288x128xf32, #tpu.memory_space<vmem>>, vector<32x128xf32>,
    %c0_12 = arith.constant 0 : index
    %c118 = arith.constant 118 : index
    %11 = vector.load %arg9[%c0_12, %c118] : memref<32x384xf32, #tpu.memory_space<vmem>>, vector<32x128xf32>
    %c32 = arith.constant 32 : index
    %c0_13 = arith.constant 0 : index
    %12 = vector.load %arg10[%c32, %c0_13] : memref<288x128xf32, #tpu.memory_space<vmem>>, vector<32x128xf32>
    tpu.vector_store %arg10[%c32, %c0_13], %11 {strides = array<i32>} : memref<288x128xf32, #tpu.memory_space<vmem>>, vector<32x128xf32>,
    %c0_14 = arith.constant 0 : index
    %c119 = arith.constant 119 : index
    %13 = vector.load %arg9[%c0_14, %c119] : memref<32x384xf32, #tpu.memory_space<vmem>>, vector<32x128xf32>
    %c64 = arith.constant 64 : index
    %c0_15 = arith.constant 0 : index
    %14 = vector.load %arg10[%c64, %c0_15] : memref<288x128xf32, #tpu.memory_space<vmem>>, vector<32x128xf32>
    tpu.vector_store %arg10[%c64, %c0_15], %13 {strides = array<i32>} : memref<288x128xf32, #tpu.memory_space<vmem>>, vector<32x128xf32>,
    %c0_16 = arith.constant 0 : index
    %c127 = arith.constant 127 : index
    %15 = vector.load %arg9[%c0_16, %c127] : memref<32x384xf32, #tpu.memory_space<vmem>>, vector<32x128xf32>
    %c96 = arith.constant 96 : index
    %c0_17 = arith.constant 0 : index
    %16 = vector.load %arg10[%c96, %c0_17] : memref<288x128xf32, #tpu.memory_space<vmem>>, vector<32x128xf32>
    tpu.vector_store %arg10[%c96, %c0_17], %15 {strides = array<i32>} : memref<288x128xf32, #tpu.memory_space<vmem>>, vector<32x128xf32>,
    %c0_18 = arith.constant 0 : index
    %c128_19 = arith.constant 128 : index
    %17 = vector.load %arg9[%c0_18, %c128_19] : memref<32x384xf32, #tpu.memory_space<vmem>>, vector<32x128xf32>
    %c128_20 = arith.constant 128 : index
    %c0_21 = arith.constant 0 : index
    %18 = vector.load %arg10[%c128_20, %c0_21] : memref<288x128xf32, #tpu.memory_space<vmem>>, vector<32x128xf32>
    tpu.vector_store %arg10[%c128_20, %c0_21], %17 {strides = array<i32>} : memref<288x128xf32, #tpu.memory_space<vmem>>, vector<32x128xf32>,
    %c0_22 = arith.constant 0 : index
    %c129 = arith.constant 129 : index
    %19 = vector.load %arg9[%c0_22, %c129] : memref<32x384xf32, #tpu.memory_space<vmem>>, vector<32x128xf32>
    %c160 = arith.constant 160 : index
    %c0_23 = arith.constant 0 : index
    %20 = vector.load %arg10[%c160, %c0_23] : memref<288x128xf32, #tpu.memory_space<vmem>>, vector<32x128xf32>
    tpu.vector_store %arg10[%c160, %c0_23], %19 {strides = array<i32>} : memref<288x128xf32, #tpu.memory_space<vmem>>, vector<32x128xf32>,
    %c0_24 = arith.constant 0 : index
    %c137 = arith.constant 137 : index
    %21 = vector.load %arg9[%c0_24, %c137] : memref<32x384xf32, #tpu.memory_space<vmem>>, vector<32x128xf32>
    %c192 = arith.constant 192 : index
    %c0_25 = arith.constant 0 : index
    %22 = vector.load %arg10[%c192, %c0_25] : memref<288x128xf32, #tpu.memory_space<vmem>>, vector<32x128xf32>
    tpu.vector_store %arg10[%c192, %c0_25], %21 {strides = array<i32>} : memref<288x128xf32, #tpu.memory_space<vmem>>, vector<32x128xf32>,
    %c0_26 = arith.constant 0 : index
    %c138 = arith.constant 138 : index
    %23 = vector.load %arg9[%c0_26, %c138] : memref<32x384xf32, #tpu.memory_space<vmem>>, vector<32x128xf32>
    %c224 = arith.constant 224 : index
    %c0_27 = arith.constant 0 : index
    %24 = vector.load %arg10[%c224, %c0_27] : memref<288x128xf32, #tpu.memory_space<vmem>>, vector<32x128xf32>
    tpu.vector_store %arg10[%c224, %c0_27], %23 {strides = array<i32>} : memref<288x128xf32, #tpu.memory_space<vmem>>, vector<32x128xf32>,
    %c0_28 = arith.constant 0 : index
    %c139 = arith.constant 139 : index
    %25 = vector.load %arg9[%c0_28, %c139] : memref<32x384xf32, #tpu.memory_space<vmem>>, vector<32x128xf32>
    %c256_29 = arith.constant 256 : index
    %c0_30 = arith.constant 0 : index
    %26 = vector.load %arg10[%c256_29, %c0_30] : memref<288x128xf32, #tpu.memory_space<vmem>>, vector<32x128xf32>
    tpu.vector_store %arg10[%c256_29, %c0_30], %25 {strides = array<i32>} : memref<288x128xf32, #tpu.memory_space<vmem>>, vector<32x128xf32>,
    %c0_31 = arith.constant 0 : index
    %c0_32 = arith.constant 0 : index
    %27 = vector.load %arg4[%c0_31, %c0_32] : memref<8x288xf32, #tpu.memory_space<vmem>>, vector<8x288xf32>
    %c0_33 = arith.constant 0 : index
    %c0_34 = arith.constant 0 : index
    %28 = vector.load %arg10[%c0_33, %c0_34] : memref<288x128xf32, #tpu.memory_space<vmem>>, vector<288x128xf32>
    %cst = arith.constant dense<0.000000e+00> : vector<8x128xf32>
    %29 = tpu.matmul %27, %28, %cst {dimension_numbers = #tpu.dot_dimension_numbers<[1], [0], [0], [1], [0, 0, 1, 1], [], []>} : vector<8x288xf32>, vector<288x128xf32>, vector<8x128xf32> -> vector<8x128xf32>
    %c0_35 = arith.constant 0 : index
    %c0_36 = arith.constant 0 : index
    %30 = vector.load %arg5[%c0_35, %c0_36] : memref<8x1xf32, #tpu.memory_space<vmem>>, vector<8x1xf32>
    %31 = vector.broadcast %30 : vector<8x1xf32> to vector<8x128xf32>
    %32 = arith.addf %29, %31 : vector<8x128xf32>
    %c0_37 = arith.constant 0 : index
    %c0_38 = arith.constant 0 : index
    %33 = vector.load %arg6[%c0_37, %c0_38] : memref<8x8xf32, #tpu.memory_space<vmem>>, vector<8x8xf32>
    %34 = arith.mulf %32, %32 : vector<8x128xf32>
    %cst_39 = arith.constant dense<0.000000e+00> : vector<8x128xf32>
    %35 = tpu.matmul %33, %34, %cst_39 {dimension_numbers = #tpu.dot_dimension_numbers<[1], [0], [0], [1], [0, 0, 1, 1], [], []>} : vector<8x8xf32>, vector<8x128xf32>, vector<8x128xf32> -> vector<8x128xf32>
    %c0_40 = arith.constant 0 : index
    %c0_41 = arith.constant 0 : index
    %36 = vector.load %arg7[%c0_40, %c0_41] : memref<8x1xf32, #tpu.memory_space<vmem>>, vector<8x1xf32>
    %37 = vector.broadcast %36 : vector<8x1xf32> to vector<8x128xf32>
    %38 = arith.addf %35, %37 : vector<8x128xf32>
    %cst_42 = arith.constant 1.000000e-10 : f32
    %39 = vector.broadcast %cst_42 : f32 to vector<8x128xf32>
    %40 = arith.maximumf %38, %39 : vector<8x128xf32>
    %41 = math.rsqrt %40 : vector<8x128xf32>
    %42 = arith.mulf %32, %41 : vector<8x128xf32>
    %43 = arith.truncf %42 : vector<8x128xf32> to vector<8x128xbf16>
    %c0_43 = arith.constant 0 : index
    %c0_44 = arith.constant 0 : index
    %44 = vector.load %arg8[%c0_43, %c0_44] : memref<8x128xbf16, #tpu.memory_space<vmem>>, vector<8x128xbf16>
    tpu.vector_store %arg8[%c0_43, %c0_44], %43 {strides = array<i32>} : memref<8x128xbf16, #tpu.memory_space<vmem>>, vector<8x128xbf16>,
    return
  }
  func.func @transform_0(%arg0: i32) -> (i32, i32) {
    %c1_i32 = arith.constant 1 : i32
    %0 = arith.addi %arg0, %c1_i32 : i32
    %c1_i32_0 = arith.constant 1 : i32
    %1 = arith.muli %0, %c1_i32_0 : i32
    %c1_i32_1 = arith.constant 1 : i32
    %2 = arith.subi %1, %c1_i32_1 : i32
    %c0_i32 = arith.constant 0 : i32
    %c0_i32_2 = arith.constant 0 : i32
    return %c0_i32, %2 : i32, i32
  }
  func.func @transform_1(%arg0: i32) -> (i32, i32) {
    %c1_i32 = arith.constant 1 : i32
    %0 = arith.addi %arg0, %c1_i32 : i32
    %c0_i32 = arith.constant 0 : i32
    %c0_i32_0 = arith.constant 0 : i32
    return %c0_i32, %0 : i32, i32
  }
  func.func @transform_2(%arg0: i32) -> (i32, i32) {
    %c2_i32 = arith.constant 2 : i32
    %0 = arith.addi %arg0, %c2_i32 : i32
    %c1_i32 = arith.constant 1 : i32
    %1 = arith.muli %0, %c1_i32 : i32
    %c0_i32 = arith.constant 0 : i32
    %c0_i32_0 = arith.constant 0 : i32
    return %c0_i32, %1 : i32, i32
  }
  func.func @transform_3(%arg0: i32) -> (i32, i32) {
    %c0_i32 = arith.constant 0 : i32
    %c0_i32_0 = arith.constant 0 : i32
    %c0_i32_1 = arith.constant 0 : i32
    return %c0_i32, %c0_i32_0 : i32, i32
  }
  func.func @transform_4(%arg0: i32) -> (i32, i32) {
    %c0_i32 = arith.constant 0 : i32
    %c0_i32_0 = arith.constant 0 : i32
    %c0_i32_1 = arith.constant 0 : i32
    return %c0_i32, %c0_i32_0 : i32, i32
  }
  func.func @transform_5(%arg0: i32) -> (i32, i32) {
    %c0_i32 = arith.constant 0 : i32
    %c0_i32_0 = arith.constant 0 : i32
    %c0_i32_1 = arith.constant 0 : i32
    return %c0_i32, %c0_i32_0 : i32, i32
  }
  func.func @transform_6(%arg0: i32) -> (i32, i32) {
    %c0_i32 = arith.constant 0 : i32
    %c0_i32_0 = arith.constant 0 : i32
    %c0_i32_1 = arith.constant 0 : i32
    return %c0_i32, %c0_i32_0 : i32, i32
  }
  func.func @transform_7(%arg0: i32) -> (i32, i32) {
    %c0_i32 = arith.constant 0 : i32
    %c0_i32_0 = arith.constant 0 : i32
    return %c0_i32, %arg0 : i32, i32
  }
}

module attributes {stable_mosaic.version = 11 : i64} {
  func.func @_conv3x3_kernel(%arg0: i32, %arg1: memref<32x128xbf16, #tpu.memory_space<vmem>>, %arg2: memref<32x128xbf16, #tpu.memory_space<vmem>>, %arg3: memref<32x128xbf16, #tpu.memory_space<vmem>>, %arg4: memref<8x288xf32, #tpu.memory_space<vmem>>, %arg5: memref<8x1xf32, #tpu.memory_space<vmem>>, %arg6: memref<8x8xf32, #tpu.memory_space<vmem>>, %arg7: memref<8x1xf32, #tpu.memory_space<vmem>>, %arg8: memref<8x128xbf16, #tpu.memory_space<vmem>>, %arg9: memref<32x384xf32, #tpu.memory_space<vmem>>, %arg10: memref<288x128xf32, #tpu.memory_space<vmem>>) attributes {dimension_semantics = [#tpu.dimension_semantics<parallel>], iteration_bounds = array<i64: 1>, scalar_prefetch = 0 : i64, scratch_operands = 2 : i64, tpu.core_type = #tpu.core_type<tc>, window_params = [{transform_indices = @transform_0, window_bounds = array<i64: 32, 128>}, {transform_indices = @transform_1, window_bounds = array<i64: 32, 128>}, {transform_indices = @transform_2, window_bounds = array<i64: 32, 128>}, {pipeline_mode = #tpu.pipeline_mode<synchronous>, transform_indices = @transform_3, window_bounds = array<i64: 8, 288>}, {pipeline_mode = #tpu.pipeline_mode<synchronous>, transform_indices = @transform_4, window_bounds = array<i64: 8, 1>}, {pipeline_mode = #tpu.pipeline_mode<synchronous>, transform_indices = @transform_5, window_bounds = array<i64: 8, 8>}, {pipeline_mode = #tpu.pipeline_mode<synchronous>, transform_indices = @transform_6, window_bounds = array<i64: 8, 1>}, {transform_indices = @transform_7, window_bounds = array<i64: 8, 128>}]} {
    %c0 = arith.constant 0 : index
    %c0_0 = arith.constant 0 : index
    %0 = vector.load %arg1[%c0, %c0_0] : memref<32x128xbf16, #tpu.memory_space<vmem>>, vector<32x128xbf16>
    %1 = arith.extf %0 : vector<32x128xbf16> to vector<32x128xf32>
    %c0_1 = arith.constant 0 : index
    %c0_2 = arith.constant 0 : index
    %2 = vector.load %arg9[%c0_1, %c0_2] : memref<32x384xf32, #tpu.memory_space<vmem>>, vector<32x128xf32>
    tpu.vector_store %arg9[%c0_1, %c0_2], %1 {strides = array<i32>} : memref<32x384xf32, #tpu.memory_space<vmem>>, vector<32x128xf32>,
    %c0_3 = arith.constant 0 : index
    %c0_4 = arith.constant 0 : index
    %3 = vector.load %arg2[%c0_3, %c0_4] : memref<32x128xbf16, #tpu.memory_space<vmem>>, vector<32x128xbf16>
    %4 = arith.extf %3 : vector<32x128xbf16> to vector<32x128xf32>
    %c0_5 = arith.constant 0 : index
    %c128 = arith.constant 128 : index
    %5 = vector.load %arg9[%c0_5, %c128] : memref<32x384xf32, #tpu.memory_space<vmem>>, vector<32x128xf32>
    tpu.vector_store %arg9[%c0_5, %c128], %4 {strides = array<i32>} : memref<32x384xf32, #tpu.memory_space<vmem>>, vector<32x128xf32>,
    %c0_6 = arith.constant 0 : index
    %c0_7 = arith.constant 0 : index
    %6 = vector.load %arg3[%c0_6, %c0_7] : memref<32x128xbf16, #tpu.memory_space<vmem>>, vector<32x128xbf16>
    %7 = arith.extf %6 : vector<32x128xbf16> to vector<32x128xf32>
    %c0_8 = arith.constant 0 : index
    %c256 = arith.constant 256 : index
    %8 = vector.load %arg9[%c0_8, %c256] : memref<32x384xf32, #tpu.memory_space<vmem>>, vector<32x128xf32>
    tpu.vector_store %arg9[%c0_8, %c256], %7 {strides = array<i32>} : memref<32x384xf32, #tpu.memory_space<vmem>>, vector<32x128xf32>,
    %c0_9 = arith.constant 0 : index
    %c121 = arith.constant 121 : index
    %9 = vector.load %arg9[%c0_9, %c121] : memref<32x384xf32, #tpu.memory_space<vmem>>, vector<32x128xf32>
    %c0_10 = arith.constant 0 : index
    %c0_11 = arith.constant 0 : index
    %10 = vector.load %arg10[%c0_10, %c0_11] : memref<288x128xf32, #tpu.memory_space<vmem>>, vector<32x128xf32>
    tpu.vector_store %arg10[%c0_10, %c0_11], %9 {strides = array<i32>} : memref<288x128xf32, #tpu.memory_space<vmem>>, vector<32x128xf32>,
    %c0_12 = arith.constant 0 : index
    %c122 = arith.constant 122 : index
    %11 = vector.load %arg9[%c0_12, %c122] : memref<32x384xf32, #tpu.memory_space<vmem>>, vector<32x128xf32>
    %c32 = arith.constant 32 : index
    %c0_13 = arith.constant 0 : index
    %12 = vector.load %arg10[%c32, %c0_13] : memref<288x128xf32, #tpu.memory_space<vmem>>, vector<32x128xf32>
    tpu.vector_store %arg10[%c32, %c0_13], %11 {strides = array<i32>} : memref<288x128xf32, #tpu.memory_space<vmem>>, vector<32x128xf32>,
    %c0_14 = arith.constant 0 : index
    %c123 = arith.constant 123 : index
    %13 = vector.load %arg9[%c0_14, %c123] : memref<32x384xf32, #tpu.memory_space<vmem>>, vector<32x128xf32>
    %c64 = arith.constant 64 : index
    %c0_15 = arith.constant 0 : index
    %14 = vector.load %arg10[%c64, %c0_15] : memref<288x128xf32, #tpu.memory_space<vmem>>, vector<32x128xf32>
    tpu.vector_store %arg10[%c64, %c0_15], %13 {strides = array<i32>} : memref<288x128xf32, #tpu.memory_space<vmem>>, vector<32x128xf32>,
    %c0_16 = arith.constant 0 : index
    %c127 = arith.constant 127 : index
    %15 = vector.load %arg9[%c0_16, %c127] : memref<32x384xf32, #tpu.memory_space<vmem>>, vector<32x128xf32>
    %c96 = arith.constant 96 : index
    %c0_17 = arith.constant 0 : index
    %16 = vector.load %arg10[%c96, %c0_17] : memref<288x128xf32, #tpu.memory_space<vmem>>, vector<32x128xf32>
    tpu.vector_store %arg10[%c96, %c0_17], %15 {strides = array<i32>} : memref<288x128xf32, #tpu.memory_space<vmem>>, vector<32x128xf32>,
    %c0_18 = arith.constant 0 : index
    %c128_19 = arith.constant 128 : index
    %17 = vector.load %arg9[%c0_18, %c128_19] : memref<32x384xf32, #tpu.memory_space<vmem>>, vector<32x128xf32>
    %c128_20 = arith.constant 128 : index
    %c0_21 = arith.constant 0 : index
    %18 = vector.load %arg10[%c128_20, %c0_21] : memref<288x128xf32, #tpu.memory_space<vmem>>, vector<32x128xf32>
    tpu.vector_store %arg10[%c128_20, %c0_21], %17 {strides = array<i32>} : memref<288x128xf32, #tpu.memory_space<vmem>>, vector<32x128xf32>,
    %c0_22 = arith.constant 0 : index
    %c129 = arith.constant 129 : index
    %19 = vector.load %arg9[%c0_22, %c129] : memref<32x384xf32, #tpu.memory_space<vmem>>, vector<32x128xf32>
    %c160 = arith.constant 160 : index
    %c0_23 = arith.constant 0 : index
    %20 = vector.load %arg10[%c160, %c0_23] : memref<288x128xf32, #tpu.memory_space<vmem>>, vector<32x128xf32>
    tpu.vector_store %arg10[%c160, %c0_23], %19 {strides = array<i32>} : memref<288x128xf32, #tpu.memory_space<vmem>>, vector<32x128xf32>,
    %c0_24 = arith.constant 0 : index
    %c133 = arith.constant 133 : index
    %21 = vector.load %arg9[%c0_24, %c133] : memref<32x384xf32, #tpu.memory_space<vmem>>, vector<32x128xf32>
    %c192 = arith.constant 192 : index
    %c0_25 = arith.constant 0 : index
    %22 = vector.load %arg10[%c192, %c0_25] : memref<288x128xf32, #tpu.memory_space<vmem>>, vector<32x128xf32>
    tpu.vector_store %arg10[%c192, %c0_25], %21 {strides = array<i32>} : memref<288x128xf32, #tpu.memory_space<vmem>>, vector<32x128xf32>,
    %c0_26 = arith.constant 0 : index
    %c134 = arith.constant 134 : index
    %23 = vector.load %arg9[%c0_26, %c134] : memref<32x384xf32, #tpu.memory_space<vmem>>, vector<32x128xf32>
    %c224 = arith.constant 224 : index
    %c0_27 = arith.constant 0 : index
    %24 = vector.load %arg10[%c224, %c0_27] : memref<288x128xf32, #tpu.memory_space<vmem>>, vector<32x128xf32>
    tpu.vector_store %arg10[%c224, %c0_27], %23 {strides = array<i32>} : memref<288x128xf32, #tpu.memory_space<vmem>>, vector<32x128xf32>,
    %c0_28 = arith.constant 0 : index
    %c135 = arith.constant 135 : index
    %25 = vector.load %arg9[%c0_28, %c135] : memref<32x384xf32, #tpu.memory_space<vmem>>, vector<32x128xf32>
    %c256_29 = arith.constant 256 : index
    %c0_30 = arith.constant 0 : index
    %26 = vector.load %arg10[%c256_29, %c0_30] : memref<288x128xf32, #tpu.memory_space<vmem>>, vector<32x128xf32>
    tpu.vector_store %arg10[%c256_29, %c0_30], %25 {strides = array<i32>} : memref<288x128xf32, #tpu.memory_space<vmem>>, vector<32x128xf32>,
    %c0_31 = arith.constant 0 : index
    %c0_32 = arith.constant 0 : index
    %27 = vector.load %arg4[%c0_31, %c0_32] : memref<8x288xf32, #tpu.memory_space<vmem>>, vector<8x288xf32>
    %c0_33 = arith.constant 0 : index
    %c0_34 = arith.constant 0 : index
    %28 = vector.load %arg10[%c0_33, %c0_34] : memref<288x128xf32, #tpu.memory_space<vmem>>, vector<288x128xf32>
    %cst = arith.constant dense<0.000000e+00> : vector<8x128xf32>
    %29 = tpu.matmul %27, %28, %cst {dimension_numbers = #tpu.dot_dimension_numbers<[1], [0], [0], [1], [0, 0, 1, 1], [], []>} : vector<8x288xf32>, vector<288x128xf32>, vector<8x128xf32> -> vector<8x128xf32>
    %c0_35 = arith.constant 0 : index
    %c0_36 = arith.constant 0 : index
    %30 = vector.load %arg5[%c0_35, %c0_36] : memref<8x1xf32, #tpu.memory_space<vmem>>, vector<8x1xf32>
    %31 = vector.broadcast %30 : vector<8x1xf32> to vector<8x128xf32>
    %32 = arith.addf %29, %31 : vector<8x128xf32>
    %c0_37 = arith.constant 0 : index
    %c0_38 = arith.constant 0 : index
    %33 = vector.load %arg6[%c0_37, %c0_38] : memref<8x8xf32, #tpu.memory_space<vmem>>, vector<8x8xf32>
    %34 = arith.mulf %32, %32 : vector<8x128xf32>
    %cst_39 = arith.constant dense<0.000000e+00> : vector<8x128xf32>
    %35 = tpu.matmul %33, %34, %cst_39 {dimension_numbers = #tpu.dot_dimension_numbers<[1], [0], [0], [1], [0, 0, 1, 1], [], []>} : vector<8x8xf32>, vector<8x128xf32>, vector<8x128xf32> -> vector<8x128xf32>
    %c0_40 = arith.constant 0 : index
    %c0_41 = arith.constant 0 : index
    %36 = vector.load %arg7[%c0_40, %c0_41] : memref<8x1xf32, #tpu.memory_space<vmem>>, vector<8x1xf32>
    %37 = vector.broadcast %36 : vector<8x1xf32> to vector<8x128xf32>
    %38 = arith.addf %35, %37 : vector<8x128xf32>
    %cst_42 = arith.constant 1.000000e-10 : f32
    %39 = vector.broadcast %cst_42 : f32 to vector<8x128xf32>
    %40 = arith.maximumf %38, %39 : vector<8x128xf32>
    %41 = math.rsqrt %40 : vector<8x128xf32>
    %42 = arith.mulf %32, %41 : vector<8x128xf32>
    %43 = arith.truncf %42 : vector<8x128xf32> to vector<8x128xbf16>
    %c0_43 = arith.constant 0 : index
    %c0_44 = arith.constant 0 : index
    %44 = vector.load %arg8[%c0_43, %c0_44] : memref<8x128xbf16, #tpu.memory_space<vmem>>, vector<8x128xbf16>
    tpu.vector_store %arg8[%c0_43, %c0_44], %43 {strides = array<i32>} : memref<8x128xbf16, #tpu.memory_space<vmem>>, vector<8x128xbf16>,
    return
  }
  func.func @transform_0(%arg0: i32) -> (i32, i32) {
    %c1_i32 = arith.constant 1 : i32
    %0 = arith.addi %arg0, %c1_i32 : i32
    %c1_i32_0 = arith.constant 1 : i32
    %1 = arith.muli %0, %c1_i32_0 : i32
    %c1_i32_1 = arith.constant 1 : i32
    %2 = arith.subi %1, %c1_i32_1 : i32
    %c0_i32 = arith.constant 0 : i32
    %c0_i32_2 = arith.constant 0 : i32
    return %c0_i32, %2 : i32, i32
  }
  func.func @transform_1(%arg0: i32) -> (i32, i32) {
    %c1_i32 = arith.constant 1 : i32
    %0 = arith.addi %arg0, %c1_i32 : i32
    %c0_i32 = arith.constant 0 : i32
    %c0_i32_0 = arith.constant 0 : i32
    return %c0_i32, %0 : i32, i32
  }
  func.func @transform_2(%arg0: i32) -> (i32, i32) {
    %c2_i32 = arith.constant 2 : i32
    %0 = arith.addi %arg0, %c2_i32 : i32
    %c1_i32 = arith.constant 1 : i32
    %1 = arith.muli %0, %c1_i32 : i32
    %c0_i32 = arith.constant 0 : i32
    %c0_i32_0 = arith.constant 0 : i32
    return %c0_i32, %1 : i32, i32
  }
  func.func @transform_3(%arg0: i32) -> (i32, i32) {
    %c0_i32 = arith.constant 0 : i32
    %c0_i32_0 = arith.constant 0 : i32
    %c0_i32_1 = arith.constant 0 : i32
    return %c0_i32, %c0_i32_0 : i32, i32
  }
  func.func @transform_4(%arg0: i32) -> (i32, i32) {
    %c0_i32 = arith.constant 0 : i32
    %c0_i32_0 = arith.constant 0 : i32
    %c0_i32_1 = arith.constant 0 : i32
    return %c0_i32, %c0_i32_0 : i32, i32
  }
  func.func @transform_5(%arg0: i32) -> (i32, i32) {
    %c0_i32 = arith.constant 0 : i32
    %c0_i32_0 = arith.constant 0 : i32
    %c0_i32_1 = arith.constant 0 : i32
    return %c0_i32, %c0_i32_0 : i32, i32
  }
  func.func @transform_6(%arg0: i32) -> (i32, i32) {
    %c0_i32 = arith.constant 0 : i32
    %c0_i32_0 = arith.constant 0 : i32
    %c0_i32_1 = arith.constant 0 : i32
    return %c0_i32, %c0_i32_0 : i32, i32
  }
  func.func @transform_7(%arg0: i32) -> (i32, i32) {
    %c0_i32 = arith.constant 0 : i32
    %c0_i32_0 = arith.constant 0 : i32
    return %c0_i32, %arg0 : i32, i32
  }
}

module attributes {stable_mosaic.version = 11 : i64} {
  func.func @_conv3x3_kernel(%arg0: i32, %arg1: memref<32x128xbf16, #tpu.memory_space<vmem>>, %arg2: memref<32x128xbf16, #tpu.memory_space<vmem>>, %arg3: memref<32x128xbf16, #tpu.memory_space<vmem>>, %arg4: memref<16x288xf32, #tpu.memory_space<vmem>>, %arg5: memref<16x1xf32, #tpu.memory_space<vmem>>, %arg6: memref<16x1xf32, #tpu.memory_space<vmem>>, %arg7: memref<16x128xf32, #tpu.memory_space<vmem>>, %arg8: memref<16x128xf32, #tpu.memory_space<vmem>>, %arg9: memref<32x384xf32, #tpu.memory_space<vmem>>, %arg10: memref<288x128xf32, #tpu.memory_space<vmem>>) attributes {dimension_semantics = [#tpu.dimension_semantics<parallel>], iteration_bounds = array<i64: 1>, scalar_prefetch = 0 : i64, scratch_operands = 2 : i64, tpu.core_type = #tpu.core_type<tc>, window_params = [{transform_indices = @transform_0, window_bounds = array<i64: 32, 128>}, {transform_indices = @transform_1, window_bounds = array<i64: 32, 128>}, {transform_indices = @transform_2, window_bounds = array<i64: 32, 128>}, {pipeline_mode = #tpu.pipeline_mode<synchronous>, transform_indices = @transform_3, window_bounds = array<i64: 16, 288>}, {pipeline_mode = #tpu.pipeline_mode<synchronous>, transform_indices = @transform_4, window_bounds = array<i64: 16, 1>}, {pipeline_mode = #tpu.pipeline_mode<synchronous>, transform_indices = @transform_5, window_bounds = array<i64: 16, 1>}, {transform_indices = @transform_6, window_bounds = array<i64: 16, 128>}, {transform_indices = @transform_7, window_bounds = array<i64: 16, 128>}]} {
    %c0 = arith.constant 0 : index
    %c0_0 = arith.constant 0 : index
    %0 = vector.load %arg1[%c0, %c0_0] : memref<32x128xbf16, #tpu.memory_space<vmem>>, vector<32x128xbf16>
    %1 = arith.extf %0 : vector<32x128xbf16> to vector<32x128xf32>
    %c0_1 = arith.constant 0 : index
    %c0_2 = arith.constant 0 : index
    %2 = vector.load %arg9[%c0_1, %c0_2] : memref<32x384xf32, #tpu.memory_space<vmem>>, vector<32x128xf32>
    tpu.vector_store %arg9[%c0_1, %c0_2], %1 {strides = array<i32>} : memref<32x384xf32, #tpu.memory_space<vmem>>, vector<32x128xf32>,
    %c0_3 = arith.constant 0 : index
    %c0_4 = arith.constant 0 : index
    %3 = vector.load %arg2[%c0_3, %c0_4] : memref<32x128xbf16, #tpu.memory_space<vmem>>, vector<32x128xbf16>
    %4 = arith.extf %3 : vector<32x128xbf16> to vector<32x128xf32>
    %c0_5 = arith.constant 0 : index
    %c128 = arith.constant 128 : index
    %5 = vector.load %arg9[%c0_5, %c128] : memref<32x384xf32, #tpu.memory_space<vmem>>, vector<32x128xf32>
    tpu.vector_store %arg9[%c0_5, %c128], %4 {strides = array<i32>} : memref<32x384xf32, #tpu.memory_space<vmem>>, vector<32x128xf32>,
    %c0_6 = arith.constant 0 : index
    %c0_7 = arith.constant 0 : index
    %6 = vector.load %arg3[%c0_6, %c0_7] : memref<32x128xbf16, #tpu.memory_space<vmem>>, vector<32x128xbf16>
    %7 = arith.extf %6 : vector<32x128xbf16> to vector<32x128xf32>
    %c0_8 = arith.constant 0 : index
    %c256 = arith.constant 256 : index
    %8 = vector.load %arg9[%c0_8, %c256] : memref<32x384xf32, #tpu.memory_space<vmem>>, vector<32x128xf32>
    tpu.vector_store %arg9[%c0_8, %c256], %7 {strides = array<i32>} : memref<32x384xf32, #tpu.memory_space<vmem>>, vector<32x128xf32>,
    %c0_9 = arith.constant 0 : index
    %c123 = arith.constant 123 : index
    %9 = vector.load %arg9[%c0_9, %c123] : memref<32x384xf32, #tpu.memory_space<vmem>>, vector<32x128xf32>
    %c0_10 = arith.constant 0 : index
    %c0_11 = arith.constant 0 : index
    %10 = vector.load %arg10[%c0_10, %c0_11] : memref<288x128xf32, #tpu.memory_space<vmem>>, vector<32x128xf32>
    tpu.vector_store %arg10[%c0_10, %c0_11], %9 {strides = array<i32>} : memref<288x128xf32, #tpu.memory_space<vmem>>, vector<32x128xf32>,
    %c0_12 = arith.constant 0 : index
    %c124 = arith.constant 124 : index
    %11 = vector.load %arg9[%c0_12, %c124] : memref<32x384xf32, #tpu.memory_space<vmem>>, vector<32x128xf32>
    %c32 = arith.constant 32 : index
    %c0_13 = arith.constant 0 : index
    %12 = vector.load %arg10[%c32, %c0_13] : memref<288x128xf32, #tpu.memory_space<vmem>>, vector<32x128xf32>
    tpu.vector_store %arg10[%c32, %c0_13], %11 {strides = array<i32>} : memref<288x128xf32, #tpu.memory_space<vmem>>, vector<32x128xf32>,
    %c0_14 = arith.constant 0 : index
    %c125 = arith.constant 125 : index
    %13 = vector.load %arg9[%c0_14, %c125] : memref<32x384xf32, #tpu.memory_space<vmem>>, vector<32x128xf32>
    %c64 = arith.constant 64 : index
    %c0_15 = arith.constant 0 : index
    %14 = vector.load %arg10[%c64, %c0_15] : memref<288x128xf32, #tpu.memory_space<vmem>>, vector<32x128xf32>
    tpu.vector_store %arg10[%c64, %c0_15], %13 {strides = array<i32>} : memref<288x128xf32, #tpu.memory_space<vmem>>, vector<32x128xf32>,
    %c0_16 = arith.constant 0 : index
    %c127 = arith.constant 127 : index
    %15 = vector.load %arg9[%c0_16, %c127] : memref<32x384xf32, #tpu.memory_space<vmem>>, vector<32x128xf32>
    %c96 = arith.constant 96 : index
    %c0_17 = arith.constant 0 : index
    %16 = vector.load %arg10[%c96, %c0_17] : memref<288x128xf32, #tpu.memory_space<vmem>>, vector<32x128xf32>
    tpu.vector_store %arg10[%c96, %c0_17], %15 {strides = array<i32>} : memref<288x128xf32, #tpu.memory_space<vmem>>, vector<32x128xf32>,
    %c0_18 = arith.constant 0 : index
    %c128_19 = arith.constant 128 : index
    %17 = vector.load %arg9[%c0_18, %c128_19] : memref<32x384xf32, #tpu.memory_space<vmem>>, vector<32x128xf32>
    %c128_20 = arith.constant 128 : index
    %c0_21 = arith.constant 0 : index
    %18 = vector.load %arg10[%c128_20, %c0_21] : memref<288x128xf32, #tpu.memory_space<vmem>>, vector<32x128xf32>
    tpu.vector_store %arg10[%c128_20, %c0_21], %17 {strides = array<i32>} : memref<288x128xf32, #tpu.memory_space<vmem>>, vector<32x128xf32>,
    %c0_22 = arith.constant 0 : index
    %c129 = arith.constant 129 : index
    %19 = vector.load %arg9[%c0_22, %c129] : memref<32x384xf32, #tpu.memory_space<vmem>>, vector<32x128xf32>
    %c160 = arith.constant 160 : index
    %c0_23 = arith.constant 0 : index
    %20 = vector.load %arg10[%c160, %c0_23] : memref<288x128xf32, #tpu.memory_space<vmem>>, vector<32x128xf32>
    tpu.vector_store %arg10[%c160, %c0_23], %19 {strides = array<i32>} : memref<288x128xf32, #tpu.memory_space<vmem>>, vector<32x128xf32>,
    %c0_24 = arith.constant 0 : index
    %c131 = arith.constant 131 : index
    %21 = vector.load %arg9[%c0_24, %c131] : memref<32x384xf32, #tpu.memory_space<vmem>>, vector<32x128xf32>
    %c192 = arith.constant 192 : index
    %c0_25 = arith.constant 0 : index
    %22 = vector.load %arg10[%c192, %c0_25] : memref<288x128xf32, #tpu.memory_space<vmem>>, vector<32x128xf32>
    tpu.vector_store %arg10[%c192, %c0_25], %21 {strides = array<i32>} : memref<288x128xf32, #tpu.memory_space<vmem>>, vector<32x128xf32>,
    %c0_26 = arith.constant 0 : index
    %c132 = arith.constant 132 : index
    %23 = vector.load %arg9[%c0_26, %c132] : memref<32x384xf32, #tpu.memory_space<vmem>>, vector<32x128xf32>
    %c224 = arith.constant 224 : index
    %c0_27 = arith.constant 0 : index
    %24 = vector.load %arg10[%c224, %c0_27] : memref<288x128xf32, #tpu.memory_space<vmem>>, vector<32x128xf32>
    tpu.vector_store %arg10[%c224, %c0_27], %23 {strides = array<i32>} : memref<288x128xf32, #tpu.memory_space<vmem>>, vector<32x128xf32>,
    %c0_28 = arith.constant 0 : index
    %c133 = arith.constant 133 : index
    %25 = vector.load %arg9[%c0_28, %c133] : memref<32x384xf32, #tpu.memory_space<vmem>>, vector<32x128xf32>
    %c256_29 = arith.constant 256 : index
    %c0_30 = arith.constant 0 : index
    %26 = vector.load %arg10[%c256_29, %c0_30] : memref<288x128xf32, #tpu.memory_space<vmem>>, vector<32x128xf32>
    tpu.vector_store %arg10[%c256_29, %c0_30], %25 {strides = array<i32>} : memref<288x128xf32, #tpu.memory_space<vmem>>, vector<32x128xf32>,
    %c0_31 = arith.constant 0 : index
    %c0_32 = arith.constant 0 : index
    %27 = vector.load %arg4[%c0_31, %c0_32] : memref<16x288xf32, #tpu.memory_space<vmem>>, vector<16x288xf32>
    %c0_33 = arith.constant 0 : index
    %c0_34 = arith.constant 0 : index
    %28 = vector.load %arg10[%c0_33, %c0_34] : memref<288x128xf32, #tpu.memory_space<vmem>>, vector<288x128xf32>
    %cst = arith.constant dense<0.000000e+00> : vector<16x128xf32>
    %29 = tpu.matmul %27, %28, %cst {dimension_numbers = #tpu.dot_dimension_numbers<[1], [0], [0], [1], [0, 0, 1, 1], [], []>} : vector<16x288xf32>, vector<288x128xf32>, vector<16x128xf32> -> vector<16x128xf32>
    %c0_35 = arith.constant 0 : index
    %c0_36 = arith.constant 0 : index
    %30 = vector.load %arg5[%c0_35, %c0_36] : memref<16x1xf32, #tpu.memory_space<vmem>>, vector<16x1xf32>
    %31 = vector.broadcast %30 : vector<16x1xf32> to vector<16x128xf32>
    %32 = arith.addf %29, %31 : vector<16x128xf32>
    %33 = math.roundeven %32 : vector<16x128xf32>
    %c0_37 = arith.constant 0 : index
    %c0_38 = arith.constant 0 : index
    %34 = vector.load %arg6[%c0_37, %c0_38] : memref<16x1xf32, #tpu.memory_space<vmem>>, vector<16x1xf32>
    %cst_39 = arith.constant 5.000000e-01 : f32
    %35 = vector.broadcast %cst_39 : f32 to vector<16x128xf32>
    %36 = arith.addf %33, %35 : vector<16x128xf32>
    %37 = vector.broadcast %34 : vector<16x1xf32> to vector<16x128xf32>
    %38 = arith.mulf %36, %37 : vector<16x128xf32>
    %cst_40 = arith.constant 5.000000e-01 : f32
    %39 = vector.broadcast %cst_40 : f32 to vector<16x128xf32>
    %40 = arith.mulf %39, %38 : vector<16x128xf32>
    %41 = math.tanh %40 : vector<16x128xf32>
    %cst_41 = arith.constant 1.000000e+00 : f32
    %42 = vector.broadcast %cst_41 : f32 to vector<16x128xf32>
    %43 = arith.addf %41, %42 : vector<16x128xf32>
    %cst_42 = arith.constant 5.000000e-01 : f32
    %44 = vector.broadcast %cst_42 : f32 to vector<16x128xf32>
    %45 = arith.mulf %44, %43 : vector<16x128xf32>
    %cst_43 = arith.constant 5.000000e-01 : f32
    %46 = vector.broadcast %cst_43 : f32 to vector<16x128xf32>
    %47 = arith.subf %33, %46 : vector<16x128xf32>
    %48 = vector.broadcast %34 : vector<16x1xf32> to vector<16x128xf32>
    %49 = arith.mulf %47, %48 : vector<16x128xf32>
    %cst_44 = arith.constant 5.000000e-01 : f32
    %50 = vector.broadcast %cst_44 : f32 to vector<16x128xf32>
    %51 = arith.mulf %50, %49 : vector<16x128xf32>
    %52 = math.tanh %51 : vector<16x128xf32>
    %cst_45 = arith.constant 1.000000e+00 : f32
    %53 = vector.broadcast %cst_45 : f32 to vector<16x128xf32>
    %54 = arith.addf %52, %53 : vector<16x128xf32>
    %cst_46 = arith.constant 5.000000e-01 : f32
    %55 = vector.broadcast %cst_46 : f32 to vector<16x128xf32>
    %56 = arith.mulf %55, %54 : vector<16x128xf32>
    %c0_47 = arith.constant 0 : index
    %c0_48 = arith.constant 0 : index
    %57 = vector.load %arg7[%c0_47, %c0_48] : memref<16x128xf32, #tpu.memory_space<vmem>>, vector<16x128xf32>
    tpu.vector_store %arg7[%c0_47, %c0_48], %33 {strides = array<i32>} : memref<16x128xf32, #tpu.memory_space<vmem>>, vector<16x128xf32>,
    %58 = arith.subf %45, %56 : vector<16x128xf32>
    %cst_49 = arith.constant 9.99999971E-10 : f32
    %59 = vector.broadcast %cst_49 : f32 to vector<16x128xf32>
    %60 = arith.maximumf %58, %59 : vector<16x128xf32>
    %c0_50 = arith.constant 0 : index
    %c0_51 = arith.constant 0 : index
    %61 = vector.load %arg8[%c0_50, %c0_51] : memref<16x128xf32, #tpu.memory_space<vmem>>, vector<16x128xf32>
    tpu.vector_store %arg8[%c0_50, %c0_51], %60 {strides = array<i32>} : memref<16x128xf32, #tpu.memory_space<vmem>>, vector<16x128xf32>,
    return
  }
  func.func @transform_0(%arg0: i32) -> (i32, i32) {
    %c1_i32 = arith.constant 1 : i32
    %0 = arith.addi %arg0, %c1_i32 : i32
    %c1_i32_0 = arith.constant 1 : i32
    %1 = arith.muli %0, %c1_i32_0 : i32
    %c1_i32_1 = arith.constant 1 : i32
    %2 = arith.subi %1, %c1_i32_1 : i32
    %c0_i32 = arith.constant 0 : i32
    %c0_i32_2 = arith.constant 0 : i32
    return %c0_i32, %2 : i32, i32
  }
  func.func @transform_1(%arg0: i32) -> (i32, i32) {
    %c1_i32 = arith.constant 1 : i32
    %0 = arith.addi %arg0, %c1_i32 : i32
    %c0_i32 = arith.constant 0 : i32
    %c0_i32_0 = arith.constant 0 : i32
    return %c0_i32, %0 : i32, i32
  }
  func.func @transform_2(%arg0: i32) -> (i32, i32) {
    %c2_i32 = arith.constant 2 : i32
    %0 = arith.addi %arg0, %c2_i32 : i32
    %c1_i32 = arith.constant 1 : i32
    %1 = arith.muli %0, %c1_i32 : i32
    %c0_i32 = arith.constant 0 : i32
    %c0_i32_0 = arith.constant 0 : i32
    return %c0_i32, %1 : i32, i32
  }
  func.func @transform_3(%arg0: i32) -> (i32, i32) {
    %c0_i32 = arith.constant 0 : i32
    %c0_i32_0 = arith.constant 0 : i32
    %c0_i32_1 = arith.constant 0 : i32
    return %c0_i32, %c0_i32_0 : i32, i32
  }
  func.func @transform_4(%arg0: i32) -> (i32, i32) {
    %c0_i32 = arith.constant 0 : i32
    %c0_i32_0 = arith.constant 0 : i32
    %c0_i32_1 = arith.constant 0 : i32
    return %c0_i32, %c0_i32_0 : i32, i32
  }
  func.func @transform_5(%arg0: i32) -> (i32, i32) {
    %c0_i32 = arith.constant 0 : i32
    %c0_i32_0 = arith.constant 0 : i32
    %c0_i32_1 = arith.constant 0 : i32
    return %c0_i32, %c0_i32_0 : i32, i32
  }
  func.func @transform_6(%arg0: i32) -> (i32, i32) {
    %c0_i32 = arith.constant 0 : i32
    %c0_i32_0 = arith.constant 0 : i32
    return %c0_i32, %arg0 : i32, i32
  }
  func.func @transform_7(%arg0: i32) -> (i32, i32) {
    %c0_i32 = arith.constant 0 : i32
    %c0_i32_0 = arith.constant 0 : i32
    return %c0_i32, %arg0 : i32, i32
  }
}

module attributes {stable_mosaic.version = 11 : i64} {
  func.func @_conv3x3_kernel(%arg0: i32, %arg1: memref<16x128xbf16, #tpu.memory_space<vmem>>, %arg2: memref<16x128xbf16, #tpu.memory_space<vmem>>, %arg3: memref<16x128xbf16, #tpu.memory_space<vmem>>, %arg4: memref<32x144xf32, #tpu.memory_space<vmem>>, %arg5: memref<32x1xf32, #tpu.memory_space<vmem>>, %arg6: memref<32x32xf32, #tpu.memory_space<vmem>>, %arg7: memref<32x1xf32, #tpu.memory_space<vmem>>, %arg8: memref<32x128xbf16, #tpu.memory_space<vmem>>, %arg9: memref<16x384xf32, #tpu.memory_space<vmem>>, %arg10: memref<144x128xf32, #tpu.memory_space<vmem>>) attributes {dimension_semantics = [#tpu.dimension_semantics<parallel>], iteration_bounds = array<i64: 1>, scalar_prefetch = 0 : i64, scratch_operands = 2 : i64, tpu.core_type = #tpu.core_type<tc>, window_params = [{transform_indices = @transform_0, window_bounds = array<i64: 16, 128>}, {transform_indices = @transform_1, window_bounds = array<i64: 16, 128>}, {transform_indices = @transform_2, window_bounds = array<i64: 16, 128>}, {pipeline_mode = #tpu.pipeline_mode<synchronous>, transform_indices = @transform_3, window_bounds = array<i64: 32, 144>}, {pipeline_mode = #tpu.pipeline_mode<synchronous>, transform_indices = @transform_4, window_bounds = array<i64: 32, 1>}, {pipeline_mode = #tpu.pipeline_mode<synchronous>, transform_indices = @transform_5, window_bounds = array<i64: 32, 32>}, {pipeline_mode = #tpu.pipeline_mode<synchronous>, transform_indices = @transform_6, window_bounds = array<i64: 32, 1>}, {transform_indices = @transform_7, window_bounds = array<i64: 32, 128>}]} {
    %c0 = arith.constant 0 : index
    %c0_0 = arith.constant 0 : index
    %0 = vector.load %arg1[%c0, %c0_0] : memref<16x128xbf16, #tpu.memory_space<vmem>>, vector<16x128xbf16>
    %1 = arith.extf %0 : vector<16x128xbf16> to vector<16x128xf32>
    %c0_1 = arith.constant 0 : index
    %c0_2 = arith.constant 0 : index
    %2 = vector.load %arg9[%c0_1, %c0_2] : memref<16x384xf32, #tpu.memory_space<vmem>>, vector<16x128xf32>
    tpu.vector_store %arg9[%c0_1, %c0_2], %1 {strides = array<i32>} : memref<16x384xf32, #tpu.memory_space<vmem>>, vector<16x128xf32>,
    %c0_3 = arith.constant 0 : index
    %c0_4 = arith.constant 0 : index
    %3 = vector.load %arg2[%c0_3, %c0_4] : memref<16x128xbf16, #tpu.memory_space<vmem>>, vector<16x128xbf16>
    %4 = arith.extf %3 : vector<16x128xbf16> to vector<16x128xf32>
    %c0_5 = arith.constant 0 : index
    %c128 = arith.constant 128 : index
    %5 = vector.load %arg9[%c0_5, %c128] : memref<16x384xf32, #tpu.memory_space<vmem>>, vector<16x128xf32>
    tpu.vector_store %arg9[%c0_5, %c128], %4 {strides = array<i32>} : memref<16x384xf32, #tpu.memory_space<vmem>>, vector<16x128xf32>,
    %c0_6 = arith.constant 0 : index
    %c0_7 = arith.constant 0 : index
    %6 = vector.load %arg3[%c0_6, %c0_7] : memref<16x128xbf16, #tpu.memory_space<vmem>>, vector<16x128xbf16>
    %7 = arith.extf %6 : vector<16x128xbf16> to vector<16x128xf32>
    %c0_8 = arith.constant 0 : index
    %c256 = arith.constant 256 : index
    %8 = vector.load %arg9[%c0_8, %c256] : memref<16x384xf32, #tpu.memory_space<vmem>>, vector<16x128xf32>
    tpu.vector_store %arg9[%c0_8, %c256], %7 {strides = array<i32>} : memref<16x384xf32, #tpu.memory_space<vmem>>, vector<16x128xf32>,
    %c0_9 = arith.constant 0 : index
    %c123 = arith.constant 123 : index
    %9 = vector.load %arg9[%c0_9, %c123] : memref<16x384xf32, #tpu.memory_space<vmem>>, vector<16x128xf32>
    %c0_10 = arith.constant 0 : index
    %c0_11 = arith.constant 0 : index
    %10 = vector.load %arg10[%c0_10, %c0_11] : memref<144x128xf32, #tpu.memory_space<vmem>>, vector<16x128xf32>
    tpu.vector_store %arg10[%c0_10, %c0_11], %9 {strides = array<i32>} : memref<144x128xf32, #tpu.memory_space<vmem>>, vector<16x128xf32>,
    %c0_12 = arith.constant 0 : index
    %c124 = arith.constant 124 : index
    %11 = vector.load %arg9[%c0_12, %c124] : memref<16x384xf32, #tpu.memory_space<vmem>>, vector<16x128xf32>
    %c16 = arith.constant 16 : index
    %c0_13 = arith.constant 0 : index
    %12 = vector.load %arg10[%c16, %c0_13] : memref<144x128xf32, #tpu.memory_space<vmem>>, vector<16x128xf32>
    tpu.vector_store %arg10[%c16, %c0_13], %11 {strides = array<i32>} : memref<144x128xf32, #tpu.memory_space<vmem>>, vector<16x128xf32>,
    %c0_14 = arith.constant 0 : index
    %c125 = arith.constant 125 : index
    %13 = vector.load %arg9[%c0_14, %c125] : memref<16x384xf32, #tpu.memory_space<vmem>>, vector<16x128xf32>
    %c32 = arith.constant 32 : index
    %c0_15 = arith.constant 0 : index
    %14 = vector.load %arg10[%c32, %c0_15] : memref<144x128xf32, #tpu.memory_space<vmem>>, vector<16x128xf32>
    tpu.vector_store %arg10[%c32, %c0_15], %13 {strides = array<i32>} : memref<144x128xf32, #tpu.memory_space<vmem>>, vector<16x128xf32>,
    %c0_16 = arith.constant 0 : index
    %c127 = arith.constant 127 : index
    %15 = vector.load %arg9[%c0_16, %c127] : memref<16x384xf32, #tpu.memory_space<vmem>>, vector<16x128xf32>
    %c48 = arith.constant 48 : index
    %c0_17 = arith.constant 0 : index
    %16 = vector.load %arg10[%c48, %c0_17] : memref<144x128xf32, #tpu.memory_space<vmem>>, vector<16x128xf32>
    tpu.vector_store %arg10[%c48, %c0_17], %15 {strides = array<i32>} : memref<144x128xf32, #tpu.memory_space<vmem>>, vector<16x128xf32>,
    %c0_18 = arith.constant 0 : index
    %c128_19 = arith.constant 128 : index
    %17 = vector.load %arg9[%c0_18, %c128_19] : memref<16x384xf32, #tpu.memory_space<vmem>>, vector<16x128xf32>
    %c64 = arith.constant 64 : index
    %c0_20 = arith.constant 0 : index
    %18 = vector.load %arg10[%c64, %c0_20] : memref<144x128xf32, #tpu.memory_space<vmem>>, vector<16x128xf32>
    tpu.vector_store %arg10[%c64, %c0_20], %17 {strides = array<i32>} : memref<144x128xf32, #tpu.memory_space<vmem>>, vector<16x128xf32>,
    %c0_21 = arith.constant 0 : index
    %c129 = arith.constant 129 : index
    %19 = vector.load %arg9[%c0_21, %c129] : memref<16x384xf32, #tpu.memory_space<vmem>>, vector<16x128xf32>
    %c80 = arith.constant 80 : index
    %c0_22 = arith.constant 0 : index
    %20 = vector.load %arg10[%c80, %c0_22] : memref<144x128xf32, #tpu.memory_space<vmem>>, vector<16x128xf32>
    tpu.vector_store %arg10[%c80, %c0_22], %19 {strides = array<i32>} : memref<144x128xf32, #tpu.memory_space<vmem>>, vector<16x128xf32>,
    %c0_23 = arith.constant 0 : index
    %c131 = arith.constant 131 : index
    %21 = vector.load %arg9[%c0_23, %c131] : memref<16x384xf32, #tpu.memory_space<vmem>>, vector<16x128xf32>
    %c96 = arith.constant 96 : index
    %c0_24 = arith.constant 0 : index
    %22 = vector.load %arg10[%c96, %c0_24] : memref<144x128xf32, #tpu.memory_space<vmem>>, vector<16x128xf32>
    tpu.vector_store %arg10[%c96, %c0_24], %21 {strides = array<i32>} : memref<144x128xf32, #tpu.memory_space<vmem>>, vector<16x128xf32>,
    %c0_25 = arith.constant 0 : index
    %c132 = arith.constant 132 : index
    %23 = vector.load %arg9[%c0_25, %c132] : memref<16x384xf32, #tpu.memory_space<vmem>>, vector<16x128xf32>
    %c112 = arith.constant 112 : index
    %c0_26 = arith.constant 0 : index
    %24 = vector.load %arg10[%c112, %c0_26] : memref<144x128xf32, #tpu.memory_space<vmem>>, vector<16x128xf32>
    tpu.vector_store %arg10[%c112, %c0_26], %23 {strides = array<i32>} : memref<144x128xf32, #tpu.memory_space<vmem>>, vector<16x128xf32>,
    %c0_27 = arith.constant 0 : index
    %c133 = arith.constant 133 : index
    %25 = vector.load %arg9[%c0_27, %c133] : memref<16x384xf32, #tpu.memory_space<vmem>>, vector<16x128xf32>
    %c128_28 = arith.constant 128 : index
    %c0_29 = arith.constant 0 : index
    %26 = vector.load %arg10[%c128_28, %c0_29] : memref<144x128xf32, #tpu.memory_space<vmem>>, vector<16x128xf32>
    tpu.vector_store %arg10[%c128_28, %c0_29], %25 {strides = array<i32>} : memref<144x128xf32, #tpu.memory_space<vmem>>, vector<16x128xf32>,
    %c0_30 = arith.constant 0 : index
    %c0_31 = arith.constant 0 : index
    %27 = vector.load %arg4[%c0_30, %c0_31] : memref<32x144xf32, #tpu.memory_space<vmem>>, vector<32x144xf32>
    %c0_32 = arith.constant 0 : index
    %c0_33 = arith.constant 0 : index
    %28 = vector.load %arg10[%c0_32, %c0_33] : memref<144x128xf32, #tpu.memory_space<vmem>>, vector<144x128xf32>
    %cst = arith.constant dense<0.000000e+00> : vector<32x128xf32>
    %29 = tpu.matmul %27, %28, %cst {dimension_numbers = #tpu.dot_dimension_numbers<[1], [0], [0], [1], [0, 0, 1, 1], [], []>} : vector<32x144xf32>, vector<144x128xf32>, vector<32x128xf32> -> vector<32x128xf32>
    %c0_34 = arith.constant 0 : index
    %c0_35 = arith.constant 0 : index
    %30 = vector.load %arg5[%c0_34, %c0_35] : memref<32x1xf32, #tpu.memory_space<vmem>>, vector<32x1xf32>
    %31 = vector.broadcast %30 : vector<32x1xf32> to vector<32x128xf32>
    %32 = arith.addf %29, %31 : vector<32x128xf32>
    %c0_36 = arith.constant 0 : index
    %c0_37 = arith.constant 0 : index
    %33 = vector.load %arg6[%c0_36, %c0_37] : memref<32x32xf32, #tpu.memory_space<vmem>>, vector<32x32xf32>
    %34 = arith.mulf %32, %32 : vector<32x128xf32>
    %cst_38 = arith.constant dense<0.000000e+00> : vector<32x128xf32>
    %35 = tpu.matmul %33, %34, %cst_38 {dimension_numbers = #tpu.dot_dimension_numbers<[1], [0], [0], [1], [0, 0, 1, 1], [], []>} : vector<32x32xf32>, vector<32x128xf32>, vector<32x128xf32> -> vector<32x128xf32>
    %c0_39 = arith.constant 0 : index
    %c0_40 = arith.constant 0 : index
    %36 = vector.load %arg7[%c0_39, %c0_40] : memref<32x1xf32, #tpu.memory_space<vmem>>, vector<32x1xf32>
    %37 = vector.broadcast %36 : vector<32x1xf32> to vector<32x128xf32>
    %38 = arith.addf %35, %37 : vector<32x128xf32>
    %cst_41 = arith.constant 1.000000e-10 : f32
    %39 = vector.broadcast %cst_41 : f32 to vector<32x128xf32>
    %40 = arith.maximumf %38, %39 : vector<32x128xf32>
    %41 = math.sqrt %40 : vector<32x128xf32>
    %42 = arith.mulf %32, %41 : vector<32x128xf32>
    %43 = arith.truncf %42 : vector<32x128xf32> to vector<32x128xbf16>
    %c0_42 = arith.constant 0 : index
    %c0_43 = arith.constant 0 : index
    %44 = vector.load %arg8[%c0_42, %c0_43] : memref<32x128xbf16, #tpu.memory_space<vmem>>, vector<32x128xbf16>
    tpu.vector_store %arg8[%c0_42, %c0_43], %43 {strides = array<i32>} : memref<32x128xbf16, #tpu.memory_space<vmem>>, vector<32x128xbf16>,
    return
  }
  func.func @transform_0(%arg0: i32) -> (i32, i32) {
    %c1_i32 = arith.constant 1 : i32
    %0 = arith.addi %arg0, %c1_i32 : i32
    %c1_i32_0 = arith.constant 1 : i32
    %1 = arith.muli %0, %c1_i32_0 : i32
    %c1_i32_1 = arith.constant 1 : i32
    %2 = arith.subi %1, %c1_i32_1 : i32
    %c0_i32 = arith.constant 0 : i32
    %c0_i32_2 = arith.constant 0 : i32
    return %c0_i32, %2 : i32, i32
  }
  func.func @transform_1(%arg0: i32) -> (i32, i32) {
    %c1_i32 = arith.constant 1 : i32
    %0 = arith.addi %arg0, %c1_i32 : i32
    %c0_i32 = arith.constant 0 : i32
    %c0_i32_0 = arith.constant 0 : i32
    return %c0_i32, %0 : i32, i32
  }
  func.func @transform_2(%arg0: i32) -> (i32, i32) {
    %c2_i32 = arith.constant 2 : i32
    %0 = arith.addi %arg0, %c2_i32 : i32
    %c1_i32 = arith.constant 1 : i32
    %1 = arith.muli %0, %c1_i32 : i32
    %c0_i32 = arith.constant 0 : i32
    %c0_i32_0 = arith.constant 0 : i32
    return %c0_i32, %1 : i32, i32
  }
  func.func @transform_3(%arg0: i32) -> (i32, i32) {
    %c0_i32 = arith.constant 0 : i32
    %c0_i32_0 = arith.constant 0 : i32
    %c0_i32_1 = arith.constant 0 : i32
    return %c0_i32, %c0_i32_0 : i32, i32
  }
  func.func @transform_4(%arg0: i32) -> (i32, i32) {
    %c0_i32 = arith.constant 0 : i32
    %c0_i32_0 = arith.constant 0 : i32
    %c0_i32_1 = arith.constant 0 : i32
    return %c0_i32, %c0_i32_0 : i32, i32
  }
  func.func @transform_5(%arg0: i32) -> (i32, i32) {
    %c0_i32 = arith.constant 0 : i32
    %c0_i32_0 = arith.constant 0 : i32
    %c0_i32_1 = arith.constant 0 : i32
    return %c0_i32, %c0_i32_0 : i32, i32
  }
  func.func @transform_6(%arg0: i32) -> (i32, i32) {
    %c0_i32 = arith.constant 0 : i32
    %c0_i32_0 = arith.constant 0 : i32
    %c0_i32_1 = arith.constant 0 : i32
    return %c0_i32, %c0_i32_0 : i32, i32
  }
  func.func @transform_7(%arg0: i32) -> (i32, i32) {
    %c0_i32 = arith.constant 0 : i32
    %c0_i32_0 = arith.constant 0 : i32
    return %c0_i32, %arg0 : i32, i32
  }
}

module attributes {stable_mosaic.version = 11 : i64} {
  func.func @_conv3x3_kernel(%arg0: i32, %arg1: memref<16x128xbf16, #tpu.memory_space<vmem>>, %arg2: memref<16x128xbf16, #tpu.memory_space<vmem>>, %arg3: memref<16x128xbf16, #tpu.memory_space<vmem>>, %arg4: memref<32x144xf32, #tpu.memory_space<vmem>>, %arg5: memref<32x1xf32, #tpu.memory_space<vmem>>, %arg6: memref<32x32xf32, #tpu.memory_space<vmem>>, %arg7: memref<32x1xf32, #tpu.memory_space<vmem>>, %arg8: memref<32x128xbf16, #tpu.memory_space<vmem>>, %arg9: memref<16x384xf32, #tpu.memory_space<vmem>>, %arg10: memref<144x128xf32, #tpu.memory_space<vmem>>) attributes {dimension_semantics = [#tpu.dimension_semantics<parallel>], iteration_bounds = array<i64: 1>, scalar_prefetch = 0 : i64, scratch_operands = 2 : i64, tpu.core_type = #tpu.core_type<tc>, window_params = [{transform_indices = @transform_0, window_bounds = array<i64: 16, 128>}, {transform_indices = @transform_1, window_bounds = array<i64: 16, 128>}, {transform_indices = @transform_2, window_bounds = array<i64: 16, 128>}, {pipeline_mode = #tpu.pipeline_mode<synchronous>, transform_indices = @transform_3, window_bounds = array<i64: 32, 144>}, {pipeline_mode = #tpu.pipeline_mode<synchronous>, transform_indices = @transform_4, window_bounds = array<i64: 32, 1>}, {pipeline_mode = #tpu.pipeline_mode<synchronous>, transform_indices = @transform_5, window_bounds = array<i64: 32, 32>}, {pipeline_mode = #tpu.pipeline_mode<synchronous>, transform_indices = @transform_6, window_bounds = array<i64: 32, 1>}, {transform_indices = @transform_7, window_bounds = array<i64: 32, 128>}]} {
    %c0 = arith.constant 0 : index
    %c0_0 = arith.constant 0 : index
    %0 = vector.load %arg1[%c0, %c0_0] : memref<16x128xbf16, #tpu.memory_space<vmem>>, vector<16x128xbf16>
    %1 = arith.extf %0 : vector<16x128xbf16> to vector<16x128xf32>
    %c0_1 = arith.constant 0 : index
    %c0_2 = arith.constant 0 : index
    %2 = vector.load %arg9[%c0_1, %c0_2] : memref<16x384xf32, #tpu.memory_space<vmem>>, vector<16x128xf32>
    tpu.vector_store %arg9[%c0_1, %c0_2], %1 {strides = array<i32>} : memref<16x384xf32, #tpu.memory_space<vmem>>, vector<16x128xf32>,
    %c0_3 = arith.constant 0 : index
    %c0_4 = arith.constant 0 : index
    %3 = vector.load %arg2[%c0_3, %c0_4] : memref<16x128xbf16, #tpu.memory_space<vmem>>, vector<16x128xbf16>
    %4 = arith.extf %3 : vector<16x128xbf16> to vector<16x128xf32>
    %c0_5 = arith.constant 0 : index
    %c128 = arith.constant 128 : index
    %5 = vector.load %arg9[%c0_5, %c128] : memref<16x384xf32, #tpu.memory_space<vmem>>, vector<16x128xf32>
    tpu.vector_store %arg9[%c0_5, %c128], %4 {strides = array<i32>} : memref<16x384xf32, #tpu.memory_space<vmem>>, vector<16x128xf32>,
    %c0_6 = arith.constant 0 : index
    %c0_7 = arith.constant 0 : index
    %6 = vector.load %arg3[%c0_6, %c0_7] : memref<16x128xbf16, #tpu.memory_space<vmem>>, vector<16x128xbf16>
    %7 = arith.extf %6 : vector<16x128xbf16> to vector<16x128xf32>
    %c0_8 = arith.constant 0 : index
    %c256 = arith.constant 256 : index
    %8 = vector.load %arg9[%c0_8, %c256] : memref<16x384xf32, #tpu.memory_space<vmem>>, vector<16x128xf32>
    tpu.vector_store %arg9[%c0_8, %c256], %7 {strides = array<i32>} : memref<16x384xf32, #tpu.memory_space<vmem>>, vector<16x128xf32>,
    %c0_9 = arith.constant 0 : index
    %c121 = arith.constant 121 : index
    %9 = vector.load %arg9[%c0_9, %c121] : memref<16x384xf32, #tpu.memory_space<vmem>>, vector<16x128xf32>
    %c0_10 = arith.constant 0 : index
    %c0_11 = arith.constant 0 : index
    %10 = vector.load %arg10[%c0_10, %c0_11] : memref<144x128xf32, #tpu.memory_space<vmem>>, vector<16x128xf32>
    tpu.vector_store %arg10[%c0_10, %c0_11], %9 {strides = array<i32>} : memref<144x128xf32, #tpu.memory_space<vmem>>, vector<16x128xf32>,
    %c0_12 = arith.constant 0 : index
    %c122 = arith.constant 122 : index
    %11 = vector.load %arg9[%c0_12, %c122] : memref<16x384xf32, #tpu.memory_space<vmem>>, vector<16x128xf32>
    %c16 = arith.constant 16 : index
    %c0_13 = arith.constant 0 : index
    %12 = vector.load %arg10[%c16, %c0_13] : memref<144x128xf32, #tpu.memory_space<vmem>>, vector<16x128xf32>
    tpu.vector_store %arg10[%c16, %c0_13], %11 {strides = array<i32>} : memref<144x128xf32, #tpu.memory_space<vmem>>, vector<16x128xf32>,
    %c0_14 = arith.constant 0 : index
    %c123 = arith.constant 123 : index
    %13 = vector.load %arg9[%c0_14, %c123] : memref<16x384xf32, #tpu.memory_space<vmem>>, vector<16x128xf32>
    %c32 = arith.constant 32 : index
    %c0_15 = arith.constant 0 : index
    %14 = vector.load %arg10[%c32, %c0_15] : memref<144x128xf32, #tpu.memory_space<vmem>>, vector<16x128xf32>
    tpu.vector_store %arg10[%c32, %c0_15], %13 {strides = array<i32>} : memref<144x128xf32, #tpu.memory_space<vmem>>, vector<16x128xf32>,
    %c0_16 = arith.constant 0 : index
    %c127 = arith.constant 127 : index
    %15 = vector.load %arg9[%c0_16, %c127] : memref<16x384xf32, #tpu.memory_space<vmem>>, vector<16x128xf32>
    %c48 = arith.constant 48 : index
    %c0_17 = arith.constant 0 : index
    %16 = vector.load %arg10[%c48, %c0_17] : memref<144x128xf32, #tpu.memory_space<vmem>>, vector<16x128xf32>
    tpu.vector_store %arg10[%c48, %c0_17], %15 {strides = array<i32>} : memref<144x128xf32, #tpu.memory_space<vmem>>, vector<16x128xf32>,
    %c0_18 = arith.constant 0 : index
    %c128_19 = arith.constant 128 : index
    %17 = vector.load %arg9[%c0_18, %c128_19] : memref<16x384xf32, #tpu.memory_space<vmem>>, vector<16x128xf32>
    %c64 = arith.constant 64 : index
    %c0_20 = arith.constant 0 : index
    %18 = vector.load %arg10[%c64, %c0_20] : memref<144x128xf32, #tpu.memory_space<vmem>>, vector<16x128xf32>
    tpu.vector_store %arg10[%c64, %c0_20], %17 {strides = array<i32>} : memref<144x128xf32, #tpu.memory_space<vmem>>, vector<16x128xf32>,
    %c0_21 = arith.constant 0 : index
    %c129 = arith.constant 129 : index
    %19 = vector.load %arg9[%c0_21, %c129] : memref<16x384xf32, #tpu.memory_space<vmem>>, vector<16x128xf32>
    %c80 = arith.constant 80 : index
    %c0_22 = arith.constant 0 : index
    %20 = vector.load %arg10[%c80, %c0_22] : memref<144x128xf32, #tpu.memory_space<vmem>>, vector<16x128xf32>
    tpu.vector_store %arg10[%c80, %c0_22], %19 {strides = array<i32>} : memref<144x128xf32, #tpu.memory_space<vmem>>, vector<16x128xf32>,
    %c0_23 = arith.constant 0 : index
    %c133 = arith.constant 133 : index
    %21 = vector.load %arg9[%c0_23, %c133] : memref<16x384xf32, #tpu.memory_space<vmem>>, vector<16x128xf32>
    %c96 = arith.constant 96 : index
    %c0_24 = arith.constant 0 : index
    %22 = vector.load %arg10[%c96, %c0_24] : memref<144x128xf32, #tpu.memory_space<vmem>>, vector<16x128xf32>
    tpu.vector_store %arg10[%c96, %c0_24], %21 {strides = array<i32>} : memref<144x128xf32, #tpu.memory_space<vmem>>, vector<16x128xf32>,
    %c0_25 = arith.constant 0 : index
    %c134 = arith.constant 134 : index
    %23 = vector.load %arg9[%c0_25, %c134] : memref<16x384xf32, #tpu.memory_space<vmem>>, vector<16x128xf32>
    %c112 = arith.constant 112 : index
    %c0_26 = arith.constant 0 : index
    %24 = vector.load %arg10[%c112, %c0_26] : memref<144x128xf32, #tpu.memory_space<vmem>>, vector<16x128xf32>
    tpu.vector_store %arg10[%c112, %c0_26], %23 {strides = array<i32>} : memref<144x128xf32, #tpu.memory_space<vmem>>, vector<16x128xf32>,
    %c0_27 = arith.constant 0 : index
    %c135 = arith.constant 135 : index
    %25 = vector.load %arg9[%c0_27, %c135] : memref<16x384xf32, #tpu.memory_space<vmem>>, vector<16x128xf32>
    %c128_28 = arith.constant 128 : index
    %c0_29 = arith.constant 0 : index
    %26 = vector.load %arg10[%c128_28, %c0_29] : memref<144x128xf32, #tpu.memory_space<vmem>>, vector<16x128xf32>
    tpu.vector_store %arg10[%c128_28, %c0_29], %25 {strides = array<i32>} : memref<144x128xf32, #tpu.memory_space<vmem>>, vector<16x128xf32>,
    %c0_30 = arith.constant 0 : index
    %c0_31 = arith.constant 0 : index
    %27 = vector.load %arg4[%c0_30, %c0_31] : memref<32x144xf32, #tpu.memory_space<vmem>>, vector<32x144xf32>
    %c0_32 = arith.constant 0 : index
    %c0_33 = arith.constant 0 : index
    %28 = vector.load %arg10[%c0_32, %c0_33] : memref<144x128xf32, #tpu.memory_space<vmem>>, vector<144x128xf32>
    %cst = arith.constant dense<0.000000e+00> : vector<32x128xf32>
    %29 = tpu.matmul %27, %28, %cst {dimension_numbers = #tpu.dot_dimension_numbers<[1], [0], [0], [1], [0, 0, 1, 1], [], []>} : vector<32x144xf32>, vector<144x128xf32>, vector<32x128xf32> -> vector<32x128xf32>
    %c0_34 = arith.constant 0 : index
    %c0_35 = arith.constant 0 : index
    %30 = vector.load %arg5[%c0_34, %c0_35] : memref<32x1xf32, #tpu.memory_space<vmem>>, vector<32x1xf32>
    %31 = vector.broadcast %30 : vector<32x1xf32> to vector<32x128xf32>
    %32 = arith.addf %29, %31 : vector<32x128xf32>
    %c0_36 = arith.constant 0 : index
    %c0_37 = arith.constant 0 : index
    %33 = vector.load %arg6[%c0_36, %c0_37] : memref<32x32xf32, #tpu.memory_space<vmem>>, vector<32x32xf32>
    %34 = arith.mulf %32, %32 : vector<32x128xf32>
    %cst_38 = arith.constant dense<0.000000e+00> : vector<32x128xf32>
    %35 = tpu.matmul %33, %34, %cst_38 {dimension_numbers = #tpu.dot_dimension_numbers<[1], [0], [0], [1], [0, 0, 1, 1], [], []>} : vector<32x32xf32>, vector<32x128xf32>, vector<32x128xf32> -> vector<32x128xf32>
    %c0_39 = arith.constant 0 : index
    %c0_40 = arith.constant 0 : index
    %36 = vector.load %arg7[%c0_39, %c0_40] : memref<32x1xf32, #tpu.memory_space<vmem>>, vector<32x1xf32>
    %37 = vector.broadcast %36 : vector<32x1xf32> to vector<32x128xf32>
    %38 = arith.addf %35, %37 : vector<32x128xf32>
    %cst_41 = arith.constant 1.000000e-10 : f32
    %39 = vector.broadcast %cst_41 : f32 to vector<32x128xf32>
    %40 = arith.maximumf %38, %39 : vector<32x128xf32>
    %41 = math.sqrt %40 : vector<32x128xf32>
    %42 = arith.mulf %32, %41 : vector<32x128xf32>
    %43 = arith.truncf %42 : vector<32x128xf32> to vector<32x128xbf16>
    %c0_42 = arith.constant 0 : index
    %c0_43 = arith.constant 0 : index
    %44 = vector.load %arg8[%c0_42, %c0_43] : memref<32x128xbf16, #tpu.memory_space<vmem>>, vector<32x128xbf16>
    tpu.vector_store %arg8[%c0_42, %c0_43], %43 {strides = array<i32>} : memref<32x128xbf16, #tpu.memory_space<vmem>>, vector<32x128xbf16>,
    return
  }
  func.func @transform_0(%arg0: i32) -> (i32, i32) {
    %c1_i32 = arith.constant 1 : i32
    %0 = arith.addi %arg0, %c1_i32 : i32
    %c1_i32_0 = arith.constant 1 : i32
    %1 = arith.muli %0, %c1_i32_0 : i32
    %c1_i32_1 = arith.constant 1 : i32
    %2 = arith.subi %1, %c1_i32_1 : i32
    %c0_i32 = arith.constant 0 : i32
    %c0_i32_2 = arith.constant 0 : i32
    return %c0_i32, %2 : i32, i32
  }
  func.func @transform_1(%arg0: i32) -> (i32, i32) {
    %c1_i32 = arith.constant 1 : i32
    %0 = arith.addi %arg0, %c1_i32 : i32
    %c0_i32 = arith.constant 0 : i32
    %c0_i32_0 = arith.constant 0 : i32
    return %c0_i32, %0 : i32, i32
  }
  func.func @transform_2(%arg0: i32) -> (i32, i32) {
    %c2_i32 = arith.constant 2 : i32
    %0 = arith.addi %arg0, %c2_i32 : i32
    %c1_i32 = arith.constant 1 : i32
    %1 = arith.muli %0, %c1_i32 : i32
    %c0_i32 = arith.constant 0 : i32
    %c0_i32_0 = arith.constant 0 : i32
    return %c0_i32, %1 : i32, i32
  }
  func.func @transform_3(%arg0: i32) -> (i32, i32) {
    %c0_i32 = arith.constant 0 : i32
    %c0_i32_0 = arith.constant 0 : i32
    %c0_i32_1 = arith.constant 0 : i32
    return %c0_i32, %c0_i32_0 : i32, i32
  }
  func.func @transform_4(%arg0: i32) -> (i32, i32) {
    %c0_i32 = arith.constant 0 : i32
    %c0_i32_0 = arith.constant 0 : i32
    %c0_i32_1 = arith.constant 0 : i32
    return %c0_i32, %c0_i32_0 : i32, i32
  }
  func.func @transform_5(%arg0: i32) -> (i32, i32) {
    %c0_i32 = arith.constant 0 : i32
    %c0_i32_0 = arith.constant 0 : i32
    %c0_i32_1 = arith.constant 0 : i32
    return %c0_i32, %c0_i32_0 : i32, i32
  }
  func.func @transform_6(%arg0: i32) -> (i32, i32) {
    %c0_i32 = arith.constant 0 : i32
    %c0_i32_0 = arith.constant 0 : i32
    %c0_i32_1 = arith.constant 0 : i32
    return %c0_i32, %c0_i32_0 : i32, i32
  }
  func.func @transform_7(%arg0: i32) -> (i32, i32) {
    %c0_i32 = arith.constant 0 : i32
    %c0_i32_0 = arith.constant 0 : i32
    return %c0_i32, %arg0 : i32, i32
  }
}

module attributes {stable_mosaic.version = 11 : i64} {
  func.func @_conv3x3_kernel(%arg0: i32, %arg1: memref<16x128xbf16, #tpu.memory_space<vmem>>, %arg2: memref<16x128xbf16, #tpu.memory_space<vmem>>, %arg3: memref<16x128xbf16, #tpu.memory_space<vmem>>, %arg4: memref<32x144xf32, #tpu.memory_space<vmem>>, %arg5: memref<32x1xf32, #tpu.memory_space<vmem>>, %arg6: memref<32x32xf32, #tpu.memory_space<vmem>>, %arg7: memref<32x1xf32, #tpu.memory_space<vmem>>, %arg8: memref<32x128xbf16, #tpu.memory_space<vmem>>, %arg9: memref<16x384xf32, #tpu.memory_space<vmem>>, %arg10: memref<144x128xf32, #tpu.memory_space<vmem>>) attributes {dimension_semantics = [#tpu.dimension_semantics<parallel>], iteration_bounds = array<i64: 2>, scalar_prefetch = 0 : i64, scratch_operands = 2 : i64, tpu.core_type = #tpu.core_type<tc>, window_params = [{transform_indices = @transform_0, window_bounds = array<i64: 16, 128>}, {transform_indices = @transform_1, window_bounds = array<i64: 16, 128>}, {transform_indices = @transform_2, window_bounds = array<i64: 16, 128>}, {pipeline_mode = #tpu.pipeline_mode<synchronous>, transform_indices = @transform_3, window_bounds = array<i64: 32, 144>}, {pipeline_mode = #tpu.pipeline_mode<synchronous>, transform_indices = @transform_4, window_bounds = array<i64: 32, 1>}, {pipeline_mode = #tpu.pipeline_mode<synchronous>, transform_indices = @transform_5, window_bounds = array<i64: 32, 32>}, {pipeline_mode = #tpu.pipeline_mode<synchronous>, transform_indices = @transform_6, window_bounds = array<i64: 32, 1>}, {transform_indices = @transform_7, window_bounds = array<i64: 32, 128>}]} {
    %c0 = arith.constant 0 : index
    %c0_0 = arith.constant 0 : index
    %0 = vector.load %arg1[%c0, %c0_0] : memref<16x128xbf16, #tpu.memory_space<vmem>>, vector<16x128xbf16>
    %1 = arith.extf %0 : vector<16x128xbf16> to vector<16x128xf32>
    %c0_1 = arith.constant 0 : index
    %c0_2 = arith.constant 0 : index
    %2 = vector.load %arg9[%c0_1, %c0_2] : memref<16x384xf32, #tpu.memory_space<vmem>>, vector<16x128xf32>
    tpu.vector_store %arg9[%c0_1, %c0_2], %1 {strides = array<i32>} : memref<16x384xf32, #tpu.memory_space<vmem>>, vector<16x128xf32>,
    %c0_3 = arith.constant 0 : index
    %c0_4 = arith.constant 0 : index
    %3 = vector.load %arg2[%c0_3, %c0_4] : memref<16x128xbf16, #tpu.memory_space<vmem>>, vector<16x128xbf16>
    %4 = arith.extf %3 : vector<16x128xbf16> to vector<16x128xf32>
    %c0_5 = arith.constant 0 : index
    %c128 = arith.constant 128 : index
    %5 = vector.load %arg9[%c0_5, %c128] : memref<16x384xf32, #tpu.memory_space<vmem>>, vector<16x128xf32>
    tpu.vector_store %arg9[%c0_5, %c128], %4 {strides = array<i32>} : memref<16x384xf32, #tpu.memory_space<vmem>>, vector<16x128xf32>,
    %c0_6 = arith.constant 0 : index
    %c0_7 = arith.constant 0 : index
    %6 = vector.load %arg3[%c0_6, %c0_7] : memref<16x128xbf16, #tpu.memory_space<vmem>>, vector<16x128xbf16>
    %7 = arith.extf %6 : vector<16x128xbf16> to vector<16x128xf32>
    %c0_8 = arith.constant 0 : index
    %c256 = arith.constant 256 : index
    %8 = vector.load %arg9[%c0_8, %c256] : memref<16x384xf32, #tpu.memory_space<vmem>>, vector<16x128xf32>
    tpu.vector_store %arg9[%c0_8, %c256], %7 {strides = array<i32>} : memref<16x384xf32, #tpu.memory_space<vmem>>, vector<16x128xf32>,
    %c0_9 = arith.constant 0 : index
    %c117 = arith.constant 117 : index
    %9 = vector.load %arg9[%c0_9, %c117] : memref<16x384xf32, #tpu.memory_space<vmem>>, vector<16x128xf32>
    %c0_10 = arith.constant 0 : index
    %c0_11 = arith.constant 0 : index
    %10 = vector.load %arg10[%c0_10, %c0_11] : memref<144x128xf32, #tpu.memory_space<vmem>>, vector<16x128xf32>
    tpu.vector_store %arg10[%c0_10, %c0_11], %9 {strides = array<i32>} : memref<144x128xf32, #tpu.memory_space<vmem>>, vector<16x128xf32>,
    %c0_12 = arith.constant 0 : index
    %c118 = arith.constant 118 : index
    %11 = vector.load %arg9[%c0_12, %c118] : memref<16x384xf32, #tpu.memory_space<vmem>>, vector<16x128xf32>
    %c16 = arith.constant 16 : index
    %c0_13 = arith.constant 0 : index
    %12 = vector.load %arg10[%c16, %c0_13] : memref<144x128xf32, #tpu.memory_space<vmem>>, vector<16x128xf32>
    tpu.vector_store %arg10[%c16, %c0_13], %11 {strides = array<i32>} : memref<144x128xf32, #tpu.memory_space<vmem>>, vector<16x128xf32>,
    %c0_14 = arith.constant 0 : index
    %c119 = arith.constant 119 : index
    %13 = vector.load %arg9[%c0_14, %c119] : memref<16x384xf32, #tpu.memory_space<vmem>>, vector<16x128xf32>
    %c32 = arith.constant 32 : index
    %c0_15 = arith.constant 0 : index
    %14 = vector.load %arg10[%c32, %c0_15] : memref<144x128xf32, #tpu.memory_space<vmem>>, vector<16x128xf32>
    tpu.vector_store %arg10[%c32, %c0_15], %13 {strides = array<i32>} : memref<144x128xf32, #tpu.memory_space<vmem>>, vector<16x128xf32>,
    %c0_16 = arith.constant 0 : index
    %c127 = arith.constant 127 : index
    %15 = vector.load %arg9[%c0_16, %c127] : memref<16x384xf32, #tpu.memory_space<vmem>>, vector<16x128xf32>
    %c48 = arith.constant 48 : index
    %c0_17 = arith.constant 0 : index
    %16 = vector.load %arg10[%c48, %c0_17] : memref<144x128xf32, #tpu.memory_space<vmem>>, vector<16x128xf32>
    tpu.vector_store %arg10[%c48, %c0_17], %15 {strides = array<i32>} : memref<144x128xf32, #tpu.memory_space<vmem>>, vector<16x128xf32>,
    %c0_18 = arith.constant 0 : index
    %c128_19 = arith.constant 128 : index
    %17 = vector.load %arg9[%c0_18, %c128_19] : memref<16x384xf32, #tpu.memory_space<vmem>>, vector<16x128xf32>
    %c64 = arith.constant 64 : index
    %c0_20 = arith.constant 0 : index
    %18 = vector.load %arg10[%c64, %c0_20] : memref<144x128xf32, #tpu.memory_space<vmem>>, vector<16x128xf32>
    tpu.vector_store %arg10[%c64, %c0_20], %17 {strides = array<i32>} : memref<144x128xf32, #tpu.memory_space<vmem>>, vector<16x128xf32>,
    %c0_21 = arith.constant 0 : index
    %c129 = arith.constant 129 : index
    %19 = vector.load %arg9[%c0_21, %c129] : memref<16x384xf32, #tpu.memory_space<vmem>>, vector<16x128xf32>
    %c80 = arith.constant 80 : index
    %c0_22 = arith.constant 0 : index
    %20 = vector.load %arg10[%c80, %c0_22] : memref<144x128xf32, #tpu.memory_space<vmem>>, vector<16x128xf32>
    tpu.vector_store %arg10[%c80, %c0_22], %19 {strides = array<i32>} : memref<144x128xf32, #tpu.memory_space<vmem>>, vector<16x128xf32>,
    %c0_23 = arith.constant 0 : index
    %c137 = arith.constant 137 : index
    %21 = vector.load %arg9[%c0_23, %c137] : memref<16x384xf32, #tpu.memory_space<vmem>>, vector<16x128xf32>
    %c96 = arith.constant 96 : index
    %c0_24 = arith.constant 0 : index
    %22 = vector.load %arg10[%c96, %c0_24] : memref<144x128xf32, #tpu.memory_space<vmem>>, vector<16x128xf32>
    tpu.vector_store %arg10[%c96, %c0_24], %21 {strides = array<i32>} : memref<144x128xf32, #tpu.memory_space<vmem>>, vector<16x128xf32>,
    %c0_25 = arith.constant 0 : index
    %c138 = arith.constant 138 : index
    %23 = vector.load %arg9[%c0_25, %c138] : memref<16x384xf32, #tpu.memory_space<vmem>>, vector<16x128xf32>
    %c112 = arith.constant 112 : index
    %c0_26 = arith.constant 0 : index
    %24 = vector.load %arg10[%c112, %c0_26] : memref<144x128xf32, #tpu.memory_space<vmem>>, vector<16x128xf32>
    tpu.vector_store %arg10[%c112, %c0_26], %23 {strides = array<i32>} : memref<144x128xf32, #tpu.memory_space<vmem>>, vector<16x128xf32>,
    %c0_27 = arith.constant 0 : index
    %c139 = arith.constant 139 : index
    %25 = vector.load %arg9[%c0_27, %c139] : memref<16x384xf32, #tpu.memory_space<vmem>>, vector<16x128xf32>
    %c128_28 = arith.constant 128 : index
    %c0_29 = arith.constant 0 : index
    %26 = vector.load %arg10[%c128_28, %c0_29] : memref<144x128xf32, #tpu.memory_space<vmem>>, vector<16x128xf32>
    tpu.vector_store %arg10[%c128_28, %c0_29], %25 {strides = array<i32>} : memref<144x128xf32, #tpu.memory_space<vmem>>, vector<16x128xf32>,
    %c0_30 = arith.constant 0 : index
    %c0_31 = arith.constant 0 : index
    %27 = vector.load %arg4[%c0_30, %c0_31] : memref<32x144xf32, #tpu.memory_space<vmem>>, vector<32x144xf32>
    %c0_32 = arith.constant 0 : index
    %c0_33 = arith.constant 0 : index
    %28 = vector.load %arg10[%c0_32, %c0_33] : memref<144x128xf32, #tpu.memory_space<vmem>>, vector<144x128xf32>
    %cst = arith.constant dense<0.000000e+00> : vector<32x128xf32>
    %29 = tpu.matmul %27, %28, %cst {dimension_numbers = #tpu.dot_dimension_numbers<[1], [0], [0], [1], [0, 0, 1, 1], [], []>} : vector<32x144xf32>, vector<144x128xf32>, vector<32x128xf32> -> vector<32x128xf32>
    %c0_34 = arith.constant 0 : index
    %c0_35 = arith.constant 0 : index
    %30 = vector.load %arg5[%c0_34, %c0_35] : memref<32x1xf32, #tpu.memory_space<vmem>>, vector<32x1xf32>
    %31 = vector.broadcast %30 : vector<32x1xf32> to vector<32x128xf32>
    %32 = arith.addf %29, %31 : vector<32x128xf32>
    %c0_36 = arith.constant 0 : index
    %c0_37 = arith.constant 0 : index
    %33 = vector.load %arg6[%c0_36, %c0_37] : memref<32x32xf32, #tpu.memory_space<vmem>>, vector<32x32xf32>
    %34 = arith.mulf %32, %32 : vector<32x128xf32>
    %cst_38 = arith.constant dense<0.000000e+00> : vector<32x128xf32>
    %35 = tpu.matmul %33, %34, %cst_38 {dimension_numbers = #tpu.dot_dimension_numbers<[1], [0], [0], [1], [0, 0, 1, 1], [], []>} : vector<32x32xf32>, vector<32x128xf32>, vector<32x128xf32> -> vector<32x128xf32>
    %c0_39 = arith.constant 0 : index
    %c0_40 = arith.constant 0 : index
    %36 = vector.load %arg7[%c0_39, %c0_40] : memref<32x1xf32, #tpu.memory_space<vmem>>, vector<32x1xf32>
    %37 = vector.broadcast %36 : vector<32x1xf32> to vector<32x128xf32>
    %38 = arith.addf %35, %37 : vector<32x128xf32>
    %cst_41 = arith.constant 1.000000e-10 : f32
    %39 = vector.broadcast %cst_41 : f32 to vector<32x128xf32>
    %40 = arith.maximumf %38, %39 : vector<32x128xf32>
    %41 = math.sqrt %40 : vector<32x128xf32>
    %42 = arith.mulf %32, %41 : vector<32x128xf32>
    %43 = arith.truncf %42 : vector<32x128xf32> to vector<32x128xbf16>
    %c0_42 = arith.constant 0 : index
    %c0_43 = arith.constant 0 : index
    %44 = vector.load %arg8[%c0_42, %c0_43] : memref<32x128xbf16, #tpu.memory_space<vmem>>, vector<32x128xbf16>
    tpu.vector_store %arg8[%c0_42, %c0_43], %43 {strides = array<i32>} : memref<32x128xbf16, #tpu.memory_space<vmem>>, vector<32x128xbf16>,
    return
  }
  func.func @transform_0(%arg0: i32) -> (i32, i32) {
    %c1_i32 = arith.constant 1 : i32
    %0 = arith.addi %arg0, %c1_i32 : i32
    %c1_i32_0 = arith.constant 1 : i32
    %1 = arith.muli %0, %c1_i32_0 : i32
    %c1_i32_1 = arith.constant 1 : i32
    %2 = arith.subi %1, %c1_i32_1 : i32
    %c0_i32 = arith.constant 0 : i32
    %c0_i32_2 = arith.constant 0 : i32
    return %c0_i32, %2 : i32, i32
  }
  func.func @transform_1(%arg0: i32) -> (i32, i32) {
    %c1_i32 = arith.constant 1 : i32
    %0 = arith.addi %arg0, %c1_i32 : i32
    %c0_i32 = arith.constant 0 : i32
    %c0_i32_0 = arith.constant 0 : i32
    return %c0_i32, %0 : i32, i32
  }
  func.func @transform_2(%arg0: i32) -> (i32, i32) {
    %c2_i32 = arith.constant 2 : i32
    %0 = arith.addi %arg0, %c2_i32 : i32
    %c1_i32 = arith.constant 1 : i32
    %1 = arith.muli %0, %c1_i32 : i32
    %c0_i32 = arith.constant 0 : i32
    %c0_i32_0 = arith.constant 0 : i32
    return %c0_i32, %1 : i32, i32
  }
  func.func @transform_3(%arg0: i32) -> (i32, i32) {
    %c0_i32 = arith.constant 0 : i32
    %c0_i32_0 = arith.constant 0 : i32
    %c0_i32_1 = arith.constant 0 : i32
    return %c0_i32, %c0_i32_0 : i32, i32
  }
  func.func @transform_4(%arg0: i32) -> (i32, i32) {
    %c0_i32 = arith.constant 0 : i32
    %c0_i32_0 = arith.constant 0 : i32
    %c0_i32_1 = arith.constant 0 : i32
    return %c0_i32, %c0_i32_0 : i32, i32
  }
  func.func @transform_5(%arg0: i32) -> (i32, i32) {
    %c0_i32 = arith.constant 0 : i32
    %c0_i32_0 = arith.constant 0 : i32
    %c0_i32_1 = arith.constant 0 : i32
    return %c0_i32, %c0_i32_0 : i32, i32
  }
  func.func @transform_6(%arg0: i32) -> (i32, i32) {
    %c0_i32 = arith.constant 0 : i32
    %c0_i32_0 = arith.constant 0 : i32
    %c0_i32_1 = arith.constant 0 : i32
    return %c0_i32, %c0_i32_0 : i32, i32
  }
  func.func @transform_7(%arg0: i32) -> (i32, i32) {
    %c0_i32 = arith.constant 0 : i32
    %c0_i32_0 = arith.constant 0 : i32
    return %c0_i32, %arg0 : i32, i32
  }
}

module attributes {stable_mosaic.version = 11 : i64} {
  func.func @_conv3x3_kernel(%arg0: i32, %arg1: memref<16x128xbf16, #tpu.memory_space<vmem>>, %arg2: memref<16x256xbf16, #tpu.memory_space<vmem>>, %arg3: memref<16x128xbf16, #tpu.memory_space<vmem>>, %arg4: memref<12x144xf32, #tpu.memory_space<vmem>>, %arg5: memref<12x1xf32, #tpu.memory_space<vmem>>, %arg6: memref<12x256xf32, #tpu.memory_space<vmem>>, %arg7: memref<16x512xf32, #tpu.memory_space<vmem>>, %arg8: memref<144x256xf32, #tpu.memory_space<vmem>>) attributes {dimension_semantics = [#tpu.dimension_semantics<parallel>], iteration_bounds = array<i64: 3>, scalar_prefetch = 0 : i64, scratch_operands = 2 : i64, tpu.core_type = #tpu.core_type<tc>, window_params = [{transform_indices = @transform_0, window_bounds = array<i64: 16, 128>}, {transform_indices = @transform_1, window_bounds = array<i64: 16, 256>}, {transform_indices = @transform_2, window_bounds = array<i64: 16, 128>}, {pipeline_mode = #tpu.pipeline_mode<synchronous>, transform_indices = @transform_3, window_bounds = array<i64: 12, 144>}, {pipeline_mode = #tpu.pipeline_mode<synchronous>, transform_indices = @transform_4, window_bounds = array<i64: 12, 1>}, {transform_indices = @transform_5, window_bounds = array<i64: 12, 256>}]} {
    %c0 = arith.constant 0 : index
    %c0_0 = arith.constant 0 : index
    %0 = vector.load %arg1[%c0, %c0_0] : memref<16x128xbf16, #tpu.memory_space<vmem>>, vector<16x128xbf16>
    %1 = arith.extf %0 : vector<16x128xbf16> to vector<16x128xf32>
    %c0_1 = arith.constant 0 : index
    %c0_2 = arith.constant 0 : index
    %2 = vector.load %arg7[%c0_1, %c0_2] : memref<16x512xf32, #tpu.memory_space<vmem>>, vector<16x128xf32>
    tpu.vector_store %arg7[%c0_1, %c0_2], %1 {strides = array<i32>} : memref<16x512xf32, #tpu.memory_space<vmem>>, vector<16x128xf32>,
    %c0_3 = arith.constant 0 : index
    %c0_4 = arith.constant 0 : index
    %3 = vector.load %arg2[%c0_3, %c0_4] : memref<16x256xbf16, #tpu.memory_space<vmem>>, vector<16x256xbf16>
    %4 = arith.extf %3 : vector<16x256xbf16> to vector<16x256xf32>
    %c0_5 = arith.constant 0 : index
    %c128 = arith.constant 128 : index
    %5 = vector.load %arg7[%c0_5, %c128] : memref<16x512xf32, #tpu.memory_space<vmem>>, vector<16x256xf32>
    tpu.vector_store %arg7[%c0_5, %c128], %4 {strides = array<i32>} : memref<16x512xf32, #tpu.memory_space<vmem>>, vector<16x256xf32>,
    %c0_6 = arith.constant 0 : index
    %c0_7 = arith.constant 0 : index
    %6 = vector.load %arg3[%c0_6, %c0_7] : memref<16x128xbf16, #tpu.memory_space<vmem>>, vector<16x128xbf16>
    %7 = arith.extf %6 : vector<16x128xbf16> to vector<16x128xf32>
    %c0_8 = arith.constant 0 : index
    %c384 = arith.constant 384 : index
    %8 = vector.load %arg7[%c0_8, %c384] : memref<16x512xf32, #tpu.memory_space<vmem>>, vector<16x128xf32>
    tpu.vector_store %arg7[%c0_8, %c384], %7 {strides = array<i32>} : memref<16x512xf32, #tpu.memory_space<vmem>>, vector<16x128xf32>,
    %c0_9 = arith.constant 0 : index
    %c109 = arith.constant 109 : index
    %9 = vector.load %arg7[%c0_9, %c109] : memref<16x512xf32, #tpu.memory_space<vmem>>, vector<16x256xf32>
    %c0_10 = arith.constant 0 : index
    %c0_11 = arith.constant 0 : index
    %10 = vector.load %arg8[%c0_10, %c0_11] : memref<144x256xf32, #tpu.memory_space<vmem>>, vector<16x256xf32>
    tpu.vector_store %arg8[%c0_10, %c0_11], %9 {strides = array<i32>} : memref<144x256xf32, #tpu.memory_space<vmem>>, vector<16x256xf32>,
    %c0_12 = arith.constant 0 : index
    %c110 = arith.constant 110 : index
    %11 = vector.load %arg7[%c0_12, %c110] : memref<16x512xf32, #tpu.memory_space<vmem>>, vector<16x256xf32>
    %c16 = arith.constant 16 : index
    %c0_13 = arith.constant 0 : index
    %12 = vector.load %arg8[%c16, %c0_13] : memref<144x256xf32, #tpu.memory_space<vmem>>, vector<16x256xf32>
    tpu.vector_store %arg8[%c16, %c0_13], %11 {strides = array<i32>} : memref<144x256xf32, #tpu.memory_space<vmem>>, vector<16x256xf32>,
    %c0_14 = arith.constant 0 : index
    %c111 = arith.constant 111 : index
    %13 = vector.load %arg7[%c0_14, %c111] : memref<16x512xf32, #tpu.memory_space<vmem>>, vector<16x256xf32>
    %c32 = arith.constant 32 : index
    %c0_15 = arith.constant 0 : index
    %14 = vector.load %arg8[%c32, %c0_15] : memref<144x256xf32, #tpu.memory_space<vmem>>, vector<16x256xf32>
    tpu.vector_store %arg8[%c32, %c0_15], %13 {strides = array<i32>} : memref<144x256xf32, #tpu.memory_space<vmem>>, vector<16x256xf32>,
    %c0_16 = arith.constant 0 : index
    %c127 = arith.constant 127 : index
    %15 = vector.load %arg7[%c0_16, %c127] : memref<16x512xf32, #tpu.memory_space<vmem>>, vector<16x256xf32>
    %c48 = arith.constant 48 : index
    %c0_17 = arith.constant 0 : index
    %16 = vector.load %arg8[%c48, %c0_17] : memref<144x256xf32, #tpu.memory_space<vmem>>, vector<16x256xf32>
    tpu.vector_store %arg8[%c48, %c0_17], %15 {strides = array<i32>} : memref<144x256xf32, #tpu.memory_space<vmem>>, vector<16x256xf32>,
    %c0_18 = arith.constant 0 : index
    %c128_19 = arith.constant 128 : index
    %17 = vector.load %arg7[%c0_18, %c128_19] : memref<16x512xf32, #tpu.memory_space<vmem>>, vector<16x256xf32>
    %c64 = arith.constant 64 : index
    %c0_20 = arith.constant 0 : index
    %18 = vector.load %arg8[%c64, %c0_20] : memref<144x256xf32, #tpu.memory_space<vmem>>, vector<16x256xf32>
    tpu.vector_store %arg8[%c64, %c0_20], %17 {strides = array<i32>} : memref<144x256xf32, #tpu.memory_space<vmem>>, vector<16x256xf32>,
    %c0_21 = arith.constant 0 : index
    %c129 = arith.constant 129 : index
    %19 = vector.load %arg7[%c0_21, %c129] : memref<16x512xf32, #tpu.memory_space<vmem>>, vector<16x256xf32>
    %c80 = arith.constant 80 : index
    %c0_22 = arith.constant 0 : index
    %20 = vector.load %arg8[%c80, %c0_22] : memref<144x256xf32, #tpu.memory_space<vmem>>, vector<16x256xf32>
    tpu.vector_store %arg8[%c80, %c0_22], %19 {strides = array<i32>} : memref<144x256xf32, #tpu.memory_space<vmem>>, vector<16x256xf32>,
    %c0_23 = arith.constant 0 : index
    %c145 = arith.constant 145 : index
    %21 = vector.load %arg7[%c0_23, %c145] : memref<16x512xf32, #tpu.memory_space<vmem>>, vector<16x256xf32>
    %c96 = arith.constant 96 : index
    %c0_24 = arith.constant 0 : index
    %22 = vector.load %arg8[%c96, %c0_24] : memref<144x256xf32, #tpu.memory_space<vmem>>, vector<16x256xf32>
    tpu.vector_store %arg8[%c96, %c0_24], %21 {strides = array<i32>} : memref<144x256xf32, #tpu.memory_space<vmem>>, vector<16x256xf32>,
    %c0_25 = arith.constant 0 : index
    %c146 = arith.constant 146 : index
    %23 = vector.load %arg7[%c0_25, %c146] : memref<16x512xf32, #tpu.memory_space<vmem>>, vector<16x256xf32>
    %c112 = arith.constant 112 : index
    %c0_26 = arith.constant 0 : index
    %24 = vector.load %arg8[%c112, %c0_26] : memref<144x256xf32, #tpu.memory_space<vmem>>, vector<16x256xf32>
    tpu.vector_store %arg8[%c112, %c0_26], %23 {strides = array<i32>} : memref<144x256xf32, #tpu.memory_space<vmem>>, vector<16x256xf32>,
    %c0_27 = arith.constant 0 : index
    %c147 = arith.constant 147 : index
    %25 = vector.load %arg7[%c0_27, %c147] : memref<16x512xf32, #tpu.memory_space<vmem>>, vector<16x256xf32>
    %c128_28 = arith.constant 128 : index
    %c0_29 = arith.constant 0 : index
    %26 = vector.load %arg8[%c128_28, %c0_29] : memref<144x256xf32, #tpu.memory_space<vmem>>, vector<16x256xf32>
    tpu.vector_store %arg8[%c128_28, %c0_29], %25 {strides = array<i32>} : memref<144x256xf32, #tpu.memory_space<vmem>>, vector<16x256xf32>,
    %c0_30 = arith.constant 0 : index
    %c0_31 = arith.constant 0 : index
    %27 = vector.load %arg4[%c0_30, %c0_31] : memref<12x144xf32, #tpu.memory_space<vmem>>, vector<12x144xf32>
    %c0_32 = arith.constant 0 : index
    %c0_33 = arith.constant 0 : index
    %28 = vector.load %arg8[%c0_32, %c0_33] : memref<144x256xf32, #tpu.memory_space<vmem>>, vector<144x256xf32>
    %cst = arith.constant dense<0.000000e+00> : vector<12x256xf32>
    %29 = tpu.matmul %27, %28, %cst {dimension_numbers = #tpu.dot_dimension_numbers<[1], [0], [0], [1], [0, 0, 1, 1], [], []>} : vector<12x144xf32>, vector<144x256xf32>, vector<12x256xf32> -> vector<12x256xf32>
    %c0_34 = arith.constant 0 : index
    %c0_35 = arith.constant 0 : index
    %30 = vector.load %arg5[%c0_34, %c0_35] : memref<12x1xf32, #tpu.memory_space<vmem>>, vector<12x1xf32>
    %31 = vector.broadcast %30 : vector<12x1xf32> to vector<12x256xf32>
    %32 = arith.addf %29, %31 : vector<12x256xf32>
    %c0_36 = arith.constant 0 : index
    %c0_37 = arith.constant 0 : index
    %33 = vector.load %arg6[%c0_36, %c0_37] : memref<12x256xf32, #tpu.memory_space<vmem>>, vector<12x256xf32>
    tpu.vector_store %arg6[%c0_36, %c0_37], %32 {strides = array<i32>} : memref<12x256xf32, #tpu.memory_space<vmem>>, vector<12x256xf32>,
    return
  }
  func.func @transform_0(%arg0: i32) -> (i32, i32) {
    %c1_i32 = arith.constant 1 : i32
    %0 = arith.addi %arg0, %c1_i32 : i32
    %c2_i32 = arith.constant 2 : i32
    %1 = arith.muli %0, %c2_i32 : i32
    %c1_i32_0 = arith.constant 1 : i32
    %2 = arith.subi %1, %c1_i32_0 : i32
    %c0_i32 = arith.constant 0 : i32
    %c0_i32_1 = arith.constant 0 : i32
    return %c0_i32, %2 : i32, i32
  }
  func.func @transform_1(%arg0: i32) -> (i32, i32) {
    %c1_i32 = arith.constant 1 : i32
    %0 = arith.addi %arg0, %c1_i32 : i32
    %c0_i32 = arith.constant 0 : i32
    %c0_i32_0 = arith.constant 0 : i32
    return %c0_i32, %0 : i32, i32
  }
  func.func @transform_2(%arg0: i32) -> (i32, i32) {
    %c2_i32 = arith.constant 2 : i32
    %0 = arith.addi %arg0, %c2_i32 : i32
    %c2_i32_0 = arith.constant 2 : i32
    %1 = arith.muli %0, %c2_i32_0 : i32
    %c0_i32 = arith.constant 0 : i32
    %c0_i32_1 = arith.constant 0 : i32
    return %c0_i32, %1 : i32, i32
  }
  func.func @transform_3(%arg0: i32) -> (i32, i32) {
    %c0_i32 = arith.constant 0 : i32
    %c0_i32_0 = arith.constant 0 : i32
    %c0_i32_1 = arith.constant 0 : i32
    return %c0_i32, %c0_i32_0 : i32, i32
  }
  func.func @transform_4(%arg0: i32) -> (i32, i32) {
    %c0_i32 = arith.constant 0 : i32
    %c0_i32_0 = arith.constant 0 : i32
    %c0_i32_1 = arith.constant 0 : i32
    return %c0_i32, %c0_i32_0 : i32, i32
  }
  func.func @transform_5(%arg0: i32) -> (i32, i32) {
    %c0_i32 = arith.constant 0 : i32
    %c0_i32_0 = arith.constant 0 : i32
    return %c0_i32, %arg0 : i32, i32
  }
}

</mosaic_0001>

<llo_original>
// kernel: _lambda_.8
$region0: #{_lambda_.8}
  #allocation0 [shape = 'u32[]', space=smem, size = 0x4, offset = 0x4, fixed_abs, tag = 'smem constant byte address 0x4 - core index']
  #allocation1 [shape = 'u32[72,128]{1,0:T(1,128)}', space=vmem, size = 0x9000, scoped, tag = 'internal scratch']
  #allocation2 [shape = 'f32[16,512]{1,0:T(8,128)}', space=vmem, size = 0x8000, scoped, tag = 'scratch operand']
  #allocation3 [shape = 'f32[144,256]{1,0:T(8,128)}', space=vmem, size = 0x24000, scoped, tag = 'scratch operand']
  %s0 = inlined_call_operand.vmem [shape: bf16[16,1280], index: 0, kind: input, shape index: {}, may-alias: {0,1,2}]
  %s1 = inlined_call_operand.vmem [shape: bf16[16,1280], index: 1, kind: input, shape index: {}, may-alias: {0,1,2}]
  %s2 = inlined_call_operand.vmem [shape: bf16[16,1280], index: 2, kind: input, shape index: {}, may-alias: {0,1,2}]
  %s3 = inlined_call_operand.vmem [shape: f32[8,144], index: 3, kind: input, shape index: {}]
  %s4 = inlined_call_operand.vmem [shape: f32[8,1], index: 4, kind: input, shape index: {}]
  %s5 = inlined_call_operand.vmem [shape: f32[8,8], index: 5, kind: input, shape index: {}]
  %s6 = inlined_call_operand.vmem [shape: f32[8,1], index: 6, kind: input, shape index: {}]
  %s7 = inlined_call_operand.vmem [shape: bf16[8,768], index: 7, kind: output, shape index: {}]
  %s8 = sld [smem:[#allocation0]]
  $region181: #{_lambda_.8} parent=0
    _
  %s10 = ssub.s32 1, %s8
  %s11 = scalar_select 0, %s10, %s8
  $region1: #{_lambda_.8} parent=0
    #allocation4 [shape = 'u8[8192]{0}', space=vmem, size = 0x2000, scoped, tag = 'input window, operand 0']
    #allocation5 [shape = 'u8[16384]{0}', space=vmem, size = 0x4000, scoped, tag = 'input window, operand 1']
    #allocation6 [shape = 'u8[8192]{0}', space=vmem, size = 0x2000, scoped, tag = 'input window, operand 2']
    loop: start=0, step=1, limit=5
    $region2: #{_lambda_.8} parent=1 // loop_pre_header
      _
    $region3: #{_lambda_.8} parent=1 // loop_header
      %s13 = sphi 0, %s17
      %p14 = scmp.ge.s32.totalorder %s13, 5
      %s29 = sphi 0, %s31
      %s32 = sphi 0, %s29
      %s33 = sphi 0, %s32
      %s49 = sphi 0, %s33
      %s57 = sphi 0, %s59
      %s60 = sphi 0, %s57
      %s61 = sphi 0, %s60
      %s77 = sphi 0, %s61
      %s87 = sphi 0, %s89
      %s90 = sphi 0, %s87
      %s91 = sphi 0, %s90
      %s107 = sphi 0, %s91
      %s111 = sphi 0, %s111
      %s113 = sphi 0, %s111
      %s114 = sphi 0, %s113
      %s128 = sphi 0, %s114
      %s132 = sphi 0, %s132
      %s134 = sphi 0, %s132
      %s135 = sphi 0, %s134
      %s149 = sphi 0, %s135
      %s153 = sphi 0, %s153
      %s155 = sphi 0, %s153
      %s156 = sphi 0, %s155
      %s170 = sphi 0, %s156
      %s174 = sphi 0, %s174
      %s176 = sphi 0, %s174
      %s177 = sphi 0, %s176
      %s191 = sphi 0, %s177
      %s197 = sphi 0, %s199
      %s200 = sphi 0, %s197
      %s201 = sphi 0, %s200
      %s217 = sphi 0, %s201
    $region4: #{_lambda_.8} parent=1 // loop_header_branch
      %16 = sbr.rel (%p14) target = $region8
    $region5: #{_lambda_.8} parent=1 // loop_body
      %s18 = ssub.s32 %s13, 1
      %s19 = ssub.s32 %s13, 2
      %s20 = sadd.s32 %s13, 1
      %s21 = sadd.s32 %s13, 1
      %s22 = smul.u32 %s21, 2
      %s23 = ssub.s32 %s22, 1
      %s24 = sadd.s32 %s20, 1
      %s25 = smul.u32 %s24, 2
      %s26 = ssub.s32 %s25, 1
      %s27 = ssub.s32 %s23, %s26
      %p28 = scmp.eq.s32.totalorder %s27, 0
      %s30 = sadd.s32 %s29, 1
      %s31 = scalar_select %p28, %s29, %s30
      %p34 = pneg %p28
      %p35 = scmp.eq.s32.totalorder %s13, 2
      %p36 = por %p34, %p35
      %p37 = scmp.ne.s32.totalorder %s29, %s32
      %p38 = scmp.eq.s32.totalorder %s13, 0
      %p39 = por %p37, %p38
      %p40 = scmp.ne.s32.totalorder %s29, %s32
      %p41 = scmp.eq.s32.totalorder %s18, 2
      %p42 = por %p40, %p41
      %p43 = scmp.ne.s32.totalorder %s32, %s33
      %p44 = scmp.eq.s32.totalorder %s18, 0
      %p45 = por %p43, %p44
      %p46 = scmp.ne.s32.totalorder %s32, %s33
      %p47 = scmp.eq.s32.totalorder %s19, 2
      %p48 = por %p46, %p47
      %p50 = scmp.ne.s32.totalorder %s33, %s49
      %p51 = scmp.eq.s32.totalorder %s19, 0
      %p52 = por %p50, %p51
      %s53 = sadd.s32 %s13, 1
      %s54 = sadd.s32 %s20, 1
      %s55 = ssub.s32 %s53, %s54
      %p56 = scmp.eq.s32.totalorder %s55, 0
      %s58 = sadd.s32 %s57, 1
      %s59 = scalar_select %p56, %s57, %s58
      %p62 = pneg %p56
      %p63 = scmp.eq.s32.totalorder %s13, 2
      %p64 = por %p62, %p63
      %p65 = scmp.ne.s32.totalorder %s57, %s60
      %p66 = scmp.eq.s32.totalorder %s13, 0
      %p67 = por %p65, %p66
      %p68 = scmp.ne.s32.totalorder %s57, %s60
      %p69 = scmp.eq.s32.totalorder %s18, 2
      %p70 = por %p68, %p69
      %p71 = scmp.ne.s32.totalorder %s60, %s61
      %p72 = scmp.eq.s32.totalorder %s18, 0
      %p73 = por %p71, %p72
      %p74 = scmp.ne.s32.totalorder %s60, %s61
      %p75 = scmp.eq.s32.totalorder %s19, 2
      %p76 = por %p74, %p75
      %p78 = scmp.ne.s32.totalorder %s61, %s77
      %p79 = scmp.eq.s32.totalorder %s19, 0
      %p80 = por %p78, %p79
      %s81 = sadd.s32 %s13, 2
      %s82 = smul.u32 %s81, 2
      %s83 = sadd.s32 %s20, 2
      %s84 = smul.u32 %s83, 2
      %s85 = ssub.s32 %s82, %s84
      %p86 = scmp.eq.s32.totalorder %s85, 0
      %s88 = sadd.s32 %s87, 1
      %s89 = scalar_select %p86, %s87, %s88
      %p92 = pneg %p86
      %p93 = scmp.eq.s32.totalorder %s13, 2
      %p94 = por %p92, %p93
      %p95 = scmp.ne.s32.totalorder %s87, %s90
      %p96 = scmp.eq.s32.totalorder %s13, 0
      %p97 = por %p95, %p96
      %p98 = scmp.ne.s32.totalorder %s87, %s90
      %p99 = scmp.eq.s32.totalorder %s18, 2
      %p100 = por %p98, %p99
      %p101 = scmp.ne.s32.totalorder %s90, %s91
      %p102 = scmp.eq.s32.totalorder %s18, 0
      %p103 = por %p101, %p102
      %p104 = scmp.ne.s32.totalorder %s90, %s91
      %p105 = scmp.eq.s32.totalorder %s19, 2
      %p106 = por %p104, %p105
      %p108 = scmp.ne.s32.totalorder %s91, %s107
      %p109 = scmp.eq.s32.totalorder %s19, 0
      %p110 = por %p108, %p109
      %s112 = sadd.s32 %s111, 1
      %p115 = scmp.eq.s32.totalorder %s13, 2
      %p116 = scmp.ne.s32.totalorder %s111, %s113
      %p117 = scmp.eq.s32.totalorder %s13, 0
      %p118 = por %p116, %p117
      %p119 = scmp.ne.s32.totalorder %s111, %s113
      %p120 = scmp.eq.s32.totalorder %s18, 2
      %p121 = por %p119, %p120
      %p122 = scmp.ne.s32.totalorder %s113, %s114
      %p123 = scmp.eq.s32.totalorder %s18, 0
      %p124 = por %p122, %p123
      %p125 = scmp.ne.s32.totalorder %s113, %s114
      %p126 = scmp.eq.s32.totalorder %s19, 2
      %p127 = por %p125, %p126
      %p129 = scmp.ne.s32.totalorder %s114, %s128
      %p130 = scmp.eq.s32.totalorder %s19, 0
      %p131 = por %p129, %p130
      %s133 = sadd.s32 %s132, 1
      %p136 = scmp.eq.s32.totalorder %s13, 2
      %p137 = scmp.ne.s32.totalorder %s132, %s134
      %p138 = scmp.eq.s32.totalorder %s13, 0
      %p139 = por %p137, %p138
      %p140 = scmp.ne.s32.totalorder %s132, %s134
      %p141 = scmp.eq.s32.totalorder %s18, 2
      %p142 = por %p140, %p141
      %p143 = scmp.ne.s32.totalorder %s134, %s135
      %p144 = scmp.eq.s32.totalorder %s18, 0
      %p145 = por %p143, %p144
      %p146 = scmp.ne.s32.totalorder %s134, %s135
      %p147 = scmp.eq.s32.totalorder %s19, 2
      %p148 = por %p146, %p147
      %p150 = scmp.ne.s32.totalorder %s135, %s149
      %p151 = scmp.eq.s32.totalorder %s19, 0
      %p152 = por %p150, %p151
      %s154 = sadd.s32 %s153, 1
      %p157 = scmp.eq.s32.totalorder %s13, 2
      %p158 = scmp.ne.s32.totalorder %s153, %s155
      %p159 = scmp.eq.s32.totalorder %s13, 0
      %p160 = por %p158, %p159
      %p161 = scmp.ne.s32.totalorder %s153, %s155
      %p162 = scmp.eq.s32.totalorder %s18, 2
      %p163 = por %p161, %p162
      %p164 = scmp.ne.s32.totalorder %s155, %s156
      %p165 = scmp.eq.s32.totalorder %s18, 0
      %p166 = por %p164, %p165
      %p167 = scmp.ne.s32.totalorder %s155, %s156
      %p168 = scmp.eq.s32.totalorder %s19, 2
      %p169 = por %p167, %p168
      %p171 = scmp.ne.s32.totalorder %s156, %s170
      %p172 = scmp.eq.s32.totalorder %s19, 0
      %p173 = por %p171, %p172
      %s175 = sadd.s32 %s174, 1
      %p178 = scmp.eq.s32.totalorder %s13, 2
      %p179 = scmp.ne.s32.totalorder %s174, %s176
      %p180 = scmp.eq.s32.totalorder %s13, 0
      %p181 = por %p179, %p180
      %p182 = scmp.ne.s32.totalorder %s174, %s176
      %p183 = scmp.eq.s32.totalorder %s18, 2
      %p184 = por %p182, %p183
      %p185 = scmp.ne.s32.totalorder %s176, %s177
      %p186 = scmp.eq.s32.totalorder %s18, 0
      %p187 = por %p185, %p186
      %p188 = scmp.ne.s32.totalorder %s176, %s177
      %p189 = scmp.eq.s32.totalorder %s19, 2
      %p190 = por %p188, %p189
      %p192 = scmp.ne.s32.totalorder %s177, %s191
      %p193 = scmp.eq.s32.totalorder %s19, 0
      %p194 = por %p192, %p193
      %s195 = ssub.s32 %s13, %s20
      %p196 = scmp.eq.s32.totalorder %s195, 0
      %s198 = sadd.s32 %s197, 1
      %s199 = scalar_select %p196, %s197, %s198
      %p202 = pneg %p196
      %p203 = scmp.eq.s32.totalorder %s13, 2
      %p204 = por %p202, %p203
      %p205 = scmp.ne.s32.totalorder %s197, %s200
      %p206 = scmp.eq.s32.totalorder %s13, 0
      %p207 = por %p205, %p206
      %p208 = scmp.ne.s32.totalorder %s197, %s200
      %p209 = scmp.eq.s32.totalorder %s18, 2
      %p210 = por %p208, %p209
      %p211 = scmp.ne.s32.totalorder %s200, %s201
      %p212 = scmp.eq.s32.totalorder %s18, 0
      %p213 = por %p211, %p212
      %p214 = scmp.ne.s32.totalorder %s200, %s201
      %p215 = scmp.eq.s32.totalorder %s19, 2
      %p216 = por %p214, %p215
      %p218 = scmp.ne.s32.totalorder %s201, %s217
      %p219 = scmp.eq.s32.totalorder %s19, 0
      %p220 = por %p218, %p219
      %p221 = scmp.le.s32.totalorder 1, %s13
      %p222 = scmp.lt.s32.totalorder %s13, 4
      %p223 = pnand %p221, %p222
      %p224 = pneg %p223
      // Predicated region
      $region9: #{_lambda_.8} parent=5 // pred_check
        _
      $region10: #{_lambda_.8} parent=5 // pred_check_branch
        %226 = sbr.rel (%p223) target = $region12
      $region11: #{_lambda_.8} parent=5 // pred_region
        %s227 = ssub.s32 %s13, 1
        // Predicated region
        $region13: #{_lambda_.8} parent=11 // pred_check
          %p228 = pneg %p124
        $region14: #{_lambda_.8} parent=11 // pred_check_branch
          %230 = sbr.rel (%p228) target = $region16
        $region15: #{_lambda_.8} parent=11 // pred_region
          _
        $region16: #{_lambda_.8} parent=11 // pred_fallthru
          _
        // Predicated region
        $region17: #{_lambda_.8} parent=11 // pred_check
          %p231 = pneg %p145
        $region18: #{_lambda_.8} parent=11 // pred_check_branch
          %233 = sbr.rel (%p231) target = $region20
        $region19: #{_lambda_.8} parent=11 // pred_region
          _
        $region20: #{_lambda_.8} parent=11 // pred_fallthru
          _
        // Predicated region
        $region21: #{_lambda_.8} parent=11 // pred_check
          %p234 = pneg %p166
        $region22: #{_lambda_.8} parent=11 // pred_check_branch
          %236 = sbr.rel (%p234) target = $region24
        $region23: #{_lambda_.8} parent=11 // pred_region
          _
        $region24: #{_lambda_.8} parent=11 // pred_fallthru
          _
        // Predicated region
        $region25: #{_lambda_.8} parent=11 // pred_check
          %p237 = pneg %p187
        $region26: #{_lambda_.8} parent=11 // pred_check_branch
          %239 = sbr.rel (%p237) target = $region28
        $region27: #{_lambda_.8} parent=11 // pred_region
          _
        $region28: #{_lambda_.8} parent=11 // pred_fallthru
          _
      $region12: #{_lambda_.8} parent=5 // pred_fallthru
        _
      %p240 = scmp.lt.s32.totalorder %s13, 3
      // Predicated region
      $region29: #{_lambda_.8} parent=5 // pred_check
        %p241 = pneg %p240
      $region30: #{_lambda_.8} parent=5 // pred_check_branch
        %243 = sbr.rel (%p241) target = $region32
      $region31: #{_lambda_.8} parent=5 // pred_region
        // Predicated region
        $region33: #{_lambda_.8} parent=31 // pred_check
          %p244 = pneg %p39
        $region34: #{_lambda_.8} parent=31 // pred_check_branch
          %246 = sbr.rel (%p244) target = $region36
        $region35: #{_lambda_.8} parent=31 // pred_region
          %s247 = sand.u32 %s29, 1
          %s248 = sand.u32 %s29, 1
          %s249 = smul.addr %s248, 8
          %s250 = scalar_lea.vmem [#allocation4], %s249
          %s251 = sadd.s32 %s13, 1
          %s252 = smul.u32 %s251, 2
          %s253 = ssub.s32 %s252, 1
          %s254 = smul.addr %s253, 4
          %s255 = scalar_lea.vmem %s0, %s254
          // Predicated region
          $region37: #{_lambda_.8} parent=35 // pred_check
            _
          $region38: #{_lambda_.8} parent=35 // pred_check_branch
            %257 = sbr.rel (0) target = $region40
          $region39: #{_lambda_.8} parent=35 // pred_region
            // Predicated region
            $region41: #{_lambda_.8} parent=39 // pred_check
              _
            $region42: #{_lambda_.8} parent=39 // pred_check_branch
              %259 = sbr.rel target = $region44
            $region43: #{_lambda_.8} parent=39 // pred_region
              // Predicated region
              $region56: #{_lambda_.8} parent=43 // pred_check
                _
              $region57: #{_lambda_.8} parent=43 // pred_check_branch
                %277 = sbr.rel (0) target = $region59
              $region58: #{_lambda_.8} parent=43 // pred_region
                loop: start=0, step=1, limit=1
                $region60: #{_lambda_.8} parent=58 // loop_pre_header
                  _
                $region61: #{_lambda_.8} parent=58 // loop_header
                  %s279 = sphi 0, %s283
                  %p280 = scmp.ge.s32.totalorder %s279, 1
                  %s284 = sphi %s255, %s255
                  %s285 = sphi %s250, %s250
                $region62: #{_lambda_.8} parent=58 // loop_header_branch
                  %282 = sbr.rel (%p280) target = $region66
                $region63: #{_lambda_.8} parent=58 // loop_body
                  _
                $region64: #{_lambda_.8} parent=58 // loop_footer
                  %s283 = sadd.s32 1, %s279
                $region65: #{_lambda_.8} parent=58 // loop_footer_branch
                  %278 = sbr.rel target = $region61
                $region66: #{_lambda_.8} parent=58 // loop_exit
                  _
                %s287 = ssub.s32 16, 1
                loop: start=0, step=1, limit=1
                $region67: #{_lambda_.8} parent=58 // loop_pre_header
                  _
                $region68: #{_lambda_.8} parent=58 // loop_header
                  %s289 = sphi 0, %s293
                  %p290 = scmp.ge.s32.totalorder %s289, 1
                  %s294 = sphi %s255, %s255
                  %s295 = sphi %s250, %s250
                $region69: #{_lambda_.8} parent=58 // loop_header_branch
                  %292 = sbr.rel (%p290) target = $region73
                $region70: #{_lambda_.8} parent=58 // loop_body
                  %v296 = vld [vmem:[%s294] sm:%s287]
                  %297 = vst [vmem:[%s295] sm:%s287] %v296
                  %v298 = vld [vmem:[%s294 + $0x28] sm:%s287]
                  %299 = vst [vmem:[%s295 + $0x4] sm:%s287] %v298
                $region71: #{_lambda_.8} parent=58 // loop_footer
                  %s293 = sadd.s32 1, %s289
                $region72: #{_lambda_.8} parent=58 // loop_footer_branch
                  %288 = sbr.rel target = $region68
                $region73: #{_lambda_.8} parent=58 // loop_exit
                  _
              $region59: #{_lambda_.8} parent=43 // pred_fallthru
                _
            $region44: #{_lambda_.8} parent=39 // pred_fallthru
              _
            // Predicated region
            $region45: #{_lambda_.8} parent=39 // pred_check
              _
            $region46: #{_lambda_.8} parent=39 // pred_check_branch
              %261 = sbr.rel (0) target = $region48
            $region47: #{_lambda_.8} parent=39 // pred_region
              %s263 = ssub.s32 16, 1
              loop: start=0, step=1, limit=1
              $region49: #{_lambda_.8} parent=47 // loop_pre_header
                _
              $region50: #{_lambda_.8} parent=47 // loop_header
                %s265 = sphi 0, %s269
                %p266 = scmp.ge.s32.totalorder %s265, 1
                %s270 = sphi %s255, %s255
                %s271 = sphi %s250, %s250
              $region51: #{_lambda_.8} parent=47 // loop_header_branch
                %268 = sbr.rel (%p266) target = $region55
              $region52: #{_lambda_.8} parent=47 // loop_body
                %v272 = vld [vmem:[%s270] sm:%s263]
                %273 = vst [vmem:[%s271] sm:%s263] %v272
                %v274 = vld [vmem:[%s270 + $0x28] sm:%s263]
                %275 = vst [vmem:[%s271 + $0x4] sm:%s263] %v274
              $region53: #{_lambda_.8} parent=47 // loop_footer
                %s269 = sadd.s32 1, %s265
              $region54: #{_lambda_.8} parent=47 // loop_footer_branch
                %264 = sbr.rel target = $region50
              $region55: #{_lambda_.8} parent=47 // loop_exit
                _
            $region48: #{_lambda_.8} parent=39 // pred_fallthru
              _
          $region40: #{_lambda_.8} parent=35 // pred_fallthru
            _
          %300 = vnop
        $region36: #{_lambda_.8} parent=31 // pred_fallthru
          _
        // Predicated region
        $region74: #{_lambda_.8} parent=31 // pred_check
          %p301 = pneg %p67
        $region75: #{_lambda_.8} parent=31 // pred_check_branch
          %303 = sbr.rel (%p301) target = $region77
        $region76: #{_lambda_.8} parent=31 // pred_region
          %s304 = sand.u32 %s57, 1
          %s305 = sand.u32 %s57, 1
          %s306 = smul.addr %s305, 16
          %s307 = scalar_lea.vmem [#allocation5], %s306
          %s308 = sadd.s32 %s13, 1
          %s309 = smul.u32 2, %s308
          %s310 = smul.addr %s309, 4
          %s311 = scalar_lea.vmem %s1, %s310
          // Predicated region
          $region78: #{_lambda_.8} parent=76 // pred_check
            _
          $region79: #{_lambda_.8} parent=76 // pred_check_branch
            %313 = sbr.rel (0) target = $region81
          $region80: #{_lambda_.8} parent=76 // pred_region
            // Predicated region
            $region82: #{_lambda_.8} parent=80 // pred_check
              _
            $region83: #{_lambda_.8} parent=80 // pred_check_branch
              %315 = sbr.rel (0) target = $region85
            $region84: #{_lambda_.8} parent=80 // pred_region
              // Predicated region
              $region97: #{_lambda_.8} parent=84 // pred_check
                _
              $region98: #{_lambda_.8} parent=84 // pred_check_branch
                %333 = sbr.rel (0) target = $region100
              $region99: #{_lambda_.8} parent=84 // pred_region
                loop: start=0, step=1, limit=1
                $region101: #{_lambda_.8} parent=99 // loop_pre_header
                  _
                $region102: #{_lambda_.8} parent=99 // loop_header
                  %s335 = sphi 0, %s339
                  %p336 = scmp.ge.s32.totalorder %s335, 1
                  %s340 = sphi %s311, %s311
                  %s341 = sphi %s307, %s307
                $region103: #{_lambda_.8} parent=99 // loop_header_branch
                  %338 = sbr.rel (%p336) target = $region107
                $region104: #{_lambda_.8} parent=99 // loop_body
                  %v342 = vld [vmem:[%s340] sm:$0xff]
                  %343 = vst [vmem:[%s341] sm:$0xff] %v342
                  %v344 = vld [vmem:[%s340 + $0x28] sm:$0xff]
                  %345 = vst [vmem:[%s341 + $0x8] sm:$0xff] %v344
                $region105: #{_lambda_.8} parent=99 // loop_footer
                  %s339 = sadd.s32 1, %s335
                $region106: #{_lambda_.8} parent=99 // loop_footer_branch
                  %334 = sbr.rel target = $region102
                $region107: #{_lambda_.8} parent=99 // loop_exit
                  _
              $region100: #{_lambda_.8} parent=84 // pred_fallthru
                _
              // Predicated region
              $region108: #{_lambda_.8} parent=84 // pred_check
                _
              $region109: #{_lambda_.8} parent=84 // pred_check_branch
                %347 = sbr.rel target = $region111
              $region110: #{_lambda_.8} parent=84 // pred_region
                _
              $region111: #{_lambda_.8} parent=84 // pred_fallthru
                _
            $region85: #{_lambda_.8} parent=80 // pred_fallthru
              _
            // Predicated region
            $region86: #{_lambda_.8} parent=80 // pred_check
              _
            $region87: #{_lambda_.8} parent=80 // pred_check_branch
              %317 = sbr.rel target = $region89
            $region88: #{_lambda_.8} parent=80 // pred_region
              %s319 = ssub.s32 256, 1
              loop: start=0, step=1, limit=1
              $region90: #{_lambda_.8} parent=88 // loop_pre_header
                _
              $region91: #{_lambda_.8} parent=88 // loop_header
                %s321 = sphi 0, %s325
                %p322 = scmp.ge.s32.totalorder %s321, 1
                %s326 = sphi %s311, %s311
                %s327 = sphi %s307, %s307
              $region92: #{_lambda_.8} parent=88 // loop_header_branch
                %324 = sbr.rel (%p322) target = $region96
              $region93: #{_lambda_.8} parent=88 // loop_body
                %v328 = vld [vmem:[%s326] sm:%s319]
                %329 = vst [vmem:[%s327] sm:%s319] %v328
                %v330 = vld [vmem:[%s326 + $0x28] sm:%s319]
                %331 = vst [vmem:[%s327 + $0x8] sm:%s319] %v330
              $region94: #{_lambda_.8} parent=88 // loop_footer
                %s325 = sadd.s32 1, %s321
              $region95: #{_lambda_.8} parent=88 // loop_footer_branch
                %320 = sbr.rel target = $region91
              $region96: #{_lambda_.8} parent=88 // loop_exit
                _
            $region89: #{_lambda_.8} parent=80 // pred_fallthru
              _
          $region81: #{_lambda_.8} parent=76 // pred_fallthru
            _
          %348 = vnop
        $region77: #{_lambda_.8} parent=31 // pred_fallthru
          _
        // Predicated region
        $region112: #{_lambda_.8} parent=31 // pred_check
          %p349 = pneg %p97
        $region113: #{_lambda_.8} parent=31 // pred_check_branch
          %351 = sbr.rel (%p349) target = $region115
        $region114: #{_lambda_.8} parent=31 // pred_region
          %s352 = sand.u32 %s87, 1
          %s353 = sand.u32 %s87, 1
          %s354 = smul.addr %s353, 8
          %s355 = scalar_lea.vmem [#allocation6], %s354
          %s356 = sadd.s32 %s13, 2
          %s357 = smul.u32 %s356, 2
          %s358 = smul.addr %s357, 4
          %s359 = scalar_lea.vmem %s2, %s358
          // Predicated region
          $region116: #{_lambda_.8} parent=114 // pred_check
            _
          $region117: #{_lambda_.8} parent=114 // pred_check_branch
            %361 = sbr.rel (0) target = $region119
          $region118: #{_lambda_.8} parent=114 // pred_region
            // Predicated region
            $region120: #{_lambda_.8} parent=118 // pred_check
              _
            $region121: #{_lambda_.8} parent=118 // pred_check_branch
              %363 = sbr.rel target = $region123
            $region122: #{_lambda_.8} parent=118 // pred_region
              // Predicated region
              $region135: #{_lambda_.8} parent=122 // pred_check
                _
              $region136: #{_lambda_.8} parent=122 // pred_check_branch
                %381 = sbr.rel (0) target = $region138
              $region137: #{_lambda_.8} parent=122 // pred_region
                loop: start=0, step=1, limit=1
                $region139: #{_lambda_.8} parent=137 // loop_pre_header
                  _
                $region140: #{_lambda_.8} parent=137 // loop_header
                  %s383 = sphi 0, %s387
                  %p384 = scmp.ge.s32.totalorder %s383, 1
                  %s388 = sphi %s359, %s359
                  %s389 = sphi %s355, %s355
                $region141: #{_lambda_.8} parent=137 // loop_header_branch
                  %386 = sbr.rel (%p384) target = $region145
                $region142: #{_lambda_.8} parent=137 // loop_body
                  _
                $region143: #{_lambda_.8} parent=137 // loop_footer
                  %s387 = sadd.s32 1, %s383
                $region144: #{_lambda_.8} parent=137 // loop_footer_branch
                  %382 = sbr.rel target = $region140
                $region145: #{_lambda_.8} parent=137 // loop_exit
                  _
                %s391 = ssub.s32 16, 1
                loop: start=0, step=1, limit=1
                $region146: #{_lambda_.8} parent=137 // loop_pre_header
                  _
                $region147: #{_lambda_.8} parent=137 // loop_header
                  %s393 = sphi 0, %s397
                  %p394 = scmp.ge.s32.totalorder %s393, 1
                  %s398 = sphi %s359, %s359
                  %s399 = sphi %s355, %s355
                $region148: #{_lambda_.8} parent=137 // loop_header_branch
                  %396 = sbr.rel (%p394) target = $region152
                $region149: #{_lambda_.8} parent=137 // loop_body
                  %v400 = vld [vmem:[%s398] sm:%s391]
                  %401 = vst [vmem:[%s399] sm:%s391] %v400
                  %v402 = vld [vmem:[%s398 + $0x28] sm:%s391]
                  %403 = vst [vmem:[%s399 + $0x4] sm:%s391] %v402
                $region150: #{_lambda_.8} parent=137 // loop_footer
                  %s397 = sadd.s32 1, %s393
                $region151: #{_lambda_.8} parent=137 // loop_footer_branch
                  %392 = sbr.rel target = $region147
                $region152: #{_lambda_.8} parent=137 // loop_exit
                  _
              $region138: #{_lambda_.8} parent=122 // pred_fallthru
                _
            $region123: #{_lambda_.8} parent=118 // pred_fallthru
              _
            // Predicated region
            $region124: #{_lambda_.8} parent=118 // pred_check
              _
            $region125: #{_lambda_.8} parent=118 // pred_check_branch
              %365 = sbr.rel (0) target = $region127
            $region126: #{_lambda_.8} parent=118 // pred_region
              %s367 = ssub.s32 16, 1
              loop: start=0, step=1, limit=1
              $region128: #{_lambda_.8} parent=126 // loop_pre_header
                _
              $region129: #{_lambda_.8} parent=126 // loop_header
                %s369 = sphi 0, %s373
                %p370 = scmp.ge.s32.totalorder %s369, 1
                %s374 = sphi %s359, %s359
                %s375 = sphi %s355, %s355
              $region130: #{_lambda_.8} parent=126 // loop_header_branch
                %372 = sbr.rel (%p370) target = $region134
              $region131: #{_lambda_.8} parent=126 // loop_body
                %v376 = vld [vmem:[%s374] sm:%s367]
                %377 = vst [vmem:[%s375] sm:%s367] %v376
                %v378 = vld [vmem:[%s374 + $0x28] sm:%s367]
                %379 = vst [vmem:[%s375 + $0x4] sm:%s367] %v378
              $region132: #{_lambda_.8} parent=126 // loop_footer
                %s373 = sadd.s32 1, %s369
              $region133: #{_lambda_.8} parent=126 // loop_footer_branch
                %368 = sbr.rel target = $region129
              $region134: #{_lambda_.8} parent=126 // loop_exit
                _
            $region127: #{_lambda_.8} parent=118 // pred_fallthru
              _
          $region119: #{_lambda_.8} parent=114 // pred_fallthru
            _
          %404 = vnop
        $region115: #{_lambda_.8} parent=31 // pred_fallthru
          _
      $region32: #{_lambda_.8} parent=5 // pred_fallthru
        _
      %p405 = scmp.le.s32.totalorder 1, %s13
      %p406 = scmp.lt.s32.totalorder %s13, 4
      %p407 = pnand %p405, %p406
      %p408 = pneg %p407
      // Predicated region
      $region153: #{_lambda_.8} parent=5 // pred_check
        _
      $region154: #{_lambda_.8} parent=5 // pred_check_branch
        %410 = sbr.rel (%p407) target = $region156
      $region155: #{_lambda_.8} parent=5 // pred_region
        %s411 = ssub.s32 %s13, 1
        %s412 = sand.u32 %s32, 1
        %s413 = sand.u32 %s32, 1
        %s414 = smul.addr %s413, 8
        %s415 = scalar_lea.vmem [#allocation4], %s414
        // Predicated region
        $region157: #{_lambda_.8} parent=155 // pred_check
          %p416 = pneg %p45
        $region158: #{_lambda_.8} parent=155 // pred_check_branch
          %418 = sbr.rel (%p416) target = $region160
        $region159: #{_lambda_.8} parent=155 // pred_region
          _
        $region160: #{_lambda_.8} parent=155 // pred_fallthru
          _
        %s419 = sand.u32 %s60, 1
        %s420 = sand.u32 %s60, 1
        %s421 = smul.addr %s420, 16
        %s422 = scalar_lea.vmem [#allocation5], %s421
        // Predicated region
        $region161: #{_lambda_.8} parent=155 // pred_check
          %p423 = pneg %p73
        $region162: #{_lambda_.8} parent=155 // pred_check_branch
          %425 = sbr.rel (%p423) target = $region164
        $region163: #{_lambda_.8} parent=155 // pred_region
          _
        $region164: #{_lambda_.8} parent=155 // pred_fallthru
          _
        %s426 = sand.u32 %s90, 1
        %s427 = sand.u32 %s90, 1
        %s428 = smul.addr %s427, 8
        %s429 = scalar_lea.vmem [#allocation6], %s428
        // Predicated region
        $region165: #{_lambda_.8} parent=155 // pred_check
          %p430 = pneg %p103
        $region166: #{_lambda_.8} parent=155 // pred_check_branch
          %432 = sbr.rel (%p430) target = $region168
        $region167: #{_lambda_.8} parent=155 // pred_region
          _
        $region168: #{_lambda_.8} parent=155 // pred_fallthru
          _
        %s433 = sand.u32 %s32, 1
        %s434 = sand.u32 %s32, 1
        %s435 = smul.addr %s434, 8
        %s436 = scalar_lea.vmem [#allocation4], %s435
        %p437 = pneg %p45
        %p438 = pneg %p42
        %s439 = sand.u32 %s60, 1
        %s440 = sand.u32 %s60, 1
        %s441 = smul.addr %s440, 16
        %s442 = scalar_lea.vmem [#allocation5], %s441
        %p443 = pneg %p73
        %p444 = pneg %p70
        %s445 = sand.u32 %s90, 1
        %s446 = sand.u32 %s90, 1
        %s447 = smul.addr %s446, 8
        %s448 = scalar_lea.vmem [#allocation6], %s447
        %p449 = pneg %p103
        %p450 = pneg %p100
        %p451 = pneg %p124
        %p452 = pneg %p121
        %p453 = pneg %p145
        %p454 = pneg %p142
        %p455 = pneg %p166
        %p456 = pneg %p163
        %p457 = pneg %p187
        %p458 = pneg %p184
        %p459 = pneg %p213
        %p460 = pneg %p210
        %s461 = smul.u32 2, %s18
        %p462 = scmp.lt.s32.totalorder %s461, 5
        %s463 = scalar_select %p462, %s461, 5
        %s464 = smul.addr %s463, 4
        %s465 = scalar_lea.vmem %s7, %s464
        %s466 = sadd.s32 %s18, 1
        %s467 = smul.u32 %s466, 2
        %s468 = ssub.s32 %s467, 1
        %s469 = sadd.s32 %s18, 1
        %s470 = smul.u32 2, %s469
        %s471 = sadd.s32 %s18, 2
        %s472 = smul.u32 %s471, 2
        %s473 = smul.u32 2, %s18
        %p474 = scmp.lt.s32.totalorder %s473, 5
        %s475 = scalar_select %p474, %s473, 5
        %s476 = smul.addr %s475, 4
        %s477 = scalar_lea.vmem %s7, %s476
        %s478 = smul.u32 2, %s18
        %v479 = vld [vmem:[%s415] sm:$0xf]
        %v480 = vld [vmem:[%s415 + $0x4] sm:$0xf]
        %v481 = vunpack.c.l.bf16 %v479
        %v482 = vunpack.c.l.bf16 %v480
        %483 = vst [vmem:[#allocation2] sm:$0xff] %v481
        %484 = vst [vmem:[#allocation2 + $0x20] sm:$0xff] %v482
        %v485 = vld [vmem:[%s422] sm:$0xff]
        %v486 = vld [vmem:[%s422 + $0x8] sm:$0xff]
        %v487 = vunpack.c.l.bf16 %v485
        %v488 = vunpack.c.h.bf16 %v485
        %v489 = vunpack.c.l.bf16 %v486
        %v490 = vunpack.c.h.bf16 %v486
        %491 = vst [vmem:[#allocation2 + $0x8] sm:$0xff] %v487
        %492 = vst [vmem:[#allocation2 + $0x10] sm:$0xff] %v488
        %493 = vst [vmem:[#allocation2 + $0x28] sm:$0xff] %v489
        %494 = vst [vmem:[#allocation2 + $0x30] sm:$0xff] %v490
        %v495 = vld [vmem:[%s429] sm:$0xf]
        %v496 = vld [vmem:[%s429 + $0x4] sm:$0xf]
        %v497 = vunpack.c.l.bf16 %v495
        %v498 = vunpack.c.l.bf16 %v496
        %499 = vst [vmem:[#allocation2 + $0x18] sm:$0xff] %v497
        %500 = vst [vmem:[#allocation2 + $0x38] sm:$0xff] %v498
        %v501 = vld [vmem:[#allocation2] sm:$0xff]
        %v502 = vld [vmem:[#allocation2 + $0x8] sm:$0xff]
        %v503 = vld [vmem:[#allocation2 + $0x10] sm:$0xff]
        %v504 = vld [vmem:[#allocation2 + $0x20] sm:$0xff]
        %v505 = vld [vmem:[#allocation2 + $0x28] sm:$0xff]
        %v506 = vld [vmem:[#allocation2 + $0x30] sm:$0xff]
        %513 = vrot.lane.b32.xlu0 %v501, 19
        %v514 = vpop.permute.xlu0 %513
        %515 = vrot.lane.b32.xlu0 %v502, 19
        %v516 = vpop.permute.xlu0 %515
        %517 = vrot.lane.b32.xlu0 %v503, 19
        %v518 = vpop.permute.xlu0 %517
        %519 = vrot.lane.b32.xlu0 %v504, 19
        %v520 = vpop.permute.xlu0 %519
        %521 = vrot.lane.b32.xlu0 %v505, 19
        %v522 = vpop.permute.xlu0 %521
        %523 = vrot.lane.b32.xlu0 %v506, 19
        %v524 = vpop.permute.xlu0 %523
        %vm525 = vcmask 154624
        %v526 = vsel %vm525, %v514, %v516
        %v527 = vsel %vm525, %v516, %v518
        %v528 = vsel %vm525, %v520, %v522
        %v529 = vsel %vm525, %v522, %v524
        %534 = vst [vmem:[#allocation3] sm:$0xff] %v526
        %535 = vst [vmem:[#allocation3 + $0x8] sm:$0xff] %v527
        %536 = vst [vmem:[#allocation3 + $0x10] sm:$0xff] %v528
        %537 = vst [vmem:[#allocation3 + $0x18] sm:$0xff] %v529
        %v538 = vld [vmem:[#allocation2] sm:$0xff]
        %v539 = vld [vmem:[#allocation2 + $0x8] sm:$0xff]
        %v540 = vld [vmem:[#allocation2 + $0x10] sm:$0xff]
        %v541 = vld [vmem:[#allocation2 + $0x20] sm:$0xff]
        %v542 = vld [vmem:[#allocation2 + $0x28] sm:$0xff]
        %v543 = vld [vmem:[#allocation2 + $0x30] sm:$0xff]
        %550 = vrot.lane.b32.xlu0 %v538, 18
        %v551 = vpop.permute.xlu0 %550
        %552 = vrot.lane.b32.xlu0 %v539, 18
        %v553 = vpop.permute.xlu0 %552
        %554 = vrot.lane.b32.xlu0 %v540, 18
        %v555 = vpop.permute.xlu0 %554
        %556 = vrot.lane.b32.xlu0 %v541, 18
        %v557 = vpop.permute.xlu0 %556
        %558 = vrot.lane.b32.xlu0 %v542, 18
        %v559 = vpop.permute.xlu0 %558
        %560 = vrot.lane.b32.xlu0 %v543, 18
        %v561 = vpop.permute.xlu0 %560
        %vm562 = vcmask 146432
        %v563 = vsel %vm562, %v551, %v553
        %v564 = vsel %vm562, %v553, %v555
        %v565 = vsel %vm562, %v557, %v559
        %v566 = vsel %vm562, %v559, %v561
        %571 = vst [vmem:[#allocation3 + $0x20] sm:$0xff] %v563
        %572 = vst [vmem:[#allocation3 + $0x28] sm:$0xff] %v564
        %573 = vst [vmem:[#allocation3 + $0x30] sm:$0xff] %v565
        %574 = vst [vmem:[#allocation3 + $0x38] sm:$0xff] %v566
        %v575 = vld [vmem:[#allocation2] sm:$0xff]
        %v576 = vld [vmem:[#allocation2 + $0x8] sm:$0xff]
        %v577 = vld [vmem:[#allocation2 + $0x10] sm:$0xff]
        %v578 = vld [vmem:[#allocation2 + $0x20] sm:$0xff]
        %v579 = vld [vmem:[#allocation2 + $0x28] sm:$0xff]
        %v580 = vld [vmem:[#allocation2 + $0x30] sm:$0xff]
        %587 = vrot.lane.b32.xlu0 %v575, 17
        %v588 = vpop.permute.xlu0 %587
        %589 = vrot.lane.b32.xlu0 %v576, 17
        %v590 = vpop.permute.xlu0 %589
        %591 = vrot.lane.b32.xlu0 %v577, 17
        %v592 = vpop.permute.xlu0 %591
        %593 = vrot.lane.b32.xlu0 %v578, 17
        %v594 = vpop.permute.xlu0 %593
        %595 = vrot.lane.b32.xlu0 %v579, 17
        %v596 = vpop.permute.xlu0 %595
        %597 = vrot.lane.b32.xlu0 %v580, 17
        %v598 = vpop.permute.xlu0 %597
        %vm599 = vcmask 138240
        %v600 = vsel %vm599, %v588, %v590
        %v601 = vsel %vm599, %v590, %v592
        %v602 = vsel %vm599, %v594, %v596
        %v603 = vsel %vm599, %v596, %v598
        %608 = vst [vmem:[#allocation3 + $0x40] sm:$0xff] %v600
        %609 = vst [vmem:[#allocation3 + $0x48] sm:$0xff] %v601
        %610 = vst [vmem:[#allocation3 + $0x50] sm:$0xff] %v602
        %611 = vst [vmem:[#allocation3 + $0x58] sm:$0xff] %v603
        %v612 = vld [vmem:[#allocation2] sm:$0xff]
        %v613 = vld [vmem:[#allocation2 + $0x8] sm:$0xff]
        %v614 = vld [vmem:[#allocation2 + $0x10] sm:$0xff]
        %v615 = vld [vmem:[#allocation2 + $0x20] sm:$0xff]
        %v616 = vld [vmem:[#allocation2 + $0x28] sm:$0xff]
        %v617 = vld [vmem:[#allocation2 + $0x30] sm:$0xff]
        %624 = vrot.lane.b32.xlu0 %v612, 1
        %v625 = vpop.permute.xlu0 %624
        %626 = vrot.lane.b32.xlu0 %v613, 1
        %v627 = vpop.permute.xlu0 %626
        %628 = vrot.lane.b32.xlu0 %v614, 1
        %v629 = vpop.permute.xlu0 %628
        %630 = vrot.lane.b32.xlu0 %v615, 1
        %v631 = vpop.permute.xlu0 %630
        %632 = vrot.lane.b32.xlu0 %v616, 1
        %v633 = vpop.permute.xlu0 %632
        %634 = vrot.lane.b32.xlu0 %v617, 1
        %v635 = vpop.permute.xlu0 %634
        %vm636 = vcmask 7168
        %v637 = vsel %vm636, %v625, %v627
        %v638 = vsel %vm636, %v627, %v629
        %v639 = vsel %vm636, %v631, %v633
        %v640 = vsel %vm636, %v633, %v635
        %645 = vst [vmem:[#allocation3 + $0x60] sm:$0xff] %v637
        %646 = vst [vmem:[#allocation3 + $0x68] sm:$0xff] %v638
        %647 = vst [vmem:[#allocation3 + $0x70] sm:$0xff] %v639
        %648 = vst [vmem:[#allocation3 + $0x78] sm:$0xff] %v640
        %v649 = vld [vmem:[#allocation2 + $0x8] sm:$0xff]
        %v650 = vld [vmem:[#allocation2 + $0x10] sm:$0xff]
        %v651 = vld [vmem:[#allocation2 + $0x28] sm:$0xff]
        %v652 = vld [vmem:[#allocation2 + $0x30] sm:$0xff]
        %653 = vst [vmem:[#allocation3 + $0x80] sm:$0xff] %v649
        %654 = vst [vmem:[#allocation3 + $0x88] sm:$0xff] %v650
        %655 = vst [vmem:[#allocation3 + $0x90] sm:$0xff] %v651
        %656 = vst [vmem:[#allocation3 + $0x98] sm:$0xff] %v652
        %v657 = vld [vmem:[#allocation2 + $0x8] sm:$0xff]
        %v658 = vld [vmem:[#allocation2 + $0x10] sm:$0xff]
        %v659 = vld [vmem:[#allocation2 + $0x18] sm:$0xff]
        %v660 = vld [vmem:[#allocation2 + $0x28] sm:$0xff]
        %v661 = vld [vmem:[#allocation2 + $0x30] sm:$0xff]
        %v662 = vld [vmem:[#allocation2 + $0x38] sm:$0xff]
        %669 = vrot.lane.b32.xlu0 %v657, 127
        %v670 = vpop.permute.xlu0 %669
        %671 = vrot.lane.b32.xlu0 %v658, 127
        %v672 = vpop.permute.xlu0 %671
        %673 = vrot.lane.b32.xlu0 %v659, 127
        %v674 = vpop.permute.xlu0 %673
        %675 = vrot.lane.b32.xlu0 %v660, 127
        %v676 = vpop.permute.xlu0 %675
        %677 = vrot.lane.b32.xlu0 %v661, 127
        %v678 = vpop.permute.xlu0 %677
        %679 = vrot.lane.b32.xlu0 %v662, 127
        %v680 = vpop.permute.xlu0 %679
        %vm681 = vcmask 1039360
        %v682 = vsel %vm681, %v670, %v672
        %v683 = vsel %vm681, %v672, %v674
        %v684 = vsel %vm681, %v676, %v678
        %v685 = vsel %vm681, %v678, %v680
        %690 = vst [vmem:[#allocation3 + $0xa0] sm:$0xff] %v682
        %691 = vst [vmem:[#allocation3 + $0xa8] sm:$0xff] %v683
        %692 = vst [vmem:[#allocation3 + $0xb0] sm:$0xff] %v684
        %693 = vst [vmem:[#allocation3 + $0xb8] sm:$0xff] %v685
        %v694 = vld [vmem:[#allocation2 + $0x8] sm:$0xff]
        %v695 = vld [vmem:[#allocation2 + $0x10] sm:$0xff]
        %v696 = vld [vmem:[#allocation2 + $0x18] sm:$0xff]
        %v697 = vld [vmem:[#allocation2 + $0x28] sm:$0xff]
        %v698 = vld [vmem:[#allocation2 + $0x30] sm:$0xff]
        %v699 = vld [vmem:[#allocation2 + $0x38] sm:$0xff]
        %706 = vrot.lane.b32.xlu0 %v694, 111
        %v707 = vpop.permute.xlu0 %706
        %708 = vrot.lane.b32.xlu0 %v695, 111
        %v709 = vpop.permute.xlu0 %708
        %710 = vrot.lane.b32.xlu0 %v696, 111
        %v711 = vpop.permute.xlu0 %710
        %712 = vrot.lane.b32.xlu0 %v697, 111
        %v713 = vpop.permute.xlu0 %712
        %714 = vrot.lane.b32.xlu0 %v698, 111
        %v715 = vpop.permute.xlu0 %714
        %716 = vrot.lane.b32.xlu0 %v699, 111
        %v717 = vpop.permute.xlu0 %716
        %vm718 = vcmask 908288
        %v719 = vsel %vm718, %v707, %v709
        %v720 = vsel %vm718, %v709, %v711
        %v721 = vsel %vm718, %v713, %v715
        %v722 = vsel %vm718, %v715, %v717
        %727 = vst [vmem:[#allocation3 + $0xc0] sm:$0xff] %v719
        %728 = vst [vmem:[#allocation3 + $0xc8] sm:$0xff] %v720
        %729 = vst [vmem:[#allocation3 + $0xd0] sm:$0xff] %v721
        %730 = vst [vmem:[#allocation3 + $0xd8] sm:$0xff] %v722
        %v731 = vld [vmem:[#allocation2 + $0x8] sm:$0xff]
        %v732 = vld [vmem:[#allocation2 + $0x10] sm:$0xff]
        %v733 = vld [vmem:[#allocation2 + $0x18] sm:$0xff]
        %v734 = vld [vmem:[#allocation2 + $0x28] sm:$0xff]
        %v735 = vld [vmem:[#allocation2 + $0x30] sm:$0xff]
        %v736 = vld [vmem:[#allocation2 + $0x38] sm:$0xff]
        %743 = vrot.lane.b32.xlu0 %v731, 110
        %v744 = vpop.permute.xlu0 %743
        %745 = vrot.lane.b32.xlu0 %v732, 110
        %v746 = vpop.permute.xlu0 %745
        %747 = vrot.lane.b32.xlu0 %v733, 110
        %v748 = vpop.permute.xlu0 %747
        %749 = vrot.lane.b32.xlu0 %v734, 110
        %v750 = vpop.permute.xlu0 %749
        %751 = vrot.lane.b32.xlu0 %v735, 110
        %v752 = vpop.permute.xlu0 %751
        %753 = vrot.lane.b32.xlu0 %v736, 110
        %v754 = vpop.permute.xlu0 %753
        %vm755 = vcmask 900096
        %v756 = vsel %vm755, %v744, %v746
        %v757 = vsel %vm755, %v746, %v748
        %v758 = vsel %vm755, %v750, %v752
        %v759 = vsel %vm755, %v752, %v754
        %764 = vst [vmem:[#allocation3 + $0xe0] sm:$0xff] %v756
        %765 = vst [vmem:[#allocation3 + $0xe8] sm:$0xff] %v757
        %766 = vst [vmem:[#allocation3 + $0xf0] sm:$0xff] %v758
        %767 = vst [vmem:[#allocation3 + $0xf8] sm:$0xff] %v759
        %v768 = vld [vmem:[#allocation2 + $0x8] sm:$0xff]
        %v769 = vld [vmem:[#allocation2 + $0x10] sm:$0xff]
        %v770 = vld [vmem:[#allocation2 + $0x18] sm:$0xff]
        %v771 = vld [vmem:[#allocation2 + $0x28] sm:$0xff]
        %v772 = vld [vmem:[#allocation2 + $0x30] sm:$0xff]
        %v773 = vld [vmem:[#allocation2 + $0x38] sm:$0xff]
        %780 = vrot.lane.b32.xlu0 %v768, 109
        %v781 = vpop.permute.xlu0 %780
        %782 = vrot.lane.b32.xlu0 %v769, 109
        %v783 = vpop.permute.xlu0 %782
        %784 = vrot.lane.b32.xlu0 %v770, 109
        %v785 = vpop.permute.xlu0 %784
        %786 = vrot.lane.b32.xlu0 %v771, 109
        %v787 = vpop.permute.xlu0 %786
        %788 = vrot.lane.b32.xlu0 %v772, 109
        %v789 = vpop.permute.xlu0 %788
        %790 = vrot.lane.b32.xlu0 %v773, 109
        %v791 = vpop.permute.xlu0 %790
        %vm792 = vcmask 891904
        %v793 = vsel %vm792, %v781, %v783
        %v794 = vsel %vm792, %v783, %v785
        %v795 = vsel %vm792, %v787, %v789
        %v796 = vsel %vm792, %v789, %v791
        %801 = vst [vmem:[#allocation3 + $0x100] sm:$0xff] %v793
        %802 = vst [vmem:[#allocation3 + $0x108] sm:$0xff] %v794
        %803 = vst [vmem:[#allocation3 + $0x110] sm:$0xff] %v795
        %804 = vst [vmem:[#allocation3 + $0x118] sm:$0xff] %v796
        %v805 = vld [vmem:[%s3] sm:$0xff]
        %v806 = vld [vmem:[%s3 + $0x8] sm:$0xff]
        %v807 = vld [vmem:[#allocation3] sm:$0xff]
        %v808 = vld [vmem:[#allocation3 + $0x8] sm:$0xff]
        %v809 = vld [vmem:[#allocation3 + $0x10] sm:$0xff]
        %v810 = vld [vmem:[#allocation3 + $0x18] sm:$0xff]
        %v811 = vld [vmem:[#allocation3 + $0x20] sm:$0xff]
        %v812 = vld [vmem:[#allocation3 + $0x28] sm:$0xff]
        %v813 = vld [vmem:[#allocation3 + $0x30] sm:$0xff]
        %v814 = vld [vmem:[#allocation3 + $0x38] sm:$0xff]
        %v815 = vld [vmem:[#allocation3 + $0x40] sm:$0xff]
        %v816 = vld [vmem:[#allocation3 + $0x48] sm:$0xff]
        %v817 = vld [vmem:[#allocation3 + $0x50] sm:$0xff]
        %v818 = vld [vmem:[#allocation3 + $0x58] sm:$0xff]
        %v819 = vld [vmem:[#allocation3 + $0x60] sm:$0xff]
        %v820 = vld [vmem:[#allocation3 + $0x68] sm:$0xff]
        %v821 = vld [vmem:[#allocation3 + $0x70] sm:$0xff]
        %v822 = vld [vmem:[#allocation3 + $0x78] sm:$0xff]
        %v823 = vld [vmem:[#allocation3 + $0x80] sm:$0xff]
        %v824 = vld [vmem:[#allocation3 + $0x88] sm:$0xff]
        %v825 = vld [vmem:[#allocation3 + $0x90] sm:$0xff]
        %v826 = vld [vmem:[#allocation3 + $0x98] sm:$0xff]
        %v827 = vld [vmem:[#allocation3 + $0xa0] sm:$0xff]
        %v828 = vld [vmem:[#allocation3 + $0xa8] sm:$0xff]
        %v829 = vld [vmem:[#allocation3 + $0xb0] sm:$0xff]
        %v830 = vld [vmem:[#allocation3 + $0xb8] sm:$0xff]
        %v831 = vld [vmem:[#allocation3 + $0xc0] sm:$0xff]
        %v832 = vld [vmem:[#allocation3 + $0xc8] sm:$0xff]
        %v833 = vld [vmem:[#allocation3 + $0xd0] sm:$0xff]
        %v834 = vld [vmem:[#allocation3 + $0xd8] sm:$0xff]
        %v835 = vld [vmem:[#allocation3 + $0xe0] sm:$0xff]
        %v836 = vld [vmem:[#allocation3 + $0xe8] sm:$0xff]
        %v837 = vld [vmem:[#allocation3 + $0xf0] sm:$0xff]
        %v838 = vld [vmem:[#allocation3 + $0xf8] sm:$0xff]
        %v839 = vld [vmem:[#allocation3 + $0x100] sm:$0xff]
        %v840 = vld [vmem:[#allocation3 + $0x108] sm:$0xff]
        %v841 = vld [vmem:[#allocation3 + $0x110] sm:$0xff]
        %v842 = vld [vmem:[#allocation3 + $0x118] sm:$0xff]
        %v843 = vld [vmem:[%s4] sm:$0xff]
        %845 = vset.pattern.permute.xlu0 0
        %846 = vperm.xlu0 %845, %v843
        %v847 = vpop.permute.xlu0 %846
        %vm849 = vcmask 130048
        %v851 = vsel %vm849, %v806, 0
        %853 = vmatpush.msra.mxu0 %v837
        %854 = vmatpush.msra.mxu0 %v835
        %855 = vmatpush.msra.mxu0 %v833
        %856 = vmatpush.msra.mxu0 %v831
        %857 = vmatpush.msra.mxu0 %v829
        %858 = vmatpush.msra.mxu0 %v827
        %859 = vmatpush.msra.mxu0 %v825
        %860 = vmatpush.msra.mxu0 %v823
        %861 = vmatpush.msra.mxu0 %v821
        %862 = vmatpush.msra.mxu0 %v819
        %863 = vmatpush.msra.mxu0 %v817
        %864 = vmatpush.msra.mxu0 %v815
        %865 = vmatpush.msra.mxu0 %v813
        %866 = vmatpush.msra.mxu0 %v811
        %867 = vmatpush.msra.mxu0 %v809
        %868 = vmatpush.msra.mxu0 %v807
        %869 = vmatmul.f32.gmra.mxu0 %v805
        %v870 = vpop.f32.mrf.mxu0
        %v871 = vadd.f32 %v847, %v870
        %872 = vdwg.mxu0
        %873 = vmatpush.msra.mxu0 0.0
        %874 = vmatpush.msra.mxu0 0.0
        %875 = vmatpush.msra.mxu0 0.0
        %876 = vmatpush.msra.mxu0 0.0
        %877 = vmatpush.msra.mxu0 0.0
        %878 = vmatpush.msra.mxu0 0.0
        %879 = vmatpush.msra.mxu0 0.0
        %880 = vmatpush.msra.mxu0 0.0
        %881 = vmatpush.msra.mxu0 0.0
        %882 = vmatpush.msra.mxu0 0.0
        %883 = vmatpush.msra.mxu0 0.0
        %884 = vmatpush.msra.mxu0 0.0
        %885 = vmatpush.msra.mxu0 0.0
        %886 = vmatpush.msra.mxu0 0.0
        %887 = vmatpush.msra.mxu0 %v841
        %888 = vmatpush.msra.mxu0 %v839
        %889 = vmatmul.f32.gmra.mxu0 %v851
        %v890 = vpop.f32.mrf.mxu0
        %v891 = vadd.f32 %v871, %v890
        %892 = vdwg.mxu0
        %893 = vmatpush.msra.mxu0 %v838
        %894 = vmatpush.msra.mxu0 %v836
        %895 = vmatpush.msra.mxu0 %v834
        %896 = vmatpush.msra.mxu0 %v832
        %897 = vmatpush.msra.mxu0 %v830
        %898 = vmatpush.msra.mxu0 %v828
        %899 = vmatpush.msra.mxu0 %v826
        %900 = vmatpush.msra.mxu0 %v824
        %901 = vmatpush.msra.mxu0 %v822
        %902 = vmatpush.msra.mxu0 %v820
        %903 = vmatpush.msra.mxu0 %v818
        %904 = vmatpush.msra.mxu0 %v816
        %905 = vmatpush.msra.mxu0 %v814
        %906 = vmatpush.msra.mxu0 %v812
        %907 = vmatpush.msra.mxu0 %v810
        %908 = vmatpush.msra.mxu0 %v808
        %909 = vmatmul.f32.gmra.mxu0 %v805
        %v910 = vpop.f32.mrf.mxu0
        %v911 = vadd.f32 %v847, %v910
        %912 = vdwg.mxu0
        %913 = vmatpush.msra.mxu0 0.0
        %914 = vmatpush.msra.mxu0 0.0
        %915 = vmatpush.msra.mxu0 0.0
        %916 = vmatpush.msra.mxu0 0.0
        %917 = vmatpush.msra.mxu0 0.0
        %918 = vmatpush.msra.mxu0 0.0
        %919 = vmatpush.msra.mxu0 0.0
        %920 = vmatpush.msra.mxu0 0.0
        %921 = vmatpush.msra.mxu0 0.0
        %922 = vmatpush.msra.mxu0 0.0
        %923 = vmatpush.msra.mxu0 0.0
        %924 = vmatpush.msra.mxu0 0.0
        %925 = vmatpush.msra.mxu0 0.0
        %926 = vmatpush.msra.mxu0 0.0
        %927 = vmatpush.msra.mxu0 %v842
        %928 = vmatpush.msra.mxu0 %v840
        %929 = vmatmul.f32.gmra.mxu0 %v851
        %v930 = vpop.f32.mrf.mxu0
        %v931 = vadd.f32 %v911, %v930
        %932 = vdwg.mxu0
        %v933 = vld [vmem:[%s5] sm:$0xff]
        %v934 = vmul.f32 %v891, %v891
        %v935 = vmul.f32 %v931, %v931
        %v936 = vld [vmem:[%s6] sm:$0xff]
        %938 = vset.pattern.permute.xlu0 0
        %939 = vperm.xlu0 %938, %v936
        %v940 = vpop.permute.xlu0 %939
        %vm942 = vcmask 64512
        %v944 = vsel %vm942, %v933, 0
        %946 = vmatpush.msra.mxu0 0.0
        %947 = vmatpush.msra.mxu0 0.0
        %948 = vmatpush.msra.mxu0 0.0
        %949 = vmatpush.msra.mxu0 0.0
        %950 = vmatpush.msra.mxu0 0.0
        %951 = vmatpush.msra.mxu0 0.0
        %952 = vmatpush.msra.mxu0 0.0
        %953 = vmatpush.msra.mxu0 0.0
        %954 = vmatpush.msra.mxu0 0.0
        %955 = vmatpush.msra.mxu0 0.0
        %956 = vmatpush.msra.mxu0 0.0
        %957 = vmatpush.msra.mxu0 0.0
        %958 = vmatpush.msra.mxu0 0.0
        %959 = vmatpush.msra.mxu0 0.0
        %960 = vmatpush.msra.mxu0 0.0
        %961 = vmatpush.msra.mxu0 %v934
        %962 = vmatmul.f32.gmra.mxu0 %v944
        %v963 = vpop.f32.mrf.mxu0
        %v964 = vadd.f32 %v940, %v963
        %965 = vdwg.mxu0
        %966 = vmatpush.msra.mxu0 0.0
        %967 = vmatpush.msra.mxu0 0.0
        %968 = vmatpush.msra.mxu0 0.0
        %969 = vmatpush.msra.mxu0 0.0
        %970 = vmatpush.msra.mxu0 0.0
        %971 = vmatpush.msra.mxu0 0.0
        %972 = vmatpush.msra.mxu0 0.0
        %973 = vmatpush.msra.mxu0 0.0
        %974 = vmatpush.msra.mxu0 0.0
        %975 = vmatpush.msra.mxu0 0.0
        %976 = vmatpush.msra.mxu0 0.0
        %977 = vmatpush.msra.mxu0 0.0
        %978 = vmatpush.msra.mxu0 0.0
        %979 = vmatpush.msra.mxu0 0.0
        %980 = vmatpush.msra.mxu0 0.0
        %981 = vmatpush.msra.mxu0 %v935
        %982 = vmatmul.f32.gmra.mxu0 %v944
        %v983 = vpop.f32.mrf.mxu0
        %v984 = vadd.f32 %v940, %v983
        %985 = vdwg.mxu0
        %v986 = vmax.f32 %v964, 1e-10
        %v987 = vmax.f32 %v984, 1e-10
        %v988 = vrsqrt.pop %v986
        %v989 = vmul.f32 %v988, %v986
        %v990 = vmul.f32 %v989, %v988
        %v991 = vmul.f32 0.5, %v990
        %v992 = vsub.f32 1.5, %v991
        %v993 = vmul.f32 %v988, %v992
        %vm994 = vweird.f32 %v986
        %vm995 = vweird.f32 %v988
        %vm996 = vmor %vm994, %vm995
        %v997 = vsel %vm996, %v988, %v993
        %v998 = vrsqrt.pop %v987
        %v999 = vmul.f32 %v998, %v987
        %v1000 = vmul.f32 %v999, %v998
        %v1001 = vmul.f32 0.5, %v1000
        %v1002 = vsub.f32 1.5, %v1001
        %v1003 = vmul.f32 %v998, %v1002
        %vm1004 = vweird.f32 %v987
        %vm1005 = vweird.f32 %v998
        %vm1006 = vmor %vm1004, %vm1005
        %v1007 = vsel %vm1006, %v998, %v1003
        %v1008 = vmul.f32 %v891, %v997
        %v1009 = vmul.f32 %v931, %v1007
        %v1010 = vpack.c.bf16 %v1009, %v1008
        %1011 = vst [vmem:[%s477] sm:$0xff] %v1010
        %s1012 = smul.u32 2, %s18
        %p1013 = scmp.lt.s32.totalorder %s1012, 5
        %s1014 = scalar_select %p1013, %s1012, 5
        %s1015 = smul.addr %s1014, 4
        %s1016 = scalar_lea.vmem %s7, %s1015
        // Predicated region
        $region169: #{_lambda_.8} parent=155 // pred_check
          %p1017 = pneg %p210
        $region170: #{_lambda_.8} parent=155 // pred_check_branch
          %1019 = sbr.rel (%p1017) target = $region172
        $region171: #{_lambda_.8} parent=155 // pred_region
          %s1020 = smul.u32 2, %s18
        $region172: #{_lambda_.8} parent=155 // pred_fallthru
          _
      $region156: #{_lambda_.8} parent=5 // pred_fallthru
        _
      %p1021 = scmp.le.s32.totalorder 2, %s13
      // Predicated region
      $region173: #{_lambda_.8} parent=5 // pred_check
        %p1022 = pneg %p1021
      $region174: #{_lambda_.8} parent=5 // pred_check_branch
        %1024 = sbr.rel (%p1022) target = $region176
      $region175: #{_lambda_.8} parent=5 // pred_region
        %s1025 = ssub.s32 %s13, 2
        // Predicated region
        $region177: #{_lambda_.8} parent=175 // pred_check
          %p1026 = pneg %p216
        $region178: #{_lambda_.8} parent=175 // pred_check_branch
          %1028 = sbr.rel (%p1026) target = $region180
        $region179: #{_lambda_.8} parent=175 // pred_region
          %s1029 = smul.u32 2, %s19
          %p1030 = scmp.lt.s32.totalorder %s1029, 5
          %s1031 = scalar_select %p1030, %s1029, 5
          %s1032 = smul.addr %s1031, 4
          %s1033 = scalar_lea.vmem %s7, %s1032
        $region180: #{_lambda_.8} parent=175 // pred_fallthru
          _
      $region176: #{_lambda_.8} parent=5 // pred_fallthru
        _
    $region6: #{_lambda_.8} parent=1 // loop_footer
      %s17 = sadd.s32 1, %s13
    $region7: #{_lambda_.8} parent=1 // loop_footer_branch
      %12 = sbr.rel target = $region3
    $region8: #{_lambda_.8} parent=1 // loop_exit
      _

// kernel: _lambda_.9
$region0: #{_lambda_.9}
  #allocation0 [shape = 'u32[]', space=smem, size = 0x4, offset = 0x4, fixed_abs, tag = 'smem constant byte address 0x4 - core index']
  #allocation1 [shape = 'u32[72,128]{1,0:T(1,128)}', space=vmem, size = 0x9000, scoped, tag = 'internal scratch']
  #allocation2 [shape = 'f32[32,384]{1,0:T(8,128)}', space=vmem, size = 0xc000, scoped, tag = 'scratch operand']
  #allocation3 [shape = 'f32[288,128]{1,0:T(8,128)}', space=vmem, size = 0x24000, scoped, tag = 'scratch operand']
  %s0 = inlined_call_operand.vmem [shape: bf16[32,512], index: 0, kind: input, shape index: {}, may-alias: {0,1,2}]
  %s1 = inlined_call_operand.vmem [shape: bf16[32,512], index: 1, kind: input, shape index: {}, may-alias: {0,1,2}]
  %s2 = inlined_call_operand.vmem [shape: bf16[32,512], index: 2, kind: input, shape index: {}, may-alias: {0,1,2}]
  %s3 = inlined_call_operand.vmem [shape: f32[8,288], index: 3, kind: input, shape index: {}]
  %s4 = inlined_call_operand.vmem [shape: f32[8,1], index: 4, kind: input, shape index: {}]
  %s5 = inlined_call_operand.vmem [shape: f32[8,8], index: 5, kind: input, shape index: {}]
  %s6 = inlined_call_operand.vmem [shape: f32[8,1], index: 6, kind: input, shape index: {}]
  %s7 = inlined_call_operand.vmem [shape: bf16[8,256], index: 7, kind: output, shape index: {}]
  %s8 = sld [smem:[#allocation0]]
  $region184: #{_lambda_.9} parent=0
    _
  %s10 = ssub.s32 1, %s8
  %s11 = scalar_select 0, %s10, %s8
  $region1: #{_lambda_.9} parent=0
    #allocation4 [shape = 'u8[16384]{0}', space=vmem, size = 0x4000, scoped, tag = 'input window, operand 0']
    #allocation5 [shape = 'u8[16384]{0}', space=vmem, size = 0x4000, scoped, tag = 'input window, operand 1']
    #allocation6 [shape = 'u8[16384]{0}', space=vmem, size = 0x4000, scoped, tag = 'input window, operand 2']
    loop: start=0, step=1, limit=4
    $region2: #{_lambda_.9} parent=1 // loop_pre_header
      _
    $region3: #{_lambda_.9} parent=1 // loop_header
      %s13 = sphi 0, %s17
      %p14 = scmp.ge.s32.totalorder %s13, 4
      %s23 = sphi 0, %s25
      %s26 = sphi 0, %s23
      %s27 = sphi 0, %s26
      %s43 = sphi 0, %s27
      %s51 = sphi 0, %s53
      %s54 = sphi 0, %s51
      %s55 = sphi 0, %s54
      %s71 = sphi 0, %s55
      %s79 = sphi 0, %s81
      %s82 = sphi 0, %s79
      %s83 = sphi 0, %s82
      %s99 = sphi 0, %s83
      %s103 = sphi 0, %s103
      %s105 = sphi 0, %s103
      %s106 = sphi 0, %s105
      %s120 = sphi 0, %s106
      %s124 = sphi 0, %s124
      %s126 = sphi 0, %s124
      %s127 = sphi 0, %s126
      %s141 = sphi 0, %s127
      %s145 = sphi 0, %s145
      %s147 = sphi 0, %s145
      %s148 = sphi 0, %s147
      %s162 = sphi 0, %s148
      %s166 = sphi 0, %s166
      %s168 = sphi 0, %s166
      %s169 = sphi 0, %s168
      %s183 = sphi 0, %s169
      %s189 = sphi 0, %s191
      %s192 = sphi 0, %s189
      %s193 = sphi 0, %s192
      %s209 = sphi 0, %s193
    $region4: #{_lambda_.9} parent=1 // loop_header_branch
      %16 = sbr.rel (%p14) target = $region8
    $region5: #{_lambda_.9} parent=1 // loop_body
      %s18 = ssub.s32 %s13, 1
      %s19 = ssub.s32 %s13, 2
      %s20 = sadd.s32 %s13, 1
      %s21 = ssub.s32 %s13, %s20
      %p22 = scmp.eq.s32.totalorder %s21, 0
      %s24 = sadd.s32 %s23, 1
      %s25 = scalar_select %p22, %s23, %s24
      %p28 = pneg %p22
      %p29 = scmp.eq.s32.totalorder %s13, 1
      %p30 = por %p28, %p29
      %p31 = scmp.ne.s32.totalorder %s23, %s26
      %p32 = scmp.eq.s32.totalorder %s13, 0
      %p33 = por %p31, %p32
      %p34 = scmp.ne.s32.totalorder %s23, %s26
      %p35 = scmp.eq.s32.totalorder %s18, 1
      %p36 = por %p34, %p35
      %p37 = scmp.ne.s32.totalorder %s26, %s27
      %p38 = scmp.eq.s32.totalorder %s18, 0
      %p39 = por %p37, %p38
      %p40 = scmp.ne.s32.totalorder %s26, %s27
      %p41 = scmp.eq.s32.totalorder %s19, 1
      %p42 = por %p40, %p41
      %p44 = scmp.ne.s32.totalorder %s27, %s43
      %p45 = scmp.eq.s32.totalorder %s19, 0
      %p46 = por %p44, %p45
      %s47 = sadd.s32 %s13, 1
      %s48 = sadd.s32 %s20, 1
      %s49 = ssub.s32 %s47, %s48
      %p50 = scmp.eq.s32.totalorder %s49, 0
      %s52 = sadd.s32 %s51, 1
      %s53 = scalar_select %p50, %s51, %s52
      %p56 = pneg %p50
      %p57 = scmp.eq.s32.totalorder %s13, 1
      %p58 = por %p56, %p57
      %p59 = scmp.ne.s32.totalorder %s51, %s54
      %p60 = scmp.eq.s32.totalorder %s13, 0
      %p61 = por %p59, %p60
      %p62 = scmp.ne.s32.totalorder %s51, %s54
      %p63 = scmp.eq.s32.totalorder %s18, 1
      %p64 = por %p62, %p63
      %p65 = scmp.ne.s32.totalorder %s54, %s55
      %p66 = scmp.eq.s32.totalorder %s18, 0
      %p67 = por %p65, %p66
      %p68 = scmp.ne.s32.totalorder %s54, %s55
      %p69 = scmp.eq.s32.totalorder %s19, 1
      %p70 = por %p68, %p69
      %p72 = scmp.ne.s32.totalorder %s55, %s71
      %p73 = scmp.eq.s32.totalorder %s19, 0
      %p74 = por %p72, %p73
      %s75 = sadd.s32 %s13, 2
      %s76 = sadd.s32 %s20, 2
      %s77 = ssub.s32 %s75, %s76
      %p78 = scmp.eq.s32.totalorder %s77, 0
      %s80 = sadd.s32 %s79, 1
      %s81 = scalar_select %p78, %s79, %s80
      %p84 = pneg %p78
      %p85 = scmp.eq.s32.totalorder %s13, 1
      %p86 = por %p84, %p85
      %p87 = scmp.ne.s32.totalorder %s79, %s82
      %p88 = scmp.eq.s32.totalorder %s13, 0
      %p89 = por %p87, %p88
      %p90 = scmp.ne.s32.totalorder %s79, %s82
      %p91 = scmp.eq.s32.totalorder %s18, 1
      %p92 = por %p90, %p91
      %p93 = scmp.ne.s32.totalorder %s82, %s83
      %p94 = scmp.eq.s32.totalorder %s18, 0
      %p95 = por %p93, %p94
      %p96 = scmp.ne.s32.totalorder %s82, %s83
      %p97 = scmp.eq.s32.totalorder %s19, 1
      %p98 = por %p96, %p97
      %p100 = scmp.ne.s32.totalorder %s83, %s99
      %p101 = scmp.eq.s32.totalorder %s19, 0
      %p102 = por %p100, %p101
      %s104 = sadd.s32 %s103, 1
      %p107 = scmp.eq.s32.totalorder %s13, 1
      %p108 = scmp.ne.s32.totalorder %s103, %s105
      %p109 = scmp.eq.s32.totalorder %s13, 0
      %p110 = por %p108, %p109
      %p111 = scmp.ne.s32.totalorder %s103, %s105
      %p112 = scmp.eq.s32.totalorder %s18, 1
      %p113 = por %p111, %p112
      %p114 = scmp.ne.s32.totalorder %s105, %s106
      %p115 = scmp.eq.s32.totalorder %s18, 0
      %p116 = por %p114, %p115
      %p117 = scmp.ne.s32.totalorder %s105, %s106
      %p118 = scmp.eq.s32.totalorder %s19, 1
      %p119 = por %p117, %p118
      %p121 = scmp.ne.s32.totalorder %s106, %s120
      %p122 = scmp.eq.s32.totalorder %s19, 0
      %p123 = por %p121, %p122
      %s125 = sadd.s32 %s124, 1
      %p128 = scmp.eq.s32.totalorder %s13, 1
      %p129 = scmp.ne.s32.totalorder %s124, %s126
      %p130 = scmp.eq.s32.totalorder %s13, 0
      %p131 = por %p129, %p130
      %p132 = scmp.ne.s32.totalorder %s124, %s126
      %p133 = scmp.eq.s32.totalorder %s18, 1
      %p134 = por %p132, %p133
      %p135 = scmp.ne.s32.totalorder %s126, %s127
      %p136 = scmp.eq.s32.totalorder %s18, 0
      %p137 = por %p135, %p136
      %p138 = scmp.ne.s32.totalorder %s126, %s127
      %p139 = scmp.eq.s32.totalorder %s19, 1
      %p140 = por %p138, %p139
      %p142 = scmp.ne.s32.totalorder %s127, %s141
      %p143 = scmp.eq.s32.totalorder %s19, 0
      %p144 = por %p142, %p143
      %s146 = sadd.s32 %s145, 1
      %p149 = scmp.eq.s32.totalorder %s13, 1
      %p150 = scmp.ne.s32.totalorder %s145, %s147
      %p151 = scmp.eq.s32.totalorder %s13, 0
      %p152 = por %p150, %p151
      %p153 = scmp.ne.s32.totalorder %s145, %s147
      %p154 = scmp.eq.s32.totalorder %s18, 1
      %p155 = por %p153, %p154
      %p156 = scmp.ne.s32.totalorder %s147, %s148
      %p157 = scmp.eq.s32.totalorder %s18, 0
      %p158 = por %p156, %p157
      %p159 = scmp.ne.s32.totalorder %s147, %s148
      %p160 = scmp.eq.s32.totalorder %s19, 1
      %p161 = por %p159, %p160
      %p163 = scmp.ne.s32.totalorder %s148, %s162
      %p164 = scmp.eq.s32.totalorder %s19, 0
      %p165 = por %p163, %p164
      %s167 = sadd.s32 %s166, 1
      %p170 = scmp.eq.s32.totalorder %s13, 1
      %p171 = scmp.ne.s32.totalorder %s166, %s168
      %p172 = scmp.eq.s32.totalorder %s13, 0
      %p173 = por %p171, %p172
      %p174 = scmp.ne.s32.totalorder %s166, %s168
      %p175 = scmp.eq.s32.totalorder %s18, 1
      %p176 = por %p174, %p175
      %p177 = scmp.ne.s32.totalorder %s168, %s169
      %p178 = scmp.eq.s32.totalorder %s18, 0
      %p179 = por %p177, %p178
      %p180 = scmp.ne.s32.totalorder %s168, %s169
      %p181 = scmp.eq.s32.totalorder %s19, 1
      %p182 = por %p180, %p181
      %p184 = scmp.ne.s32.totalorder %s169, %s183
      %p185 = scmp.eq.s32.totalorder %s19, 0
      %p186 = por %p184, %p185
      %s187 = ssub.s32 %s13, %s20
      %p188 = scmp.eq.s32.totalorder %s187, 0
      %s190 = sadd.s32 %s189, 1
      %s191 = scalar_select %p188, %s189, %s190
      %p194 = pneg %p188
      %p195 = scmp.eq.s32.totalorder %s13, 1
      %p196 = por %p194, %p195
      %p197 = scmp.ne.s32.totalorder %s189, %s192
      %p198 = scmp.eq.s32.totalorder %s13, 0
      %p199 = por %p197, %p198
      %p200 = scmp.ne.s32.totalorder %s189, %s192
      %p201 = scmp.eq.s32.totalorder %s18, 1
      %p202 = por %p200, %p201
      %p203 = scmp.ne.s32.totalorder %s192, %s193
      %p204 = scmp.eq.s32.totalorder %s18, 0
      %p205 = por %p203, %p204
      %p206 = scmp.ne.s32.totalorder %s192, %s193
      %p207 = scmp.eq.s32.totalorder %s19, 1
      %p208 = por %p206, %p207
      %p210 = scmp.ne.s32.totalorder %s193, %s209
      %p211 = scmp.eq.s32.totalorder %s19, 0
      %p212 = por %p210, %p211
      %p213 = scmp.le.s32.totalorder 1, %s13
      %p214 = scmp.lt.s32.totalorder %s13, 3
      %p215 = pnand %p213, %p214
      %p216 = pneg %p215
      // Predicated region
      $region9: #{_lambda_.9} parent=5 // pred_check
        _
      $region10: #{_lambda_.9} parent=5 // pred_check_branch
        %218 = sbr.rel (%p215) target = $region12
      $region11: #{_lambda_.9} parent=5 // pred_region
        %s219 = ssub.s32 %s13, 1
        // Predicated region
        $region13: #{_lambda_.9} parent=11 // pred_check
          %p220 = pneg %p116
        $region14: #{_lambda_.9} parent=11 // pred_check_branch
          %222 = sbr.rel (%p220) target = $region16
        $region15: #{_lambda_.9} parent=11 // pred_region
          _
        $region16: #{_lambda_.9} parent=11 // pred_fallthru
          _
        // Predicated region
        $region17: #{_lambda_.9} parent=11 // pred_check
          %p223 = pneg %p137
        $region18: #{_lambda_.9} parent=11 // pred_check_branch
          %225 = sbr.rel (%p223) target = $region20
        $region19: #{_lambda_.9} parent=11 // pred_region
          _
        $region20: #{_lambda_.9} parent=11 // pred_fallthru
          _
        // Predicated region
        $region21: #{_lambda_.9} parent=11 // pred_check
          %p226 = pneg %p158
        $region22: #{_lambda_.9} parent=11 // pred_check_branch
          %228 = sbr.rel (%p226) target = $region24
        $region23: #{_lambda_.9} parent=11 // pred_region
          _
        $region24: #{_lambda_.9} parent=11 // pred_fallthru
          _
        // Predicated region
        $region25: #{_lambda_.9} parent=11 // pred_check
          %p229 = pneg %p179
        $region26: #{_lambda_.9} parent=11 // pred_check_branch
          %231 = sbr.rel (%p229) target = $region28
        $region27: #{_lambda_.9} parent=11 // pred_region
          _
        $region28: #{_lambda_.9} parent=11 // pred_fallthru
          _
      $region12: #{_lambda_.9} parent=5 // pred_fallthru
        _
      %p232 = scmp.lt.s32.totalorder %s13, 2
      // Predicated region
      $region29: #{_lambda_.9} parent=5 // pred_check
        %p233 = pneg %p232
      $region30: #{_lambda_.9} parent=5 // pred_check_branch
        %235 = sbr.rel (%p233) target = $region32
      $region31: #{_lambda_.9} parent=5 // pred_region
        // Predicated region
        $region33: #{_lambda_.9} parent=31 // pred_check
          %p236 = pneg %p33
        $region34: #{_lambda_.9} parent=31 // pred_check_branch
          %238 = sbr.rel (%p236) target = $region36
        $region35: #{_lambda_.9} parent=31 // pred_region
          %s239 = sand.u32 %s23, 1
          %s240 = sand.u32 %s23, 1
          %s241 = smul.addr %s240, 16
          %s242 = scalar_lea.vmem [#allocation4], %s241
          %s243 = smul.addr %s13, 4
          %s244 = scalar_lea.vmem %s0, %s243
          // Predicated region
          $region37: #{_lambda_.9} parent=35 // pred_check
            _
          $region38: #{_lambda_.9} parent=35 // pred_check_branch
            %246 = sbr.rel (0) target = $region40
          $region39: #{_lambda_.9} parent=35 // pred_region
            // Predicated region
            $region41: #{_lambda_.9} parent=39 // pred_check
              _
            $region42: #{_lambda_.9} parent=39 // pred_check_branch
              %248 = sbr.rel target = $region44
            $region43: #{_lambda_.9} parent=39 // pred_region
              // Predicated region
              $region56: #{_lambda_.9} parent=43 // pred_check
                _
              $region57: #{_lambda_.9} parent=43 // pred_check_branch
                %270 = sbr.rel (0) target = $region59
              $region58: #{_lambda_.9} parent=43 // pred_region
                loop: start=0, step=1, limit=1
                $region60: #{_lambda_.9} parent=58 // loop_pre_header
                  _
                $region61: #{_lambda_.9} parent=58 // loop_header
                  %s272 = sphi 0, %s276
                  %p273 = scmp.ge.s32.totalorder %s272, 1
                  %s277 = sphi %s244, %s244
                  %s278 = sphi %s242, %s242
                $region62: #{_lambda_.9} parent=58 // loop_header_branch
                  %275 = sbr.rel (%p273) target = $region66
                $region63: #{_lambda_.9} parent=58 // loop_body
                  _
                $region64: #{_lambda_.9} parent=58 // loop_footer
                  %s276 = sadd.s32 1, %s272
                $region65: #{_lambda_.9} parent=58 // loop_footer_branch
                  %271 = sbr.rel target = $region61
                $region66: #{_lambda_.9} parent=58 // loop_exit
                  _
                %s280 = ssub.s32 16, 1
                loop: start=0, step=1, limit=1
                $region67: #{_lambda_.9} parent=58 // loop_pre_header
                  _
                $region68: #{_lambda_.9} parent=58 // loop_header
                  %s282 = sphi 0, %s286
                  %p283 = scmp.ge.s32.totalorder %s282, 1
                  %s287 = sphi %s244, %s244
                  %s288 = sphi %s242, %s242
                $region69: #{_lambda_.9} parent=58 // loop_header_branch
                  %285 = sbr.rel (%p283) target = $region73
                $region70: #{_lambda_.9} parent=58 // loop_body
                  %v289 = vld [vmem:[%s287] sm:%s280]
                  %290 = vst [vmem:[%s288] sm:%s280] %v289
                  %v291 = vld [vmem:[%s287 + $0x10] sm:%s280]
                  %292 = vst [vmem:[%s288 + $0x4] sm:%s280] %v291
                  %v293 = vld [vmem:[%s287 + $0x20] sm:%s280]
                  %294 = vst [vmem:[%s288 + $0x8] sm:%s280] %v293
                  %v295 = vld [vmem:[%s287 + $0x30] sm:%s280]
                  %296 = vst [vmem:[%s288 + $0xc] sm:%s280] %v295
                $region71: #{_lambda_.9} parent=58 // loop_footer
                  %s286 = sadd.s32 1, %s282
                $region72: #{_lambda_.9} parent=58 // loop_footer_branch
                  %281 = sbr.rel target = $region68
                $region73: #{_lambda_.9} parent=58 // loop_exit
                  _
              $region59: #{_lambda_.9} parent=43 // pred_fallthru
                _
            $region44: #{_lambda_.9} parent=39 // pred_fallthru
              _
            // Predicated region
            $region45: #{_lambda_.9} parent=39 // pred_check
              _
            $region46: #{_lambda_.9} parent=39 // pred_check_branch
              %250 = sbr.rel (0) target = $region48
            $region47: #{_lambda_.9} parent=39 // pred_region
              %s252 = ssub.s32 16, 1
              loop: start=0, step=1, limit=1
              $region49: #{_lambda_.9} parent=47 // loop_pre_header
                _
              $region50: #{_lambda_.9} parent=47 // loop_header
                %s254 = sphi 0, %s258
                %p255 = scmp.ge.s32.totalorder %s254, 1
                %s259 = sphi %s244, %s244
                %s260 = sphi %s242, %s242
              $region51: #{_lambda_.9} parent=47 // loop_header_branch
                %257 = sbr.rel (%p255) target = $region55
              $region52: #{_lambda_.9} parent=47 // loop_body
                %v261 = vld [vmem:[%s259] sm:%s252]
                %262 = vst [vmem:[%s260] sm:%s252] %v261
                %v263 = vld [vmem:[%s259 + $0x10] sm:%s252]
                %264 = vst [vmem:[%s260 + $0x4] sm:%s252] %v263
                %v265 = vld [vmem:[%s259 + $0x20] sm:%s252]
                %266 = vst [vmem:[%s260 + $0x8] sm:%s252] %v265
                %v267 = vld [vmem:[%s259 + $0x30] sm:%s252]
                %268 = vst [vmem:[%s260 + $0xc] sm:%s252] %v267
              $region53: #{_lambda_.9} parent=47 // loop_footer
                %s258 = sadd.s32 1, %s254
              $region54: #{_lambda_.9} parent=47 // loop_footer_branch
                %253 = sbr.rel target = $region50
              $region55: #{_lambda_.9} parent=47 // loop_exit
                _
            $region48: #{_lambda_.9} parent=39 // pred_fallthru
              _
          $region40: #{_lambda_.9} parent=35 // pred_fallthru
            _
          %297 = vnop
        $region36: #{_lambda_.9} parent=31 // pred_fallthru
          _
        // Predicated region
        $region74: #{_lambda_.9} parent=31 // pred_check
          %p298 = pneg %p61
        $region75: #{_lambda_.9} parent=31 // pred_check_branch
          %300 = sbr.rel (%p298) target = $region77
        $region76: #{_lambda_.9} parent=31 // pred_region
          %s301 = sand.u32 %s51, 1
          %s302 = sand.u32 %s51, 1
          %s303 = smul.addr %s302, 16
          %s304 = scalar_lea.vmem [#allocation5], %s303
          %s305 = sadd.s32 %s13, 1
          %s306 = smul.addr %s305, 4
          %s307 = scalar_lea.vmem %s1, %s306
          // Predicated region
          $region78: #{_lambda_.9} parent=76 // pred_check
            _
          $region79: #{_lambda_.9} parent=76 // pred_check_branch
            %309 = sbr.rel (0) target = $region81
          $region80: #{_lambda_.9} parent=76 // pred_region
            // Predicated region
            $region82: #{_lambda_.9} parent=80 // pred_check
              _
            $region83: #{_lambda_.9} parent=80 // pred_check_branch
              %311 = sbr.rel target = $region85
            $region84: #{_lambda_.9} parent=80 // pred_region
              // Predicated region
              $region97: #{_lambda_.9} parent=84 // pred_check
                _
              $region98: #{_lambda_.9} parent=84 // pred_check_branch
                %333 = sbr.rel (0) target = $region100
              $region99: #{_lambda_.9} parent=84 // pred_region
                loop: start=0, step=1, limit=1
                $region101: #{_lambda_.9} parent=99 // loop_pre_header
                  _
                $region102: #{_lambda_.9} parent=99 // loop_header
                  %s335 = sphi 0, %s339
                  %p336 = scmp.ge.s32.totalorder %s335, 1
                  %s340 = sphi %s307, %s307
                  %s341 = sphi %s304, %s304
                $region103: #{_lambda_.9} parent=99 // loop_header_branch
                  %338 = sbr.rel (%p336) target = $region107
                $region104: #{_lambda_.9} parent=99 // loop_body
                  _
                $region105: #{_lambda_.9} parent=99 // loop_footer
                  %s339 = sadd.s32 1, %s335
                $region106: #{_lambda_.9} parent=99 // loop_footer_branch
                  %334 = sbr.rel target = $region102
                $region107: #{_lambda_.9} parent=99 // loop_exit
                  _
                %s343 = ssub.s32 16, 1
                loop: start=0, step=1, limit=1
                $region108: #{_lambda_.9} parent=99 // loop_pre_header
                  _
                $region109: #{_lambda_.9} parent=99 // loop_header
                  %s345 = sphi 0, %s349
                  %p346 = scmp.ge.s32.totalorder %s345, 1
                  %s350 = sphi %s307, %s307
                  %s351 = sphi %s304, %s304
                $region110: #{_lambda_.9} parent=99 // loop_header_branch
                  %348 = sbr.rel (%p346) target = $region114
                $region111: #{_lambda_.9} parent=99 // loop_body
                  %v352 = vld [vmem:[%s350] sm:%s343]
                  %353 = vst [vmem:[%s351] sm:%s343] %v352
                  %v354 = vld [vmem:[%s350 + $0x10] sm:%s343]
                  %355 = vst [vmem:[%s351 + $0x4] sm:%s343] %v354
                  %v356 = vld [vmem:[%s350 + $0x20] sm:%s343]
                  %357 = vst [vmem:[%s351 + $0x8] sm:%s343] %v356
                  %v358 = vld [vmem:[%s350 + $0x30] sm:%s343]
                  %359 = vst [vmem:[%s351 + $0xc] sm:%s343] %v358
                $region112: #{_lambda_.9} parent=99 // loop_footer
                  %s349 = sadd.s32 1, %s345
                $region113: #{_lambda_.9} parent=99 // loop_footer_branch
                  %344 = sbr.rel target = $region109
                $region114: #{_lambda_.9} parent=99 // loop_exit
                  _
              $region100: #{_lambda_.9} parent=84 // pred_fallthru
                _
            $region85: #{_lambda_.9} parent=80 // pred_fallthru
              _
            // Predicated region
            $region86: #{_lambda_.9} parent=80 // pred_check
              _
            $region87: #{_lambda_.9} parent=80 // pred_check_branch
              %313 = sbr.rel (0) target = $region89
            $region88: #{_lambda_.9} parent=80 // pred_region
              %s315 = ssub.s32 16, 1
              loop: start=0, step=1, limit=1
              $region90: #{_lambda_.9} parent=88 // loop_pre_header
                _
              $region91: #{_lambda_.9} parent=88 // loop_header
                %s317 = sphi 0, %s321
                %p318 = scmp.ge.s32.totalorder %s317, 1
                %s322 = sphi %s307, %s307
                %s323 = sphi %s304, %s304
              $region92: #{_lambda_.9} parent=88 // loop_header_branch
                %320 = sbr.rel (%p318) target = $region96
              $region93: #{_lambda_.9} parent=88 // loop_body
                %v324 = vld [vmem:[%s322] sm:%s315]
                %325 = vst [vmem:[%s323] sm:%s315] %v324
                %v326 = vld [vmem:[%s322 + $0x10] sm:%s315]
                %327 = vst [vmem:[%s323 + $0x4] sm:%s315] %v326
                %v328 = vld [vmem:[%s322 + $0x20] sm:%s315]
                %329 = vst [vmem:[%s323 + $0x8] sm:%s315] %v328
                %v330 = vld [vmem:[%s322 + $0x30] sm:%s315]
                %331 = vst [vmem:[%s323 + $0xc] sm:%s315] %v330
              $region94: #{_lambda_.9} parent=88 // loop_footer
                %s321 = sadd.s32 1, %s317
              $region95: #{_lambda_.9} parent=88 // loop_footer_branch
                %316 = sbr.rel target = $region91
              $region96: #{_lambda_.9} parent=88 // loop_exit
                _
            $region89: #{_lambda_.9} parent=80 // pred_fallthru
              _
          $region81: #{_lambda_.9} parent=76 // pred_fallthru
            _
          %360 = vnop
        $region77: #{_lambda_.9} parent=31 // pred_fallthru
          _
        // Predicated region
        $region115: #{_lambda_.9} parent=31 // pred_check
          %p361 = pneg %p89
        $region116: #{_lambda_.9} parent=31 // pred_check_branch
          %363 = sbr.rel (%p361) target = $region118
        $region117: #{_lambda_.9} parent=31 // pred_region
          %s364 = sand.u32 %s79, 1
          %s365 = sand.u32 %s79, 1
          %s366 = smul.addr %s365, 16
          %s367 = scalar_lea.vmem [#allocation6], %s366
          %s368 = sadd.s32 %s13, 2
          %s369 = smul.addr %s368, 4
          %s370 = scalar_lea.vmem %s2, %s369
          // Predicated region
          $region119: #{_lambda_.9} parent=117 // pred_check
            _
          $region120: #{_lambda_.9} parent=117 // pred_check_branch
            %372 = sbr.rel (0) target = $region122
          $region121: #{_lambda_.9} parent=117 // pred_region
            // Predicated region
            $region123: #{_lambda_.9} parent=121 // pred_check
              _
            $region124: #{_lambda_.9} parent=121 // pred_check_branch
              %374 = sbr.rel target = $region126
            $region125: #{_lambda_.9} parent=121 // pred_region
              // Predicated region
              $region138: #{_lambda_.9} parent=125 // pred_check
                _
              $region139: #{_lambda_.9} parent=125 // pred_check_branch
                %396 = sbr.rel (0) target = $region141
              $region140: #{_lambda_.9} parent=125 // pred_region
                loop: start=0, step=1, limit=1
                $region142: #{_lambda_.9} parent=140 // loop_pre_header
                  _
                $region143: #{_lambda_.9} parent=140 // loop_header
                  %s398 = sphi 0, %s402
                  %p399 = scmp.ge.s32.totalorder %s398, 1
                  %s403 = sphi %s370, %s370
                  %s404 = sphi %s367, %s367
                $region144: #{_lambda_.9} parent=140 // loop_header_branch
                  %401 = sbr.rel (%p399) target = $region148
                $region145: #{_lambda_.9} parent=140 // loop_body
                  _
                $region146: #{_lambda_.9} parent=140 // loop_footer
                  %s402 = sadd.s32 1, %s398
                $region147: #{_lambda_.9} parent=140 // loop_footer_branch
                  %397 = sbr.rel target = $region143
                $region148: #{_lambda_.9} parent=140 // loop_exit
                  _
                %s406 = ssub.s32 16, 1
                loop: start=0, step=1, limit=1
                $region149: #{_lambda_.9} parent=140 // loop_pre_header
                  _
                $region150: #{_lambda_.9} parent=140 // loop_header
                  %s408 = sphi 0, %s412
                  %p409 = scmp.ge.s32.totalorder %s408, 1
                  %s413 = sphi %s370, %s370
                  %s414 = sphi %s367, %s367
                $region151: #{_lambda_.9} parent=140 // loop_header_branch
                  %411 = sbr.rel (%p409) target = $region155
                $region152: #{_lambda_.9} parent=140 // loop_body
                  %v415 = vld [vmem:[%s413] sm:%s406]
                  %416 = vst [vmem:[%s414] sm:%s406] %v415
                  %v417 = vld [vmem:[%s413 + $0x10] sm:%s406]
                  %418 = vst [vmem:[%s414 + $0x4] sm:%s406] %v417
                  %v419 = vld [vmem:[%s413 + $0x20] sm:%s406]
                  %420 = vst [vmem:[%s414 + $0x8] sm:%s406] %v419
                  %v421 = vld [vmem:[%s413 + $0x30] sm:%s406]
                  %422 = vst [vmem:[%s414 + $0xc] sm:%s406] %v421
                $region153: #{_lambda_.9} parent=140 // loop_footer
                  %s412 = sadd.s32 1, %s408
                $region154: #{_lambda_.9} parent=140 // loop_footer_branch
                  %407 = sbr.rel target = $region150
                $region155: #{_lambda_.9} parent=140 // loop_exit
                  _
              $region141: #{_lambda_.9} parent=125 // pred_fallthru
                _
            $region126: #{_lambda_.9} parent=121 // pred_fallthru
              _
            // Predicated region
            $region127: #{_lambda_.9} parent=121 // pred_check
              _
            $region128: #{_lambda_.9} parent=121 // pred_check_branch
              %376 = sbr.rel (0) target = $region130
            $region129: #{_lambda_.9} parent=121 // pred_region
              %s378 = ssub.s32 16, 1
              loop: start=0, step=1, limit=1
              $region131: #{_lambda_.9} parent=129 // loop_pre_header
                _
              $region132: #{_lambda_.9} parent=129 // loop_header
                %s380 = sphi 0, %s384
                %p381 = scmp.ge.s32.totalorder %s380, 1
                %s385 = sphi %s370, %s370
                %s386 = sphi %s367, %s367
              $region133: #{_lambda_.9} parent=129 // loop_header_branch
                %383 = sbr.rel (%p381) target = $region137
              $region134: #{_lambda_.9} parent=129 // loop_body
                %v387 = vld [vmem:[%s385] sm:%s378]
                %388 = vst [vmem:[%s386] sm:%s378] %v387
                %v389 = vld [vmem:[%s385 + $0x10] sm:%s378]
                %390 = vst [vmem:[%s386 + $0x4] sm:%s378] %v389
                %v391 = vld [vmem:[%s385 + $0x20] sm:%s378]
                %392 = vst [vmem:[%s386 + $0x8] sm:%s378] %v391
                %v393 = vld [vmem:[%s385 + $0x30] sm:%s378]
                %394 = vst [vmem:[%s386 + $0xc] sm:%s378] %v393
              $region135: #{_lambda_.9} parent=129 // loop_footer
                %s384 = sadd.s32 1, %s380
              $region136: #{_lambda_.9} parent=129 // loop_footer_branch
                %379 = sbr.rel target = $region132
              $region137: #{_lambda_.9} parent=129 // loop_exit
                _
            $region130: #{_lambda_.9} parent=121 // pred_fallthru
              _
          $region122: #{_lambda_.9} parent=117 // pred_fallthru
            _
          %423 = vnop
        $region118: #{_lambda_.9} parent=31 // pred_fallthru
          _
      $region32: #{_lambda_.9} parent=5 // pred_fallthru
        _
      %p424 = scmp.le.s32.totalorder 1, %s13
      %p425 = scmp.lt.s32.totalorder %s13, 3
      %p426 = pnand %p424, %p425
      %p427 = pneg %p426
      // Predicated region
      $region156: #{_lambda_.9} parent=5 // pred_check
        _
      $region157: #{_lambda_.9} parent=5 // pred_check_branch
        %429 = sbr.rel (%p426) target = $region159
      $region158: #{_lambda_.9} parent=5 // pred_region
        %s430 = ssub.s32 %s13, 1
        %s431 = sand.u32 %s26, 1
        %s432 = sand.u32 %s26, 1
        %s433 = smul.addr %s432, 16
        %s434 = scalar_lea.vmem [#allocation4], %s433
        // Predicated region
        $region160: #{_lambda_.9} parent=158 // pred_check
          %p435 = pneg %p39
        $region161: #{_lambda_.9} parent=158 // pred_check_branch
          %437 = sbr.rel (%p435) target = $region163
        $region162: #{_lambda_.9} parent=158 // pred_region
          _
        $region163: #{_lambda_.9} parent=158 // pred_fallthru
          _
        %s438 = sand.u32 %s54, 1
        %s439 = sand.u32 %s54, 1
        %s440 = smul.addr %s439, 16
        %s441 = scalar_lea.vmem [#allocation5], %s440
        // Predicated region
        $region164: #{_lambda_.9} parent=158 // pred_check
          %p442 = pneg %p67
        $region165: #{_lambda_.9} parent=158 // pred_check_branch
          %444 = sbr.rel (%p442) target = $region167
        $region166: #{_lambda_.9} parent=158 // pred_region
          _
        $region167: #{_lambda_.9} parent=158 // pred_fallthru
          _
        %s445 = sand.u32 %s82, 1
        %s446 = sand.u32 %s82, 1
        %s447 = smul.addr %s446, 16
        %s448 = scalar_lea.vmem [#allocation6], %s447
        // Predicated region
        $region168: #{_lambda_.9} parent=158 // pred_check
          %p449 = pneg %p95
        $region169: #{_lambda_.9} parent=158 // pred_check_branch
          %451 = sbr.rel (%p449) target = $region171
        $region170: #{_lambda_.9} parent=158 // pred_region
          _
        $region171: #{_lambda_.9} parent=158 // pred_fallthru
          _
        %s452 = sand.u32 %s26, 1
        %s453 = sand.u32 %s26, 1
        %s454 = smul.addr %s453, 16
        %s455 = scalar_lea.vmem [#allocation4], %s454
        %p456 = pneg %p39
        %p457 = pneg %p36
        %s458 = sand.u32 %s54, 1
        %s459 = sand.u32 %s54, 1
        %s460 = smul.addr %s459, 16
        %s461 = scalar_lea.vmem [#allocation5], %s460
        %p462 = pneg %p67
        %p463 = pneg %p64
        %s464 = sand.u32 %s82, 1
        %s465 = sand.u32 %s82, 1
        %s466 = smul.addr %s465, 16
        %s467 = scalar_lea.vmem [#allocation6], %s466
        %p468 = pneg %p95
        %p469 = pneg %p92
        %p470 = pneg %p116
        %p471 = pneg %p113
        %p472 = pneg %p137
        %p473 = pneg %p134
        %p474 = pneg %p158
        %p475 = pneg %p155
        %p476 = pneg %p179
        %p477 = pneg %p176
        %p478 = pneg %p205
        %p479 = pneg %p202
        %p480 = scmp.lt.s32.totalorder %s18, 1
        %s481 = scalar_select %p480, %s18, 1
        %s482 = smul.addr %s481, 4
        %s483 = scalar_lea.vmem %s7, %s482
        %s484 = sadd.s32 %s18, 1
        %s485 = sadd.s32 %s18, 2
        %p486 = scmp.lt.s32.totalorder %s18, 1
        %s487 = scalar_select %p486, %s18, 1
        %s488 = smul.addr %s487, 4
        %s489 = scalar_lea.vmem %s7, %s488
        %v490 = vld [vmem:[%s434] sm:$0xf]
        %v491 = vld [vmem:[%s434 + $0x4] sm:$0xf]
        %v492 = vld [vmem:[%s434 + $0x8] sm:$0xf]
        %v493 = vld [vmem:[%s434 + $0xc] sm:$0xf]
        %v494 = vunpack.c.l.bf16 %v490
        %v495 = vunpack.c.l.bf16 %v491
        %v496 = vunpack.c.l.bf16 %v492
        %v497 = vunpack.c.l.bf16 %v493
        %498 = vst [vmem:[#allocation2] sm:$0xff] %v494
        %499 = vst [vmem:[#allocation2 + $0x18] sm:$0xff] %v495
        %500 = vst [vmem:[#allocation2 + $0x30] sm:$0xff] %v496
        %501 = vst [vmem:[#allocation2 + $0x48] sm:$0xff] %v497
        %v502 = vld [vmem:[%s441] sm:$0xf]
        %v503 = vld [vmem:[%s441 + $0x4] sm:$0xf]
        %v504 = vld [vmem:[%s441 + $0x8] sm:$0xf]
        %v505 = vld [vmem:[%s441 + $0xc] sm:$0xf]
        %v506 = vunpack.c.l.bf16 %v502
        %v507 = vunpack.c.l.bf16 %v503
        %v508 = vunpack.c.l.bf16 %v504
        %v509 = vunpack.c.l.bf16 %v505
        %510 = vst [vmem:[#allocation2 + $0x8] sm:$0xff] %v506
        %511 = vst [vmem:[#allocation2 + $0x20] sm:$0xff] %v507
        %512 = vst [vmem:[#allocation2 + $0x38] sm:$0xff] %v508
        %513 = vst [vmem:[#allocation2 + $0x50] sm:$0xff] %v509
        %v514 = vld [vmem:[%s448] sm:$0xf]
        %v515 = vld [vmem:[%s448 + $0x4] sm:$0xf]
        %v516 = vld [vmem:[%s448 + $0x8] sm:$0xf]
        %v517 = vld [vmem:[%s448 + $0xc] sm:$0xf]
        %v518 = vunpack.c.l.bf16 %v514
        %v519 = vunpack.c.l.bf16 %v515
        %v520 = vunpack.c.l.bf16 %v516
        %v521 = vunpack.c.l.bf16 %v517
        %522 = vst [vmem:[#allocation2 + $0x10] sm:$0xff] %v518
        %523 = vst [vmem:[#allocation2 + $0x28] sm:$0xff] %v519
        %524 = vst [vmem:[#allocation2 + $0x40] sm:$0xff] %v520
        %525 = vst [vmem:[#allocation2 + $0x58] sm:$0xff] %v521
        %v526 = vld [vmem:[#allocation2] sm:$0xff]
        %v527 = vld [vmem:[#allocation2 + $0x8] sm:$0xff]
        %v528 = vld [vmem:[#allocation2 + $0x18] sm:$0xff]
        %v529 = vld [vmem:[#allocation2 + $0x20] sm:$0xff]
        %v530 = vld [vmem:[#allocation2 + $0x30] sm:$0xff]
        %v531 = vld [vmem:[#allocation2 + $0x38] sm:$0xff]
        %v532 = vld [vmem:[#allocation2 + $0x48] sm:$0xff]
        %v533 = vld [vmem:[#allocation2 + $0x50] sm:$0xff]
        %542 = vrot.lane.b32.xlu0 %v526, 11
        %v543 = vpop.permute.xlu0 %542
        %544 = vrot.lane.b32.xlu0 %v527, 11
        %v545 = vpop.permute.xlu0 %544
        %546 = vrot.lane.b32.xlu0 %v528, 11
        %v547 = vpop.permute.xlu0 %546
        %548 = vrot.lane.b32.xlu0 %v529, 11
        %v549 = vpop.permute.xlu0 %548
        %550 = vrot.lane.b32.xlu0 %v530, 11
        %v551 = vpop.permute.xlu0 %550
        %552 = vrot.lane.b32.xlu0 %v531, 11
        %v553 = vpop.permute.xlu0 %552
        %554 = vrot.lane.b32.xlu0 %v532, 11
        %v555 = vpop.permute.xlu0 %554
        %556 = vrot.lane.b32.xlu0 %v533, 11
        %v557 = vpop.permute.xlu0 %556
        %vm558 = vcmask 89088
        %v559 = vsel %vm558, %v543, %v545
        %v560 = vsel %vm558, %v547, %v549
        %v561 = vsel %vm558, %v551, %v553
        %v562 = vsel %vm558, %v555, %v557
        %567 = vst [vmem:[#allocation3] sm:$0xff] %v559
        %568 = vst [vmem:[#allocation3 + $0x8] sm:$0xff] %v560
        %569 = vst [vmem:[#allocation3 + $0x10] sm:$0xff] %v561
        %570 = vst [vmem:[#allocation3 + $0x18] sm:$0xff] %v562
        %v571 = vld [vmem:[#allocation2] sm:$0xff]
        %v572 = vld [vmem:[#allocation2 + $0x8] sm:$0xff]
        %v573 = vld [vmem:[#allocation2 + $0x18] sm:$0xff]
        %v574 = vld [vmem:[#allocation2 + $0x20] sm:$0xff]
        %v575 = vld [vmem:[#allocation2 + $0x30] sm:$0xff]
        %v576 = vld [vmem:[#allocation2 + $0x38] sm:$0xff]
        %v577 = vld [vmem:[#allocation2 + $0x48] sm:$0xff]
        %v578 = vld [vmem:[#allocation2 + $0x50] sm:$0xff]
        %587 = vrot.lane.b32.xlu0 %v571, 10
        %v588 = vpop.permute.xlu0 %587
        %589 = vrot.lane.b32.xlu0 %v572, 10
        %v590 = vpop.permute.xlu0 %589
        %591 = vrot.lane.b32.xlu0 %v573, 10
        %v592 = vpop.permute.xlu0 %591
        %593 = vrot.lane.b32.xlu0 %v574, 10
        %v594 = vpop.permute.xlu0 %593
        %595 = vrot.lane.b32.xlu0 %v575, 10
        %v596 = vpop.permute.xlu0 %595
        %597 = vrot.lane.b32.xlu0 %v576, 10
        %v598 = vpop.permute.xlu0 %597
        %599 = vrot.lane.b32.xlu0 %v577, 10
        %v600 = vpop.permute.xlu0 %599
        %601 = vrot.lane.b32.xlu0 %v578, 10
        %v602 = vpop.permute.xlu0 %601
        %vm603 = vcmask 80896
        %v604 = vsel %vm603, %v588, %v590
        %v605 = vsel %vm603, %v592, %v594
        %v606 = vsel %vm603, %v596, %v598
        %v607 = vsel %vm603, %v600, %v602
        %612 = vst [vmem:[#allocation3 + $0x20] sm:$0xff] %v604
        %613 = vst [vmem:[#allocation3 + $0x28] sm:$0xff] %v605
        %614 = vst [vmem:[#allocation3 + $0x30] sm:$0xff] %v606
        %615 = vst [vmem:[#allocation3 + $0x38] sm:$0xff] %v607
        %v616 = vld [vmem:[#allocation2] sm:$0xff]
        %v617 = vld [vmem:[#allocation2 + $0x8] sm:$0xff]
        %v618 = vld [vmem:[#allocation2 + $0x18] sm:$0xff]
        %v619 = vld [vmem:[#allocation2 + $0x20] sm:$0xff]
        %v620 = vld [vmem:[#allocation2 + $0x30] sm:$0xff]
        %v621 = vld [vmem:[#allocation2 + $0x38] sm:$0xff]
        %v622 = vld [vmem:[#allocation2 + $0x48] sm:$0xff]
        %v623 = vld [vmem:[#allocation2 + $0x50] sm:$0xff]
        %632 = vrot.lane.b32.xlu0 %v616, 9
        %v633 = vpop.permute.xlu0 %632
        %634 = vrot.lane.b32.xlu0 %v617, 9
        %v635 = vpop.permute.xlu0 %634
        %636 = vrot.lane.b32.xlu0 %v618, 9
        %v637 = vpop.permute.xlu0 %636
        %638 = vrot.lane.b32.xlu0 %v619, 9
        %v639 = vpop.permute.xlu0 %638
        %640 = vrot.lane.b32.xlu0 %v620, 9
        %v641 = vpop.permute.xlu0 %640
        %642 = vrot.lane.b32.xlu0 %v621, 9
        %v643 = vpop.permute.xlu0 %642
        %644 = vrot.lane.b32.xlu0 %v622, 9
        %v645 = vpop.permute.xlu0 %644
        %646 = vrot.lane.b32.xlu0 %v623, 9
        %v647 = vpop.permute.xlu0 %646
        %vm648 = vcmask 72704
        %v649 = vsel %vm648, %v633, %v635
        %v650 = vsel %vm648, %v637, %v639
        %v651 = vsel %vm648, %v641, %v643
        %v652 = vsel %vm648, %v645, %v647
        %657 = vst [vmem:[#allocation3 + $0x40] sm:$0xff] %v649
        %658 = vst [vmem:[#allocation3 + $0x48] sm:$0xff] %v650
        %659 = vst [vmem:[#allocation3 + $0x50] sm:$0xff] %v651
        %660 = vst [vmem:[#allocation3 + $0x58] sm:$0xff] %v652
        %v661 = vld [vmem:[#allocation2] sm:$0xff]
        %v662 = vld [vmem:[#allocation2 + $0x8] sm:$0xff]
        %v663 = vld [vmem:[#allocation2 + $0x18] sm:$0xff]
        %v664 = vld [vmem:[#allocation2 + $0x20] sm:$0xff]
        %v665 = vld [vmem:[#allocation2 + $0x30] sm:$0xff]
        %v666 = vld [vmem:[#allocation2 + $0x38] sm:$0xff]
        %v667 = vld [vmem:[#allocation2 + $0x48] sm:$0xff]
        %v668 = vld [vmem:[#allocation2 + $0x50] sm:$0xff]
        %677 = vrot.lane.b32.xlu0 %v661, 1
        %v678 = vpop.permute.xlu0 %677
        %679 = vrot.lane.b32.xlu0 %v662, 1
        %v680 = vpop.permute.xlu0 %679
        %681 = vrot.lane.b32.xlu0 %v663, 1
        %v682 = vpop.permute.xlu0 %681
        %683 = vrot.lane.b32.xlu0 %v664, 1
        %v684 = vpop.permute.xlu0 %683
        %685 = vrot.lane.b32.xlu0 %v665, 1
        %v686 = vpop.permute.xlu0 %685
        %687 = vrot.lane.b32.xlu0 %v666, 1
        %v688 = vpop.permute.xlu0 %687
        %689 = vrot.lane.b32.xlu0 %v667, 1
        %v690 = vpop.permute.xlu0 %689
        %691 = vrot.lane.b32.xlu0 %v668, 1
        %v692 = vpop.permute.xlu0 %691
        %vm693 = vcmask 7168
        %v694 = vsel %vm693, %v678, %v680
        %v695 = vsel %vm693, %v682, %v684
        %v696 = vsel %vm693, %v686, %v688
        %v697 = vsel %vm693, %v690, %v692
        %702 = vst [vmem:[#allocation3 + $0x60] sm:$0xff] %v694
        %703 = vst [vmem:[#allocation3 + $0x68] sm:$0xff] %v695
        %704 = vst [vmem:[#allocation3 + $0x70] sm:$0xff] %v696
        %705 = vst [vmem:[#allocation3 + $0x78] sm:$0xff] %v697
        %v706 = vld [vmem:[#allocation2 + $0x8] sm:$0xff]
        %v707 = vld [vmem:[#allocation2 + $0x20] sm:$0xff]
        %v708 = vld [vmem:[#allocation2 + $0x38] sm:$0xff]
        %v709 = vld [vmem:[#allocation2 + $0x50] sm:$0xff]
        %710 = vst [vmem:[#allocation3 + $0x80] sm:$0xff] %v706
        %711 = vst [vmem:[#allocation3 + $0x88] sm:$0xff] %v707
        %712 = vst [vmem:[#allocation3 + $0x90] sm:$0xff] %v708
        %713 = vst [vmem:[#allocation3 + $0x98] sm:$0xff] %v709
        %v714 = vld [vmem:[#allocation2 + $0x8] sm:$0xff]
        %v715 = vld [vmem:[#allocation2 + $0x10] sm:$0xff]
        %v716 = vld [vmem:[#allocation2 + $0x20] sm:$0xff]
        %v717 = vld [vmem:[#allocation2 + $0x28] sm:$0xff]
        %v718 = vld [vmem:[#allocation2 + $0x38] sm:$0xff]
        %v719 = vld [vmem:[#allocation2 + $0x40] sm:$0xff]
        %v720 = vld [vmem:[#allocation2 + $0x50] sm:$0xff]
        %v721 = vld [vmem:[#allocation2 + $0x58] sm:$0xff]
        %730 = vrot.lane.b32.xlu0 %v714, 127
        %v731 = vpop.permute.xlu0 %730
        %732 = vrot.lane.b32.xlu0 %v715, 127
        %v733 = vpop.permute.xlu0 %732
        %734 = vrot.lane.b32.xlu0 %v716, 127
        %v735 = vpop.permute.xlu0 %734
        %736 = vrot.lane.b32.xlu0 %v717, 127
        %v737 = vpop.permute.xlu0 %736
        %738 = vrot.lane.b32.xlu0 %v718, 127
        %v739 = vpop.permute.xlu0 %738
        %740 = vrot.lane.b32.xlu0 %v719, 127
        %v741 = vpop.permute.xlu0 %740
        %742 = vrot.lane.b32.xlu0 %v720, 127
        %v743 = vpop.permute.xlu0 %742
        %744 = vrot.lane.b32.xlu0 %v721, 127
        %v745 = vpop.permute.xlu0 %744
        %vm746 = vcmask 1039360
        %v747 = vsel %vm746, %v731, %v733
        %v748 = vsel %vm746, %v735, %v737
        %v749 = vsel %vm746, %v739, %v741
        %v750 = vsel %vm746, %v743, %v745
        %755 = vst [vmem:[#allocation3 + $0xa0] sm:$0xff] %v747
        %756 = vst [vmem:[#allocation3 + $0xa8] sm:$0xff] %v748
        %757 = vst [vmem:[#allocation3 + $0xb0] sm:$0xff] %v749
        %758 = vst [vmem:[#allocation3 + $0xb8] sm:$0xff] %v750
        %v759 = vld [vmem:[#allocation2 + $0x8] sm:$0xff]
        %v760 = vld [vmem:[#allocation2 + $0x10] sm:$0xff]
        %v761 = vld [vmem:[#allocation2 + $0x20] sm:$0xff]
        %v762 = vld [vmem:[#allocation2 + $0x28] sm:$0xff]
        %v763 = vld [vmem:[#allocation2 + $0x38] sm:$0xff]
        %v764 = vld [vmem:[#allocation2 + $0x40] sm:$0xff]
        %v765 = vld [vmem:[#allocation2 + $0x50] sm:$0xff]
        %v766 = vld [vmem:[#allocation2 + $0x58] sm:$0xff]
        %775 = vrot.lane.b32.xlu0 %v759, 119
        %v776 = vpop.permute.xlu0 %775
        %777 = vrot.lane.b32.xlu0 %v760, 119
        %v778 = vpop.permute.xlu0 %777
        %779 = vrot.lane.b32.xlu0 %v761, 119
        %v780 = vpop.permute.xlu0 %779
        %781 = vrot.lane.b32.xlu0 %v762, 119
        %v782 = vpop.permute.xlu0 %781
        %783 = vrot.lane.b32.xlu0 %v763, 119
        %v784 = vpop.permute.xlu0 %783
        %785 = vrot.lane.b32.xlu0 %v764, 119
        %v786 = vpop.permute.xlu0 %785
        %787 = vrot.lane.b32.xlu0 %v765, 119
        %v788 = vpop.permute.xlu0 %787
        %789 = vrot.lane.b32.xlu0 %v766, 119
        %v790 = vpop.permute.xlu0 %789
        %vm791 = vcmask 973824
        %v792 = vsel %vm791, %v776, %v778
        %v793 = vsel %vm791, %v780, %v782
        %v794 = vsel %vm791, %v784, %v786
        %v795 = vsel %vm791, %v788, %v790
        %800 = vst [vmem:[#allocation3 + $0xc0] sm:$0xff] %v792
        %801 = vst [vmem:[#allocation3 + $0xc8] sm:$0xff] %v793
        %802 = vst [vmem:[#allocation3 + $0xd0] sm:$0xff] %v794
        %803 = vst [vmem:[#allocation3 + $0xd8] sm:$0xff] %v795
        %v804 = vld [vmem:[#allocation2 + $0x8] sm:$0xff]
        %v805 = vld [vmem:[#allocation2 + $0x10] sm:$0xff]
        %v806 = vld [vmem:[#allocation2 + $0x20] sm:$0xff]
        %v807 = vld [vmem:[#allocation2 + $0x28] sm:$0xff]
        %v808 = vld [vmem:[#allocation2 + $0x38] sm:$0xff]
        %v809 = vld [vmem:[#allocation2 + $0x40] sm:$0xff]
        %v810 = vld [vmem:[#allocation2 + $0x50] sm:$0xff]
        %v811 = vld [vmem:[#allocation2 + $0x58] sm:$0xff]
        %820 = vrot.lane.b32.xlu0 %v804, 118
        %v821 = vpop.permute.xlu0 %820
        %822 = vrot.lane.b32.xlu0 %v805, 118
        %v823 = vpop.permute.xlu0 %822
        %824 = vrot.lane.b32.xlu0 %v806, 118
        %v825 = vpop.permute.xlu0 %824
        %826 = vrot.lane.b32.xlu0 %v807, 118
        %v827 = vpop.permute.xlu0 %826
        %828 = vrot.lane.b32.xlu0 %v808, 118
        %v829 = vpop.permute.xlu0 %828
        %830 = vrot.lane.b32.xlu0 %v809, 118
        %v831 = vpop.permute.xlu0 %830
        %832 = vrot.lane.b32.xlu0 %v810, 118
        %v833 = vpop.permute.xlu0 %832
        %834 = vrot.lane.b32.xlu0 %v811, 118
        %v835 = vpop.permute.xlu0 %834
        %vm836 = vcmask 965632
        %v837 = vsel %vm836, %v821, %v823
        %v838 = vsel %vm836, %v825, %v827
        %v839 = vsel %vm836, %v829, %v831
        %v840 = vsel %vm836, %v833, %v835
        %845 = vst [vmem:[#allocation3 + $0xe0] sm:$0xff] %v837
        %846 = vst [vmem:[#allocation3 + $0xe8] sm:$0xff] %v838
        %847 = vst [vmem:[#allocation3 + $0xf0] sm:$0xff] %v839
        %848 = vst [vmem:[#allocation3 + $0xf8] sm:$0xff] %v840
        %v849 = vld [vmem:[#allocation2 + $0x8] sm:$0xff]
        %v850 = vld [vmem:[#allocation2 + $0x10] sm:$0xff]
        %v851 = vld [vmem:[#allocation2 + $0x20] sm:$0xff]
        %v852 = vld [vmem:[#allocation2 + $0x28] sm:$0xff]
        %v853 = vld [vmem:[#allocation2 + $0x38] sm:$0xff]
        %v854 = vld [vmem:[#allocation2 + $0x40] sm:$0xff]
        %v855 = vld [vmem:[#allocation2 + $0x50] sm:$0xff]
        %v856 = vld [vmem:[#allocation2 + $0x58] sm:$0xff]
        %865 = vrot.lane.b32.xlu0 %v849, 117
        %v866 = vpop.permute.xlu0 %865
        %867 = vrot.lane.b32.xlu0 %v850, 117
        %v868 = vpop.permute.xlu0 %867
        %869 = vrot.lane.b32.xlu0 %v851, 117
        %v870 = vpop.permute.xlu0 %869
        %871 = vrot.lane.b32.xlu0 %v852, 117
        %v872 = vpop.permute.xlu0 %871
        %873 = vrot.lane.b32.xlu0 %v853, 117
        %v874 = vpop.permute.xlu0 %873
        %875 = vrot.lane.b32.xlu0 %v854, 117
        %v876 = vpop.permute.xlu0 %875
        %877 = vrot.lane.b32.xlu0 %v855, 117
        %v878 = vpop.permute.xlu0 %877
        %879 = vrot.lane.b32.xlu0 %v856, 117
        %v880 = vpop.permute.xlu0 %879
        %vm881 = vcmask 957440
        %v882 = vsel %vm881, %v866, %v868
        %v883 = vsel %vm881, %v870, %v872
        %v884 = vsel %vm881, %v874, %v876
        %v885 = vsel %vm881, %v878, %v880
        %890 = vst [vmem:[#allocation3 + $0x100] sm:$0xff] %v882
        %891 = vst [vmem:[#allocation3 + $0x108] sm:$0xff] %v883
        %892 = vst [vmem:[#allocation3 + $0x110] sm:$0xff] %v884
        %893 = vst [vmem:[#allocation3 + $0x118] sm:$0xff] %v885
        %v894 = vld [vmem:[%s3] sm:$0xff]
        %v895 = vld [vmem:[%s3 + $0x8] sm:$0xff]
        %v896 = vld [vmem:[%s3 + $0x10] sm:$0xff]
        %v897 = vld [vmem:[#allocation3] sm:$0xff]
        %v898 = vld [vmem:[#allocation3 + $0x8] sm:$0xff]
        %v899 = vld [vmem:[#allocation3 + $0x10] sm:$0xff]
        %v900 = vld [vmem:[#allocation3 + $0x18] sm:$0xff]
        %v901 = vld [vmem:[#allocation3 + $0x20] sm:$0xff]
        %v902 = vld [vmem:[#allocation3 + $0x28] sm:$0xff]
        %v903 = vld [vmem:[#allocation3 + $0x30] sm:$0xff]
        %v904 = vld [vmem:[#allocation3 + $0x38] sm:$0xff]
        %v905 = vld [vmem:[#allocation3 + $0x40] sm:$0xff]
        %v906 = vld [vmem:[#allocation3 + $0x48] sm:$0xff]
        %v907 = vld [vmem:[#allocation3 + $0x50] sm:$0xff]
        %v908 = vld [vmem:[#allocation3 + $0x58] sm:$0xff]
        %v909 = vld [vmem:[#allocation3 + $0x60] sm:$0xff]
        %v910 = vld [vmem:[#allocation3 + $0x68] sm:$0xff]
        %v911 = vld [vmem:[#allocation3 + $0x70] sm:$0xff]
        %v912 = vld [vmem:[#allocation3 + $0x78] sm:$0xff]
        %v913 = vld [vmem:[#allocation3 + $0x80] sm:$0xff]
        %v914 = vld [vmem:[#allocation3 + $0x88] sm:$0xff]
        %v915 = vld [vmem:[#allocation3 + $0x90] sm:$0xff]
        %v916 = vld [vmem:[#allocation3 + $0x98] sm:$0xff]
        %v917 = vld [vmem:[#allocation3 + $0xa0] sm:$0xff]
        %v918 = vld [vmem:[#allocation3 + $0xa8] sm:$0xff]
        %v919 = vld [vmem:[#allocation3 + $0xb0] sm:$0xff]
        %v920 = vld [vmem:[#allocation3 + $0xb8] sm:$0xff]
        %v921 = vld [vmem:[#allocation3 + $0xc0] sm:$0xff]
        %v922 = vld [vmem:[#allocation3 + $0xc8] sm:$0xff]
        %v923 = vld [vmem:[#allocation3 + $0xd0] sm:$0xff]
        %v924 = vld [vmem:[#allocation3 + $0xd8] sm:$0xff]
        %v925 = vld [vmem:[#allocation3 + $0xe0] sm:$0xff]
        %v926 = vld [vmem:[#allocation3 + $0xe8] sm:$0xff]
        %v927 = vld [vmem:[#allocation3 + $0xf0] sm:$0xff]
        %v928 = vld [vmem:[#allocation3 + $0xf8] sm:$0xff]
        %v929 = vld [vmem:[#allocation3 + $0x100] sm:$0xff]
        %v930 = vld [vmem:[#allocation3 + $0x108] sm:$0xff]
        %v931 = vld [vmem:[#allocation3 + $0x110] sm:$0xff]
        %v932 = vld [vmem:[#allocation3 + $0x118] sm:$0xff]
        %v933 = vld [vmem:[%s4] sm:$0xff]
        %935 = vset.pattern.permute.xlu0 0
        %936 = vperm.xlu0 %935, %v933
        %v937 = vpop.permute.xlu0 %936
        %vm939 = vcmask 261120
        %v941 = vsel %vm939, %v896, 0
        %943 = vmatpush.msra.mxu0 %v912
        %944 = vmatpush.msra.mxu0 %v911
        %945 = vmatpush.msra.mxu0 %v910
        %946 = vmatpush.msra.mxu0 %v909
        %947 = vmatpush.msra.mxu0 %v908
        %948 = vmatpush.msra.mxu0 %v907
        %949 = vmatpush.msra.mxu0 %v906
        %950 = vmatpush.msra.mxu0 %v905
        %951 = vmatpush.msra.mxu0 %v904
        %952 = vmatpush.msra.mxu0 %v903
        %953 = vmatpush.msra.mxu0 %v902
        %954 = vmatpush.msra.mxu0 %v901
        %955 = vmatpush.msra.mxu0 %v900
        %956 = vmatpush.msra.mxu0 %v899
        %957 = vmatpush.msra.mxu0 %v898
        %958 = vmatpush.msra.mxu0 %v897
        %959 = vmatmul.f32.gmra.mxu0 %v894
        %v960 = vpop.f32.mrf.mxu0
        %v961 = vadd.f32 %v937, %v960
        %962 = vdwg.mxu0
        %963 = vmatpush.msra.mxu0 %v928
        %964 = vmatpush.msra.mxu0 %v927
        %965 = vmatpush.msra.mxu0 %v926
        %966 = vmatpush.msra.mxu0 %v925
        %967 = vmatpush.msra.mxu0 %v924
        %968 = vmatpush.msra.mxu0 %v923
        %969 = vmatpush.msra.mxu0 %v922
        %970 = vmatpush.msra.mxu0 %v921
        %971 = vmatpush.msra.mxu0 %v920
        %972 = vmatpush.msra.mxu0 %v919
        %973 = vmatpush.msra.mxu0 %v918
        %974 = vmatpush.msra.mxu0 %v917
        %975 = vmatpush.msra.mxu0 %v916
        %976 = vmatpush.msra.mxu0 %v915
        %977 = vmatpush.msra.mxu0 %v914
        %978 = vmatpush.msra.mxu0 %v913
        %979 = vmatmul.f32.gmra.mxu0 %v895
        %v980 = vpop.f32.mrf.mxu0
        %v981 = vadd.f32 %v961, %v980
        %982 = vdwg.mxu0
        %983 = vmatpush.msra.mxu0 0.0
        %984 = vmatpush.msra.mxu0 0.0
        %985 = vmatpush.msra.mxu0 0.0
        %986 = vmatpush.msra.mxu0 0.0
        %987 = vmatpush.msra.mxu0 0.0
        %988 = vmatpush.msra.mxu0 0.0
        %989 = vmatpush.msra.mxu0 0.0
        %990 = vmatpush.msra.mxu0 0.0
        %991 = vmatpush.msra.mxu0 0.0
        %992 = vmatpush.msra.mxu0 0.0
        %993 = vmatpush.msra.mxu0 0.0
        %994 = vmatpush.msra.mxu0 0.0
        %995 = vmatpush.msra.mxu0 %v932
        %996 = vmatpush.msra.mxu0 %v931
        %997 = vmatpush.msra.mxu0 %v930
        %998 = vmatpush.msra.mxu0 %v929
        %999 = vmatmul.f32.gmra.mxu0 %v941
        %v1000 = vpop.f32.mrf.mxu0
        %v1001 = vadd.f32 %v981, %v1000
        %1002 = vdwg.mxu0
        %v1003 = vld [vmem:[%s5] sm:$0xff]
        %v1004 = vmul.f32 %v1001, %v1001
        %v1005 = vld [vmem:[%s6] sm:$0xff]
        %1007 = vset.pattern.permute.xlu0 0
        %1008 = vperm.xlu0 %1007, %v1005
        %v1009 = vpop.permute.xlu0 %1008
        %vm1011 = vcmask 64512
        %v1013 = vsel %vm1011, %v1003, 0
        %1015 = vmatpush.msra.mxu0 0.0
        %1016 = vmatpush.msra.mxu0 0.0
        %1017 = vmatpush.msra.mxu0 0.0
        %1018 = vmatpush.msra.mxu0 0.0
        %1019 = vmatpush.msra.mxu0 0.0
        %1020 = vmatpush.msra.mxu0 0.0
        %1021 = vmatpush.msra.mxu0 0.0
        %1022 = vmatpush.msra.mxu0 0.0
        %1023 = vmatpush.msra.mxu0 0.0
        %1024 = vmatpush.msra.mxu0 0.0
        %1025 = vmatpush.msra.mxu0 0.0
        %1026 = vmatpush.msra.mxu0 0.0
        %1027 = vmatpush.msra.mxu0 0.0
        %1028 = vmatpush.msra.mxu0 0.0
        %1029 = vmatpush.msra.mxu0 0.0
        %1030 = vmatpush.msra.mxu0 %v1004
        %1031 = vmatmul.f32.gmra.mxu0 %v1013
        %v1032 = vpop.f32.mrf.mxu0
        %v1033 = vadd.f32 %v1009, %v1032
        %1034 = vdwg.mxu0
        %v1035 = vmax.f32 %v1033, 1e-10
        %v1036 = vrsqrt.pop %v1035
        %v1037 = vmul.f32 %v1036, %v1035
        %v1038 = vmul.f32 %v1037, %v1036
        %v1039 = vmul.f32 0.5, %v1038
        %v1040 = vsub.f32 1.5, %v1039
        %v1041 = vmul.f32 %v1036, %v1040
        %vm1042 = vweird.f32 %v1035
        %vm1043 = vweird.f32 %v1036
        %vm1044 = vmor %vm1042, %vm1043
        %v1045 = vsel %vm1044, %v1036, %v1041
        %v1046 = vmul.f32 %v1001, %v1045
        %v1047 = vpack.c.bf16 %v1046, %v1046
        %1048 = vst [vmem:[%s489] sm:$0xf] %v1047
        %p1049 = scmp.lt.s32.totalorder %s18, 1
        %s1050 = scalar_select %p1049, %s18, 1
        %s1051 = smul.addr %s1050, 4
        %s1052 = scalar_lea.vmem %s7, %s1051
        // Predicated region
        $region172: #{_lambda_.9} parent=158 // pred_check
          %p1053 = pneg %p202
        $region173: #{_lambda_.9} parent=158 // pred_check_branch
          %1055 = sbr.rel (%p1053) target = $region175
        $region174: #{_lambda_.9} parent=158 // pred_region
          _
        $region175: #{_lambda_.9} parent=158 // pred_fallthru
          _
      $region159: #{_lambda_.9} parent=5 // pred_fallthru
        _
      %p1056 = scmp.le.s32.totalorder 2, %s13
      // Predicated region
      $region176: #{_lambda_.9} parent=5 // pred_check
        %p1057 = pneg %p1056
      $region177: #{_lambda_.9} parent=5 // pred_check_branch
        %1059 = sbr.rel (%p1057) target = $region179
      $region178: #{_lambda_.9} parent=5 // pred_region
        %s1060 = ssub.s32 %s13, 2
        // Predicated region
        $region180: #{_lambda_.9} parent=178 // pred_check
          %p1061 = pneg %p208
        $region181: #{_lambda_.9} parent=178 // pred_check_branch
          %1063 = sbr.rel (%p1061) target = $region183
        $region182: #{_lambda_.9} parent=178 // pred_region
          %p1064 = scmp.lt.s32.totalorder %s19, 1
          %s1065 = scalar_select %p1064, %s19, 1
          %s1066 = smul.addr %s1065, 4
          %s1067 = scalar_lea.vmem %s7, %s1066
        $region183: #{_lambda_.9} parent=178 // pred_fallthru
          _
      $region179: #{_lambda_.9} parent=5 // pred_fallthru
        _
    $region6: #{_lambda_.9} parent=1 // loop_footer
      %s17 = sadd.s32 1, %s13
    $region7: #{_lambda_.9} parent=1 // loop_footer_branch
      %12 = sbr.rel target = $region3
    $region8: #{_lambda_.9} parent=1 // loop_exit
      _

// kernel: _lambda_.10
$region0: #{_lambda_.10}
  #allocation0 [shape = 'u32[]', space=smem, size = 0x4, offset = 0x4, fixed_abs, tag = 'smem constant byte address 0x4 - core index']
  #allocation1 [shape = 'u32[72,128]{1,0:T(1,128)}', space=vmem, size = 0x9000, scoped, tag = 'internal scratch']
  #allocation2 [shape = 'f32[32,384]{1,0:T(8,128)}', space=vmem, size = 0xc000, scoped, tag = 'scratch operand']
  #allocation3 [shape = 'f32[288,128]{1,0:T(8,128)}', space=vmem, size = 0x24000, scoped, tag = 'scratch operand']
  %s0 = inlined_call_operand.vmem [shape: bf16[32,384], index: 0, kind: input, shape index: {}, may-alias: {0,1,2}]
  %s1 = inlined_call_operand.vmem [shape: bf16[32,384], index: 1, kind: input, shape index: {}, may-alias: {0,1,2}]
  %s2 = inlined_call_operand.vmem [shape: bf16[32,384], index: 2, kind: input, shape index: {}, may-alias: {0,1,2}]
  %s3 = inlined_call_operand.vmem [shape: f32[8,288], index: 3, kind: input, shape index: {}]
  %s4 = inlined_call_operand.vmem [shape: f32[8,1], index: 4, kind: input, shape index: {}]
  %s5 = inlined_call_operand.vmem [shape: f32[8,8], index: 5, kind: input, shape index: {}]
  %s6 = inlined_call_operand.vmem [shape: f32[8,1], index: 6, kind: input, shape index: {}]
  %s7 = inlined_call_operand.vmem [shape: bf16[8,128], index: 7, kind: output, shape index: {}]
  %s8 = sld [smem:[#allocation0]]
  $region161: #{_lambda_.10} parent=0
    _
  %s10 = ssub.s32 1, %s8
  %s11 = scalar_select 0, %s10, %s8
  $region1: #{_lambda_.10} parent=0
    #allocation4 [shape = 'u8[8192]{0}', space=vmem, size = 0x2000, scoped, tag = 'input window, operand 0, single buffered']
    #allocation5 [shape = 'u8[8192]{0}', space=vmem, size = 0x2000, scoped, tag = 'input window, operand 1, single buffered']
    #allocation6 [shape = 'u8[8192]{0}', space=vmem, size = 0x2000, scoped, tag = 'input window, operand 2, single buffered']
    // Predicated region
    $region2: #{_lambda_.10} parent=1 // pred_check
      _
    $region3: #{_lambda_.10} parent=1 // pred_check_branch
      %13 = sbr.rel (0) target = $region5
    $region4: #{_lambda_.10} parent=1 // pred_region
      // Predicated region
      $region6: #{_lambda_.10} parent=4 // pred_check
        _
      $region7: #{_lambda_.10} parent=4 // pred_check_branch
        %15 = sbr.rel (0) target = $region9
      $region8: #{_lambda_.10} parent=4 // pred_region
        // Predicated region
        $region10: #{_lambda_.10} parent=8 // pred_check
          _
        $region11: #{_lambda_.10} parent=8 // pred_check_branch
          %17 = sbr.rel target = $region13
        $region12: #{_lambda_.10} parent=8 // pred_region
          // Predicated region
          $region25: #{_lambda_.10} parent=12 // pred_check
            _
          $region26: #{_lambda_.10} parent=12 // pred_check_branch
            %39 = sbr.rel (0) target = $region28
          $region27: #{_lambda_.10} parent=12 // pred_region
            loop: start=0, step=1, limit=1
            $region29: #{_lambda_.10} parent=27 // loop_pre_header
              _
            $region30: #{_lambda_.10} parent=27 // loop_header
              %s41 = sphi 0, %s45
              %p42 = scmp.ge.s32.totalorder %s41, 1
              %s46 = sphi %s0, %s0
              %s47 = sphi [#allocation4], [#allocation4]
            $region31: #{_lambda_.10} parent=27 // loop_header_branch
              %44 = sbr.rel (%p42) target = $region35
            $region32: #{_lambda_.10} parent=27 // loop_body
              _
            $region33: #{_lambda_.10} parent=27 // loop_footer
              %s45 = sadd.s32 1, %s41
            $region34: #{_lambda_.10} parent=27 // loop_footer_branch
              %40 = sbr.rel target = $region30
            $region35: #{_lambda_.10} parent=27 // loop_exit
              _
            %s49 = ssub.s32 16, 1
            loop: start=0, step=1, limit=1
            $region36: #{_lambda_.10} parent=27 // loop_pre_header
              _
            $region37: #{_lambda_.10} parent=27 // loop_header
              %s51 = sphi 0, %s55
              %p52 = scmp.ge.s32.totalorder %s51, 1
              %s56 = sphi %s0, %s0
              %s57 = sphi [#allocation4], [#allocation4]
            $region38: #{_lambda_.10} parent=27 // loop_header_branch
              %54 = sbr.rel (%p52) target = $region42
            $region39: #{_lambda_.10} parent=27 // loop_body
              %v58 = vld [vmem:[%s56] sm:%s49]
              %59 = vst [vmem:[%s57] sm:%s49] %v58
              %v60 = vld [vmem:[%s56 + $0xc] sm:%s49]
              %61 = vst [vmem:[%s57 + $0x4] sm:%s49] %v60
              %v62 = vld [vmem:[%s56 + $0x18] sm:%s49]
              %63 = vst [vmem:[%s57 + $0x8] sm:%s49] %v62
              %v64 = vld [vmem:[%s56 + $0x24] sm:%s49]
              %65 = vst [vmem:[%s57 + $0xc] sm:%s49] %v64
            $region40: #{_lambda_.10} parent=27 // loop_footer
              %s55 = sadd.s32 1, %s51
            $region41: #{_lambda_.10} parent=27 // loop_footer_branch
              %50 = sbr.rel target = $region37
            $region42: #{_lambda_.10} parent=27 // loop_exit
              _
          $region28: #{_lambda_.10} parent=12 // pred_fallthru
            _
        $region13: #{_lambda_.10} parent=8 // pred_fallthru
          _
        // Predicated region
        $region14: #{_lambda_.10} parent=8 // pred_check
          _
        $region15: #{_lambda_.10} parent=8 // pred_check_branch
          %19 = sbr.rel (0) target = $region17
        $region16: #{_lambda_.10} parent=8 // pred_region
          %s21 = ssub.s32 16, 1
          loop: start=0, step=1, limit=1
          $region18: #{_lambda_.10} parent=16 // loop_pre_header
            _
          $region19: #{_lambda_.10} parent=16 // loop_header
            %s23 = sphi 0, %s27
            %p24 = scmp.ge.s32.totalorder %s23, 1
            %s28 = sphi %s0, %s0
            %s29 = sphi [#allocation4], [#allocation4]
          $region20: #{_lambda_.10} parent=16 // loop_header_branch
            %26 = sbr.rel (%p24) target = $region24
          $region21: #{_lambda_.10} parent=16 // loop_body
            %v30 = vld [vmem:[%s28] sm:%s21]
            %31 = vst [vmem:[%s29] sm:%s21] %v30
            %v32 = vld [vmem:[%s28 + $0xc] sm:%s21]
            %33 = vst [vmem:[%s29 + $0x4] sm:%s21] %v32
            %v34 = vld [vmem:[%s28 + $0x18] sm:%s21]
            %35 = vst [vmem:[%s29 + $0x8] sm:%s21] %v34
            %v36 = vld [vmem:[%s28 + $0x24] sm:%s21]
            %37 = vst [vmem:[%s29 + $0xc] sm:%s21] %v36
          $region22: #{_lambda_.10} parent=16 // loop_footer
            %s27 = sadd.s32 1, %s23
          $region23: #{_lambda_.10} parent=16 // loop_footer_branch
            %22 = sbr.rel target = $region19
          $region24: #{_lambda_.10} parent=16 // loop_exit
            _
        $region17: #{_lambda_.10} parent=8 // pred_fallthru
          _
      $region9: #{_lambda_.10} parent=4 // pred_fallthru
        _
      %66 = vnop
    $region5: #{_lambda_.10} parent=1 // pred_fallthru
      _
    // Predicated region
    $region43: #{_lambda_.10} parent=1 // pred_check
      _
    $region44: #{_lambda_.10} parent=1 // pred_check_branch
      %68 = sbr.rel (0) target = $region46
    $region45: #{_lambda_.10} parent=1 // pred_region
      %s69 = sadd.s32 0, 1
      %s70 = smul.addr %s69, 4
      %s71 = scalar_lea.vmem %s1, %s70
      // Predicated region
      $region47: #{_lambda_.10} parent=45 // pred_check
        _
      $region48: #{_lambda_.10} parent=45 // pred_check_branch
        %73 = sbr.rel (0) target = $region50
      $region49: #{_lambda_.10} parent=45 // pred_region
        // Predicated region
        $region51: #{_lambda_.10} parent=49 // pred_check
          _
        $region52: #{_lambda_.10} parent=49 // pred_check_branch
          %75 = sbr.rel target = $region54
        $region53: #{_lambda_.10} parent=49 // pred_region
          // Predicated region
          $region66: #{_lambda_.10} parent=53 // pred_check
            _
          $region67: #{_lambda_.10} parent=53 // pred_check_branch
            %97 = sbr.rel (0) target = $region69
          $region68: #{_lambda_.10} parent=53 // pred_region
            loop: start=0, step=1, limit=1
            $region70: #{_lambda_.10} parent=68 // loop_pre_header
              _
            $region71: #{_lambda_.10} parent=68 // loop_header
              %s99 = sphi 0, %s103
              %p100 = scmp.ge.s32.totalorder %s99, 1
              %s104 = sphi %s71, %s71
              %s105 = sphi [#allocation5], [#allocation5]
            $region72: #{_lambda_.10} parent=68 // loop_header_branch
              %102 = sbr.rel (%p100) target = $region76
            $region73: #{_lambda_.10} parent=68 // loop_body
              _
            $region74: #{_lambda_.10} parent=68 // loop_footer
              %s103 = sadd.s32 1, %s99
            $region75: #{_lambda_.10} parent=68 // loop_footer_branch
              %98 = sbr.rel target = $region71
            $region76: #{_lambda_.10} parent=68 // loop_exit
              _
            %s107 = ssub.s32 16, 1
            loop: start=0, step=1, limit=1
            $region77: #{_lambda_.10} parent=68 // loop_pre_header
              _
            $region78: #{_lambda_.10} parent=68 // loop_header
              %s109 = sphi 0, %s113
              %p110 = scmp.ge.s32.totalorder %s109, 1
              %s114 = sphi %s71, %s71
              %s115 = sphi [#allocation5], [#allocation5]
            $region79: #{_lambda_.10} parent=68 // loop_header_branch
              %112 = sbr.rel (%p110) target = $region83
            $region80: #{_lambda_.10} parent=68 // loop_body
              %v116 = vld [vmem:[%s114] sm:%s107]
              %117 = vst [vmem:[%s115] sm:%s107] %v116
              %v118 = vld [vmem:[%s114 + $0xc] sm:%s107]
              %119 = vst [vmem:[%s115 + $0x4] sm:%s107] %v118
              %v120 = vld [vmem:[%s114 + $0x18] sm:%s107]
              %121 = vst [vmem:[%s115 + $0x8] sm:%s107] %v120
              %v122 = vld [vmem:[%s114 + $0x24] sm:%s107]
              %123 = vst [vmem:[%s115 + $0xc] sm:%s107] %v122
            $region81: #{_lambda_.10} parent=68 // loop_footer
              %s113 = sadd.s32 1, %s109
            $region82: #{_lambda_.10} parent=68 // loop_footer_branch
              %108 = sbr.rel target = $region78
            $region83: #{_lambda_.10} parent=68 // loop_exit
              _
          $region69: #{_lambda_.10} parent=53 // pred_fallthru
            _
        $region54: #{_lambda_.10} parent=49 // pred_fallthru
          _
        // Predicated region
        $region55: #{_lambda_.10} parent=49 // pred_check
          _
        $region56: #{_lambda_.10} parent=49 // pred_check_branch
          %77 = sbr.rel (0) target = $region58
        $region57: #{_lambda_.10} parent=49 // pred_region
          %s79 = ssub.s32 16, 1
          loop: start=0, step=1, limit=1
          $region59: #{_lambda_.10} parent=57 // loop_pre_header
            _
          $region60: #{_lambda_.10} parent=57 // loop_header
            %s81 = sphi 0, %s85
            %p82 = scmp.ge.s32.totalorder %s81, 1
            %s86 = sphi %s71, %s71
            %s87 = sphi [#allocation5], [#allocation5]
          $region61: #{_lambda_.10} parent=57 // loop_header_branch
            %84 = sbr.rel (%p82) target = $region65
          $region62: #{_lambda_.10} parent=57 // loop_body
            %v88 = vld [vmem:[%s86] sm:%s79]
            %89 = vst [vmem:[%s87] sm:%s79] %v88
            %v90 = vld [vmem:[%s86 + $0xc] sm:%s79]
            %91 = vst [vmem:[%s87 + $0x4] sm:%s79] %v90
            %v92 = vld [vmem:[%s86 + $0x18] sm:%s79]
            %93 = vst [vmem:[%s87 + $0x8] sm:%s79] %v92
            %v94 = vld [vmem:[%s86 + $0x24] sm:%s79]
            %95 = vst [vmem:[%s87 + $0xc] sm:%s79] %v94
          $region63: #{_lambda_.10} parent=57 // loop_footer
            %s85 = sadd.s32 1, %s81
          $region64: #{_lambda_.10} parent=57 // loop_footer_branch
            %80 = sbr.rel target = $region60
          $region65: #{_lambda_.10} parent=57 // loop_exit
            _
        $region58: #{_lambda_.10} parent=49 // pred_fallthru
          _
      $region50: #{_lambda_.10} parent=45 // pred_fallthru
        _
      %124 = vnop
    $region46: #{_lambda_.10} parent=1 // pred_fallthru
      _
    // Predicated region
    $region84: #{_lambda_.10} parent=1 // pred_check
      _
    $region85: #{_lambda_.10} parent=1 // pred_check_branch
      %126 = sbr.rel (0) target = $region87
    $region86: #{_lambda_.10} parent=1 // pred_region
      %s127 = sadd.s32 0, 2
      %s128 = smul.addr %s127, 4
      %s129 = scalar_lea.vmem %s2, %s128
      // Predicated region
      $region88: #{_lambda_.10} parent=86 // pred_check
        _
      $region89: #{_lambda_.10} parent=86 // pred_check_branch
        %131 = sbr.rel (0) target = $region91
      $region90: #{_lambda_.10} parent=86 // pred_region
        // Predicated region
        $region92: #{_lambda_.10} parent=90 // pred_check
          _
        $region93: #{_lambda_.10} parent=90 // pred_check_branch
          %133 = sbr.rel target = $region95
        $region94: #{_lambda_.10} parent=90 // pred_region
          // Predicated region
          $region107: #{_lambda_.10} parent=94 // pred_check
            _
          $region108: #{_lambda_.10} parent=94 // pred_check_branch
            %155 = sbr.rel (0) target = $region110
          $region109: #{_lambda_.10} parent=94 // pred_region
            loop: start=0, step=1, limit=1
            $region111: #{_lambda_.10} parent=109 // loop_pre_header
              _
            $region112: #{_lambda_.10} parent=109 // loop_header
              %s157 = sphi 0, %s161
              %p158 = scmp.ge.s32.totalorder %s157, 1
              %s162 = sphi %s129, %s129
              %s163 = sphi [#allocation6], [#allocation6]
            $region113: #{_lambda_.10} parent=109 // loop_header_branch
              %160 = sbr.rel (%p158) target = $region117
            $region114: #{_lambda_.10} parent=109 // loop_body
              _
            $region115: #{_lambda_.10} parent=109 // loop_footer
              %s161 = sadd.s32 1, %s157
            $region116: #{_lambda_.10} parent=109 // loop_footer_branch
              %156 = sbr.rel target = $region112
            $region117: #{_lambda_.10} parent=109 // loop_exit
              _
            %s165 = ssub.s32 16, 1
            loop: start=0, step=1, limit=1
            $region118: #{_lambda_.10} parent=109 // loop_pre_header
              _
            $region119: #{_lambda_.10} parent=109 // loop_header
              %s167 = sphi 0, %s171
              %p168 = scmp.ge.s32.totalorder %s167, 1
              %s172 = sphi %s129, %s129
              %s173 = sphi [#allocation6], [#allocation6]
            $region120: #{_lambda_.10} parent=109 // loop_header_branch
              %170 = sbr.rel (%p168) target = $region124
            $region121: #{_lambda_.10} parent=109 // loop_body
              %v174 = vld [vmem:[%s172] sm:%s165]
              %175 = vst [vmem:[%s173] sm:%s165] %v174
              %v176 = vld [vmem:[%s172 + $0xc] sm:%s165]
              %177 = vst [vmem:[%s173 + $0x4] sm:%s165] %v176
              %v178 = vld [vmem:[%s172 + $0x18] sm:%s165]
              %179 = vst [vmem:[%s173 + $0x8] sm:%s165] %v178
              %v180 = vld [vmem:[%s172 + $0x24] sm:%s165]
              %181 = vst [vmem:[%s173 + $0xc] sm:%s165] %v180
            $region122: #{_lambda_.10} parent=109 // loop_footer
              %s171 = sadd.s32 1, %s167
            $region123: #{_lambda_.10} parent=109 // loop_footer_branch
              %166 = sbr.rel target = $region119
            $region124: #{_lambda_.10} parent=109 // loop_exit
              _
          $region110: #{_lambda_.10} parent=94 // pred_fallthru
            _
        $region95: #{_lambda_.10} parent=90 // pred_fallthru
          _
        // Predicated region
        $region96: #{_lambda_.10} parent=90 // pred_check
          _
        $region97: #{_lambda_.10} parent=90 // pred_check_branch
          %135 = sbr.rel (0) target = $region99
        $region98: #{_lambda_.10} parent=90 // pred_region
          %s137 = ssub.s32 16, 1
          loop: start=0, step=1, limit=1
          $region100: #{_lambda_.10} parent=98 // loop_pre_header
            _
          $region101: #{_lambda_.10} parent=98 // loop_header
            %s139 = sphi 0, %s143
            %p140 = scmp.ge.s32.totalorder %s139, 1
            %s144 = sphi %s129, %s129
            %s145 = sphi [#allocation6], [#allocation6]
          $region102: #{_lambda_.10} parent=98 // loop_header_branch
            %142 = sbr.rel (%p140) target = $region106
          $region103: #{_lambda_.10} parent=98 // loop_body
            %v146 = vld [vmem:[%s144] sm:%s137]
            %147 = vst [vmem:[%s145] sm:%s137] %v146
            %v148 = vld [vmem:[%s144 + $0xc] sm:%s137]
            %149 = vst [vmem:[%s145 + $0x4] sm:%s137] %v148
            %v150 = vld [vmem:[%s144 + $0x18] sm:%s137]
            %151 = vst [vmem:[%s145 + $0x8] sm:%s137] %v150
            %v152 = vld [vmem:[%s144 + $0x24] sm:%s137]
            %153 = vst [vmem:[%s145 + $0xc] sm:%s137] %v152
          $region104: #{_lambda_.10} parent=98 // loop_footer
            %s143 = sadd.s32 1, %s139
          $region105: #{_lambda_.10} parent=98 // loop_footer_branch
            %138 = sbr.rel target = $region101
          $region106: #{_lambda_.10} parent=98 // loop_exit
            _
        $region99: #{_lambda_.10} parent=90 // pred_fallthru
          _
      $region91: #{_lambda_.10} parent=86 // pred_fallthru
        _
      %182 = vnop
    $region87: #{_lambda_.10} parent=1 // pred_fallthru
      _
    // Predicated region
    $region125: #{_lambda_.10} parent=1 // pred_check
      _
    $region126: #{_lambda_.10} parent=1 // pred_check_branch
      %184 = sbr.rel (0) target = $region128
    $region127: #{_lambda_.10} parent=1 // pred_region
      _
    $region128: #{_lambda_.10} parent=1 // pred_fallthru
      _
    // Predicated region
    $region129: #{_lambda_.10} parent=1 // pred_check
      _
    $region130: #{_lambda_.10} parent=1 // pred_check_branch
      %186 = sbr.rel (0) target = $region132
    $region131: #{_lambda_.10} parent=1 // pred_region
      _
    $region132: #{_lambda_.10} parent=1 // pred_fallthru
      _
    // Predicated region
    $region133: #{_lambda_.10} parent=1 // pred_check
      _
    $region134: #{_lambda_.10} parent=1 // pred_check_branch
      %188 = sbr.rel (0) target = $region136
    $region135: #{_lambda_.10} parent=1 // pred_region
      _
    $region136: #{_lambda_.10} parent=1 // pred_fallthru
      _
    // Predicated region
    $region137: #{_lambda_.10} parent=1 // pred_check
      _
    $region138: #{_lambda_.10} parent=1 // pred_check_branch
      %190 = sbr.rel (0) target = $region140
    $region139: #{_lambda_.10} parent=1 // pred_region
      _
    $region140: #{_lambda_.10} parent=1 // pred_fallthru
      _
    // Predicated region
    $region141: #{_lambda_.10} parent=1 // pred_check
      _
    $region142: #{_lambda_.10} parent=1 // pred_check_branch
      %192 = sbr.rel (0) target = $region144
    $region143: #{_lambda_.10} parent=1 // pred_region
      _
    $region144: #{_lambda_.10} parent=1 // pred_fallthru
      _
    // Predicated region
    $region145: #{_lambda_.10} parent=1 // pred_check
      _
    $region146: #{_lambda_.10} parent=1 // pred_check_branch
      %194 = sbr.rel (0) target = $region148
    $region147: #{_lambda_.10} parent=1 // pred_region
      _
    $region148: #{_lambda_.10} parent=1 // pred_fallthru
      _
    // Predicated region
    $region149: #{_lambda_.10} parent=1 // pred_check
      _
    $region150: #{_lambda_.10} parent=1 // pred_check_branch
      %196 = sbr.rel (0) target = $region152
    $region151: #{_lambda_.10} parent=1 // pred_region
      _
    $region152: #{_lambda_.10} parent=1 // pred_fallthru
      _
    %s197 = sadd.s32 0, 1
    %s198 = sadd.s32 0, 2
    %v199 = vld [vmem:[#allocation4] sm:$0xf]
    %v200 = vld [vmem:[#allocation4 + $0x4] sm:$0xf]
    %v201 = vld [vmem:[#allocation4 + $0x8] sm:$0xf]
    %v202 = vld [vmem:[#allocation4 + $0xc] sm:$0xf]
    %v203 = vunpack.c.l.bf16 %v199
    %v204 = vunpack.c.l.bf16 %v200
    %v205 = vunpack.c.l.bf16 %v201
    %v206 = vunpack.c.l.bf16 %v202
    %207 = vst [vmem:[#allocation2] sm:$0xff] %v203
    %208 = vst [vmem:[#allocation2 + $0x18] sm:$0xff] %v204
    %209 = vst [vmem:[#allocation2 + $0x30] sm:$0xff] %v205
    %210 = vst [vmem:[#allocation2 + $0x48] sm:$0xff] %v206
    %v211 = vld [vmem:[#allocation5] sm:$0xf]
    %v212 = vld [vmem:[#allocation5 + $0x4] sm:$0xf]
    %v213 = vld [vmem:[#allocation5 + $0x8] sm:$0xf]
    %v214 = vld [vmem:[#allocation5 + $0xc] sm:$0xf]
    %v215 = vunpack.c.l.bf16 %v211
    %v216 = vunpack.c.l.bf16 %v212
    %v217 = vunpack.c.l.bf16 %v213
    %v218 = vunpack.c.l.bf16 %v214
    %219 = vst [vmem:[#allocation2 + $0x8] sm:$0xff] %v215
    %220 = vst [vmem:[#allocation2 + $0x20] sm:$0xff] %v216
    %221 = vst [vmem:[#allocation2 + $0x38] sm:$0xff] %v217
    %222 = vst [vmem:[#allocation2 + $0x50] sm:$0xff] %v218
    %v223 = vld [vmem:[#allocation6] sm:$0xf]
    %v224 = vld [vmem:[#allocation6 + $0x4] sm:$0xf]
    %v225 = vld [vmem:[#allocation6 + $0x8] sm:$0xf]
    %v226 = vld [vmem:[#allocation6 + $0xc] sm:$0xf]
    %v227 = vunpack.c.l.bf16 %v223
    %v228 = vunpack.c.l.bf16 %v224
    %v229 = vunpack.c.l.bf16 %v225
    %v230 = vunpack.c.l.bf16 %v226
    %231 = vst [vmem:[#allocation2 + $0x10] sm:$0xff] %v227
    %232 = vst [vmem:[#allocation2 + $0x28] sm:$0xff] %v228
    %233 = vst [vmem:[#allocation2 + $0x40] sm:$0xff] %v229
    %234 = vst [vmem:[#allocation2 + $0x58] sm:$0xff] %v230
    %v235 = vld [vmem:[#allocation2] sm:$0xff]
    %v236 = vld [vmem:[#allocation2 + $0x8] sm:$0xff]
    %v237 = vld [vmem:[#allocation2 + $0x18] sm:$0xff]
    %v238 = vld [vmem:[#allocation2 + $0x20] sm:$0xff]
    %v239 = vld [vmem:[#allocation2 + $0x30] sm:$0xff]
    %v240 = vld [vmem:[#allocation2 + $0x38] sm:$0xff]
    %v241 = vld [vmem:[#allocation2 + $0x48] sm:$0xff]
    %v242 = vld [vmem:[#allocation2 + $0x50] sm:$0xff]
    %251 = vrot.lane.b32.xlu0 %v235, 7
    %v252 = vpop.permute.xlu0 %251
    %253 = vrot.lane.b32.xlu0 %v236, 7
    %v254 = vpop.permute.xlu0 %253
    %255 = vrot.lane.b32.xlu0 %v237, 7
    %v256 = vpop.permute.xlu0 %255
    %257 = vrot.lane.b32.xlu0 %v238, 7
    %v258 = vpop.permute.xlu0 %257
    %259 = vrot.lane.b32.xlu0 %v239, 7
    %v260 = vpop.permute.xlu0 %259
    %261 = vrot.lane.b32.xlu0 %v240, 7
    %v262 = vpop.permute.xlu0 %261
    %263 = vrot.lane.b32.xlu0 %v241, 7
    %v264 = vpop.permute.xlu0 %263
    %265 = vrot.lane.b32.xlu0 %v242, 7
    %v266 = vpop.permute.xlu0 %265
    %vm267 = vcmask 56320
    %v268 = vsel %vm267, %v252, %v254
    %v269 = vsel %vm267, %v256, %v258
    %v270 = vsel %vm267, %v260, %v262
    %v271 = vsel %vm267, %v264, %v266
    %276 = vst [vmem:[#allocation3] sm:$0xff] %v268
    %277 = vst [vmem:[#allocation3 + $0x8] sm:$0xff] %v269
    %278 = vst [vmem:[#allocation3 + $0x10] sm:$0xff] %v270
    %279 = vst [vmem:[#allocation3 + $0x18] sm:$0xff] %v271
    %v280 = vld [vmem:[#allocation2] sm:$0xff]
    %v281 = vld [vmem:[#allocation2 + $0x8] sm:$0xff]
    %v282 = vld [vmem:[#allocation2 + $0x18] sm:$0xff]
    %v283 = vld [vmem:[#allocation2 + $0x20] sm:$0xff]
    %v284 = vld [vmem:[#allocation2 + $0x30] sm:$0xff]
    %v285 = vld [vmem:[#allocation2 + $0x38] sm:$0xff]
    %v286 = vld [vmem:[#allocation2 + $0x48] sm:$0xff]
    %v287 = vld [vmem:[#allocation2 + $0x50] sm:$0xff]
    %296 = vrot.lane.b32.xlu0 %v280, 6
    %v297 = vpop.permute.xlu0 %296
    %298 = vrot.lane.b32.xlu0 %v281, 6
    %v299 = vpop.permute.xlu0 %298
    %300 = vrot.lane.b32.xlu0 %v282, 6
    %v301 = vpop.permute.xlu0 %300
    %302 = vrot.lane.b32.xlu0 %v283, 6
    %v303 = vpop.permute.xlu0 %302
    %304 = vrot.lane.b32.xlu0 %v284, 6
    %v305 = vpop.permute.xlu0 %304
    %306 = vrot.lane.b32.xlu0 %v285, 6
    %v307 = vpop.permute.xlu0 %306
    %308 = vrot.lane.b32.xlu0 %v286, 6
    %v309 = vpop.permute.xlu0 %308
    %310 = vrot.lane.b32.xlu0 %v287, 6
    %v311 = vpop.permute.xlu0 %310
    %vm312 = vcmask 48128
    %v313 = vsel %vm312, %v297, %v299
    %v314 = vsel %vm312, %v301, %v303
    %v315 = vsel %vm312, %v305, %v307
    %v316 = vsel %vm312, %v309, %v311
    %321 = vst [vmem:[#allocation3 + $0x20] sm:$0xff] %v313
    %322 = vst [vmem:[#allocation3 + $0x28] sm:$0xff] %v314
    %323 = vst [vmem:[#allocation3 + $0x30] sm:$0xff] %v315
    %324 = vst [vmem:[#allocation3 + $0x38] sm:$0xff] %v316
    %v325 = vld [vmem:[#allocation2] sm:$0xff]
    %v326 = vld [vmem:[#allocation2 + $0x8] sm:$0xff]
    %v327 = vld [vmem:[#allocation2 + $0x18] sm:$0xff]
    %v328 = vld [vmem:[#allocation2 + $0x20] sm:$0xff]
    %v329 = vld [vmem:[#allocation2 + $0x30] sm:$0xff]
    %v330 = vld [vmem:[#allocation2 + $0x38] sm:$0xff]
    %v331 = vld [vmem:[#allocation2 + $0x48] sm:$0xff]
    %v332 = vld [vmem:[#allocation2 + $0x50] sm:$0xff]
    %341 = vrot.lane.b32.xlu0 %v325, 5
    %v342 = vpop.permute.xlu0 %341
    %343 = vrot.lane.b32.xlu0 %v326, 5
    %v344 = vpop.permute.xlu0 %343
    %345 = vrot.lane.b32.xlu0 %v327, 5
    %v346 = vpop.permute.xlu0 %345
    %347 = vrot.lane.b32.xlu0 %v328, 5
    %v348 = vpop.permute.xlu0 %347
    %349 = vrot.lane.b32.xlu0 %v329, 5
    %v350 = vpop.permute.xlu0 %349
    %351 = vrot.lane.b32.xlu0 %v330, 5
    %v352 = vpop.permute.xlu0 %351
    %353 = vrot.lane.b32.xlu0 %v331, 5
    %v354 = vpop.permute.xlu0 %353
    %355 = vrot.lane.b32.xlu0 %v332, 5
    %v356 = vpop.permute.xlu0 %355
    %vm357 = vcmask 39936
    %v358 = vsel %vm357, %v342, %v344
    %v359 = vsel %vm357, %v346, %v348
    %v360 = vsel %vm357, %v350, %v352
    %v361 = vsel %vm357, %v354, %v356
    %366 = vst [vmem:[#allocation3 + $0x40] sm:$0xff] %v358
    %367 = vst [vmem:[#allocation3 + $0x48] sm:$0xff] %v359
    %368 = vst [vmem:[#allocation3 + $0x50] sm:$0xff] %v360
    %369 = vst [vmem:[#allocation3 + $0x58] sm:$0xff] %v361
    %v370 = vld [vmem:[#allocation2] sm:$0xff]
    %v371 = vld [vmem:[#allocation2 + $0x8] sm:$0xff]
    %v372 = vld [vmem:[#allocation2 + $0x18] sm:$0xff]
    %v373 = vld [vmem:[#allocation2 + $0x20] sm:$0xff]
    %v374 = vld [vmem:[#allocation2 + $0x30] sm:$0xff]
    %v375 = vld [vmem:[#allocation2 + $0x38] sm:$0xff]
    %v376 = vld [vmem:[#allocation2 + $0x48] sm:$0xff]
    %v377 = vld [vmem:[#allocation2 + $0x50] sm:$0xff]
    %386 = vrot.lane.b32.xlu0 %v370, 1
    %v387 = vpop.permute.xlu0 %386
    %388 = vrot.lane.b32.xlu0 %v371, 1
    %v389 = vpop.permute.xlu0 %388
    %390 = vrot.lane.b32.xlu0 %v372, 1
    %v391 = vpop.permute.xlu0 %390
    %392 = vrot.lane.b32.xlu0 %v373, 1
    %v393 = vpop.permute.xlu0 %392
    %394 = vrot.lane.b32.xlu0 %v374, 1
    %v395 = vpop.permute.xlu0 %394
    %396 = vrot.lane.b32.xlu0 %v375, 1
    %v397 = vpop.permute.xlu0 %396
    %398 = vrot.lane.b32.xlu0 %v376, 1
    %v399 = vpop.permute.xlu0 %398
    %400 = vrot.lane.b32.xlu0 %v377, 1
    %v401 = vpop.permute.xlu0 %400
    %vm402 = vcmask 7168
    %v403 = vsel %vm402, %v387, %v389
    %v404 = vsel %vm402, %v391, %v393
    %v405 = vsel %vm402, %v395, %v397
    %v406 = vsel %vm402, %v399, %v401
    %411 = vst [vmem:[#allocation3 + $0x60] sm:$0xff] %v403
    %412 = vst [vmem:[#allocation3 + $0x68] sm:$0xff] %v404
    %413 = vst [vmem:[#allocation3 + $0x70] sm:$0xff] %v405
    %414 = vst [vmem:[#allocation3 + $0x78] sm:$0xff] %v406
    %v415 = vld [vmem:[#allocation2 + $0x8] sm:$0xff]
    %v416 = vld [vmem:[#allocation2 + $0x20] sm:$0xff]
    %v417 = vld [vmem:[#allocation2 + $0x38] sm:$0xff]
    %v418 = vld [vmem:[#allocation2 + $0x50] sm:$0xff]
    %419 = vst [vmem:[#allocation3 + $0x80] sm:$0xff] %v415
    %420 = vst [vmem:[#allocation3 + $0x88] sm:$0xff] %v416
    %421 = vst [vmem:[#allocation3 + $0x90] sm:$0xff] %v417
    %422 = vst [vmem:[#allocation3 + $0x98] sm:$0xff] %v418
    %v423 = vld [vmem:[#allocation2 + $0x8] sm:$0xff]
    %v424 = vld [vmem:[#allocation2 + $0x10] sm:$0xff]
    %v425 = vld [vmem:[#allocation2 + $0x20] sm:$0xff]
    %v426 = vld [vmem:[#allocation2 + $0x28] sm:$0xff]
    %v427 = vld [vmem:[#allocation2 + $0x38] sm:$0xff]
    %v428 = vld [vmem:[#allocation2 + $0x40] sm:$0xff]
    %v429 = vld [vmem:[#allocation2 + $0x50] sm:$0xff]
    %v430 = vld [vmem:[#allocation2 + $0x58] sm:$0xff]
    %439 = vrot.lane.b32.xlu0 %v423, 127
    %v440 = vpop.permute.xlu0 %439
    %441 = vrot.lane.b32.xlu0 %v424, 127
    %v442 = vpop.permute.xlu0 %441
    %443 = vrot.lane.b32.xlu0 %v425, 127
    %v444 = vpop.permute.xlu0 %443
    %445 = vrot.lane.b32.xlu0 %v426, 127
    %v446 = vpop.permute.xlu0 %445
    %447 = vrot.lane.b32.xlu0 %v427, 127
    %v448 = vpop.permute.xlu0 %447
    %449 = vrot.lane.b32.xlu0 %v428, 127
    %v450 = vpop.permute.xlu0 %449
    %451 = vrot.lane.b32.xlu0 %v429, 127
    %v452 = vpop.permute.xlu0 %451
    %453 = vrot.lane.b32.xlu0 %v430, 127
    %v454 = vpop.permute.xlu0 %453
    %vm455 = vcmask 1039360
    %v456 = vsel %vm455, %v440, %v442
    %v457 = vsel %vm455, %v444, %v446
    %v458 = vsel %vm455, %v448, %v450
    %v459 = vsel %vm455, %v452, %v454
    %464 = vst [vmem:[#allocation3 + $0xa0] sm:$0xff] %v456
    %465 = vst [vmem:[#allocation3 + $0xa8] sm:$0xff] %v457
    %466 = vst [vmem:[#allocation3 + $0xb0] sm:$0xff] %v458
    %467 = vst [vmem:[#allocation3 + $0xb8] sm:$0xff] %v459
    %v468 = vld [vmem:[#allocation2 + $0x8] sm:$0xff]
    %v469 = vld [vmem:[#allocation2 + $0x10] sm:$0xff]
    %v470 = vld [vmem:[#allocation2 + $0x20] sm:$0xff]
    %v471 = vld [vmem:[#allocation2 + $0x28] sm:$0xff]
    %v472 = vld [vmem:[#allocation2 + $0x38] sm:$0xff]
    %v473 = vld [vmem:[#allocation2 + $0x40] sm:$0xff]
    %v474 = vld [vmem:[#allocation2 + $0x50] sm:$0xff]
    %v475 = vld [vmem:[#allocation2 + $0x58] sm:$0xff]
    %484 = vrot.lane.b32.xlu0 %v468, 123
    %v485 = vpop.permute.xlu0 %484
    %486 = vrot.lane.b32.xlu0 %v469, 123
    %v487 = vpop.permute.xlu0 %486
    %488 = vrot.lane.b32.xlu0 %v470, 123
    %v489 = vpop.permute.xlu0 %488
    %490 = vrot.lane.b32.xlu0 %v471, 123
    %v491 = vpop.permute.xlu0 %490
    %492 = vrot.lane.b32.xlu0 %v472, 123
    %v493 = vpop.permute.xlu0 %492
    %494 = vrot.lane.b32.xlu0 %v473, 123
    %v495 = vpop.permute.xlu0 %494
    %496 = vrot.lane.b32.xlu0 %v474, 123
    %v497 = vpop.permute.xlu0 %496
    %498 = vrot.lane.b32.xlu0 %v475, 123
    %v499 = vpop.permute.xlu0 %498
    %vm500 = vcmask 1006592
    %v501 = vsel %vm500, %v485, %v487
    %v502 = vsel %vm500, %v489, %v491
    %v503 = vsel %vm500, %v493, %v495
    %v504 = vsel %vm500, %v497, %v499
    %509 = vst [vmem:[#allocation3 + $0xc0] sm:$0xff] %v501
    %510 = vst [vmem:[#allocation3 + $0xc8] sm:$0xff] %v502
    %511 = vst [vmem:[#allocation3 + $0xd0] sm:$0xff] %v503
    %512 = vst [vmem:[#allocation3 + $0xd8] sm:$0xff] %v504
    %v513 = vld [vmem:[#allocation2 + $0x8] sm:$0xff]
    %v514 = vld [vmem:[#allocation2 + $0x10] sm:$0xff]
    %v515 = vld [vmem:[#allocation2 + $0x20] sm:$0xff]
    %v516 = vld [vmem:[#allocation2 + $0x28] sm:$0xff]
    %v517 = vld [vmem:[#allocation2 + $0x38] sm:$0xff]
    %v518 = vld [vmem:[#allocation2 + $0x40] sm:$0xff]
    %v519 = vld [vmem:[#allocation2 + $0x50] sm:$0xff]
    %v520 = vld [vmem:[#allocation2 + $0x58] sm:$0xff]
    %529 = vrot.lane.b32.xlu0 %v513, 122
    %v530 = vpop.permute.xlu0 %529
    %531 = vrot.lane.b32.xlu0 %v514, 122
    %v532 = vpop.permute.xlu0 %531
    %533 = vrot.lane.b32.xlu0 %v515, 122
    %v534 = vpop.permute.xlu0 %533
    %535 = vrot.lane.b32.xlu0 %v516, 122
    %v536 = vpop.permute.xlu0 %535
    %537 = vrot.lane.b32.xlu0 %v517, 122
    %v538 = vpop.permute.xlu0 %537
    %539 = vrot.lane.b32.xlu0 %v518, 122
    %v540 = vpop.permute.xlu0 %539
    %541 = vrot.lane.b32.xlu0 %v519, 122
    %v542 = vpop.permute.xlu0 %541
    %543 = vrot.lane.b32.xlu0 %v520, 122
    %v544 = vpop.permute.xlu0 %543
    %vm545 = vcmask 998400
    %v546 = vsel %vm545, %v530, %v532
    %v547 = vsel %vm545, %v534, %v536
    %v548 = vsel %vm545, %v538, %v540
    %v549 = vsel %vm545, %v542, %v544
    %554 = vst [vmem:[#allocation3 + $0xe0] sm:$0xff] %v546
    %555 = vst [vmem:[#allocation3 + $0xe8] sm:$0xff] %v547
    %556 = vst [vmem:[#allocation3 + $0xf0] sm:$0xff] %v548
    %557 = vst [vmem:[#allocation3 + $0xf8] sm:$0xff] %v549
    %v558 = vld [vmem:[#allocation2 + $0x8] sm:$0xff]
    %v559 = vld [vmem:[#allocation2 + $0x10] sm:$0xff]
    %v560 = vld [vmem:[#allocation2 + $0x20] sm:$0xff]
    %v561 = vld [vmem:[#allocation2 + $0x28] sm:$0xff]
    %v562 = vld [vmem:[#allocation2 + $0x38] sm:$0xff]
    %v563 = vld [vmem:[#allocation2 + $0x40] sm:$0xff]
    %v564 = vld [vmem:[#allocation2 + $0x50] sm:$0xff]
    %v565 = vld [vmem:[#allocation2 + $0x58] sm:$0xff]
    %574 = vrot.lane.b32.xlu0 %v558, 121
    %v575 = vpop.permute.xlu0 %574
    %576 = vrot.lane.b32.xlu0 %v559, 121
    %v577 = vpop.permute.xlu0 %576
    %578 = vrot.lane.b32.xlu0 %v560, 121
    %v579 = vpop.permute.xlu0 %578
    %580 = vrot.lane.b32.xlu0 %v561, 121
    %v581 = vpop.permute.xlu0 %580
    %582 = vrot.lane.b32.xlu0 %v562, 121
    %v583 = vpop.permute.xlu0 %582
    %584 = vrot.lane.b32.xlu0 %v563, 121
    %v585 = vpop.permute.xlu0 %584
    %586 = vrot.lane.b32.xlu0 %v564, 121
    %v587 = vpop.permute.xlu0 %586
    %588 = vrot.lane.b32.xlu0 %v565, 121
    %v589 = vpop.permute.xlu0 %588
    %vm590 = vcmask 990208
    %v591 = vsel %vm590, %v575, %v577
    %v592 = vsel %vm590, %v579, %v581
    %v593 = vsel %vm590, %v583, %v585
    %v594 = vsel %vm590, %v587, %v589
    %599 = vst [vmem:[#allocation3 + $0x100] sm:$0xff] %v591
    %600 = vst [vmem:[#allocation3 + $0x108] sm:$0xff] %v592
    %601 = vst [vmem:[#allocation3 + $0x110] sm:$0xff] %v593
    %602 = vst [vmem:[#allocation3 + $0x118] sm:$0xff] %v594
    %v603 = vld [vmem:[%s3] sm:$0xff]
    %v604 = vld [vmem:[%s3 + $0x8] sm:$0xff]
    %v605 = vld [vmem:[%s3 + $0x10] sm:$0xff]
    %v606 = vld [vmem:[#allocation3] sm:$0xff]
    %v607 = vld [vmem:[#allocation3 + $0x8] sm:$0xff]
    %v608 = vld [vmem:[#allocation3 + $0x10] sm:$0xff]
    %v609 = vld [vmem:[#allocation3 + $0x18] sm:$0xff]
    %v610 = vld [vmem:[#allocation3 + $0x20] sm:$0xff]
    %v611 = vld [vmem:[#allocation3 + $0x28] sm:$0xff]
    %v612 = vld [vmem:[#allocation3 + $0x30] sm:$0xff]
    %v613 = vld [vmem:[#allocation3 + $0x38] sm:$0xff]
    %v614 = vld [vmem:[#allocation3 + $0x40] sm:$0xff]
    %v615 = vld [vmem:[#allocation3 + $0x48] sm:$0xff]
    %v616 = vld [vmem:[#allocation3 + $0x50] sm:$0xff]
    %v617 = vld [vmem:[#allocation3 + $0x58] sm:$0xff]
    %v618 = vld [vmem:[#allocation3 + $0x60] sm:$0xff]
    %v619 = vld [vmem:[#allocation3 + $0x68] sm:$0xff]
    %v620 = vld [vmem:[#allocation3 + $0x70] sm:$0xff]
    %v621 = vld [vmem:[#allocation3 + $0x78] sm:$0xff]
    %v622 = vld [vmem:[#allocation3 + $0x80] sm:$0xff]
    %v623 = vld [vmem:[#allocation3 + $0x88] sm:$0xff]
    %v624 = vld [vmem:[#allocation3 + $0x90] sm:$0xff]
    %v625 = vld [vmem:[#allocation3 + $0x98] sm:$0xff]
    %v626 = vld [vmem:[#allocation3 + $0xa0] sm:$0xff]
    %v627 = vld [vmem:[#allocation3 + $0xa8] sm:$0xff]
    %v628 = vld [vmem:[#allocation3 + $0xb0] sm:$0xff]
    %v629 = vld [vmem:[#allocation3 + $0xb8] sm:$0xff]
    %v630 = vld [vmem:[#allocation3 + $0xc0] sm:$0xff]
    %v631 = vld [vmem:[#allocation3 + $0xc8] sm:$0xff]
    %v632 = vld [vmem:[#allocation3 + $0xd0] sm:$0xff]
    %v633 = vld [vmem:[#allocation3 + $0xd8] sm:$0xff]
    %v634 = vld [vmem:[#allocation3 + $0xe0] sm:$0xff]
    %v635 = vld [vmem:[#allocation3 + $0xe8] sm:$0xff]
    %v636 = vld [vmem:[#allocation3 + $0xf0] sm:$0xff]
    %v637 = vld [vmem:[#allocation3 + $0xf8] sm:$0xff]
    %v638 = vld [vmem:[#allocation3 + $0x100] sm:$0xff]
    %v639 = vld [vmem:[#allocation3 + $0x108] sm:$0xff]
    %v640 = vld [vmem:[#allocation3 + $0x110] sm:$0xff]
    %v641 = vld [vmem:[#allocation3 + $0x118] sm:$0xff]
    %v642 = vld [vmem:[%s4] sm:$0xff]
    %644 = vset.pattern.permute.xlu0 0
    %645 = vperm.xlu0 %644, %v642
    %v646 = vpop.permute.xlu0 %645
    %vm648 = vcmask 261120
    %v650 = vsel %vm648, %v605, 0
    %652 = vmatpush.msra.mxu0 %v621
    %653 = vmatpush.msra.mxu0 %v620
    %654 = vmatpush.msra.mxu0 %v619
    %655 = vmatpush.msra.mxu0 %v618
    %656 = vmatpush.msra.mxu0 %v617
    %657 = vmatpush.msra.mxu0 %v616
    %658 = vmatpush.msra.mxu0 %v615
    %659 = vmatpush.msra.mxu0 %v614
    %660 = vmatpush.msra.mxu0 %v613
    %661 = vmatpush.msra.mxu0 %v612
    %662 = vmatpush.msra.mxu0 %v611
    %663 = vmatpush.msra.mxu0 %v610
    %664 = vmatpush.msra.mxu0 %v609
    %665 = vmatpush.msra.mxu0 %v608
    %666 = vmatpush.msra.mxu0 %v607
    %667 = vmatpush.msra.mxu0 %v606
    %668 = vmatmul.f32.gmra.mxu0 %v603
    %v669 = vpop.f32.mrf.mxu0
    %v670 = vadd.f32 %v646, %v669
    %671 = vdwg.mxu0
    %672 = vmatpush.msra.mxu0 %v637
    %673 = vmatpush.msra.mxu0 %v636
    %674 = vmatpush.msra.mxu0 %v635
    %675 = vmatpush.msra.mxu0 %v634
    %676 = vmatpush.msra.mxu0 %v633
    %677 = vmatpush.msra.mxu0 %v632
    %678 = vmatpush.msra.mxu0 %v631
    %679 = vmatpush.msra.mxu0 %v630
    %680 = vmatpush.msra.mxu0 %v629
    %681 = vmatpush.msra.mxu0 %v628
    %682 = vmatpush.msra.mxu0 %v627
    %683 = vmatpush.msra.mxu0 %v626
    %684 = vmatpush.msra.mxu0 %v625
    %685 = vmatpush.msra.mxu0 %v624
    %686 = vmatpush.msra.mxu0 %v623
    %687 = vmatpush.msra.mxu0 %v622
    %688 = vmatmul.f32.gmra.mxu0 %v604
    %v689 = vpop.f32.mrf.mxu0
    %v690 = vadd.f32 %v670, %v689
    %691 = vdwg.mxu0
    %692 = vmatpush.msra.mxu0 0.0
    %693 = vmatpush.msra.mxu0 0.0
    %694 = vmatpush.msra.mxu0 0.0
    %695 = vmatpush.msra.mxu0 0.0
    %696 = vmatpush.msra.mxu0 0.0
    %697 = vmatpush.msra.mxu0 0.0
    %698 = vmatpush.msra.mxu0 0.0
    %699 = vmatpush.msra.mxu0 0.0
    %700 = vmatpush.msra.mxu0 0.0
    %701 = vmatpush.msra.mxu0 0.0
    %702 = vmatpush.msra.mxu0 0.0
    %703 = vmatpush.msra.mxu0 0.0
    %704 = vmatpush.msra.mxu0 %v641
    %705 = vmatpush.msra.mxu0 %v640
    %706 = vmatpush.msra.mxu0 %v639
    %707 = vmatpush.msra.mxu0 %v638
    %708 = vmatmul.f32.gmra.mxu0 %v650
    %v709 = vpop.f32.mrf.mxu0
    %v710 = vadd.f32 %v690, %v709
    %711 = vdwg.mxu0
    %v712 = vld [vmem:[%s5] sm:$0xff]
    %v713 = vmul.f32 %v710, %v710
    %v714 = vld [vmem:[%s6] sm:$0xff]
    %716 = vset.pattern.permute.xlu0 0
    %717 = vperm.xlu0 %716, %v714
    %v718 = vpop.permute.xlu0 %717
    %vm720 = vcmask 64512
    %v722 = vsel %vm720, %v712, 0
    %724 = vmatpush.msra.mxu0 0.0
    %725 = vmatpush.msra.mxu0 0.0
    %726 = vmatpush.msra.mxu0 0.0
    %727 = vmatpush.msra.mxu0 0.0
    %728 = vmatpush.msra.mxu0 0.0
    %729 = vmatpush.msra.mxu0 0.0
    %730 = vmatpush.msra.mxu0 0.0
    %731 = vmatpush.msra.mxu0 0.0
    %732 = vmatpush.msra.mxu0 0.0
    %733 = vmatpush.msra.mxu0 0.0
    %734 = vmatpush.msra.mxu0 0.0
    %735 = vmatpush.msra.mxu0 0.0
    %736 = vmatpush.msra.mxu0 0.0
    %737 = vmatpush.msra.mxu0 0.0
    %738 = vmatpush.msra.mxu0 0.0
    %739 = vmatpush.msra.mxu0 %v713
    %740 = vmatmul.f32.gmra.mxu0 %v722
    %v741 = vpop.f32.mrf.mxu0
    %v742 = vadd.f32 %v718, %v741
    %743 = vdwg.mxu0
    %v744 = vmax.f32 %v742, 1e-10
    %v745 = vrsqrt.pop %v744
    %v746 = vmul.f32 %v745, %v744
    %v747 = vmul.f32 %v746, %v745
    %v748 = vmul.f32 0.5, %v747
    %v749 = vsub.f32 1.5, %v748
    %v750 = vmul.f32 %v745, %v749
    %vm751 = vweird.f32 %v744
    %vm752 = vweird.f32 %v745
    %vm753 = vmor %vm751, %vm752
    %v754 = vsel %vm753, %v745, %v750
    %v755 = vmul.f32 %v710, %v754
    %v756 = vpack.c.bf16 %v755, %v755
    %757 = vst [vmem:[%s7] sm:$0xf] %v756
    // Predicated region
    $region153: #{_lambda_.10} parent=1 // pred_check
      _
    $region154: #{_lambda_.10} parent=1 // pred_check_branch
      %759 = sbr.rel (0) target = $region156
    $region155: #{_lambda_.10} parent=1 // pred_region
      _
    $region156: #{_lambda_.10} parent=1 // pred_fallthru
      _
    // Predicated region
    $region157: #{_lambda_.10} parent=1 // pred_check
      _
    $region158: #{_lambda_.10} parent=1 // pred_check_branch
      %761 = sbr.rel (0) target = $region160
    $region159: #{_lambda_.10} parent=1 // pred_region
      _
    $region160: #{_lambda_.10} parent=1 // pred_fallthru
      _

// kernel: _lambda_.12
$region0: #{_lambda_.12}
  #allocation0 [shape = 'u32[]', space=smem, size = 0x4, offset = 0x4, fixed_abs, tag = 'smem constant byte address 0x4 - core index']
  #allocation1 [shape = 'u32[72,128]{1,0:T(1,128)}', space=vmem, size = 0x9000, scoped, tag = 'internal scratch']
  #allocation2 [shape = 'f32[16,384]{1,0:T(8,128)}', space=vmem, size = 0x6000, scoped, tag = 'scratch operand']
  #allocation3 [shape = 'f32[144,128]{1,0:T(8,128)}', space=vmem, size = 0x12000, scoped, tag = 'scratch operand']
  %s0 = inlined_call_operand.vmem [shape: bf16[16,384], index: 0, kind: input, shape index: {}, may-alias: {0,1,2}]
  %s1 = inlined_call_operand.vmem [shape: bf16[16,384], index: 1, kind: input, shape index: {}, may-alias: {0,1,2}]
  %s2 = inlined_call_operand.vmem [shape: bf16[16,384], index: 2, kind: input, shape index: {}, may-alias: {0,1,2}]
  %s3 = inlined_call_operand.vmem [shape: f32[32,144], index: 3, kind: input, shape index: {}]
  %s4 = inlined_call_operand.vmem [shape: f32[32,1], index: 4, kind: input, shape index: {}]
  %s5 = inlined_call_operand.vmem [shape: f32[32,32], index: 5, kind: input, shape index: {}]
  %s6 = inlined_call_operand.vmem [shape: f32[32,1], index: 6, kind: input, shape index: {}]
  %s7 = inlined_call_operand.vmem [shape: bf16[32,128], index: 7, kind: output, shape index: {}]
  %s8 = sld [smem:[#allocation0]]
  $region161: #{_lambda_.12} parent=0
    _
  %s10 = ssub.s32 1, %s8
  %s11 = scalar_select 0, %s10, %s8
  $region1: #{_lambda_.12} parent=0
    #allocation4 [shape = 'u8[4096]{0}', space=vmem, size = 0x1000, scoped, tag = 'input window, operand 0, single buffered']
    #allocation5 [shape = 'u8[4096]{0}', space=vmem, size = 0x1000, scoped, tag = 'input window, operand 1, single buffered']
    #allocation6 [shape = 'u8[4096]{0}', space=vmem, size = 0x1000, scoped, tag = 'input window, operand 2, single buffered']
    // Predicated region
    $region2: #{_lambda_.12} parent=1 // pred_check
      _
    $region3: #{_lambda_.12} parent=1 // pred_check_branch
      %13 = sbr.rel (0) target = $region5
    $region4: #{_lambda_.12} parent=1 // pred_region
      // Predicated region
      $region6: #{_lambda_.12} parent=4 // pred_check
        _
      $region7: #{_lambda_.12} parent=4 // pred_check_branch
        %15 = sbr.rel (0) target = $region9
      $region8: #{_lambda_.12} parent=4 // pred_region
        // Predicated region
        $region10: #{_lambda_.12} parent=8 // pred_check
          _
        $region11: #{_lambda_.12} parent=8 // pred_check_branch
          %17 = sbr.rel target = $region13
        $region12: #{_lambda_.12} parent=8 // pred_region
          // Predicated region
          $region25: #{_lambda_.12} parent=12 // pred_check
            _
          $region26: #{_lambda_.12} parent=12 // pred_check_branch
            %35 = sbr.rel (0) target = $region28
          $region27: #{_lambda_.12} parent=12 // pred_region
            loop: start=0, step=1, limit=1
            $region29: #{_lambda_.12} parent=27 // loop_pre_header
              _
            $region30: #{_lambda_.12} parent=27 // loop_header
              %s37 = sphi 0, %s41
              %p38 = scmp.ge.s32.totalorder %s37, 1
              %s42 = sphi %s0, %s0
              %s43 = sphi [#allocation4], [#allocation4]
            $region31: #{_lambda_.12} parent=27 // loop_header_branch
              %40 = sbr.rel (%p38) target = $region35
            $region32: #{_lambda_.12} parent=27 // loop_body
              _
            $region33: #{_lambda_.12} parent=27 // loop_footer
              %s41 = sadd.s32 1, %s37
            $region34: #{_lambda_.12} parent=27 // loop_footer_branch
              %36 = sbr.rel target = $region30
            $region35: #{_lambda_.12} parent=27 // loop_exit
              _
            %s45 = ssub.s32 16, 1
            loop: start=0, step=1, limit=1
            $region36: #{_lambda_.12} parent=27 // loop_pre_header
              _
            $region37: #{_lambda_.12} parent=27 // loop_header
              %s47 = sphi 0, %s51
              %p48 = scmp.ge.s32.totalorder %s47, 1
              %s52 = sphi %s0, %s0
              %s53 = sphi [#allocation4], [#allocation4]
            $region38: #{_lambda_.12} parent=27 // loop_header_branch
              %50 = sbr.rel (%p48) target = $region42
            $region39: #{_lambda_.12} parent=27 // loop_body
              %v54 = vld [vmem:[%s52] sm:%s45]
              %55 = vst [vmem:[%s53] sm:%s45] %v54
              %v56 = vld [vmem:[%s52 + $0xc] sm:%s45]
              %57 = vst [vmem:[%s53 + $0x4] sm:%s45] %v56
            $region40: #{_lambda_.12} parent=27 // loop_footer
              %s51 = sadd.s32 1, %s47
            $region41: #{_lambda_.12} parent=27 // loop_footer_branch
              %46 = sbr.rel target = $region37
            $region42: #{_lambda_.12} parent=27 // loop_exit
              _
          $region28: #{_lambda_.12} parent=12 // pred_fallthru
            _
        $region13: #{_lambda_.12} parent=8 // pred_fallthru
          _
        // Predicated region
        $region14: #{_lambda_.12} parent=8 // pred_check
          _
        $region15: #{_lambda_.12} parent=8 // pred_check_branch
          %19 = sbr.rel (0) target = $region17
        $region16: #{_lambda_.12} parent=8 // pred_region
          %s21 = ssub.s32 16, 1
          loop: start=0, step=1, limit=1
          $region18: #{_lambda_.12} parent=16 // loop_pre_header
            _
          $region19: #{_lambda_.12} parent=16 // loop_header
            %s23 = sphi 0, %s27
            %p24 = scmp.ge.s32.totalorder %s23, 1
            %s28 = sphi %s0, %s0
            %s29 = sphi [#allocation4], [#allocation4]
          $region20: #{_lambda_.12} parent=16 // loop_header_branch
            %26 = sbr.rel (%p24) target = $region24
          $region21: #{_lambda_.12} parent=16 // loop_body
            %v30 = vld [vmem:[%s28] sm:%s21]
            %31 = vst [vmem:[%s29] sm:%s21] %v30
            %v32 = vld [vmem:[%s28 + $0xc] sm:%s21]
            %33 = vst [vmem:[%s29 + $0x4] sm:%s21] %v32
          $region22: #{_lambda_.12} parent=16 // loop_footer
            %s27 = sadd.s32 1, %s23
          $region23: #{_lambda_.12} parent=16 // loop_footer_branch
            %22 = sbr.rel target = $region19
          $region24: #{_lambda_.12} parent=16 // loop_exit
            _
        $region17: #{_lambda_.12} parent=8 // pred_fallthru
          _
      $region9: #{_lambda_.12} parent=4 // pred_fallthru
        _
      %58 = vnop
    $region5: #{_lambda_.12} parent=1 // pred_fallthru
      _
    // Predicated region
    $region43: #{_lambda_.12} parent=1 // pred_check
      _
    $region44: #{_lambda_.12} parent=1 // pred_check_branch
      %60 = sbr.rel (0) target = $region46
    $region45: #{_lambda_.12} parent=1 // pred_region
      %s61 = sadd.s32 0, 1
      %s62 = smul.addr %s61, 4
      %s63 = scalar_lea.vmem %s1, %s62
      // Predicated region
      $region47: #{_lambda_.12} parent=45 // pred_check
        _
      $region48: #{_lambda_.12} parent=45 // pred_check_branch
        %65 = sbr.rel (0) target = $region50
      $region49: #{_lambda_.12} parent=45 // pred_region
        // Predicated region
        $region51: #{_lambda_.12} parent=49 // pred_check
          _
        $region52: #{_lambda_.12} parent=49 // pred_check_branch
          %67 = sbr.rel target = $region54
        $region53: #{_lambda_.12} parent=49 // pred_region
          // Predicated region
          $region66: #{_lambda_.12} parent=53 // pred_check
            _
          $region67: #{_lambda_.12} parent=53 // pred_check_branch
            %85 = sbr.rel (0) target = $region69
          $region68: #{_lambda_.12} parent=53 // pred_region
            loop: start=0, step=1, limit=1
            $region70: #{_lambda_.12} parent=68 // loop_pre_header
              _
            $region71: #{_lambda_.12} parent=68 // loop_header
              %s87 = sphi 0, %s91
              %p88 = scmp.ge.s32.totalorder %s87, 1
              %s92 = sphi %s63, %s63
              %s93 = sphi [#allocation5], [#allocation5]
            $region72: #{_lambda_.12} parent=68 // loop_header_branch
              %90 = sbr.rel (%p88) target = $region76
            $region73: #{_lambda_.12} parent=68 // loop_body
              _
            $region74: #{_lambda_.12} parent=68 // loop_footer
              %s91 = sadd.s32 1, %s87
            $region75: #{_lambda_.12} parent=68 // loop_footer_branch
              %86 = sbr.rel target = $region71
            $region76: #{_lambda_.12} parent=68 // loop_exit
              _
            %s95 = ssub.s32 16, 1
            loop: start=0, step=1, limit=1
            $region77: #{_lambda_.12} parent=68 // loop_pre_header
              _
            $region78: #{_lambda_.12} parent=68 // loop_header
              %s97 = sphi 0, %s101
              %p98 = scmp.ge.s32.totalorder %s97, 1
              %s102 = sphi %s63, %s63
              %s103 = sphi [#allocation5], [#allocation5]
            $region79: #{_lambda_.12} parent=68 // loop_header_branch
              %100 = sbr.rel (%p98) target = $region83
            $region80: #{_lambda_.12} parent=68 // loop_body
              %v104 = vld [vmem:[%s102] sm:%s95]
              %105 = vst [vmem:[%s103] sm:%s95] %v104
              %v106 = vld [vmem:[%s102 + $0xc] sm:%s95]
              %107 = vst [vmem:[%s103 + $0x4] sm:%s95] %v106
            $region81: #{_lambda_.12} parent=68 // loop_footer
              %s101 = sadd.s32 1, %s97
            $region82: #{_lambda_.12} parent=68 // loop_footer_branch
              %96 = sbr.rel target = $region78
            $region83: #{_lambda_.12} parent=68 // loop_exit
              _
          $region69: #{_lambda_.12} parent=53 // pred_fallthru
            _
        $region54: #{_lambda_.12} parent=49 // pred_fallthru
          _
        // Predicated region
        $region55: #{_lambda_.12} parent=49 // pred_check
          _
        $region56: #{_lambda_.12} parent=49 // pred_check_branch
          %69 = sbr.rel (0) target = $region58
        $region57: #{_lambda_.12} parent=49 // pred_region
          %s71 = ssub.s32 16, 1
          loop: start=0, step=1, limit=1
          $region59: #{_lambda_.12} parent=57 // loop_pre_header
            _
          $region60: #{_lambda_.12} parent=57 // loop_header
            %s73 = sphi 0, %s77
            %p74 = scmp.ge.s32.totalorder %s73, 1
            %s78 = sphi %s63, %s63
            %s79 = sphi [#allocation5], [#allocation5]
          $region61: #{_lambda_.12} parent=57 // loop_header_branch
            %76 = sbr.rel (%p74) target = $region65
          $region62: #{_lambda_.12} parent=57 // loop_body
            %v80 = vld [vmem:[%s78] sm:%s71]
            %81 = vst [vmem:[%s79] sm:%s71] %v80
            %v82 = vld [vmem:[%s78 + $0xc] sm:%s71]
            %83 = vst [vmem:[%s79 + $0x4] sm:%s71] %v82
          $region63: #{_lambda_.12} parent=57 // loop_footer
            %s77 = sadd.s32 1, %s73
          $region64: #{_lambda_.12} parent=57 // loop_footer_branch
            %72 = sbr.rel target = $region60
          $region65: #{_lambda_.12} parent=57 // loop_exit
            _
        $region58: #{_lambda_.12} parent=49 // pred_fallthru
          _
      $region50: #{_lambda_.12} parent=45 // pred_fallthru
        _
      %108 = vnop
    $region46: #{_lambda_.12} parent=1 // pred_fallthru
      _
    // Predicated region
    $region84: #{_lambda_.12} parent=1 // pred_check
      _
    $region85: #{_lambda_.12} parent=1 // pred_check_branch
      %110 = sbr.rel (0) target = $region87
    $region86: #{_lambda_.12} parent=1 // pred_region
      %s111 = sadd.s32 0, 2
      %s112 = smul.addr %s111, 4
      %s113 = scalar_lea.vmem %s2, %s112
      // Predicated region
      $region88: #{_lambda_.12} parent=86 // pred_check
        _
      $region89: #{_lambda_.12} parent=86 // pred_check_branch
        %115 = sbr.rel (0) target = $region91
      $region90: #{_lambda_.12} parent=86 // pred_region
        // Predicated region
        $region92: #{_lambda_.12} parent=90 // pred_check
          _
        $region93: #{_lambda_.12} parent=90 // pred_check_branch
          %117 = sbr.rel target = $region95
        $region94: #{_lambda_.12} parent=90 // pred_region
          // Predicated region
          $region107: #{_lambda_.12} parent=94 // pred_check
            _
          $region108: #{_lambda_.12} parent=94 // pred_check_branch
            %135 = sbr.rel (0) target = $region110
          $region109: #{_lambda_.12} parent=94 // pred_region
            loop: start=0, step=1, limit=1
            $region111: #{_lambda_.12} parent=109 // loop_pre_header
              _
            $region112: #{_lambda_.12} parent=109 // loop_header
              %s137 = sphi 0, %s141
              %p138 = scmp.ge.s32.totalorder %s137, 1
              %s142 = sphi %s113, %s113
              %s143 = sphi [#allocation6], [#allocation6]
            $region113: #{_lambda_.12} parent=109 // loop_header_branch
              %140 = sbr.rel (%p138) target = $region117
            $region114: #{_lambda_.12} parent=109 // loop_body
              _
            $region115: #{_lambda_.12} parent=109 // loop_footer
              %s141 = sadd.s32 1, %s137
            $region116: #{_lambda_.12} parent=109 // loop_footer_branch
              %136 = sbr.rel target = $region112
            $region117: #{_lambda_.12} parent=109 // loop_exit
              _
            %s145 = ssub.s32 16, 1
            loop: start=0, step=1, limit=1
            $region118: #{_lambda_.12} parent=109 // loop_pre_header
              _
            $region119: #{_lambda_.12} parent=109 // loop_header
              %s147 = sphi 0, %s151
              %p148 = scmp.ge.s32.totalorder %s147, 1
              %s152 = sphi %s113, %s113
              %s153 = sphi [#allocation6], [#allocation6]
            $region120: #{_lambda_.12} parent=109 // loop_header_branch
              %150 = sbr.rel (%p148) target = $region124
            $region121: #{_lambda_.12} parent=109 // loop_body
              %v154 = vld [vmem:[%s152] sm:%s145]
              %155 = vst [vmem:[%s153] sm:%s145] %v154
              %v156 = vld [vmem:[%s152 + $0xc] sm:%s145]
              %157 = vst [vmem:[%s153 + $0x4] sm:%s145] %v156
            $region122: #{_lambda_.12} parent=109 // loop_footer
              %s151 = sadd.s32 1, %s147
            $region123: #{_lambda_.12} parent=109 // loop_footer_branch
              %146 = sbr.rel target = $region119
            $region124: #{_lambda_.12} parent=109 // loop_exit
              _
          $region110: #{_lambda_.12} parent=94 // pred_fallthru
            _
        $region95: #{_lambda_.12} parent=90 // pred_fallthru
          _
        // Predicated region
        $region96: #{_lambda_.12} parent=90 // pred_check
          _
        $region97: #{_lambda_.12} parent=90 // pred_check_branch
          %119 = sbr.rel (0) target = $region99
        $region98: #{_lambda_.12} parent=90 // pred_region
          %s121 = ssub.s32 16, 1
          loop: start=0, step=1, limit=1
          $region100: #{_lambda_.12} parent=98 // loop_pre_header
            _
          $region101: #{_lambda_.12} parent=98 // loop_header
            %s123 = sphi 0, %s127
            %p124 = scmp.ge.s32.totalorder %s123, 1
            %s128 = sphi %s113, %s113
            %s129 = sphi [#allocation6], [#allocation6]
          $region102: #{_lambda_.12} parent=98 // loop_header_branch
            %126 = sbr.rel (%p124) target = $region106
          $region103: #{_lambda_.12} parent=98 // loop_body
            %v130 = vld [vmem:[%s128] sm:%s121]
            %131 = vst [vmem:[%s129] sm:%s121] %v130
            %v132 = vld [vmem:[%s128 + $0xc] sm:%s121]
            %133 = vst [vmem:[%s129 + $0x4] sm:%s121] %v132
          $region104: #{_lambda_.12} parent=98 // loop_footer
            %s127 = sadd.s32 1, %s123
          $region105: #{_lambda_.12} parent=98 // loop_footer_branch
            %122 = sbr.rel target = $region101
          $region106: #{_lambda_.12} parent=98 // loop_exit
            _
        $region99: #{_lambda_.12} parent=90 // pred_fallthru
          _
      $region91: #{_lambda_.12} parent=86 // pred_fallthru
        _
      %158 = vnop
    $region87: #{_lambda_.12} parent=1 // pred_fallthru
      _
    // Predicated region
    $region125: #{_lambda_.12} parent=1 // pred_check
      _
    $region126: #{_lambda_.12} parent=1 // pred_check_branch
      %160 = sbr.rel (0) target = $region128
    $region127: #{_lambda_.12} parent=1 // pred_region
      _
    $region128: #{_lambda_.12} parent=1 // pred_fallthru
      _
    // Predicated region
    $region129: #{_lambda_.12} parent=1 // pred_check
      _
    $region130: #{_lambda_.12} parent=1 // pred_check_branch
      %162 = sbr.rel (0) target = $region132
    $region131: #{_lambda_.12} parent=1 // pred_region
      _
    $region132: #{_lambda_.12} parent=1 // pred_fallthru
      _
    // Predicated region
    $region133: #{_lambda_.12} parent=1 // pred_check
      _
    $region134: #{_lambda_.12} parent=1 // pred_check_branch
      %164 = sbr.rel (0) target = $region136
    $region135: #{_lambda_.12} parent=1 // pred_region
      _
    $region136: #{_lambda_.12} parent=1 // pred_fallthru
      _
    // Predicated region
    $region137: #{_lambda_.12} parent=1 // pred_check
      _
    $region138: #{_lambda_.12} parent=1 // pred_check_branch
      %166 = sbr.rel (0) target = $region140
    $region139: #{_lambda_.12} parent=1 // pred_region
      _
    $region140: #{_lambda_.12} parent=1 // pred_fallthru
      _
    // Predicated region
    $region141: #{_lambda_.12} parent=1 // pred_check
      _
    $region142: #{_lambda_.12} parent=1 // pred_check_branch
      %168 = sbr.rel (0) target = $region144
    $region143: #{_lambda_.12} parent=1 // pred_region
      _
    $region144: #{_lambda_.12} parent=1 // pred_fallthru
      _
    // Predicated region
    $region145: #{_lambda_.12} parent=1 // pred_check
      _
    $region146: #{_lambda_.12} parent=1 // pred_check_branch
      %170 = sbr.rel (0) target = $region148
    $region147: #{_lambda_.12} parent=1 // pred_region
      _
    $region148: #{_lambda_.12} parent=1 // pred_fallthru
      _
    // Predicated region
    $region149: #{_lambda_.12} parent=1 // pred_check
      _
    $region150: #{_lambda_.12} parent=1 // pred_check_branch
      %172 = sbr.rel (0) target = $region152
    $region151: #{_lambda_.12} parent=1 // pred_region
      _
    $region152: #{_lambda_.12} parent=1 // pred_fallthru
      _
    %s173 = sadd.s32 0, 1
    %s174 = sadd.s32 0, 2
    %v175 = vld [vmem:[#allocation4] sm:$0xf]
    %v176 = vld [vmem:[#allocation4 + $0x4] sm:$0xf]
    %v177 = vunpack.c.l.bf16 %v175
    %v178 = vunpack.c.l.bf16 %v176
    %179 = vst [vmem:[#allocation2] sm:$0xff] %v177
    %180 = vst [vmem:[#allocation2 + $0x18] sm:$0xff] %v178
    %v181 = vld [vmem:[#allocation5] sm:$0xf]
    %v182 = vld [vmem:[#allocation5 + $0x4] sm:$0xf]
    %v183 = vunpack.c.l.bf16 %v181
    %v184 = vunpack.c.l.bf16 %v182
    %185 = vst [vmem:[#allocation2 + $0x8] sm:$0xff] %v183
    %186 = vst [vmem:[#allocation2 + $0x20] sm:$0xff] %v184
    %v187 = vld [vmem:[#allocation6] sm:$0xf]
    %v188 = vld [vmem:[#allocation6 + $0x4] sm:$0xf]
    %v189 = vunpack.c.l.bf16 %v187
    %v190 = vunpack.c.l.bf16 %v188
    %191 = vst [vmem:[#allocation2 + $0x10] sm:$0xff] %v189
    %192 = vst [vmem:[#allocation2 + $0x28] sm:$0xff] %v190
    %v193 = vld [vmem:[#allocation2] sm:$0xff]
    %v194 = vld [vmem:[#allocation2 + $0x8] sm:$0xff]
    %v195 = vld [vmem:[#allocation2 + $0x18] sm:$0xff]
    %v196 = vld [vmem:[#allocation2 + $0x20] sm:$0xff]
    %201 = vrot.lane.b32.xlu0 %v193, 5
    %v202 = vpop.permute.xlu0 %201
    %203 = vrot.lane.b32.xlu0 %v194, 5
    %v204 = vpop.permute.xlu0 %203
    %205 = vrot.lane.b32.xlu0 %v195, 5
    %v206 = vpop.permute.xlu0 %205
    %207 = vrot.lane.b32.xlu0 %v196, 5
    %v208 = vpop.permute.xlu0 %207
    %vm209 = vcmask 39936
    %v210 = vsel %vm209, %v202, %v204
    %v211 = vsel %vm209, %v206, %v208
    %214 = vst [vmem:[#allocation3] sm:$0xff] %v210
    %215 = vst [vmem:[#allocation3 + $0x8] sm:$0xff] %v211
    %v216 = vld [vmem:[#allocation2] sm:$0xff]
    %v217 = vld [vmem:[#allocation2 + $0x8] sm:$0xff]
    %v218 = vld [vmem:[#allocation2 + $0x18] sm:$0xff]
    %v219 = vld [vmem:[#allocation2 + $0x20] sm:$0xff]
    %224 = vrot.lane.b32.xlu0 %v216, 4
    %v225 = vpop.permute.xlu0 %224
    %226 = vrot.lane.b32.xlu0 %v217, 4
    %v227 = vpop.permute.xlu0 %226
    %228 = vrot.lane.b32.xlu0 %v218, 4
    %v229 = vpop.permute.xlu0 %228
    %230 = vrot.lane.b32.xlu0 %v219, 4
    %v231 = vpop.permute.xlu0 %230
    %vm232 = vcmask 31744
    %v233 = vsel %vm232, %v225, %v227
    %v234 = vsel %vm232, %v229, %v231
    %237 = vst [vmem:[#allocation3 + $0x10] sm:$0xff] %v233
    %238 = vst [vmem:[#allocation3 + $0x18] sm:$0xff] %v234
    %v239 = vld [vmem:[#allocation2] sm:$0xff]
    %v240 = vld [vmem:[#allocation2 + $0x8] sm:$0xff]
    %v241 = vld [vmem:[#allocation2 + $0x18] sm:$0xff]
    %v242 = vld [vmem:[#allocation2 + $0x20] sm:$0xff]
    %247 = vrot.lane.b32.xlu0 %v239, 3
    %v248 = vpop.permute.xlu0 %247
    %249 = vrot.lane.b32.xlu0 %v240, 3
    %v250 = vpop.permute.xlu0 %249
    %251 = vrot.lane.b32.xlu0 %v241, 3
    %v252 = vpop.permute.xlu0 %251
    %253 = vrot.lane.b32.xlu0 %v242, 3
    %v254 = vpop.permute.xlu0 %253
    %vm255 = vcmask 23552
    %v256 = vsel %vm255, %v248, %v250
    %v257 = vsel %vm255, %v252, %v254
    %260 = vst [vmem:[#allocation3 + $0x20] sm:$0xff] %v256
    %261 = vst [vmem:[#allocation3 + $0x28] sm:$0xff] %v257
    %v262 = vld [vmem:[#allocation2] sm:$0xff]
    %v263 = vld [vmem:[#allocation2 + $0x8] sm:$0xff]
    %v264 = vld [vmem:[#allocation2 + $0x18] sm:$0xff]
    %v265 = vld [vmem:[#allocation2 + $0x20] sm:$0xff]
    %270 = vrot.lane.b32.xlu0 %v262, 1
    %v271 = vpop.permute.xlu0 %270
    %272 = vrot.lane.b32.xlu0 %v263, 1
    %v273 = vpop.permute.xlu0 %272
    %274 = vrot.lane.b32.xlu0 %v264, 1
    %v275 = vpop.permute.xlu0 %274
    %276 = vrot.lane.b32.xlu0 %v265, 1
    %v277 = vpop.permute.xlu0 %276
    %vm278 = vcmask 7168
    %v279 = vsel %vm278, %v271, %v273
    %v280 = vsel %vm278, %v275, %v277
    %283 = vst [vmem:[#allocation3 + $0x30] sm:$0xff] %v279
    %284 = vst [vmem:[#allocation3 + $0x38] sm:$0xff] %v280
    %v285 = vld [vmem:[#allocation2 + $0x8] sm:$0xff]
    %v286 = vld [vmem:[#allocation2 + $0x20] sm:$0xff]
    %287 = vst [vmem:[#allocation3 + $0x40] sm:$0xff] %v285
    %288 = vst [vmem:[#allocation3 + $0x48] sm:$0xff] %v286
    %v289 = vld [vmem:[#allocation2 + $0x8] sm:$0xff]
    %v290 = vld [vmem:[#allocation2 + $0x10] sm:$0xff]
    %v291 = vld [vmem:[#allocation2 + $0x20] sm:$0xff]
    %v292 = vld [vmem:[#allocation2 + $0x28] sm:$0xff]
    %297 = vrot.lane.b32.xlu0 %v289, 127
    %v298 = vpop.permute.xlu0 %297
    %299 = vrot.lane.b32.xlu0 %v290, 127
    %v300 = vpop.permute.xlu0 %299
    %301 = vrot.lane.b32.xlu0 %v291, 127
    %v302 = vpop.permute.xlu0 %301
    %303 = vrot.lane.b32.xlu0 %v292, 127
    %v304 = vpop.permute.xlu0 %303
    %vm305 = vcmask 1039360
    %v306 = vsel %vm305, %v298, %v300
    %v307 = vsel %vm305, %v302, %v304
    %310 = vst [vmem:[#allocation3 + $0x50] sm:$0xff] %v306
    %311 = vst [vmem:[#allocation3 + $0x58] sm:$0xff] %v307
    %v312 = vld [vmem:[#allocation2 + $0x8] sm:$0xff]
    %v313 = vld [vmem:[#allocation2 + $0x10] sm:$0xff]
    %v314 = vld [vmem:[#allocation2 + $0x20] sm:$0xff]
    %v315 = vld [vmem:[#allocation2 + $0x28] sm:$0xff]
    %320 = vrot.lane.b32.xlu0 %v312, 125
    %v321 = vpop.permute.xlu0 %320
    %322 = vrot.lane.b32.xlu0 %v313, 125
    %v323 = vpop.permute.xlu0 %322
    %324 = vrot.lane.b32.xlu0 %v314, 125
    %v325 = vpop.permute.xlu0 %324
    %326 = vrot.lane.b32.xlu0 %v315, 125
    %v327 = vpop.permute.xlu0 %326
    %vm328 = vcmask 1022976
    %v329 = vsel %vm328, %v321, %v323
    %v330 = vsel %vm328, %v325, %v327
    %333 = vst [vmem:[#allocation3 + $0x60] sm:$0xff] %v329
    %334 = vst [vmem:[#allocation3 + $0x68] sm:$0xff] %v330
    %v335 = vld [vmem:[#allocation2 + $0x8] sm:$0xff]
    %v336 = vld [vmem:[#allocation2 + $0x10] sm:$0xff]
    %v337 = vld [vmem:[#allocation2 + $0x20] sm:$0xff]
    %v338 = vld [vmem:[#allocation2 + $0x28] sm:$0xff]
    %343 = vrot.lane.b32.xlu0 %v335, 124
    %v344 = vpop.permute.xlu0 %343
    %345 = vrot.lane.b32.xlu0 %v336, 124
    %v346 = vpop.permute.xlu0 %345
    %347 = vrot.lane.b32.xlu0 %v337, 124
    %v348 = vpop.permute.xlu0 %347
    %349 = vrot.lane.b32.xlu0 %v338, 124
    %v350 = vpop.permute.xlu0 %349
    %vm351 = vcmask 1014784
    %v352 = vsel %vm351, %v344, %v346
    %v353 = vsel %vm351, %v348, %v350
    %356 = vst [vmem:[#allocation3 + $0x70] sm:$0xff] %v352
    %357 = vst [vmem:[#allocation3 + $0x78] sm:$0xff] %v353
    %v358 = vld [vmem:[#allocation2 + $0x8] sm:$0xff]
    %v359 = vld [vmem:[#allocation2 + $0x10] sm:$0xff]
    %v360 = vld [vmem:[#allocation2 + $0x20] sm:$0xff]
    %v361 = vld [vmem:[#allocation2 + $0x28] sm:$0xff]
    %366 = vrot.lane.b32.xlu0 %v358, 123
    %v367 = vpop.permute.xlu0 %366
    %368 = vrot.lane.b32.xlu0 %v359, 123
    %v369 = vpop.permute.xlu0 %368
    %370 = vrot.lane.b32.xlu0 %v360, 123
    %v371 = vpop.permute.xlu0 %370
    %372 = vrot.lane.b32.xlu0 %v361, 123
    %v373 = vpop.permute.xlu0 %372
    %vm374 = vcmask 1006592
    %v375 = vsel %vm374, %v367, %v369
    %v376 = vsel %vm374, %v371, %v373
    %379 = vst [vmem:[#allocation3 + $0x80] sm:$0xff] %v375
    %380 = vst [vmem:[#allocation3 + $0x88] sm:$0xff] %v376
    %v381 = vld [vmem:[%s3] sm:$0xff]
    %v382 = vld [vmem:[%s3 + $0x8] sm:$0xff]
    %v383 = vld [vmem:[%s3 + $0x10] sm:$0xff]
    %v384 = vld [vmem:[%s3 + $0x18] sm:$0xff]
    %v385 = vld [vmem:[%s3 + $0x20] sm:$0xff]
    %v386 = vld [vmem:[%s3 + $0x28] sm:$0xff]
    %v387 = vld [vmem:[%s3 + $0x30] sm:$0xff]
    %v388 = vld [vmem:[%s3 + $0x38] sm:$0xff]
    %v389 = vld [vmem:[#allocation3] sm:$0xff]
    %v390 = vld [vmem:[#allocation3 + $0x8] sm:$0xff]
    %v391 = vld [vmem:[#allocation3 + $0x10] sm:$0xff]
    %v392 = vld [vmem:[#allocation3 + $0x18] sm:$0xff]
    %v393 = vld [vmem:[#allocation3 + $0x20] sm:$0xff]
    %v394 = vld [vmem:[#allocation3 + $0x28] sm:$0xff]
    %v395 = vld [vmem:[#allocation3 + $0x30] sm:$0xff]
    %v396 = vld [vmem:[#allocation3 + $0x38] sm:$0xff]
    %v397 = vld [vmem:[#allocation3 + $0x40] sm:$0xff]
    %v398 = vld [vmem:[#allocation3 + $0x48] sm:$0xff]
    %v399 = vld [vmem:[#allocation3 + $0x50] sm:$0xff]
    %v400 = vld [vmem:[#allocation3 + $0x58] sm:$0xff]
    %v401 = vld [vmem:[#allocation3 + $0x60] sm:$0xff]
    %v402 = vld [vmem:[#allocation3 + $0x68] sm:$0xff]
    %v403 = vld [vmem:[#allocation3 + $0x70] sm:$0xff]
    %v404 = vld [vmem:[#allocation3 + $0x78] sm:$0xff]
    %v405 = vld [vmem:[#allocation3 + $0x80] sm:$0xff]
    %v406 = vld [vmem:[#allocation3 + $0x88] sm:$0xff]
    %v407 = vld [vmem:[%s4] sm:$0xff]
    %v408 = vld [vmem:[%s4 + $0x8] sm:$0xff]
    %v409 = vld [vmem:[%s4 + $0x10] sm:$0xff]
    %v410 = vld [vmem:[%s4 + $0x18] sm:$0xff]
    %412 = vset.pattern.permute.xlu0 0
    %413 = vperm.xlu0 %412, %v407
    %v414 = vpop.permute.xlu0 %413
    %417 = vset.pattern.permute.xlu0 0
    %418 = vperm.xlu0 %417, %v408
    %v419 = vpop.permute.xlu0 %418
    %422 = vset.pattern.permute.xlu0 0
    %423 = vperm.xlu0 %422, %v409
    %v424 = vpop.permute.xlu0 %423
    %427 = vset.pattern.permute.xlu0 0
    %428 = vperm.xlu0 %427, %v410
    %v429 = vpop.permute.xlu0 %428
    %vm431 = vcmask 130048
    %v433 = vsel %vm431, %v382, 0
    %v436 = vsel %vm431, %v384, 0
    %v439 = vsel %vm431, %v386, 0
    %v442 = vsel %vm431, %v388, 0
    %444 = vmatpush.msra.mxu0 %v404
    %445 = vmatpush.msra.mxu0 %v403
    %446 = vmatpush.msra.mxu0 %v402
    %447 = vmatpush.msra.mxu0 %v401
    %448 = vmatpush.msra.mxu0 %v400
    %449 = vmatpush.msra.mxu0 %v399
    %450 = vmatpush.msra.mxu0 %v398
    %451 = vmatpush.msra.mxu0 %v397
    %452 = vmatpush.msra.mxu0 %v396
    %453 = vmatpush.msra.mxu0 %v395
    %454 = vmatpush.msra.mxu0 %v394
    %455 = vmatpush.msra.mxu0 %v393
    %456 = vmatpush.msra.mxu0 %v392
    %457 = vmatpush.msra.mxu0 %v391
    %458 = vmatpush.msra.mxu0 %v390
    %459 = vmatpush.msra.mxu0 %v389
    %460 = vmatmul.f32.gmra.mxu0 %v381
    %v461 = vpop.f32.mrf.mxu0
    %v462 = vadd.f32 %v414, %v461
    %463 = vmatmul.f32.gmra.mxu0 %v383
    %v464 = vpop.f32.mrf.mxu0
    %v465 = vadd.f32 %v419, %v464
    %466 = vmatmul.f32.gmra.mxu0 %v385
    %v467 = vpop.f32.mrf.mxu0
    %v468 = vadd.f32 %v424, %v467
    %469 = vmatmul.f32.gmra.mxu0 %v387
    %v470 = vpop.f32.mrf.mxu0
    %v471 = vadd.f32 %v429, %v470
    %472 = vdwg.mxu0
    %473 = vmatpush.msra.mxu0 0.0
    %474 = vmatpush.msra.mxu0 0.0
    %475 = vmatpush.msra.mxu0 0.0
    %476 = vmatpush.msra.mxu0 0.0
    %477 = vmatpush.msra.mxu0 0.0
    %478 = vmatpush.msra.mxu0 0.0
    %479 = vmatpush.msra.mxu0 0.0
    %480 = vmatpush.msra.mxu0 0.0
    %481 = vmatpush.msra.mxu0 0.0
    %482 = vmatpush.msra.mxu0 0.0
    %483 = vmatpush.msra.mxu0 0.0
    %484 = vmatpush.msra.mxu0 0.0
    %485 = vmatpush.msra.mxu0 0.0
    %486 = vmatpush.msra.mxu0 0.0
    %487 = vmatpush.msra.mxu0 %v406
    %488 = vmatpush.msra.mxu0 %v405
    %489 = vmatmul.f32.gmra.mxu0 %v433
    %v490 = vpop.f32.mrf.mxu0
    %v491 = vadd.f32 %v462, %v490
    %492 = vmatmul.f32.gmra.mxu0 %v436
    %v493 = vpop.f32.mrf.mxu0
    %v494 = vadd.f32 %v465, %v493
    %495 = vmatmul.f32.gmra.mxu0 %v439
    %v496 = vpop.f32.mrf.mxu0
    %v497 = vadd.f32 %v468, %v496
    %498 = vmatmul.f32.gmra.mxu0 %v442
    %v499 = vpop.f32.mrf.mxu0
    %v500 = vadd.f32 %v471, %v499
    %501 = vdwg.mxu0
    %v502 = vld [vmem:[%s5] sm:$0xff]
    %v503 = vld [vmem:[%s5 + $0x8] sm:$0xff]
    %v504 = vld [vmem:[%s5 + $0x10] sm:$0xff]
    %v505 = vld [vmem:[%s5 + $0x18] sm:$0xff]
    %v506 = vmul.f32 %v491, %v491
    %v507 = vmul.f32 %v494, %v494
    %v508 = vmul.f32 %v497, %v497
    %v509 = vmul.f32 %v500, %v500
    %v510 = vld [vmem:[%s6] sm:$0xff]
    %v511 = vld [vmem:[%s6 + $0x8] sm:$0xff]
    %v512 = vld [vmem:[%s6 + $0x10] sm:$0xff]
    %v513 = vld [vmem:[%s6 + $0x18] sm:$0xff]
    %515 = vset.pattern.permute.xlu0 0
    %516 = vperm.xlu0 %515, %v510
    %v517 = vpop.permute.xlu0 %516
    %520 = vset.pattern.permute.xlu0 0
    %521 = vperm.xlu0 %520, %v511
    %v522 = vpop.permute.xlu0 %521
    %525 = vset.pattern.permute.xlu0 0
    %526 = vperm.xlu0 %525, %v512
    %v527 = vpop.permute.xlu0 %526
    %530 = vset.pattern.permute.xlu0 0
    %531 = vperm.xlu0 %530, %v513
    %v532 = vpop.permute.xlu0 %531
    %vm534 = vcmask 261120
    %v536 = vsel %vm534, %v502, 0
    %v539 = vsel %vm534, %v503, 0
    %v542 = vsel %vm534, %v504, 0
    %v545 = vsel %vm534, %v505, 0
    %547 = vmatpush.msra.mxu0 0.0
    %548 = vmatpush.msra.mxu0 0.0
    %549 = vmatpush.msra.mxu0 0.0
    %550 = vmatpush.msra.mxu0 0.0
    %551 = vmatpush.msra.mxu0 0.0
    %552 = vmatpush.msra.mxu0 0.0
    %553 = vmatpush.msra.mxu0 0.0
    %554 = vmatpush.msra.mxu0 0.0
    %555 = vmatpush.msra.mxu0 0.0
    %556 = vmatpush.msra.mxu0 0.0
    %557 = vmatpush.msra.mxu0 0.0
    %558 = vmatpush.msra.mxu0 0.0
    %559 = vmatpush.msra.mxu0 %v509
    %560 = vmatpush.msra.mxu0 %v508
    %561 = vmatpush.msra.mxu0 %v507
    %562 = vmatpush.msra.mxu0 %v506
    %563 = vmatmul.f32.gmra.mxu0 %v536
    %v564 = vpop.f32.mrf.mxu0
    %v565 = vadd.f32 %v517, %v564
    %566 = vmatmul.f32.gmra.mxu0 %v539
    %v567 = vpop.f32.mrf.mxu0
    %v568 = vadd.f32 %v522, %v567
    %569 = vmatmul.f32.gmra.mxu0 %v542
    %v570 = vpop.f32.mrf.mxu0
    %v571 = vadd.f32 %v527, %v570
    %572 = vmatmul.f32.gmra.mxu0 %v545
    %v573 = vpop.f32.mrf.mxu0
    %v574 = vadd.f32 %v532, %v573
    %575 = vdwg.mxu0
    %v576 = vmax.f32 %v565, 1e-10
    %v577 = vmax.f32 %v568, 1e-10
    %v578 = vmax.f32 %v571, 1e-10
    %v579 = vmax.f32 %v574, 1e-10
    %v580 = vrsqrt.pop %v576
    %v581 = vmul.f32 %v580, %v576
    %v582 = vmul.f32 %v581, %v580
    %v583 = vmul.f32 0.5, %v582
    %v584 = vsub.f32 1.5, %v583
    %v585 = vmul.f32 %v580, %v584
    %v586 = vmul.f32 %v576, %v585
    %vm587 = vcmp.eq.f32.partialorder %v576, inf
    %v588 = vsel %vm587, %v576, %v586
    %vm589 = vcmp.eq.f32.partialorder %v576, 0.0
    %v590 = vand.u32 %v576, 2147483648
    %v591 = vsel %vm589, %v590, %v588
    %v592 = vrsqrt.pop %v577
    %v593 = vmul.f32 %v592, %v577
    %v594 = vmul.f32 %v593, %v592
    %v595 = vmul.f32 0.5, %v594
    %v596 = vsub.f32 1.5, %v595
    %v597 = vmul.f32 %v592, %v596
    %v598 = vmul.f32 %v577, %v597
    %vm599 = vcmp.eq.f32.partialorder %v577, inf
    %v600 = vsel %vm599, %v577, %v598
    %vm601 = vcmp.eq.f32.partialorder %v577, 0.0
    %v602 = vand.u32 %v577, 2147483648
    %v603 = vsel %vm601, %v602, %v600
    %v604 = vrsqrt.pop %v578
    %v605 = vmul.f32 %v604, %v578
    %v606 = vmul.f32 %v605, %v604
    %v607 = vmul.f32 0.5, %v606
    %v608 = vsub.f32 1.5, %v607
    %v609 = vmul.f32 %v604, %v608
    %v610 = vmul.f32 %v578, %v609
    %vm611 = vcmp.eq.f32.partialorder %v578, inf
    %v612 = vsel %vm611, %v578, %v610
    %vm613 = vcmp.eq.f32.partialorder %v578, 0.0
    %v614 = vand.u32 %v578, 2147483648
    %v615 = vsel %vm613, %v614, %v612
    %v616 = vrsqrt.pop %v579
    %v617 = vmul.f32 %v616, %v579
    %v618 = vmul.f32 %v617, %v616
    %v619 = vmul.f32 0.5, %v618
    %v620 = vsub.f32 1.5, %v619
    %v621 = vmul.f32 %v616, %v620
    %v622 = vmul.f32 %v579, %v621
    %vm623 = vcmp.eq.f32.partialorder %v579, inf
    %v624 = vsel %vm623, %v579, %v622
    %vm625 = vcmp.eq.f32.partialorder %v579, 0.0
    %v626 = vand.u32 %v579, 2147483648
    %v627 = vsel %vm625, %v626, %v624
    %v628 = vmul.f32 %v491, %v591
    %v629 = vmul.f32 %v494, %v603
    %v630 = vmul.f32 %v497, %v615
    %v631 = vmul.f32 %v500, %v627
    %v632 = vpack.c.bf16 %v628, %v628
    %v633 = vpack.c.bf16 %v629, %v629
    %v634 = vpack.c.bf16 %v630, %v630
    %v635 = vpack.c.bf16 %v631, %v631
    %636 = vst [vmem:[%s7] sm:$0xf] %v632
    %637 = vst [vmem:[%s7 + $0x4] sm:$0xf] %v633
    %638 = vst [vmem:[%s7 + $0x8] sm:$0xf] %v634
    %639 = vst [vmem:[%s7 + $0xc] sm:$0xf] %v635
    // Predicated region
    $region153: #{_lambda_.12} parent=1 // pred_check
      _
    $region154: #{_lambda_.12} parent=1 // pred_check_branch
      %641 = sbr.rel (0) target = $region156
    $region155: #{_lambda_.12} parent=1 // pred_region
      _
    $region156: #{_lambda_.12} parent=1 // pred_fallthru
      _
    // Predicated region
    $region157: #{_lambda_.12} parent=1 // pred_check
      _
    $region158: #{_lambda_.12} parent=1 // pred_check_branch
      %643 = sbr.rel (0) target = $region160
    $region159: #{_lambda_.12} parent=1 // pred_region
      _
    $region160: #{_lambda_.12} parent=1 // pred_fallthru
      _

// kernel: _lambda_.11
$region0: #{_lambda_.11}
  #allocation0 [shape = 'u32[]', space=smem, size = 0x4, offset = 0x4, fixed_abs, tag = 'smem constant byte address 0x4 - core index']
  #allocation1 [shape = 'u32[72,128]{1,0:T(1,128)}', space=vmem, size = 0x9000, scoped, tag = 'internal scratch']
  #allocation2 [shape = 'f32[32,384]{1,0:T(8,128)}', space=vmem, size = 0xc000, scoped, tag = 'scratch operand']
  #allocation3 [shape = 'f32[288,128]{1,0:T(8,128)}', space=vmem, size = 0x24000, scoped, tag = 'scratch operand']
  %s0 = inlined_call_operand.vmem [shape: bf16[32,384], index: 0, kind: input, shape index: {}, may-alias: {0,1,2}]
  %s1 = inlined_call_operand.vmem [shape: bf16[32,384], index: 1, kind: input, shape index: {}, may-alias: {0,1,2}]
  %s2 = inlined_call_operand.vmem [shape: bf16[32,384], index: 2, kind: input, shape index: {}, may-alias: {0,1,2}]
  %s3 = inlined_call_operand.vmem [shape: f32[16,288], index: 3, kind: input, shape index: {}]
  %s4 = inlined_call_operand.vmem [shape: f32[16,1], index: 4, kind: input, shape index: {}]
  %s5 = inlined_call_operand.vmem [shape: f32[16,1], index: 5, kind: input, shape index: {}]
  %s6 = inlined_call_operand.vmem [shape: f32[16,128], index: 6, kind: output, shape index: {0}]
  %s7 = inlined_call_operand.vmem [shape: f32[16,128], index: 7, kind: output, shape index: {1}]
  %8 = xla_tuple %s6, %s7
  %s9 = sld [smem:[#allocation0]]
  $region165: #{_lambda_.11} parent=0
    _
  %s11 = ssub.s32 1, %s9
  %s12 = scalar_select 0, %s11, %s9
  $region1: #{_lambda_.11} parent=0
    #allocation4 [shape = 'u8[8192]{0}', space=vmem, size = 0x2000, scoped, tag = 'input window, operand 0, single buffered']
    #allocation5 [shape = 'u8[8192]{0}', space=vmem, size = 0x2000, scoped, tag = 'input window, operand 1, single buffered']
    #allocation6 [shape = 'u8[8192]{0}', space=vmem, size = 0x2000, scoped, tag = 'input window, operand 2, single buffered']
    // Predicated region
    $region2: #{_lambda_.11} parent=1 // pred_check
      _
    $region3: #{_lambda_.11} parent=1 // pred_check_branch
      %14 = sbr.rel (0) target = $region5
    $region4: #{_lambda_.11} parent=1 // pred_region
      // Predicated region
      $region6: #{_lambda_.11} parent=4 // pred_check
        _
      $region7: #{_lambda_.11} parent=4 // pred_check_branch
        %16 = sbr.rel (0) target = $region9
      $region8: #{_lambda_.11} parent=4 // pred_region
        // Predicated region
        $region10: #{_lambda_.11} parent=8 // pred_check
          _
        $region11: #{_lambda_.11} parent=8 // pred_check_branch
          %18 = sbr.rel target = $region13
        $region12: #{_lambda_.11} parent=8 // pred_region
          // Predicated region
          $region25: #{_lambda_.11} parent=12 // pred_check
            _
          $region26: #{_lambda_.11} parent=12 // pred_check_branch
            %40 = sbr.rel (0) target = $region28
          $region27: #{_lambda_.11} parent=12 // pred_region
            loop: start=0, step=1, limit=1
            $region29: #{_lambda_.11} parent=27 // loop_pre_header
              _
            $region30: #{_lambda_.11} parent=27 // loop_header
              %s42 = sphi 0, %s46
              %p43 = scmp.ge.s32.totalorder %s42, 1
              %s47 = sphi %s0, %s0
              %s48 = sphi [#allocation4], [#allocation4]
            $region31: #{_lambda_.11} parent=27 // loop_header_branch
              %45 = sbr.rel (%p43) target = $region35
            $region32: #{_lambda_.11} parent=27 // loop_body
              _
            $region33: #{_lambda_.11} parent=27 // loop_footer
              %s46 = sadd.s32 1, %s42
            $region34: #{_lambda_.11} parent=27 // loop_footer_branch
              %41 = sbr.rel target = $region30
            $region35: #{_lambda_.11} parent=27 // loop_exit
              _
            %s50 = ssub.s32 16, 1
            loop: start=0, step=1, limit=1
            $region36: #{_lambda_.11} parent=27 // loop_pre_header
              _
            $region37: #{_lambda_.11} parent=27 // loop_header
              %s52 = sphi 0, %s56
              %p53 = scmp.ge.s32.totalorder %s52, 1
              %s57 = sphi %s0, %s0
              %s58 = sphi [#allocation4], [#allocation4]
            $region38: #{_lambda_.11} parent=27 // loop_header_branch
              %55 = sbr.rel (%p53) target = $region42
            $region39: #{_lambda_.11} parent=27 // loop_body
              %v59 = vld [vmem:[%s57] sm:%s50]
              %60 = vst [vmem:[%s58] sm:%s50] %v59
              %v61 = vld [vmem:[%s57 + $0xc] sm:%s50]
              %62 = vst [vmem:[%s58 + $0x4] sm:%s50] %v61
              %v63 = vld [vmem:[%s57 + $0x18] sm:%s50]
              %64 = vst [vmem:[%s58 + $0x8] sm:%s50] %v63
              %v65 = vld [vmem:[%s57 + $0x24] sm:%s50]
              %66 = vst [vmem:[%s58 + $0xc] sm:%s50] %v65
            $region40: #{_lambda_.11} parent=27 // loop_footer
              %s56 = sadd.s32 1, %s52
            $region41: #{_lambda_.11} parent=27 // loop_footer_branch
              %51 = sbr.rel target = $region37
            $region42: #{_lambda_.11} parent=27 // loop_exit
              _
          $region28: #{_lambda_.11} parent=12 // pred_fallthru
            _
        $region13: #{_lambda_.11} parent=8 // pred_fallthru
          _
        // Predicated region
        $region14: #{_lambda_.11} parent=8 // pred_check
          _
        $region15: #{_lambda_.11} parent=8 // pred_check_branch
          %20 = sbr.rel (0) target = $region17
        $region16: #{_lambda_.11} parent=8 // pred_region
          %s22 = ssub.s32 16, 1
          loop: start=0, step=1, limit=1
          $region18: #{_lambda_.11} parent=16 // loop_pre_header
            _
          $region19: #{_lambda_.11} parent=16 // loop_header
            %s24 = sphi 0, %s28
            %p25 = scmp.ge.s32.totalorder %s24, 1
            %s29 = sphi %s0, %s0
            %s30 = sphi [#allocation4], [#allocation4]
          $region20: #{_lambda_.11} parent=16 // loop_header_branch
            %27 = sbr.rel (%p25) target = $region24
          $region21: #{_lambda_.11} parent=16 // loop_body
            %v31 = vld [vmem:[%s29] sm:%s22]
            %32 = vst [vmem:[%s30] sm:%s22] %v31
            %v33 = vld [vmem:[%s29 + $0xc] sm:%s22]
            %34 = vst [vmem:[%s30 + $0x4] sm:%s22] %v33
            %v35 = vld [vmem:[%s29 + $0x18] sm:%s22]
            %36 = vst [vmem:[%s30 + $0x8] sm:%s22] %v35
            %v37 = vld [vmem:[%s29 + $0x24] sm:%s22]
            %38 = vst [vmem:[%s30 + $0xc] sm:%s22] %v37
          $region22: #{_lambda_.11} parent=16 // loop_footer
            %s28 = sadd.s32 1, %s24
          $region23: #{_lambda_.11} parent=16 // loop_footer_branch
            %23 = sbr.rel target = $region19
          $region24: #{_lambda_.11} parent=16 // loop_exit
            _
        $region17: #{_lambda_.11} parent=8 // pred_fallthru
          _
      $region9: #{_lambda_.11} parent=4 // pred_fallthru
        _
      %67 = vnop
    $region5: #{_lambda_.11} parent=1 // pred_fallthru
      _
    // Predicated region
    $region43: #{_lambda_.11} parent=1 // pred_check
      _
    $region44: #{_lambda_.11} parent=1 // pred_check_branch
      %69 = sbr.rel (0) target = $region46
    $region45: #{_lambda_.11} parent=1 // pred_region
      %s70 = sadd.s32 0, 1
      %s71 = smul.addr %s70, 4
      %s72 = scalar_lea.vmem %s1, %s71
      // Predicated region
      $region47: #{_lambda_.11} parent=45 // pred_check
        _
      $region48: #{_lambda_.11} parent=45 // pred_check_branch
        %74 = sbr.rel (0) target = $region50
      $region49: #{_lambda_.11} parent=45 // pred_region
        // Predicated region
        $region51: #{_lambda_.11} parent=49 // pred_check
          _
        $region52: #{_lambda_.11} parent=49 // pred_check_branch
          %76 = sbr.rel target = $region54
        $region53: #{_lambda_.11} parent=49 // pred_region
          // Predicated region
          $region66: #{_lambda_.11} parent=53 // pred_check
            _
          $region67: #{_lambda_.11} parent=53 // pred_check_branch
            %98 = sbr.rel (0) target = $region69
          $region68: #{_lambda_.11} parent=53 // pred_region
            loop: start=0, step=1, limit=1
            $region70: #{_lambda_.11} parent=68 // loop_pre_header
              _
            $region71: #{_lambda_.11} parent=68 // loop_header
              %s100 = sphi 0, %s104
              %p101 = scmp.ge.s32.totalorder %s100, 1
              %s105 = sphi %s72, %s72
              %s106 = sphi [#allocation5], [#allocation5]
            $region72: #{_lambda_.11} parent=68 // loop_header_branch
              %103 = sbr.rel (%p101) target = $region76
            $region73: #{_lambda_.11} parent=68 // loop_body
              _
            $region74: #{_lambda_.11} parent=68 // loop_footer
              %s104 = sadd.s32 1, %s100
            $region75: #{_lambda_.11} parent=68 // loop_footer_branch
              %99 = sbr.rel target = $region71
            $region76: #{_lambda_.11} parent=68 // loop_exit
              _
            %s108 = ssub.s32 16, 1
            loop: start=0, step=1, limit=1
            $region77: #{_lambda_.11} parent=68 // loop_pre_header
              _
            $region78: #{_lambda_.11} parent=68 // loop_header
              %s110 = sphi 0, %s114
              %p111 = scmp.ge.s32.totalorder %s110, 1
              %s115 = sphi %s72, %s72
              %s116 = sphi [#allocation5], [#allocation5]
            $region79: #{_lambda_.11} parent=68 // loop_header_branch
              %113 = sbr.rel (%p111) target = $region83
            $region80: #{_lambda_.11} parent=68 // loop_body
              %v117 = vld [vmem:[%s115] sm:%s108]
              %118 = vst [vmem:[%s116] sm:%s108] %v117
              %v119 = vld [vmem:[%s115 + $0xc] sm:%s108]
              %120 = vst [vmem:[%s116 + $0x4] sm:%s108] %v119
              %v121 = vld [vmem:[%s115 + $0x18] sm:%s108]
              %122 = vst [vmem:[%s116 + $0x8] sm:%s108] %v121
              %v123 = vld [vmem:[%s115 + $0x24] sm:%s108]
              %124 = vst [vmem:[%s116 + $0xc] sm:%s108] %v123
            $region81: #{_lambda_.11} parent=68 // loop_footer
              %s114 = sadd.s32 1, %s110
            $region82: #{_lambda_.11} parent=68 // loop_footer_branch
              %109 = sbr.rel target = $region78
            $region83: #{_lambda_.11} parent=68 // loop_exit
              _
          $region69: #{_lambda_.11} parent=53 // pred_fallthru
            _
        $region54: #{_lambda_.11} parent=49 // pred_fallthru
          _
        // Predicated region
        $region55: #{_lambda_.11} parent=49 // pred_check
          _
        $region56: #{_lambda_.11} parent=49 // pred_check_branch
          %78 = sbr.rel (0) target = $region58
        $region57: #{_lambda_.11} parent=49 // pred_region
          %s80 = ssub.s32 16, 1
          loop: start=0, step=1, limit=1
          $region59: #{_lambda_.11} parent=57 // loop_pre_header
            _
          $region60: #{_lambda_.11} parent=57 // loop_header
            %s82 = sphi 0, %s86
            %p83 = scmp.ge.s32.totalorder %s82, 1
            %s87 = sphi %s72, %s72
            %s88 = sphi [#allocation5], [#allocation5]
          $region61: #{_lambda_.11} parent=57 // loop_header_branch
            %85 = sbr.rel (%p83) target = $region65
          $region62: #{_lambda_.11} parent=57 // loop_body
            %v89 = vld [vmem:[%s87] sm:%s80]
            %90 = vst [vmem:[%s88] sm:%s80] %v89
            %v91 = vld [vmem:[%s87 + $0xc] sm:%s80]
            %92 = vst [vmem:[%s88 + $0x4] sm:%s80] %v91
            %v93 = vld [vmem:[%s87 + $0x18] sm:%s80]
            %94 = vst [vmem:[%s88 + $0x8] sm:%s80] %v93
            %v95 = vld [vmem:[%s87 + $0x24] sm:%s80]
            %96 = vst [vmem:[%s88 + $0xc] sm:%s80] %v95
          $region63: #{_lambda_.11} parent=57 // loop_footer
            %s86 = sadd.s32 1, %s82
          $region64: #{_lambda_.11} parent=57 // loop_footer_branch
            %81 = sbr.rel target = $region60
          $region65: #{_lambda_.11} parent=57 // loop_exit
            _
        $region58: #{_lambda_.11} parent=49 // pred_fallthru
          _
      $region50: #{_lambda_.11} parent=45 // pred_fallthru
        _
      %125 = vnop
    $region46: #{_lambda_.11} parent=1 // pred_fallthru
      _
    // Predicated region
    $region84: #{_lambda_.11} parent=1 // pred_check
      _
    $region85: #{_lambda_.11} parent=1 // pred_check_branch
      %127 = sbr.rel (0) target = $region87
    $region86: #{_lambda_.11} parent=1 // pred_region
      %s128 = sadd.s32 0, 2
      %s129 = smul.addr %s128, 4
      %s130 = scalar_lea.vmem %s2, %s129
      // Predicated region
      $region88: #{_lambda_.11} parent=86 // pred_check
        _
      $region89: #{_lambda_.11} parent=86 // pred_check_branch
        %132 = sbr.rel (0) target = $region91
      $region90: #{_lambda_.11} parent=86 // pred_region
        // Predicated region
        $region92: #{_lambda_.11} parent=90 // pred_check
          _
        $region93: #{_lambda_.11} parent=90 // pred_check_branch
          %134 = sbr.rel target = $region95
        $region94: #{_lambda_.11} parent=90 // pred_region
          // Predicated region
          $region107: #{_lambda_.11} parent=94 // pred_check
            _
          $region108: #{_lambda_.11} parent=94 // pred_check_branch
            %156 = sbr.rel (0) target = $region110
          $region109: #{_lambda_.11} parent=94 // pred_region
            loop: start=0, step=1, limit=1
            $region111: #{_lambda_.11} parent=109 // loop_pre_header
              _
            $region112: #{_lambda_.11} parent=109 // loop_header
              %s158 = sphi 0, %s162
              %p159 = scmp.ge.s32.totalorder %s158, 1
              %s163 = sphi %s130, %s130
              %s164 = sphi [#allocation6], [#allocation6]
            $region113: #{_lambda_.11} parent=109 // loop_header_branch
              %161 = sbr.rel (%p159) target = $region117
            $region114: #{_lambda_.11} parent=109 // loop_body
              _
            $region115: #{_lambda_.11} parent=109 // loop_footer
              %s162 = sadd.s32 1, %s158
            $region116: #{_lambda_.11} parent=109 // loop_footer_branch
              %157 = sbr.rel target = $region112
            $region117: #{_lambda_.11} parent=109 // loop_exit
              _
            %s166 = ssub.s32 16, 1
            loop: start=0, step=1, limit=1
            $region118: #{_lambda_.11} parent=109 // loop_pre_header
              _
            $region119: #{_lambda_.11} parent=109 // loop_header
              %s168 = sphi 0, %s172
              %p169 = scmp.ge.s32.totalorder %s168, 1
              %s173 = sphi %s130, %s130
              %s174 = sphi [#allocation6], [#allocation6]
            $region120: #{_lambda_.11} parent=109 // loop_header_branch
              %171 = sbr.rel (%p169) target = $region124
            $region121: #{_lambda_.11} parent=109 // loop_body
              %v175 = vld [vmem:[%s173] sm:%s166]
              %176 = vst [vmem:[%s174] sm:%s166] %v175
              %v177 = vld [vmem:[%s173 + $0xc] sm:%s166]
              %178 = vst [vmem:[%s174 + $0x4] sm:%s166] %v177
              %v179 = vld [vmem:[%s173 + $0x18] sm:%s166]
              %180 = vst [vmem:[%s174 + $0x8] sm:%s166] %v179
              %v181 = vld [vmem:[%s173 + $0x24] sm:%s166]
              %182 = vst [vmem:[%s174 + $0xc] sm:%s166] %v181
            $region122: #{_lambda_.11} parent=109 // loop_footer
              %s172 = sadd.s32 1, %s168
            $region123: #{_lambda_.11} parent=109 // loop_footer_branch
              %167 = sbr.rel target = $region119
            $region124: #{_lambda_.11} parent=109 // loop_exit
              _
          $region110: #{_lambda_.11} parent=94 // pred_fallthru
            _
        $region95: #{_lambda_.11} parent=90 // pred_fallthru
          _
        // Predicated region
        $region96: #{_lambda_.11} parent=90 // pred_check
          _
        $region97: #{_lambda_.11} parent=90 // pred_check_branch
          %136 = sbr.rel (0) target = $region99
        $region98: #{_lambda_.11} parent=90 // pred_region
          %s138 = ssub.s32 16, 1
          loop: start=0, step=1, limit=1
          $region100: #{_lambda_.11} parent=98 // loop_pre_header
            _
          $region101: #{_lambda_.11} parent=98 // loop_header
            %s140 = sphi 0, %s144
            %p141 = scmp.ge.s32.totalorder %s140, 1
            %s145 = sphi %s130, %s130
            %s146 = sphi [#allocation6], [#allocation6]
          $region102: #{_lambda_.11} parent=98 // loop_header_branch
            %143 = sbr.rel (%p141) target = $region106
          $region103: #{_lambda_.11} parent=98 // loop_body
            %v147 = vld [vmem:[%s145] sm:%s138]
            %148 = vst [vmem:[%s146] sm:%s138] %v147
            %v149 = vld [vmem:[%s145 + $0xc] sm:%s138]
            %150 = vst [vmem:[%s146 + $0x4] sm:%s138] %v149
            %v151 = vld [vmem:[%s145 + $0x18] sm:%s138]
            %152 = vst [vmem:[%s146 + $0x8] sm:%s138] %v151
            %v153 = vld [vmem:[%s145 + $0x24] sm:%s138]
            %154 = vst [vmem:[%s146 + $0xc] sm:%s138] %v153
          $region104: #{_lambda_.11} parent=98 // loop_footer
            %s144 = sadd.s32 1, %s140
          $region105: #{_lambda_.11} parent=98 // loop_footer_branch
            %139 = sbr.rel target = $region101
          $region106: #{_lambda_.11} parent=98 // loop_exit
            _
        $region99: #{_lambda_.11} parent=90 // pred_fallthru
          _
      $region91: #{_lambda_.11} parent=86 // pred_fallthru
        _
      %183 = vnop
    $region87: #{_lambda_.11} parent=1 // pred_fallthru
      _
    // Predicated region
    $region125: #{_lambda_.11} parent=1 // pred_check
      _
    $region126: #{_lambda_.11} parent=1 // pred_check_branch
      %185 = sbr.rel (0) target = $region128
    $region127: #{_lambda_.11} parent=1 // pred_region
      _
    $region128: #{_lambda_.11} parent=1 // pred_fallthru
      _
    // Predicated region
    $region129: #{_lambda_.11} parent=1 // pred_check
      _
    $region130: #{_lambda_.11} parent=1 // pred_check_branch
      %187 = sbr.rel (0) target = $region132
    $region131: #{_lambda_.11} parent=1 // pred_region
      _
    $region132: #{_lambda_.11} parent=1 // pred_fallthru
      _
    // Predicated region
    $region133: #{_lambda_.11} parent=1 // pred_check
      _
    $region134: #{_lambda_.11} parent=1 // pred_check_branch
      %189 = sbr.rel (0) target = $region136
    $region135: #{_lambda_.11} parent=1 // pred_region
      _
    $region136: #{_lambda_.11} parent=1 // pred_fallthru
      _
    // Predicated region
    $region137: #{_lambda_.11} parent=1 // pred_check
      _
    $region138: #{_lambda_.11} parent=1 // pred_check_branch
      %191 = sbr.rel (0) target = $region140
    $region139: #{_lambda_.11} parent=1 // pred_region
      _
    $region140: #{_lambda_.11} parent=1 // pred_fallthru
      _
    // Predicated region
    $region141: #{_lambda_.11} parent=1 // pred_check
      _
    $region142: #{_lambda_.11} parent=1 // pred_check_branch
      %193 = sbr.rel (0) target = $region144
    $region143: #{_lambda_.11} parent=1 // pred_region
      _
    $region144: #{_lambda_.11} parent=1 // pred_fallthru
      _
    // Predicated region
    $region145: #{_lambda_.11} parent=1 // pred_check
      _
    $region146: #{_lambda_.11} parent=1 // pred_check_branch
      %195 = sbr.rel (0) target = $region148
    $region147: #{_lambda_.11} parent=1 // pred_region
      _
    $region148: #{_lambda_.11} parent=1 // pred_fallthru
      _
    %s196 = sadd.s32 0, 1
    %s197 = sadd.s32 0, 2
    %v198 = vld [vmem:[#allocation4] sm:$0xf]
    %v199 = vld [vmem:[#allocation4 + $0x4] sm:$0xf]
    %v200 = vld [vmem:[#allocation4 + $0x8] sm:$0xf]
    %v201 = vld [vmem:[#allocation4 + $0xc] sm:$0xf]
    %v202 = vunpack.c.l.bf16 %v198
    %v203 = vunpack.c.l.bf16 %v199
    %v204 = vunpack.c.l.bf16 %v200
    %v205 = vunpack.c.l.bf16 %v201
    %206 = vst [vmem:[#allocation2] sm:$0xff] %v202
    %207 = vst [vmem:[#allocation2 + $0x18] sm:$0xff] %v203
    %208 = vst [vmem:[#allocation2 + $0x30] sm:$0xff] %v204
    %209 = vst [vmem:[#allocation2 + $0x48] sm:$0xff] %v205
    %v210 = vld [vmem:[#allocation5] sm:$0xf]
    %v211 = vld [vmem:[#allocation5 + $0x4] sm:$0xf]
    %v212 = vld [vmem:[#allocation5 + $0x8] sm:$0xf]
    %v213 = vld [vmem:[#allocation5 + $0xc] sm:$0xf]
    %v214 = vunpack.c.l.bf16 %v210
    %v215 = vunpack.c.l.bf16 %v211
    %v216 = vunpack.c.l.bf16 %v212
    %v217 = vunpack.c.l.bf16 %v213
    %218 = vst [vmem:[#allocation2 + $0x8] sm:$0xff] %v214
    %219 = vst [vmem:[#allocation2 + $0x20] sm:$0xff] %v215
    %220 = vst [vmem:[#allocation2 + $0x38] sm:$0xff] %v216
    %221 = vst [vmem:[#allocation2 + $0x50] sm:$0xff] %v217
    %v222 = vld [vmem:[#allocation6] sm:$0xf]
    %v223 = vld [vmem:[#allocation6 + $0x4] sm:$0xf]
    %v224 = vld [vmem:[#allocation6 + $0x8] sm:$0xf]
    %v225 = vld [vmem:[#allocation6 + $0xc] sm:$0xf]
    %v226 = vunpack.c.l.bf16 %v222
    %v227 = vunpack.c.l.bf16 %v223
    %v228 = vunpack.c.l.bf16 %v224
    %v229 = vunpack.c.l.bf16 %v225
    %230 = vst [vmem:[#allocation2 + $0x10] sm:$0xff] %v226
    %231 = vst [vmem:[#allocation2 + $0x28] sm:$0xff] %v227
    %232 = vst [vmem:[#allocation2 + $0x40] sm:$0xff] %v228
    %233 = vst [vmem:[#allocation2 + $0x58] sm:$0xff] %v229
    %v234 = vld [vmem:[#allocation2] sm:$0xff]
    %v235 = vld [vmem:[#allocation2 + $0x8] sm:$0xff]
    %v236 = vld [vmem:[#allocation2 + $0x18] sm:$0xff]
    %v237 = vld [vmem:[#allocation2 + $0x20] sm:$0xff]
    %v238 = vld [vmem:[#allocation2 + $0x30] sm:$0xff]
    %v239 = vld [vmem:[#allocation2 + $0x38] sm:$0xff]
    %v240 = vld [vmem:[#allocation2 + $0x48] sm:$0xff]
    %v241 = vld [vmem:[#allocation2 + $0x50] sm:$0xff]
    %250 = vrot.lane.b32.xlu0 %v234, 5
    %v251 = vpop.permute.xlu0 %250
    %252 = vrot.lane.b32.xlu0 %v235, 5
    %v253 = vpop.permute.xlu0 %252
    %254 = vrot.lane.b32.xlu0 %v236, 5
    %v255 = vpop.permute.xlu0 %254
    %256 = vrot.lane.b32.xlu0 %v237, 5
    %v257 = vpop.permute.xlu0 %256
    %258 = vrot.lane.b32.xlu0 %v238, 5
    %v259 = vpop.permute.xlu0 %258
    %260 = vrot.lane.b32.xlu0 %v239, 5
    %v261 = vpop.permute.xlu0 %260
    %262 = vrot.lane.b32.xlu0 %v240, 5
    %v263 = vpop.permute.xlu0 %262
    %264 = vrot.lane.b32.xlu0 %v241, 5
    %v265 = vpop.permute.xlu0 %264
    %vm266 = vcmask 39936
    %v267 = vsel %vm266, %v251, %v253
    %v268 = vsel %vm266, %v255, %v257
    %v269 = vsel %vm266, %v259, %v261
    %v270 = vsel %vm266, %v263, %v265
    %275 = vst [vmem:[#allocation3] sm:$0xff] %v267
    %276 = vst [vmem:[#allocation3 + $0x8] sm:$0xff] %v268
    %277 = vst [vmem:[#allocation3 + $0x10] sm:$0xff] %v269
    %278 = vst [vmem:[#allocation3 + $0x18] sm:$0xff] %v270
    %v279 = vld [vmem:[#allocation2] sm:$0xff]
    %v280 = vld [vmem:[#allocation2 + $0x8] sm:$0xff]
    %v281 = vld [vmem:[#allocation2 + $0x18] sm:$0xff]
    %v282 = vld [vmem:[#allocation2 + $0x20] sm:$0xff]
    %v283 = vld [vmem:[#allocation2 + $0x30] sm:$0xff]
    %v284 = vld [vmem:[#allocation2 + $0x38] sm:$0xff]
    %v285 = vld [vmem:[#allocation2 + $0x48] sm:$0xff]
    %v286 = vld [vmem:[#allocation2 + $0x50] sm:$0xff]
    %295 = vrot.lane.b32.xlu0 %v279, 4
    %v296 = vpop.permute.xlu0 %295
    %297 = vrot.lane.b32.xlu0 %v280, 4
    %v298 = vpop.permute.xlu0 %297
    %299 = vrot.lane.b32.xlu0 %v281, 4
    %v300 = vpop.permute.xlu0 %299
    %301 = vrot.lane.b32.xlu0 %v282, 4
    %v302 = vpop.permute.xlu0 %301
    %303 = vrot.lane.b32.xlu0 %v283, 4
    %v304 = vpop.permute.xlu0 %303
    %305 = vrot.lane.b32.xlu0 %v284, 4
    %v306 = vpop.permute.xlu0 %305
    %307 = vrot.lane.b32.xlu0 %v285, 4
    %v308 = vpop.permute.xlu0 %307
    %309 = vrot.lane.b32.xlu0 %v286, 4
    %v310 = vpop.permute.xlu0 %309
    %vm311 = vcmask 31744
    %v312 = vsel %vm311, %v296, %v298
    %v313 = vsel %vm311, %v300, %v302
    %v314 = vsel %vm311, %v304, %v306
    %v315 = vsel %vm311, %v308, %v310
    %320 = vst [vmem:[#allocation3 + $0x20] sm:$0xff] %v312
    %321 = vst [vmem:[#allocation3 + $0x28] sm:$0xff] %v313
    %322 = vst [vmem:[#allocation3 + $0x30] sm:$0xff] %v314
    %323 = vst [vmem:[#allocation3 + $0x38] sm:$0xff] %v315
    %v324 = vld [vmem:[#allocation2] sm:$0xff]
    %v325 = vld [vmem:[#allocation2 + $0x8] sm:$0xff]
    %v326 = vld [vmem:[#allocation2 + $0x18] sm:$0xff]
    %v327 = vld [vmem:[#allocation2 + $0x20] sm:$0xff]
    %v328 = vld [vmem:[#allocation2 + $0x30] sm:$0xff]
    %v329 = vld [vmem:[#allocation2 + $0x38] sm:$0xff]
    %v330 = vld [vmem:[#allocation2 + $0x48] sm:$0xff]
    %v331 = vld [vmem:[#allocation2 + $0x50] sm:$0xff]
    %340 = vrot.lane.b32.xlu0 %v324, 3
    %v341 = vpop.permute.xlu0 %340
    %342 = vrot.lane.b32.xlu0 %v325, 3
    %v343 = vpop.permute.xlu0 %342
    %344 = vrot.lane.b32.xlu0 %v326, 3
    %v345 = vpop.permute.xlu0 %344
    %346 = vrot.lane.b32.xlu0 %v327, 3
    %v347 = vpop.permute.xlu0 %346
    %348 = vrot.lane.b32.xlu0 %v328, 3
    %v349 = vpop.permute.xlu0 %348
    %350 = vrot.lane.b32.xlu0 %v329, 3
    %v351 = vpop.permute.xlu0 %350
    %352 = vrot.lane.b32.xlu0 %v330, 3
    %v353 = vpop.permute.xlu0 %352
    %354 = vrot.lane.b32.xlu0 %v331, 3
    %v355 = vpop.permute.xlu0 %354
    %vm356 = vcmask 23552
    %v357 = vsel %vm356, %v341, %v343
    %v358 = vsel %vm356, %v345, %v347
    %v359 = vsel %vm356, %v349, %v351
    %v360 = vsel %vm356, %v353, %v355
    %365 = vst [vmem:[#allocation3 + $0x40] sm:$0xff] %v357
    %366 = vst [vmem:[#allocation3 + $0x48] sm:$0xff] %v358
    %367 = vst [vmem:[#allocation3 + $0x50] sm:$0xff] %v359
    %368 = vst [vmem:[#allocation3 + $0x58] sm:$0xff] %v360
    %v369 = vld [vmem:[#allocation2] sm:$0xff]
    %v370 = vld [vmem:[#allocation2 + $0x8] sm:$0xff]
    %v371 = vld [vmem:[#allocation2 + $0x18] sm:$0xff]
    %v372 = vld [vmem:[#allocation2 + $0x20] sm:$0xff]
    %v373 = vld [vmem:[#allocation2 + $0x30] sm:$0xff]
    %v374 = vld [vmem:[#allocation2 + $0x38] sm:$0xff]
    %v375 = vld [vmem:[#allocation2 + $0x48] sm:$0xff]
    %v376 = vld [vmem:[#allocation2 + $0x50] sm:$0xff]
    %385 = vrot.lane.b32.xlu0 %v369, 1
    %v386 = vpop.permute.xlu0 %385
    %387 = vrot.lane.b32.xlu0 %v370, 1
    %v388 = vpop.permute.xlu0 %387
    %389 = vrot.lane.b32.xlu0 %v371, 1
    %v390 = vpop.permute.xlu0 %389
    %391 = vrot.lane.b32.xlu0 %v372, 1
    %v392 = vpop.permute.xlu0 %391
    %393 = vrot.lane.b32.xlu0 %v373, 1
    %v394 = vpop.permute.xlu0 %393
    %395 = vrot.lane.b32.xlu0 %v374, 1
    %v396 = vpop.permute.xlu0 %395
    %397 = vrot.lane.b32.xlu0 %v375, 1
    %v398 = vpop.permute.xlu0 %397
    %399 = vrot.lane.b32.xlu0 %v376, 1
    %v400 = vpop.permute.xlu0 %399
    %vm401 = vcmask 7168
    %v402 = vsel %vm401, %v386, %v388
    %v403 = vsel %vm401, %v390, %v392
    %v404 = vsel %vm401, %v394, %v396
    %v405 = vsel %vm401, %v398, %v400
    %410 = vst [vmem:[#allocation3 + $0x60] sm:$0xff] %v402
    %411 = vst [vmem:[#allocation3 + $0x68] sm:$0xff] %v403
    %412 = vst [vmem:[#allocation3 + $0x70] sm:$0xff] %v404
    %413 = vst [vmem:[#allocation3 + $0x78] sm:$0xff] %v405
    %v414 = vld [vmem:[#allocation2 + $0x8] sm:$0xff]
    %v415 = vld [vmem:[#allocation2 + $0x20] sm:$0xff]
    %v416 = vld [vmem:[#allocation2 + $0x38] sm:$0xff]
    %v417 = vld [vmem:[#allocation2 + $0x50] sm:$0xff]
    %418 = vst [vmem:[#allocation3 + $0x80] sm:$0xff] %v414
    %419 = vst [vmem:[#allocation3 + $0x88] sm:$0xff] %v415
    %420 = vst [vmem:[#allocation3 + $0x90] sm:$0xff] %v416
    %421 = vst [vmem:[#allocation3 + $0x98] sm:$0xff] %v417
    %v422 = vld [vmem:[#allocation2 + $0x8] sm:$0xff]
    %v423 = vld [vmem:[#allocation2 + $0x10] sm:$0xff]
    %v424 = vld [vmem:[#allocation2 + $0x20] sm:$0xff]
    %v425 = vld [vmem:[#allocation2 + $0x28] sm:$0xff]
    %v426 = vld [vmem:[#allocation2 + $0x38] sm:$0xff]
    %v427 = vld [vmem:[#allocation2 + $0x40] sm:$0xff]
    %v428 = vld [vmem:[#allocation2 + $0x50] sm:$0xff]
    %v429 = vld [vmem:[#allocation2 + $0x58] sm:$0xff]
    %438 = vrot.lane.b32.xlu0 %v422, 127
    %v439 = vpop.permute.xlu0 %438
    %440 = vrot.lane.b32.xlu0 %v423, 127
    %v441 = vpop.permute.xlu0 %440
    %442 = vrot.lane.b32.xlu0 %v424, 127
    %v443 = vpop.permute.xlu0 %442
    %444 = vrot.lane.b32.xlu0 %v425, 127
    %v445 = vpop.permute.xlu0 %444
    %446 = vrot.lane.b32.xlu0 %v426, 127
    %v447 = vpop.permute.xlu0 %446
    %448 = vrot.lane.b32.xlu0 %v427, 127
    %v449 = vpop.permute.xlu0 %448
    %450 = vrot.lane.b32.xlu0 %v428, 127
    %v451 = vpop.permute.xlu0 %450
    %452 = vrot.lane.b32.xlu0 %v429, 127
    %v453 = vpop.permute.xlu0 %452
    %vm454 = vcmask 1039360
    %v455 = vsel %vm454, %v439, %v441
    %v456 = vsel %vm454, %v443, %v445
    %v457 = vsel %vm454, %v447, %v449
    %v458 = vsel %vm454, %v451, %v453
    %463 = vst [vmem:[#allocation3 + $0xa0] sm:$0xff] %v455
    %464 = vst [vmem:[#allocation3 + $0xa8] sm:$0xff] %v456
    %465 = vst [vmem:[#allocation3 + $0xb0] sm:$0xff] %v457
    %466 = vst [vmem:[#allocation3 + $0xb8] sm:$0xff] %v458
    %v467 = vld [vmem:[#allocation2 + $0x8] sm:$0xff]
    %v468 = vld [vmem:[#allocation2 + $0x10] sm:$0xff]
    %v469 = vld [vmem:[#allocation2 + $0x20] sm:$0xff]
    %v470 = vld [vmem:[#allocation2 + $0x28] sm:$0xff]
    %v471 = vld [vmem:[#allocation2 + $0x38] sm:$0xff]
    %v472 = vld [vmem:[#allocation2 + $0x40] sm:$0xff]
    %v473 = vld [vmem:[#allocation2 + $0x50] sm:$0xff]
    %v474 = vld [vmem:[#allocation2 + $0x58] sm:$0xff]
    %483 = vrot.lane.b32.xlu0 %v467, 125
    %v484 = vpop.permute.xlu0 %483
    %485 = vrot.lane.b32.xlu0 %v468, 125
    %v486 = vpop.permute.xlu0 %485
    %487 = vrot.lane.b32.xlu0 %v469, 125
    %v488 = vpop.permute.xlu0 %487
    %489 = vrot.lane.b32.xlu0 %v470, 125
    %v490 = vpop.permute.xlu0 %489
    %491 = vrot.lane.b32.xlu0 %v471, 125
    %v492 = vpop.permute.xlu0 %491
    %493 = vrot.lane.b32.xlu0 %v472, 125
    %v494 = vpop.permute.xlu0 %493
    %495 = vrot.lane.b32.xlu0 %v473, 125
    %v496 = vpop.permute.xlu0 %495
    %497 = vrot.lane.b32.xlu0 %v474, 125
    %v498 = vpop.permute.xlu0 %497
    %vm499 = vcmask 1022976
    %v500 = vsel %vm499, %v484, %v486
    %v501 = vsel %vm499, %v488, %v490
    %v502 = vsel %vm499, %v492, %v494
    %v503 = vsel %vm499, %v496, %v498
    %508 = vst [vmem:[#allocation3 + $0xc0] sm:$0xff] %v500
    %509 = vst [vmem:[#allocation3 + $0xc8] sm:$0xff] %v501
    %510 = vst [vmem:[#allocation3 + $0xd0] sm:$0xff] %v502
    %511 = vst [vmem:[#allocation3 + $0xd8] sm:$0xff] %v503
    %v512 = vld [vmem:[#allocation2 + $0x8] sm:$0xff]
    %v513 = vld [vmem:[#allocation2 + $0x10] sm:$0xff]
    %v514 = vld [vmem:[#allocation2 + $0x20] sm:$0xff]
    %v515 = vld [vmem:[#allocation2 + $0x28] sm:$0xff]
    %v516 = vld [vmem:[#allocation2 + $0x38] sm:$0xff]
    %v517 = vld [vmem:[#allocation2 + $0x40] sm:$0xff]
    %v518 = vld [vmem:[#allocation2 + $0x50] sm:$0xff]
    %v519 = vld [vmem:[#allocation2 + $0x58] sm:$0xff]
    %528 = vrot.lane.b32.xlu0 %v512, 124
    %v529 = vpop.permute.xlu0 %528
    %530 = vrot.lane.b32.xlu0 %v513, 124
    %v531 = vpop.permute.xlu0 %530
    %532 = vrot.lane.b32.xlu0 %v514, 124
    %v533 = vpop.permute.xlu0 %532
    %534 = vrot.lane.b32.xlu0 %v515, 124
    %v535 = vpop.permute.xlu0 %534
    %536 = vrot.lane.b32.xlu0 %v516, 124
    %v537 = vpop.permute.xlu0 %536
    %538 = vrot.lane.b32.xlu0 %v517, 124
    %v539 = vpop.permute.xlu0 %538
    %540 = vrot.lane.b32.xlu0 %v518, 124
    %v541 = vpop.permute.xlu0 %540
    %542 = vrot.lane.b32.xlu0 %v519, 124
    %v543 = vpop.permute.xlu0 %542
    %vm544 = vcmask 1014784
    %v545 = vsel %vm544, %v529, %v531
    %v546 = vsel %vm544, %v533, %v535
    %v547 = vsel %vm544, %v537, %v539
    %v548 = vsel %vm544, %v541, %v543
    %553 = vst [vmem:[#allocation3 + $0xe0] sm:$0xff] %v545
    %554 = vst [vmem:[#allocation3 + $0xe8] sm:$0xff] %v546
    %555 = vst [vmem:[#allocation3 + $0xf0] sm:$0xff] %v547
    %556 = vst [vmem:[#allocation3 + $0xf8] sm:$0xff] %v548
    %v557 = vld [vmem:[#allocation2 + $0x8] sm:$0xff]
    %v558 = vld [vmem:[#allocation2 + $0x10] sm:$0xff]
    %v559 = vld [vmem:[#allocation2 + $0x20] sm:$0xff]
    %v560 = vld [vmem:[#allocation2 + $0x28] sm:$0xff]
    %v561 = vld [vmem:[#allocation2 + $0x38] sm:$0xff]
    %v562 = vld [vmem:[#allocation2 + $0x40] sm:$0xff]
    %v563 = vld [vmem:[#allocation2 + $0x50] sm:$0xff]
    %v564 = vld [vmem:[#allocation2 + $0x58] sm:$0xff]
    %573 = vrot.lane.b32.xlu0 %v557, 123
    %v574 = vpop.permute.xlu0 %573
    %575 = vrot.lane.b32.xlu0 %v558, 123
    %v576 = vpop.permute.xlu0 %575
    %577 = vrot.lane.b32.xlu0 %v559, 123
    %v578 = vpop.permute.xlu0 %577
    %579 = vrot.lane.b32.xlu0 %v560, 123
    %v580 = vpop.permute.xlu0 %579
    %581 = vrot.lane.b32.xlu0 %v561, 123
    %v582 = vpop.permute.xlu0 %581
    %583 = vrot.lane.b32.xlu0 %v562, 123
    %v584 = vpop.permute.xlu0 %583
    %585 = vrot.lane.b32.xlu0 %v563, 123
    %v586 = vpop.permute.xlu0 %585
    %587 = vrot.lane.b32.xlu0 %v564, 123
    %v588 = vpop.permute.xlu0 %587
    %vm589 = vcmask 1006592
    %v590 = vsel %vm589, %v574, %v576
    %v591 = vsel %vm589, %v578, %v580
    %v592 = vsel %vm589, %v582, %v584
    %v593 = vsel %vm589, %v586, %v588
    %598 = vst [vmem:[#allocation3 + $0x100] sm:$0xff] %v590
    %599 = vst [vmem:[#allocation3 + $0x108] sm:$0xff] %v591
    %600 = vst [vmem:[#allocation3 + $0x110] sm:$0xff] %v592
    %601 = vst [vmem:[#allocation3 + $0x118] sm:$0xff] %v593
    %v602 = vld [vmem:[%s3] sm:$0xff]
    %v603 = vld [vmem:[%s3 + $0x8] sm:$0xff]
    %v604 = vld [vmem:[%s3 + $0x10] sm:$0xff]
    %v605 = vld [vmem:[%s3 + $0x18] sm:$0xff]
    %v606 = vld [vmem:[%s3 + $0x20] sm:$0xff]
    %v607 = vld [vmem:[%s3 + $0x28] sm:$0xff]
    %v608 = vld [vmem:[#allocation3] sm:$0xff]
    %v609 = vld [vmem:[#allocation3 + $0x8] sm:$0xff]
    %v610 = vld [vmem:[#allocation3 + $0x10] sm:$0xff]
    %v611 = vld [vmem:[#allocation3 + $0x18] sm:$0xff]
    %v612 = vld [vmem:[#allocation3 + $0x20] sm:$0xff]
    %v613 = vld [vmem:[#allocation3 + $0x28] sm:$0xff]
    %v614 = vld [vmem:[#allocation3 + $0x30] sm:$0xff]
    %v615 = vld [vmem:[#allocation3 + $0x38] sm:$0xff]
    %v616 = vld [vmem:[#allocation3 + $0x40] sm:$0xff]
    %v617 = vld [vmem:[#allocation3 + $0x48] sm:$0xff]
    %v618 = vld [vmem:[#allocation3 + $0x50] sm:$0xff]
    %v619 = vld [vmem:[#allocation3 + $0x58] sm:$0xff]
    %v620 = vld [vmem:[#allocation3 + $0x60] sm:$0xff]
    %v621 = vld [vmem:[#allocation3 + $0x68] sm:$0xff]
    %v622 = vld [vmem:[#allocation3 + $0x70] sm:$0xff]
    %v623 = vld [vmem:[#allocation3 + $0x78] sm:$0xff]
    %v624 = vld [vmem:[#allocation3 + $0x80] sm:$0xff]
    %v625 = vld [vmem:[#allocation3 + $0x88] sm:$0xff]
    %v626 = vld [vmem:[#allocation3 + $0x90] sm:$0xff]
    %v627 = vld [vmem:[#allocation3 + $0x98] sm:$0xff]
    %v628 = vld [vmem:[#allocation3 + $0xa0] sm:$0xff]
    %v629 = vld [vmem:[#allocation3 + $0xa8] sm:$0xff]
    %v630 = vld [vmem:[#allocation3 + $0xb0] sm:$0xff]
    %v631 = vld [vmem:[#allocation3 + $0xb8] sm:$0xff]
    %v632 = vld [vmem:[#allocation3 + $0xc0] sm:$0xff]
    %v633 = vld [vmem:[#allocation3 + $0xc8] sm:$0xff]
    %v634 = vld [vmem:[#allocation3 + $0xd0] sm:$0xff]
    %v635 = vld [vmem:[#allocation3 + $0xd8] sm:$0xff]
    %v636 = vld [vmem:[#allocation3 + $0xe0] sm:$0xff]
    %v637 = vld [vmem:[#allocation3 + $0xe8] sm:$0xff]
    %v638 = vld [vmem:[#allocation3 + $0xf0] sm:$0xff]
    %v639 = vld [vmem:[#allocation3 + $0xf8] sm:$0xff]
    %v640 = vld [vmem:[#allocation3 + $0x100] sm:$0xff]
    %v641 = vld [vmem:[#allocation3 + $0x108] sm:$0xff]
    %v642 = vld [vmem:[#allocation3 + $0x110] sm:$0xff]
    %v643 = vld [vmem:[#allocation3 + $0x118] sm:$0xff]
    %v644 = vld [vmem:[%s4] sm:$0xff]
    %v645 = vld [vmem:[%s4 + $0x8] sm:$0xff]
    %647 = vset.pattern.permute.xlu0 0
    %648 = vperm.xlu0 %647, %v644
    %v649 = vpop.permute.xlu0 %648
    %652 = vset.pattern.permute.xlu0 0
    %653 = vperm.xlu0 %652, %v645
    %v654 = vpop.permute.xlu0 %653
    %vm656 = vcmask 261120
    %v658 = vsel %vm656, %v604, 0
    %v661 = vsel %vm656, %v607, 0
    %663 = vmatpush.msra.mxu0 %v623
    %664 = vmatpush.msra.mxu0 %v622
    %665 = vmatpush.msra.mxu0 %v621
    %666 = vmatpush.msra.mxu0 %v620
    %667 = vmatpush.msra.mxu0 %v619
    %668 = vmatpush.msra.mxu0 %v618
    %669 = vmatpush.msra.mxu0 %v617
    %670 = vmatpush.msra.mxu0 %v616
    %671 = vmatpush.msra.mxu0 %v615
    %672 = vmatpush.msra.mxu0 %v614
    %673 = vmatpush.msra.mxu0 %v613
    %674 = vmatpush.msra.mxu0 %v612
    %675 = vmatpush.msra.mxu0 %v611
    %676 = vmatpush.msra.mxu0 %v610
    %677 = vmatpush.msra.mxu0 %v609
    %678 = vmatpush.msra.mxu0 %v608
    %679 = vmatmul.f32.gmra.mxu0 %v602
    %v680 = vpop.f32.mrf.mxu0
    %v681 = vadd.f32 %v649, %v680
    %682 = vmatmul.f32.gmra.mxu0 %v605
    %v683 = vpop.f32.mrf.mxu0
    %v684 = vadd.f32 %v654, %v683
    %685 = vdwg.mxu0
    %686 = vmatpush.msra.mxu0 %v639
    %687 = vmatpush.msra.mxu0 %v638
    %688 = vmatpush.msra.mxu0 %v637
    %689 = vmatpush.msra.mxu0 %v636
    %690 = vmatpush.msra.mxu0 %v635
    %691 = vmatpush.msra.mxu0 %v634
    %692 = vmatpush.msra.mxu0 %v633
    %693 = vmatpush.msra.mxu0 %v632
    %694 = vmatpush.msra.mxu0 %v631
    %695 = vmatpush.msra.mxu0 %v630
    %696 = vmatpush.msra.mxu0 %v629
    %697 = vmatpush.msra.mxu0 %v628
    %698 = vmatpush.msra.mxu0 %v627
    %699 = vmatpush.msra.mxu0 %v626
    %700 = vmatpush.msra.mxu0 %v625
    %701 = vmatpush.msra.mxu0 %v624
    %702 = vmatmul.f32.gmra.mxu0 %v603
    %v703 = vpop.f32.mrf.mxu0
    %v704 = vadd.f32 %v681, %v703
    %705 = vmatmul.f32.gmra.mxu0 %v606
    %v706 = vpop.f32.mrf.mxu0
    %v707 = vadd.f32 %v684, %v706
    %708 = vdwg.mxu0
    %709 = vmatpush.msra.mxu0 0.0
    %710 = vmatpush.msra.mxu0 0.0
    %711 = vmatpush.msra.mxu0 0.0
    %712 = vmatpush.msra.mxu0 0.0
    %713 = vmatpush.msra.mxu0 0.0
    %714 = vmatpush.msra.mxu0 0.0
    %715 = vmatpush.msra.mxu0 0.0
    %716 = vmatpush.msra.mxu0 0.0
    %717 = vmatpush.msra.mxu0 0.0
    %718 = vmatpush.msra.mxu0 0.0
    %719 = vmatpush.msra.mxu0 0.0
    %720 = vmatpush.msra.mxu0 0.0
    %721 = vmatpush.msra.mxu0 %v643
    %722 = vmatpush.msra.mxu0 %v642
    %723 = vmatpush.msra.mxu0 %v641
    %724 = vmatpush.msra.mxu0 %v640
    %725 = vmatmul.f32.gmra.mxu0 %v658
    %v726 = vpop.f32.mrf.mxu0
    %v727 = vadd.f32 %v704, %v726
    %728 = vmatmul.f32.gmra.mxu0 %v661
    %v729 = vpop.f32.mrf.mxu0
    %v730 = vadd.f32 %v707, %v729
    %731 = vdwg.mxu0
    %v732 = vround.ne.pseudo %v727
    %v733 = vround.ne.pseudo %v730
    %v734 = vld [vmem:[%s5] sm:$0xff]
    %v735 = vld [vmem:[%s5 + $0x8] sm:$0xff]
    %v736 = vadd.f32 %v732, 0.5
    %v737 = vadd.f32 %v733, 0.5
    %739 = vset.pattern.permute.xlu0 0
    %740 = vperm.xlu0 %739, %v734
    %v741 = vpop.permute.xlu0 %740
    %744 = vset.pattern.permute.xlu0 0
    %745 = vperm.xlu0 %744, %v735
    %v746 = vpop.permute.xlu0 %745
    %v748 = vmul.f32 %v736, %v741
    %v749 = vmul.f32 %v737, %v746
    %v750 = vmul.f32 %v748, 0.5
    %v751 = vmul.f32 %v749, 0.5
    %v752 = vtanh.pop %v750
    %v753 = vtanh.pop %v751
    %v754 = vadd.f32 %v752, 1.0
    %v755 = vadd.f32 %v753, 1.0
    %v756 = vmul.f32 %v754, 0.5
    %v757 = vmul.f32 %v755, 0.5
    %v758 = vsub.f32 %v732, 0.5
    %v759 = vsub.f32 %v733, 0.5
    %v760 = vmul.f32 %v758, %v741
    %v761 = vmul.f32 %v759, %v746
    %v762 = vmul.f32 %v760, 0.5
    %v763 = vmul.f32 %v761, 0.5
    %v764 = vtanh.pop %v762
    %v765 = vtanh.pop %v763
    %v766 = vadd.f32 %v764, 1.0
    %v767 = vadd.f32 %v765, 1.0
    %v768 = vmul.f32 %v766, 0.5
    %v769 = vmul.f32 %v767, 0.5
    %770 = vst [vmem:[%s6] sm:$0xff] %v732
    %771 = vst [vmem:[%s6 + $0x8] sm:$0xff] %v733
    %v772 = vsub.f32 %v756, %v768
    %v773 = vsub.f32 %v757, %v769
    %v774 = vmax.f32 %v772, 1e-09
    %v775 = vmax.f32 %v773, 1e-09
    %776 = vst [vmem:[%s7] sm:$0xff] %v774
    %777 = vst [vmem:[%s7 + $0x8] sm:$0xff] %v775
    // Predicated region
    $region149: #{_lambda_.11} parent=1 // pred_check
      _
    $region150: #{_lambda_.11} parent=1 // pred_check_branch
      %779 = sbr.rel (0) target = $region152
    $region151: #{_lambda_.11} parent=1 // pred_region
      _
    $region152: #{_lambda_.11} parent=1 // pred_fallthru
      _
    // Predicated region
    $region153: #{_lambda_.11} parent=1 // pred_check
      _
    $region154: #{_lambda_.11} parent=1 // pred_check_branch
      %781 = sbr.rel (0) target = $region156
    $region155: #{_lambda_.11} parent=1 // pred_region
      _
    $region156: #{_lambda_.11} parent=1 // pred_fallthru
      _
    // Predicated region
    $region157: #{_lambda_.11} parent=1 // pred_check
      _
    $region158: #{_lambda_.11} parent=1 // pred_check_branch
      %783 = sbr.rel (0) target = $region160
    $region159: #{_lambda_.11} parent=1 // pred_region
      _
    $region160: #{_lambda_.11} parent=1 // pred_fallthru
      _
    // Predicated region
    $region161: #{_lambda_.11} parent=1 // pred_check
      _
    $region162: #{_lambda_.11} parent=1 // pred_check_branch
      %785 = sbr.rel (0) target = $region164
    $region163: #{_lambda_.11} parent=1 // pred_region
      _
    $region164: #{_lambda_.11} parent=1 // pred_fallthru
      _

// kernel: _lambda_.13
$region0: #{_lambda_.13}
  #allocation0 [shape = 'u32[]', space=smem, size = 0x4, offset = 0x4, fixed_abs, tag = 'smem constant byte address 0x4 - core index']
  #allocation1 [shape = 'u32[72,128]{1,0:T(1,128)}', space=vmem, size = 0x9000, scoped, tag = 'internal scratch']
  #allocation2 [shape = 'f32[16,384]{1,0:T(8,128)}', space=vmem, size = 0x6000, scoped, tag = 'scratch operand']
  #allocation3 [shape = 'f32[144,128]{1,0:T(8,128)}', space=vmem, size = 0x12000, scoped, tag = 'scratch operand']
  %s0 = inlined_call_operand.vmem [shape: bf16[16,384], index: 0, kind: input, shape index: {}, may-alias: {0,1,2}]
  %s1 = inlined_call_operand.vmem [shape: bf16[16,384], index: 1, kind: input, shape index: {}, may-alias: {0,1,2}]
  %s2 = inlined_call_operand.vmem [shape: bf16[16,384], index: 2, kind: input, shape index: {}, may-alias: {0,1,2}]
  %s3 = inlined_call_operand.vmem [shape: f32[32,144], index: 3, kind: input, shape index: {}]
  %s4 = inlined_call_operand.vmem [shape: f32[32,1], index: 4, kind: input, shape index: {}]
  %s5 = inlined_call_operand.vmem [shape: f32[32,32], index: 5, kind: input, shape index: {}]
  %s6 = inlined_call_operand.vmem [shape: f32[32,1], index: 6, kind: input, shape index: {}]
  %s7 = inlined_call_operand.vmem [shape: bf16[32,128], index: 7, kind: output, shape index: {}]
  %s8 = sld [smem:[#allocation0]]
  $region161: #{_lambda_.13} parent=0
    _
  %s10 = ssub.s32 1, %s8
  %s11 = scalar_select 0, %s10, %s8
  $region1: #{_lambda_.13} parent=0
    #allocation4 [shape = 'u8[4096]{0}', space=vmem, size = 0x1000, scoped, tag = 'input window, operand 0, single buffered']
    #allocation5 [shape = 'u8[4096]{0}', space=vmem, size = 0x1000, scoped, tag = 'input window, operand 1, single buffered']
    #allocation6 [shape = 'u8[4096]{0}', space=vmem, size = 0x1000, scoped, tag = 'input window, operand 2, single buffered']
    // Predicated region
    $region2: #{_lambda_.13} parent=1 // pred_check
      _
    $region3: #{_lambda_.13} parent=1 // pred_check_branch
      %13 = sbr.rel (0) target = $region5
    $region4: #{_lambda_.13} parent=1 // pred_region
      // Predicated region
      $region6: #{_lambda_.13} parent=4 // pred_check
        _
      $region7: #{_lambda_.13} parent=4 // pred_check_branch
        %15 = sbr.rel (0) target = $region9
      $region8: #{_lambda_.13} parent=4 // pred_region
        // Predicated region
        $region10: #{_lambda_.13} parent=8 // pred_check
          _
        $region11: #{_lambda_.13} parent=8 // pred_check_branch
          %17 = sbr.rel target = $region13
        $region12: #{_lambda_.13} parent=8 // pred_region
          // Predicated region
          $region25: #{_lambda_.13} parent=12 // pred_check
            _
          $region26: #{_lambda_.13} parent=12 // pred_check_branch
            %35 = sbr.rel (0) target = $region28
          $region27: #{_lambda_.13} parent=12 // pred_region
            loop: start=0, step=1, limit=1
            $region29: #{_lambda_.13} parent=27 // loop_pre_header
              _
            $region30: #{_lambda_.13} parent=27 // loop_header
              %s37 = sphi 0, %s41
              %p38 = scmp.ge.s32.totalorder %s37, 1
              %s42 = sphi %s0, %s0
              %s43 = sphi [#allocation4], [#allocation4]
            $region31: #{_lambda_.13} parent=27 // loop_header_branch
              %40 = sbr.rel (%p38) target = $region35
            $region32: #{_lambda_.13} parent=27 // loop_body
              _
            $region33: #{_lambda_.13} parent=27 // loop_footer
              %s41 = sadd.s32 1, %s37
            $region34: #{_lambda_.13} parent=27 // loop_footer_branch
              %36 = sbr.rel target = $region30
            $region35: #{_lambda_.13} parent=27 // loop_exit
              _
            %s45 = ssub.s32 16, 1
            loop: start=0, step=1, limit=1
            $region36: #{_lambda_.13} parent=27 // loop_pre_header
              _
            $region37: #{_lambda_.13} parent=27 // loop_header
              %s47 = sphi 0, %s51
              %p48 = scmp.ge.s32.totalorder %s47, 1
              %s52 = sphi %s0, %s0
              %s53 = sphi [#allocation4], [#allocation4]
            $region38: #{_lambda_.13} parent=27 // loop_header_branch
              %50 = sbr.rel (%p48) target = $region42
            $region39: #{_lambda_.13} parent=27 // loop_body
              %v54 = vld [vmem:[%s52] sm:%s45]
              %55 = vst [vmem:[%s53] sm:%s45] %v54
              %v56 = vld [vmem:[%s52 + $0xc] sm:%s45]
              %57 = vst [vmem:[%s53 + $0x4] sm:%s45] %v56
            $region40: #{_lambda_.13} parent=27 // loop_footer
              %s51 = sadd.s32 1, %s47
            $region41: #{_lambda_.13} parent=27 // loop_footer_branch
              %46 = sbr.rel target = $region37
            $region42: #{_lambda_.13} parent=27 // loop_exit
              _
          $region28: #{_lambda_.13} parent=12 // pred_fallthru
            _
        $region13: #{_lambda_.13} parent=8 // pred_fallthru
          _
        // Predicated region
        $region14: #{_lambda_.13} parent=8 // pred_check
          _
        $region15: #{_lambda_.13} parent=8 // pred_check_branch
          %19 = sbr.rel (0) target = $region17
        $region16: #{_lambda_.13} parent=8 // pred_region
          %s21 = ssub.s32 16, 1
          loop: start=0, step=1, limit=1
          $region18: #{_lambda_.13} parent=16 // loop_pre_header
            _
          $region19: #{_lambda_.13} parent=16 // loop_header
            %s23 = sphi 0, %s27
            %p24 = scmp.ge.s32.totalorder %s23, 1
            %s28 = sphi %s0, %s0
            %s29 = sphi [#allocation4], [#allocation4]
          $region20: #{_lambda_.13} parent=16 // loop_header_branch
            %26 = sbr.rel (%p24) target = $region24
          $region21: #{_lambda_.13} parent=16 // loop_body
            %v30 = vld [vmem:[%s28] sm:%s21]
            %31 = vst [vmem:[%s29] sm:%s21] %v30
            %v32 = vld [vmem:[%s28 + $0xc] sm:%s21]
            %33 = vst [vmem:[%s29 + $0x4] sm:%s21] %v32
          $region22: #{_lambda_.13} parent=16 // loop_footer
            %s27 = sadd.s32 1, %s23
          $region23: #{_lambda_.13} parent=16 // loop_footer_branch
            %22 = sbr.rel target = $region19
          $region24: #{_lambda_.13} parent=16 // loop_exit
            _
        $region17: #{_lambda_.13} parent=8 // pred_fallthru
          _
      $region9: #{_lambda_.13} parent=4 // pred_fallthru
        _
      %58 = vnop
    $region5: #{_lambda_.13} parent=1 // pred_fallthru
      _
    // Predicated region
    $region43: #{_lambda_.13} parent=1 // pred_check
      _
    $region44: #{_lambda_.13} parent=1 // pred_check_branch
      %60 = sbr.rel (0) target = $region46
    $region45: #{_lambda_.13} parent=1 // pred_region
      %s61 = sadd.s32 0, 1
      %s62 = smul.addr %s61, 4
      %s63 = scalar_lea.vmem %s1, %s62
      // Predicated region
      $region47: #{_lambda_.13} parent=45 // pred_check
        _
      $region48: #{_lambda_.13} parent=45 // pred_check_branch
        %65 = sbr.rel (0) target = $region50
      $region49: #{_lambda_.13} parent=45 // pred_region
        // Predicated region
        $region51: #{_lambda_.13} parent=49 // pred_check
          _
        $region52: #{_lambda_.13} parent=49 // pred_check_branch
          %67 = sbr.rel target = $region54
        $region53: #{_lambda_.13} parent=49 // pred_region
          // Predicated region
          $region66: #{_lambda_.13} parent=53 // pred_check
            _
          $region67: #{_lambda_.13} parent=53 // pred_check_branch
            %85 = sbr.rel (0) target = $region69
          $region68: #{_lambda_.13} parent=53 // pred_region
            loop: start=0, step=1, limit=1
            $region70: #{_lambda_.13} parent=68 // loop_pre_header
              _
            $region71: #{_lambda_.13} parent=68 // loop_header
              %s87 = sphi 0, %s91
              %p88 = scmp.ge.s32.totalorder %s87, 1
              %s92 = sphi %s63, %s63
              %s93 = sphi [#allocation5], [#allocation5]
            $region72: #{_lambda_.13} parent=68 // loop_header_branch
              %90 = sbr.rel (%p88) target = $region76
            $region73: #{_lambda_.13} parent=68 // loop_body
              _
            $region74: #{_lambda_.13} parent=68 // loop_footer
              %s91 = sadd.s32 1, %s87
            $region75: #{_lambda_.13} parent=68 // loop_footer_branch
              %86 = sbr.rel target = $region71
            $region76: #{_lambda_.13} parent=68 // loop_exit
              _
            %s95 = ssub.s32 16, 1
            loop: start=0, step=1, limit=1
            $region77: #{_lambda_.13} parent=68 // loop_pre_header
              _
            $region78: #{_lambda_.13} parent=68 // loop_header
              %s97 = sphi 0, %s101
              %p98 = scmp.ge.s32.totalorder %s97, 1
              %s102 = sphi %s63, %s63
              %s103 = sphi [#allocation5], [#allocation5]
            $region79: #{_lambda_.13} parent=68 // loop_header_branch
              %100 = sbr.rel (%p98) target = $region83
            $region80: #{_lambda_.13} parent=68 // loop_body
              %v104 = vld [vmem:[%s102] sm:%s95]
              %105 = vst [vmem:[%s103] sm:%s95] %v104
              %v106 = vld [vmem:[%s102 + $0xc] sm:%s95]
              %107 = vst [vmem:[%s103 + $0x4] sm:%s95] %v106
            $region81: #{_lambda_.13} parent=68 // loop_footer
              %s101 = sadd.s32 1, %s97
            $region82: #{_lambda_.13} parent=68 // loop_footer_branch
              %96 = sbr.rel target = $region78
            $region83: #{_lambda_.13} parent=68 // loop_exit
              _
          $region69: #{_lambda_.13} parent=53 // pred_fallthru
            _
        $region54: #{_lambda_.13} parent=49 // pred_fallthru
          _
        // Predicated region
        $region55: #{_lambda_.13} parent=49 // pred_check
          _
        $region56: #{_lambda_.13} parent=49 // pred_check_branch
          %69 = sbr.rel (0) target = $region58
        $region57: #{_lambda_.13} parent=49 // pred_region
          %s71 = ssub.s32 16, 1
          loop: start=0, step=1, limit=1
          $region59: #{_lambda_.13} parent=57 // loop_pre_header
            _
          $region60: #{_lambda_.13} parent=57 // loop_header
            %s73 = sphi 0, %s77
            %p74 = scmp.ge.s32.totalorder %s73, 1
            %s78 = sphi %s63, %s63
            %s79 = sphi [#allocation5], [#allocation5]
          $region61: #{_lambda_.13} parent=57 // loop_header_branch
            %76 = sbr.rel (%p74) target = $region65
          $region62: #{_lambda_.13} parent=57 // loop_body
            %v80 = vld [vmem:[%s78] sm:%s71]
            %81 = vst [vmem:[%s79] sm:%s71] %v80
            %v82 = vld [vmem:[%s78 + $0xc] sm:%s71]
            %83 = vst [vmem:[%s79 + $0x4] sm:%s71] %v82
          $region63: #{_lambda_.13} parent=57 // loop_footer
            %s77 = sadd.s32 1, %s73
          $region64: #{_lambda_.13} parent=57 // loop_footer_branch
            %72 = sbr.rel target = $region60
          $region65: #{_lambda_.13} parent=57 // loop_exit
            _
        $region58: #{_lambda_.13} parent=49 // pred_fallthru
          _
      $region50: #{_lambda_.13} parent=45 // pred_fallthru
        _
      %108 = vnop
    $region46: #{_lambda_.13} parent=1 // pred_fallthru
      _
    // Predicated region
    $region84: #{_lambda_.13} parent=1 // pred_check
      _
    $region85: #{_lambda_.13} parent=1 // pred_check_branch
      %110 = sbr.rel (0) target = $region87
    $region86: #{_lambda_.13} parent=1 // pred_region
      %s111 = sadd.s32 0, 2
      %s112 = smul.addr %s111, 4
      %s113 = scalar_lea.vmem %s2, %s112
      // Predicated region
      $region88: #{_lambda_.13} parent=86 // pred_check
        _
      $region89: #{_lambda_.13} parent=86 // pred_check_branch
        %115 = sbr.rel (0) target = $region91
      $region90: #{_lambda_.13} parent=86 // pred_region
        // Predicated region
        $region92: #{_lambda_.13} parent=90 // pred_check
          _
        $region93: #{_lambda_.13} parent=90 // pred_check_branch
          %117 = sbr.rel target = $region95
        $region94: #{_lambda_.13} parent=90 // pred_region
          // Predicated region
          $region107: #{_lambda_.13} parent=94 // pred_check
            _
          $region108: #{_lambda_.13} parent=94 // pred_check_branch
            %135 = sbr.rel (0) target = $region110
          $region109: #{_lambda_.13} parent=94 // pred_region
            loop: start=0, step=1, limit=1
            $region111: #{_lambda_.13} parent=109 // loop_pre_header
              _
            $region112: #{_lambda_.13} parent=109 // loop_header
              %s137 = sphi 0, %s141
              %p138 = scmp.ge.s32.totalorder %s137, 1
              %s142 = sphi %s113, %s113
              %s143 = sphi [#allocation6], [#allocation6]
            $region113: #{_lambda_.13} parent=109 // loop_header_branch
              %140 = sbr.rel (%p138) target = $region117
            $region114: #{_lambda_.13} parent=109 // loop_body
              _
            $region115: #{_lambda_.13} parent=109 // loop_footer
              %s141 = sadd.s32 1, %s137
            $region116: #{_lambda_.13} parent=109 // loop_footer_branch
              %136 = sbr.rel target = $region112
            $region117: #{_lambda_.13} parent=109 // loop_exit
              _
            %s145 = ssub.s32 16, 1
            loop: start=0, step=1, limit=1
            $region118: #{_lambda_.13} parent=109 // loop_pre_header
              _
            $region119: #{_lambda_.13} parent=109 // loop_header
              %s147 = sphi 0, %s151
              %p148 = scmp.ge.s32.totalorder %s147, 1
              %s152 = sphi %s113, %s113
              %s153 = sphi [#allocation6], [#allocation6]
            $region120: #{_lambda_.13} parent=109 // loop_header_branch
              %150 = sbr.rel (%p148) target = $region124
            $region121: #{_lambda_.13} parent=109 // loop_body
              %v154 = vld [vmem:[%s152] sm:%s145]
              %155 = vst [vmem:[%s153] sm:%s145] %v154
              %v156 = vld [vmem:[%s152 + $0xc] sm:%s145]
              %157 = vst [vmem:[%s153 + $0x4] sm:%s145] %v156
            $region122: #{_lambda_.13} parent=109 // loop_footer
              %s151 = sadd.s32 1, %s147
            $region123: #{_lambda_.13} parent=109 // loop_footer_branch
              %146 = sbr.rel target = $region119
            $region124: #{_lambda_.13} parent=109 // loop_exit
              _
          $region110: #{_lambda_.13} parent=94 // pred_fallthru
            _
        $region95: #{_lambda_.13} parent=90 // pred_fallthru
          _
        // Predicated region
        $region96: #{_lambda_.13} parent=90 // pred_check
          _
        $region97: #{_lambda_.13} parent=90 // pred_check_branch
          %119 = sbr.rel (0) target = $region99
        $region98: #{_lambda_.13} parent=90 // pred_region
          %s121 = ssub.s32 16, 1
          loop: start=0, step=1, limit=1
          $region100: #{_lambda_.13} parent=98 // loop_pre_header
            _
          $region101: #{_lambda_.13} parent=98 // loop_header
            %s123 = sphi 0, %s127
            %p124 = scmp.ge.s32.totalorder %s123, 1
            %s128 = sphi %s113, %s113
            %s129 = sphi [#allocation6], [#allocation6]
          $region102: #{_lambda_.13} parent=98 // loop_header_branch
            %126 = sbr.rel (%p124) target = $region106
          $region103: #{_lambda_.13} parent=98 // loop_body
            %v130 = vld [vmem:[%s128] sm:%s121]
            %131 = vst [vmem:[%s129] sm:%s121] %v130
            %v132 = vld [vmem:[%s128 + $0xc] sm:%s121]
            %133 = vst [vmem:[%s129 + $0x4] sm:%s121] %v132
          $region104: #{_lambda_.13} parent=98 // loop_footer
            %s127 = sadd.s32 1, %s123
          $region105: #{_lambda_.13} parent=98 // loop_footer_branch
            %122 = sbr.rel target = $region101
          $region106: #{_lambda_.13} parent=98 // loop_exit
            _
        $region99: #{_lambda_.13} parent=90 // pred_fallthru
          _
      $region91: #{_lambda_.13} parent=86 // pred_fallthru
        _
      %158 = vnop
    $region87: #{_lambda_.13} parent=1 // pred_fallthru
      _
    // Predicated region
    $region125: #{_lambda_.13} parent=1 // pred_check
      _
    $region126: #{_lambda_.13} parent=1 // pred_check_branch
      %160 = sbr.rel (0) target = $region128
    $region127: #{_lambda_.13} parent=1 // pred_region
      _
    $region128: #{_lambda_.13} parent=1 // pred_fallthru
      _
    // Predicated region
    $region129: #{_lambda_.13} parent=1 // pred_check
      _
    $region130: #{_lambda_.13} parent=1 // pred_check_branch
      %162 = sbr.rel (0) target = $region132
    $region131: #{_lambda_.13} parent=1 // pred_region
      _
    $region132: #{_lambda_.13} parent=1 // pred_fallthru
      _
    // Predicated region
    $region133: #{_lambda_.13} parent=1 // pred_check
      _
    $region134: #{_lambda_.13} parent=1 // pred_check_branch
      %164 = sbr.rel (0) target = $region136
    $region135: #{_lambda_.13} parent=1 // pred_region
      _
    $region136: #{_lambda_.13} parent=1 // pred_fallthru
      _
    // Predicated region
    $region137: #{_lambda_.13} parent=1 // pred_check
      _
    $region138: #{_lambda_.13} parent=1 // pred_check_branch
      %166 = sbr.rel (0) target = $region140
    $region139: #{_lambda_.13} parent=1 // pred_region
      _
    $region140: #{_lambda_.13} parent=1 // pred_fallthru
      _
    // Predicated region
    $region141: #{_lambda_.13} parent=1 // pred_check
      _
    $region142: #{_lambda_.13} parent=1 // pred_check_branch
      %168 = sbr.rel (0) target = $region144
    $region143: #{_lambda_.13} parent=1 // pred_region
      _
    $region144: #{_lambda_.13} parent=1 // pred_fallthru
      _
    // Predicated region
    $region145: #{_lambda_.13} parent=1 // pred_check
      _
    $region146: #{_lambda_.13} parent=1 // pred_check_branch
      %170 = sbr.rel (0) target = $region148
    $region147: #{_lambda_.13} parent=1 // pred_region
      _
    $region148: #{_lambda_.13} parent=1 // pred_fallthru
      _
    // Predicated region
    $region149: #{_lambda_.13} parent=1 // pred_check
      _
    $region150: #{_lambda_.13} parent=1 // pred_check_branch
      %172 = sbr.rel (0) target = $region152
    $region151: #{_lambda_.13} parent=1 // pred_region
      _
    $region152: #{_lambda_.13} parent=1 // pred_fallthru
      _
    %s173 = sadd.s32 0, 1
    %s174 = sadd.s32 0, 2
    %v175 = vld [vmem:[#allocation4] sm:$0xf]
    %v176 = vld [vmem:[#allocation4 + $0x4] sm:$0xf]
    %v177 = vunpack.c.l.bf16 %v175
    %v178 = vunpack.c.l.bf16 %v176
    %179 = vst [vmem:[#allocation2] sm:$0xff] %v177
    %180 = vst [vmem:[#allocation2 + $0x18] sm:$0xff] %v178
    %v181 = vld [vmem:[#allocation5] sm:$0xf]
    %v182 = vld [vmem:[#allocation5 + $0x4] sm:$0xf]
    %v183 = vunpack.c.l.bf16 %v181
    %v184 = vunpack.c.l.bf16 %v182
    %185 = vst [vmem:[#allocation2 + $0x8] sm:$0xff] %v183
    %186 = vst [vmem:[#allocation2 + $0x20] sm:$0xff] %v184
    %v187 = vld [vmem:[#allocation6] sm:$0xf]
    %v188 = vld [vmem:[#allocation6 + $0x4] sm:$0xf]
    %v189 = vunpack.c.l.bf16 %v187
    %v190 = vunpack.c.l.bf16 %v188
    %191 = vst [vmem:[#allocation2 + $0x10] sm:$0xff] %v189
    %192 = vst [vmem:[#allocation2 + $0x28] sm:$0xff] %v190
    %v193 = vld [vmem:[#allocation2] sm:$0xff]
    %v194 = vld [vmem:[#allocation2 + $0x8] sm:$0xff]
    %v195 = vld [vmem:[#allocation2 + $0x18] sm:$0xff]
    %v196 = vld [vmem:[#allocation2 + $0x20] sm:$0xff]
    %201 = vrot.lane.b32.xlu0 %v193, 7
    %v202 = vpop.permute.xlu0 %201
    %203 = vrot.lane.b32.xlu0 %v194, 7
    %v204 = vpop.permute.xlu0 %203
    %205 = vrot.lane.b32.xlu0 %v195, 7
    %v206 = vpop.permute.xlu0 %205
    %207 = vrot.lane.b32.xlu0 %v196, 7
    %v208 = vpop.permute.xlu0 %207
    %vm209 = vcmask 56320
    %v210 = vsel %vm209, %v202, %v204
    %v211 = vsel %vm209, %v206, %v208
    %214 = vst [vmem:[#allocation3] sm:$0xff] %v210
    %215 = vst [vmem:[#allocation3 + $0x8] sm:$0xff] %v211
    %v216 = vld [vmem:[#allocation2] sm:$0xff]
    %v217 = vld [vmem:[#allocation2 + $0x8] sm:$0xff]
    %v218 = vld [vmem:[#allocation2 + $0x18] sm:$0xff]
    %v219 = vld [vmem:[#allocation2 + $0x20] sm:$0xff]
    %224 = vrot.lane.b32.xlu0 %v216, 6
    %v225 = vpop.permute.xlu0 %224
    %226 = vrot.lane.b32.xlu0 %v217, 6
    %v227 = vpop.permute.xlu0 %226
    %228 = vrot.lane.b32.xlu0 %v218, 6
    %v229 = vpop.permute.xlu0 %228
    %230 = vrot.lane.b32.xlu0 %v219, 6
    %v231 = vpop.permute.xlu0 %230
    %vm232 = vcmask 48128
    %v233 = vsel %vm232, %v225, %v227
    %v234 = vsel %vm232, %v229, %v231
    %237 = vst [vmem:[#allocation3 + $0x10] sm:$0xff] %v233
    %238 = vst [vmem:[#allocation3 + $0x18] sm:$0xff] %v234
    %v239 = vld [vmem:[#allocation2] sm:$0xff]
    %v240 = vld [vmem:[#allocation2 + $0x8] sm:$0xff]
    %v241 = vld [vmem:[#allocation2 + $0x18] sm:$0xff]
    %v242 = vld [vmem:[#allocation2 + $0x20] sm:$0xff]
    %247 = vrot.lane.b32.xlu0 %v239, 5
    %v248 = vpop.permute.xlu0 %247
    %249 = vrot.lane.b32.xlu0 %v240, 5
    %v250 = vpop.permute.xlu0 %249
    %251 = vrot.lane.b32.xlu0 %v241, 5
    %v252 = vpop.permute.xlu0 %251
    %253 = vrot.lane.b32.xlu0 %v242, 5
    %v254 = vpop.permute.xlu0 %253
    %vm255 = vcmask 39936
    %v256 = vsel %vm255, %v248, %v250
    %v257 = vsel %vm255, %v252, %v254
    %260 = vst [vmem:[#allocation3 + $0x20] sm:$0xff] %v256
    %261 = vst [vmem:[#allocation3 + $0x28] sm:$0xff] %v257
    %v262 = vld [vmem:[#allocation2] sm:$0xff]
    %v263 = vld [vmem:[#allocation2 + $0x8] sm:$0xff]
    %v264 = vld [vmem:[#allocation2 + $0x18] sm:$0xff]
    %v265 = vld [vmem:[#allocation2 + $0x20] sm:$0xff]
    %270 = vrot.lane.b32.xlu0 %v262, 1
    %v271 = vpop.permute.xlu0 %270
    %272 = vrot.lane.b32.xlu0 %v263, 1
    %v273 = vpop.permute.xlu0 %272
    %274 = vrot.lane.b32.xlu0 %v264, 1
    %v275 = vpop.permute.xlu0 %274
    %276 = vrot.lane.b32.xlu0 %v265, 1
    %v277 = vpop.permute.xlu0 %276
    %vm278 = vcmask 7168
    %v279 = vsel %vm278, %v271, %v273
    %v280 = vsel %vm278, %v275, %v277
    %283 = vst [vmem:[#allocation3 + $0x30] sm:$0xff] %v279
    %284 = vst [vmem:[#allocation3 + $0x38] sm:$0xff] %v280
    %v285 = vld [vmem:[#allocation2 + $0x8] sm:$0xff]
    %v286 = vld [vmem:[#allocation2 + $0x20] sm:$0xff]
    %287 = vst [vmem:[#allocation3 + $0x40] sm:$0xff] %v285
    %288 = vst [vmem:[#allocation3 + $0x48] sm:$0xff] %v286
    %v289 = vld [vmem:[#allocation2 + $0x8] sm:$0xff]
    %v290 = vld [vmem:[#allocation2 + $0x10] sm:$0xff]
    %v291 = vld [vmem:[#allocation2 + $0x20] sm:$0xff]
    %v292 = vld [vmem:[#allocation2 + $0x28] sm:$0xff]
    %297 = vrot.lane.b32.xlu0 %v289, 127
    %v298 = vpop.permute.xlu0 %297
    %299 = vrot.lane.b32.xlu0 %v290, 127
    %v300 = vpop.permute.xlu0 %299
    %301 = vrot.lane.b32.xlu0 %v291, 127
    %v302 = vpop.permute.xlu0 %301
    %303 = vrot.lane.b32.xlu0 %v292, 127
    %v304 = vpop.permute.xlu0 %303
    %vm305 = vcmask 1039360
    %v306 = vsel %vm305, %v298, %v300
    %v307 = vsel %vm305, %v302, %v304
    %310 = vst [vmem:[#allocation3 + $0x50] sm:$0xff] %v306
    %311 = vst [vmem:[#allocation3 + $0x58] sm:$0xff] %v307
    %v312 = vld [vmem:[#allocation2 + $0x8] sm:$0xff]
    %v313 = vld [vmem:[#allocation2 + $0x10] sm:$0xff]
    %v314 = vld [vmem:[#allocation2 + $0x20] sm:$0xff]
    %v315 = vld [vmem:[#allocation2 + $0x28] sm:$0xff]
    %320 = vrot.lane.b32.xlu0 %v312, 123
    %v321 = vpop.permute.xlu0 %320
    %322 = vrot.lane.b32.xlu0 %v313, 123
    %v323 = vpop.permute.xlu0 %322
    %324 = vrot.lane.b32.xlu0 %v314, 123
    %v325 = vpop.permute.xlu0 %324
    %326 = vrot.lane.b32.xlu0 %v315, 123
    %v327 = vpop.permute.xlu0 %326
    %vm328 = vcmask 1006592
    %v329 = vsel %vm328, %v321, %v323
    %v330 = vsel %vm328, %v325, %v327
    %333 = vst [vmem:[#allocation3 + $0x60] sm:$0xff] %v329
    %334 = vst [vmem:[#allocation3 + $0x68] sm:$0xff] %v330
    %v335 = vld [vmem:[#allocation2 + $0x8] sm:$0xff]
    %v336 = vld [vmem:[#allocation2 + $0x10] sm:$0xff]
    %v337 = vld [vmem:[#allocation2 + $0x20] sm:$0xff]
    %v338 = vld [vmem:[#allocation2 + $0x28] sm:$0xff]
    %343 = vrot.lane.b32.xlu0 %v335, 122
    %v344 = vpop.permute.xlu0 %343
    %345 = vrot.lane.b32.xlu0 %v336, 122
    %v346 = vpop.permute.xlu0 %345
    %347 = vrot.lane.b32.xlu0 %v337, 122
    %v348 = vpop.permute.xlu0 %347
    %349 = vrot.lane.b32.xlu0 %v338, 122
    %v350 = vpop.permute.xlu0 %349
    %vm351 = vcmask 998400
    %v352 = vsel %vm351, %v344, %v346
    %v353 = vsel %vm351, %v348, %v350
    %356 = vst [vmem:[#allocation3 + $0x70] sm:$0xff] %v352
    %357 = vst [vmem:[#allocation3 + $0x78] sm:$0xff] %v353
    %v358 = vld [vmem:[#allocation2 + $0x8] sm:$0xff]
    %v359 = vld [vmem:[#allocation2 + $0x10] sm:$0xff]
    %v360 = vld [vmem:[#allocation2 + $0x20] sm:$0xff]
    %v361 = vld [vmem:[#allocation2 + $0x28] sm:$0xff]
    %366 = vrot.lane.b32.xlu0 %v358, 121
    %v367 = vpop.permute.xlu0 %366
    %368 = vrot.lane.b32.xlu0 %v359, 121
    %v369 = vpop.permute.xlu0 %368
    %370 = vrot.lane.b32.xlu0 %v360, 121
    %v371 = vpop.permute.xlu0 %370
    %372 = vrot.lane.b32.xlu0 %v361, 121
    %v373 = vpop.permute.xlu0 %372
    %vm374 = vcmask 990208
    %v375 = vsel %vm374, %v367, %v369
    %v376 = vsel %vm374, %v371, %v373
    %379 = vst [vmem:[#allocation3 + $0x80] sm:$0xff] %v375
    %380 = vst [vmem:[#allocation3 + $0x88] sm:$0xff] %v376
    %v381 = vld [vmem:[%s3] sm:$0xff]
    %v382 = vld [vmem:[%s3 + $0x8] sm:$0xff]
    %v383 = vld [vmem:[%s3 + $0x10] sm:$0xff]
    %v384 = vld [vmem:[%s3 + $0x18] sm:$0xff]
    %v385 = vld [vmem:[%s3 + $0x20] sm:$0xff]
    %v386 = vld [vmem:[%s3 + $0x28] sm:$0xff]
    %v387 = vld [vmem:[%s3 + $0x30] sm:$0xff]
    %v388 = vld [vmem:[%s3 + $0x38] sm:$0xff]
    %v389 = vld [vmem:[#allocation3] sm:$0xff]
    %v390 = vld [vmem:[#allocation3 + $0x8] sm:$0xff]
    %v391 = vld [vmem:[#allocation3 + $0x10] sm:$0xff]
    %v392 = vld [vmem:[#allocation3 + $0x18] sm:$0xff]
    %v393 = vld [vmem:[#allocation3 + $0x20] sm:$0xff]
    %v394 = vld [vmem:[#allocation3 + $0x28] sm:$0xff]
    %v395 = vld [vmem:[#allocation3 + $0x30] sm:$0xff]
    %v396 = vld [vmem:[#allocation3 + $0x38] sm:$0xff]
    %v397 = vld [vmem:[#allocation3 + $0x40] sm:$0xff]
    %v398 = vld [vmem:[#allocation3 + $0x48] sm:$0xff]
    %v399 = vld [vmem:[#allocation3 + $0x50] sm:$0xff]
    %v400 = vld [vmem:[#allocation3 + $0x58] sm:$0xff]
    %v401 = vld [vmem:[#allocation3 + $0x60] sm:$0xff]
    %v402 = vld [vmem:[#allocation3 + $0x68] sm:$0xff]
    %v403 = vld [vmem:[#allocation3 + $0x70] sm:$0xff]
    %v404 = vld [vmem:[#allocation3 + $0x78] sm:$0xff]
    %v405 = vld [vmem:[#allocation3 + $0x80] sm:$0xff]
    %v406 = vld [vmem:[#allocation3 + $0x88] sm:$0xff]
    %v407 = vld [vmem:[%s4] sm:$0xff]
    %v408 = vld [vmem:[%s4 + $0x8] sm:$0xff]
    %v409 = vld [vmem:[%s4 + $0x10] sm:$0xff]
    %v410 = vld [vmem:[%s4 + $0x18] sm:$0xff]
    %412 = vset.pattern.permute.xlu0 0
    %413 = vperm.xlu0 %412, %v407
    %v414 = vpop.permute.xlu0 %413
    %417 = vset.pattern.permute.xlu0 0
    %418 = vperm.xlu0 %417, %v408
    %v419 = vpop.permute.xlu0 %418
    %422 = vset.pattern.permute.xlu0 0
    %423 = vperm.xlu0 %422, %v409
    %v424 = vpop.permute.xlu0 %423
    %427 = vset.pattern.permute.xlu0 0
    %428 = vperm.xlu0 %427, %v410
    %v429 = vpop.permute.xlu0 %428
    %vm431 = vcmask 130048
    %v433 = vsel %vm431, %v382, 0
    %v436 = vsel %vm431, %v384, 0
    %v439 = vsel %vm431, %v386, 0
    %v442 = vsel %vm431, %v388, 0
    %444 = vmatpush.msra.mxu0 %v404
    %445 = vmatpush.msra.mxu0 %v403
    %446 = vmatpush.msra.mxu0 %v402
    %447 = vmatpush.msra.mxu0 %v401
    %448 = vmatpush.msra.mxu0 %v400
    %449 = vmatpush.msra.mxu0 %v399
    %450 = vmatpush.msra.mxu0 %v398
    %451 = vmatpush.msra.mxu0 %v397
    %452 = vmatpush.msra.mxu0 %v396
    %453 = vmatpush.msra.mxu0 %v395
    %454 = vmatpush.msra.mxu0 %v394
    %455 = vmatpush.msra.mxu0 %v393
    %456 = vmatpush.msra.mxu0 %v392
    %457 = vmatpush.msra.mxu0 %v391
    %458 = vmatpush.msra.mxu0 %v390
    %459 = vmatpush.msra.mxu0 %v389
    %460 = vmatmul.f32.gmra.mxu0 %v381
    %v461 = vpop.f32.mrf.mxu0
    %v462 = vadd.f32 %v414, %v461
    %463 = vmatmul.f32.gmra.mxu0 %v383
    %v464 = vpop.f32.mrf.mxu0
    %v465 = vadd.f32 %v419, %v464
    %466 = vmatmul.f32.gmra.mxu0 %v385
    %v467 = vpop.f32.mrf.mxu0
    %v468 = vadd.f32 %v424, %v467
    %469 = vmatmul.f32.gmra.mxu0 %v387
    %v470 = vpop.f32.mrf.mxu0
    %v471 = vadd.f32 %v429, %v470
    %472 = vdwg.mxu0
    %473 = vmatpush.msra.mxu0 0.0
    %474 = vmatpush.msra.mxu0 0.0
    %475 = vmatpush.msra.mxu0 0.0
    %476 = vmatpush.msra.mxu0 0.0
    %477 = vmatpush.msra.mxu0 0.0
    %478 = vmatpush.msra.mxu0 0.0
    %479 = vmatpush.msra.mxu0 0.0
    %480 = vmatpush.msra.mxu0 0.0
    %481 = vmatpush.msra.mxu0 0.0
    %482 = vmatpush.msra.mxu0 0.0
    %483 = vmatpush.msra.mxu0 0.0
    %484 = vmatpush.msra.mxu0 0.0
    %485 = vmatpush.msra.mxu0 0.0
    %486 = vmatpush.msra.mxu0 0.0
    %487 = vmatpush.msra.mxu0 %v406
    %488 = vmatpush.msra.mxu0 %v405
    %489 = vmatmul.f32.gmra.mxu0 %v433
    %v490 = vpop.f32.mrf.mxu0
    %v491 = vadd.f32 %v462, %v490
    %492 = vmatmul.f32.gmra.mxu0 %v436
    %v493 = vpop.f32.mrf.mxu0
    %v494 = vadd.f32 %v465, %v493
    %495 = vmatmul.f32.gmra.mxu0 %v439
    %v496 = vpop.f32.mrf.mxu0
    %v497 = vadd.f32 %v468, %v496
    %498 = vmatmul.f32.gmra.mxu0 %v442
    %v499 = vpop.f32.mrf.mxu0
    %v500 = vadd.f32 %v471, %v499
    %501 = vdwg.mxu0
    %v502 = vld [vmem:[%s5] sm:$0xff]
    %v503 = vld [vmem:[%s5 + $0x8] sm:$0xff]
    %v504 = vld [vmem:[%s5 + $0x10] sm:$0xff]
    %v505 = vld [vmem:[%s5 + $0x18] sm:$0xff]
    %v506 = vmul.f32 %v491, %v491
    %v507 = vmul.f32 %v494, %v494
    %v508 = vmul.f32 %v497, %v497
    %v509 = vmul.f32 %v500, %v500
    %v510 = vld [vmem:[%s6] sm:$0xff]
    %v511 = vld [vmem:[%s6 + $0x8] sm:$0xff]
    %v512 = vld [vmem:[%s6 + $0x10] sm:$0xff]
    %v513 = vld [vmem:[%s6 + $0x18] sm:$0xff]
    %515 = vset.pattern.permute.xlu0 0
    %516 = vperm.xlu0 %515, %v510
    %v517 = vpop.permute.xlu0 %516
    %520 = vset.pattern.permute.xlu0 0
    %521 = vperm.xlu0 %520, %v511
    %v522 = vpop.permute.xlu0 %521
    %525 = vset.pattern.permute.xlu0 0
    %526 = vperm.xlu0 %525, %v512
    %v527 = vpop.permute.xlu0 %526
    %530 = vset.pattern.permute.xlu0 0
    %531 = vperm.xlu0 %530, %v513
    %v532 = vpop.permute.xlu0 %531
    %vm534 = vcmask 261120
    %v536 = vsel %vm534, %v502, 0
    %v539 = vsel %vm534, %v503, 0
    %v542 = vsel %vm534, %v504, 0
    %v545 = vsel %vm534, %v505, 0
    %547 = vmatpush.msra.mxu0 0.0
    %548 = vmatpush.msra.mxu0 0.0
    %549 = vmatpush.msra.mxu0 0.0
    %550 = vmatpush.msra.mxu0 0.0
    %551 = vmatpush.msra.mxu0 0.0
    %552 = vmatpush.msra.mxu0 0.0
    %553 = vmatpush.msra.mxu0 0.0
    %554 = vmatpush.msra.mxu0 0.0
    %555 = vmatpush.msra.mxu0 0.0
    %556 = vmatpush.msra.mxu0 0.0
    %557 = vmatpush.msra.mxu0 0.0
    %558 = vmatpush.msra.mxu0 0.0
    %559 = vmatpush.msra.mxu0 %v509
    %560 = vmatpush.msra.mxu0 %v508
    %561 = vmatpush.msra.mxu0 %v507
    %562 = vmatpush.msra.mxu0 %v506
    %563 = vmatmul.f32.gmra.mxu0 %v536
    %v564 = vpop.f32.mrf.mxu0
    %v565 = vadd.f32 %v517, %v564
    %566 = vmatmul.f32.gmra.mxu0 %v539
    %v567 = vpop.f32.mrf.mxu0
    %v568 = vadd.f32 %v522, %v567
    %569 = vmatmul.f32.gmra.mxu0 %v542
    %v570 = vpop.f32.mrf.mxu0
    %v571 = vadd.f32 %v527, %v570
    %572 = vmatmul.f32.gmra.mxu0 %v545
    %v573 = vpop.f32.mrf.mxu0
    %v574 = vadd.f32 %v532, %v573
    %575 = vdwg.mxu0
    %v576 = vmax.f32 %v565, 1e-10
    %v577 = vmax.f32 %v568, 1e-10
    %v578 = vmax.f32 %v571, 1e-10
    %v579 = vmax.f32 %v574, 1e-10
    %v580 = vrsqrt.pop %v576
    %v581 = vmul.f32 %v580, %v576
    %v582 = vmul.f32 %v581, %v580
    %v583 = vmul.f32 0.5, %v582
    %v584 = vsub.f32 1.5, %v583
    %v585 = vmul.f32 %v580, %v584
    %v586 = vmul.f32 %v576, %v585
    %vm587 = vcmp.eq.f32.partialorder %v576, inf
    %v588 = vsel %vm587, %v576, %v586
    %vm589 = vcmp.eq.f32.partialorder %v576, 0.0
    %v590 = vand.u32 %v576, 2147483648
    %v591 = vsel %vm589, %v590, %v588
    %v592 = vrsqrt.pop %v577
    %v593 = vmul.f32 %v592, %v577
    %v594 = vmul.f32 %v593, %v592
    %v595 = vmul.f32 0.5, %v594
    %v596 = vsub.f32 1.5, %v595
    %v597 = vmul.f32 %v592, %v596
    %v598 = vmul.f32 %v577, %v597
    %vm599 = vcmp.eq.f32.partialorder %v577, inf
    %v600 = vsel %vm599, %v577, %v598
    %vm601 = vcmp.eq.f32.partialorder %v577, 0.0
    %v602 = vand.u32 %v577, 2147483648
    %v603 = vsel %vm601, %v602, %v600
    %v604 = vrsqrt.pop %v578
    %v605 = vmul.f32 %v604, %v578
    %v606 = vmul.f32 %v605, %v604
    %v607 = vmul.f32 0.5, %v606
    %v608 = vsub.f32 1.5, %v607
    %v609 = vmul.f32 %v604, %v608
    %v610 = vmul.f32 %v578, %v609
    %vm611 = vcmp.eq.f32.partialorder %v578, inf
    %v612 = vsel %vm611, %v578, %v610
    %vm613 = vcmp.eq.f32.partialorder %v578, 0.0
    %v614 = vand.u32 %v578, 2147483648
    %v615 = vsel %vm613, %v614, %v612
    %v616 = vrsqrt.pop %v579
    %v617 = vmul.f32 %v616, %v579
    %v618 = vmul.f32 %v617, %v616
    %v619 = vmul.f32 0.5, %v618
    %v620 = vsub.f32 1.5, %v619
    %v621 = vmul.f32 %v616, %v620
    %v622 = vmul.f32 %v579, %v621
    %vm623 = vcmp.eq.f32.partialorder %v579, inf
    %v624 = vsel %vm623, %v579, %v622
    %vm625 = vcmp.eq.f32.partialorder %v579, 0.0
    %v626 = vand.u32 %v579, 2147483648
    %v627 = vsel %vm625, %v626, %v624
    %v628 = vmul.f32 %v491, %v591
    %v629 = vmul.f32 %v494, %v603
    %v630 = vmul.f32 %v497, %v615
    %v631 = vmul.f32 %v500, %v627
    %v632 = vpack.c.bf16 %v628, %v628
    %v633 = vpack.c.bf16 %v629, %v629
    %v634 = vpack.c.bf16 %v630, %v630
    %v635 = vpack.c.bf16 %v631, %v631
    %636 = vst [vmem:[%s7] sm:$0xf] %v632
    %637 = vst [vmem:[%s7 + $0x4] sm:$0xf] %v633
    %638 = vst [vmem:[%s7 + $0x8] sm:$0xf] %v634
    %639 = vst [vmem:[%s7 + $0xc] sm:$0xf] %v635
    // Predicated region
    $region153: #{_lambda_.13} parent=1 // pred_check
      _
    $region154: #{_lambda_.13} parent=1 // pred_check_branch
      %641 = sbr.rel (0) target = $region156
    $region155: #{_lambda_.13} parent=1 // pred_region
      _
    $region156: #{_lambda_.13} parent=1 // pred_fallthru
      _
    // Predicated region
    $region157: #{_lambda_.13} parent=1 // pred_check
      _
    $region158: #{_lambda_.13} parent=1 // pred_check_branch
      %643 = sbr.rel (0) target = $region160
    $region159: #{_lambda_.13} parent=1 // pred_region
      _
    $region160: #{_lambda_.13} parent=1 // pred_fallthru
      _

// kernel: _lambda_.14
$region0: #{_lambda_.14}
  #allocation0 [shape = 'u32[]', space=smem, size = 0x4, offset = 0x4, fixed_abs, tag = 'smem constant byte address 0x4 - core index']
  #allocation1 [shape = 'u32[72,128]{1,0:T(1,128)}', space=vmem, size = 0x9000, scoped, tag = 'internal scratch']
  #allocation2 [shape = 'f32[16,384]{1,0:T(8,128)}', space=vmem, size = 0x6000, scoped, tag = 'scratch operand']
  #allocation3 [shape = 'f32[144,128]{1,0:T(8,128)}', space=vmem, size = 0x12000, scoped, tag = 'scratch operand']
  %s0 = inlined_call_operand.vmem [shape: bf16[16,512], index: 0, kind: input, shape index: {}, may-alias: {0,1,2}]
  %s1 = inlined_call_operand.vmem [shape: bf16[16,512], index: 1, kind: input, shape index: {}, may-alias: {0,1,2}]
  %s2 = inlined_call_operand.vmem [shape: bf16[16,512], index: 2, kind: input, shape index: {}, may-alias: {0,1,2}]
  %s3 = inlined_call_operand.vmem [shape: f32[32,144], index: 3, kind: input, shape index: {}]
  %s4 = inlined_call_operand.vmem [shape: f32[32,1], index: 4, kind: input, shape index: {}]
  %s5 = inlined_call_operand.vmem [shape: f32[32,32], index: 5, kind: input, shape index: {}]
  %s6 = inlined_call_operand.vmem [shape: f32[32,1], index: 6, kind: input, shape index: {}]
  %s7 = inlined_call_operand.vmem [shape: bf16[32,256], index: 7, kind: output, shape index: {}]
  %s8 = sld [smem:[#allocation0]]
  $region221: #{_lambda_.14} parent=0
    _
  %s10 = ssub.s32 1, %s8
  %s11 = scalar_select 0, %s10, %s8
  $region1: #{_lambda_.14} parent=0
    #allocation4 [shape = 'u8[8192]{0}', space=vmem, size = 0x2000, scoped, tag = 'input window, operand 0']
    #allocation5 [shape = 'u8[8192]{0}', space=vmem, size = 0x2000, scoped, tag = 'input window, operand 1']
    #allocation6 [shape = 'u8[8192]{0}', space=vmem, size = 0x2000, scoped, tag = 'input window, operand 2']
    #allocation7 [shape = 'u8[16384]{0}', space=vmem, size = 0x4000, scoped, tag = 'output window, operand 0']
    loop: start=0, step=1, limit=4
    $region2: #{_lambda_.14} parent=1 // loop_pre_header
      _
    $region3: #{_lambda_.14} parent=1 // loop_header
      %s13 = sphi 0, %s17
      %p14 = scmp.ge.s32.totalorder %s13, 4
      %s23 = sphi 0, %s25
      %s26 = sphi 0, %s23
      %s27 = sphi 0, %s26
      %s43 = sphi 0, %s27
      %s51 = sphi 0, %s53
      %s54 = sphi 0, %s51
      %s55 = sphi 0, %s54
      %s71 = sphi 0, %s55
      %s79 = sphi 0, %s81
      %s82 = sphi 0, %s79
      %s83 = sphi 0, %s82
      %s99 = sphi 0, %s83
      %s103 = sphi 0, %s103
      %s105 = sphi 0, %s103
      %s106 = sphi 0, %s105
      %s120 = sphi 0, %s106
      %s124 = sphi 0, %s124
      %s126 = sphi 0, %s124
      %s127 = sphi 0, %s126
      %s141 = sphi 0, %s127
      %s145 = sphi 0, %s145
      %s147 = sphi 0, %s145
      %s148 = sphi 0, %s147
      %s162 = sphi 0, %s148
      %s166 = sphi 0, %s166
      %s168 = sphi 0, %s166
      %s169 = sphi 0, %s168
      %s183 = sphi 0, %s169
      %s189 = sphi 0, %s191
      %s192 = sphi 0, %s189
      %s193 = sphi 0, %s192
      %s209 = sphi 0, %s193
    $region4: #{_lambda_.14} parent=1 // loop_header_branch
      %16 = sbr.rel (%p14) target = $region8
    $region5: #{_lambda_.14} parent=1 // loop_body
      %s18 = ssub.s32 %s13, 1
      %s19 = ssub.s32 %s13, 2
      %s20 = sadd.s32 %s13, 1
      %s21 = ssub.s32 %s13, %s20
      %p22 = scmp.eq.s32.totalorder %s21, 0
      %s24 = sadd.s32 %s23, 1
      %s25 = scalar_select %p22, %s23, %s24
      %p28 = pneg %p22
      %p29 = scmp.eq.s32.totalorder %s13, 1
      %p30 = por %p28, %p29
      %p31 = scmp.ne.s32.totalorder %s23, %s26
      %p32 = scmp.eq.s32.totalorder %s13, 0
      %p33 = por %p31, %p32
      %p34 = scmp.ne.s32.totalorder %s23, %s26
      %p35 = scmp.eq.s32.totalorder %s18, 1
      %p36 = por %p34, %p35
      %p37 = scmp.ne.s32.totalorder %s26, %s27
      %p38 = scmp.eq.s32.totalorder %s18, 0
      %p39 = por %p37, %p38
      %p40 = scmp.ne.s32.totalorder %s26, %s27
      %p41 = scmp.eq.s32.totalorder %s19, 1
      %p42 = por %p40, %p41
      %p44 = scmp.ne.s32.totalorder %s27, %s43
      %p45 = scmp.eq.s32.totalorder %s19, 0
      %p46 = por %p44, %p45
      %s47 = sadd.s32 %s13, 1
      %s48 = sadd.s32 %s20, 1
      %s49 = ssub.s32 %s47, %s48
      %p50 = scmp.eq.s32.totalorder %s49, 0
      %s52 = sadd.s32 %s51, 1
      %s53 = scalar_select %p50, %s51, %s52
      %p56 = pneg %p50
      %p57 = scmp.eq.s32.totalorder %s13, 1
      %p58 = por %p56, %p57
      %p59 = scmp.ne.s32.totalorder %s51, %s54
      %p60 = scmp.eq.s32.totalorder %s13, 0
      %p61 = por %p59, %p60
      %p62 = scmp.ne.s32.totalorder %s51, %s54
      %p63 = scmp.eq.s32.totalorder %s18, 1
      %p64 = por %p62, %p63
      %p65 = scmp.ne.s32.totalorder %s54, %s55
      %p66 = scmp.eq.s32.totalorder %s18, 0
      %p67 = por %p65, %p66
      %p68 = scmp.ne.s32.totalorder %s54, %s55
      %p69 = scmp.eq.s32.totalorder %s19, 1
      %p70 = por %p68, %p69
      %p72 = scmp.ne.s32.totalorder %s55, %s71
      %p73 = scmp.eq.s32.totalorder %s19, 0
      %p74 = por %p72, %p73
      %s75 = sadd.s32 %s13, 2
      %s76 = sadd.s32 %s20, 2
      %s77 = ssub.s32 %s75, %s76
      %p78 = scmp.eq.s32.totalorder %s77, 0
      %s80 = sadd.s32 %s79, 1
      %s81 = scalar_select %p78, %s79, %s80
      %p84 = pneg %p78
      %p85 = scmp.eq.s32.totalorder %s13, 1
      %p86 = por %p84, %p85
      %p87 = scmp.ne.s32.totalorder %s79, %s82
      %p88 = scmp.eq.s32.totalorder %s13, 0
      %p89 = por %p87, %p88
      %p90 = scmp.ne.s32.totalorder %s79, %s82
      %p91 = scmp.eq.s32.totalorder %s18, 1
      %p92 = por %p90, %p91
      %p93 = scmp.ne.s32.totalorder %s82, %s83
      %p94 = scmp.eq.s32.totalorder %s18, 0
      %p95 = por %p93, %p94
      %p96 = scmp.ne.s32.totalorder %s82, %s83
      %p97 = scmp.eq.s32.totalorder %s19, 1
      %p98 = por %p96, %p97
      %p100 = scmp.ne.s32.totalorder %s83, %s99
      %p101 = scmp.eq.s32.totalorder %s19, 0
      %p102 = por %p100, %p101
      %s104 = sadd.s32 %s103, 1
      %p107 = scmp.eq.s32.totalorder %s13, 1
      %p108 = scmp.ne.s32.totalorder %s103, %s105
      %p109 = scmp.eq.s32.totalorder %s13, 0
      %p110 = por %p108, %p109
      %p111 = scmp.ne.s32.totalorder %s103, %s105
      %p112 = scmp.eq.s32.totalorder %s18, 1
      %p113 = por %p111, %p112
      %p114 = scmp.ne.s32.totalorder %s105, %s106
      %p115 = scmp.eq.s32.totalorder %s18, 0
      %p116 = por %p114, %p115
      %p117 = scmp.ne.s32.totalorder %s105, %s106
      %p118 = scmp.eq.s32.totalorder %s19, 1
      %p119 = por %p117, %p118
      %p121 = scmp.ne.s32.totalorder %s106, %s120
      %p122 = scmp.eq.s32.totalorder %s19, 0
      %p123 = por %p121, %p122
      %s125 = sadd.s32 %s124, 1
      %p128 = scmp.eq.s32.totalorder %s13, 1
      %p129 = scmp.ne.s32.totalorder %s124, %s126
      %p130 = scmp.eq.s32.totalorder %s13, 0
      %p131 = por %p129, %p130
      %p132 = scmp.ne.s32.totalorder %s124, %s126
      %p133 = scmp.eq.s32.totalorder %s18, 1
      %p134 = por %p132, %p133
      %p135 = scmp.ne.s32.totalorder %s126, %s127
      %p136 = scmp.eq.s32.totalorder %s18, 0
      %p137 = por %p135, %p136
      %p138 = scmp.ne.s32.totalorder %s126, %s127
      %p139 = scmp.eq.s32.totalorder %s19, 1
      %p140 = por %p138, %p139
      %p142 = scmp.ne.s32.totalorder %s127, %s141
      %p143 = scmp.eq.s32.totalorder %s19, 0
      %p144 = por %p142, %p143
      %s146 = sadd.s32 %s145, 1
      %p149 = scmp.eq.s32.totalorder %s13, 1
      %p150 = scmp.ne.s32.totalorder %s145, %s147
      %p151 = scmp.eq.s32.totalorder %s13, 0
      %p152 = por %p150, %p151
      %p153 = scmp.ne.s32.totalorder %s145, %s147
      %p154 = scmp.eq.s32.totalorder %s18, 1
      %p155 = por %p153, %p154
      %p156 = scmp.ne.s32.totalorder %s147, %s148
      %p157 = scmp.eq.s32.totalorder %s18, 0
      %p158 = por %p156, %p157
      %p159 = scmp.ne.s32.totalorder %s147, %s148
      %p160 = scmp.eq.s32.totalorder %s19, 1
      %p161 = por %p159, %p160
      %p163 = scmp.ne.s32.totalorder %s148, %s162
      %p164 = scmp.eq.s32.totalorder %s19, 0
      %p165 = por %p163, %p164
      %s167 = sadd.s32 %s166, 1
      %p170 = scmp.eq.s32.totalorder %s13, 1
      %p171 = scmp.ne.s32.totalorder %s166, %s168
      %p172 = scmp.eq.s32.totalorder %s13, 0
      %p173 = por %p171, %p172
      %p174 = scmp.ne.s32.totalorder %s166, %s168
      %p175 = scmp.eq.s32.totalorder %s18, 1
      %p176 = por %p174, %p175
      %p177 = scmp.ne.s32.totalorder %s168, %s169
      %p178 = scmp.eq.s32.totalorder %s18, 0
      %p179 = por %p177, %p178
      %p180 = scmp.ne.s32.totalorder %s168, %s169
      %p181 = scmp.eq.s32.totalorder %s19, 1
      %p182 = por %p180, %p181
      %p184 = scmp.ne.s32.totalorder %s169, %s183
      %p185 = scmp.eq.s32.totalorder %s19, 0
      %p186 = por %p184, %p185
      %s187 = ssub.s32 %s13, %s20
      %p188 = scmp.eq.s32.totalorder %s187, 0
      %s190 = sadd.s32 %s189, 1
      %s191 = scalar_select %p188, %s189, %s190
      %p194 = pneg %p188
      %p195 = scmp.eq.s32.totalorder %s13, 1
      %p196 = por %p194, %p195
      %p197 = scmp.ne.s32.totalorder %s189, %s192
      %p198 = scmp.eq.s32.totalorder %s13, 0
      %p199 = por %p197, %p198
      %p200 = scmp.ne.s32.totalorder %s189, %s192
      %p201 = scmp.eq.s32.totalorder %s18, 1
      %p202 = por %p200, %p201
      %p203 = scmp.ne.s32.totalorder %s192, %s193
      %p204 = scmp.eq.s32.totalorder %s18, 0
      %p205 = por %p203, %p204
      %p206 = scmp.ne.s32.totalorder %s192, %s193
      %p207 = scmp.eq.s32.totalorder %s19, 1
      %p208 = por %p206, %p207
      %p210 = scmp.ne.s32.totalorder %s193, %s209
      %p211 = scmp.eq.s32.totalorder %s19, 0
      %p212 = por %p210, %p211
      %p213 = scmp.le.s32.totalorder 1, %s13
      %p214 = scmp.lt.s32.totalorder %s13, 3
      %p215 = pnand %p213, %p214
      %p216 = pneg %p215
      // Predicated region
      $region9: #{_lambda_.14} parent=5 // pred_check
        _
      $region10: #{_lambda_.14} parent=5 // pred_check_branch
        %218 = sbr.rel (%p215) target = $region12
      $region11: #{_lambda_.14} parent=5 // pred_region
        %s219 = ssub.s32 %s13, 1
        // Predicated region
        $region13: #{_lambda_.14} parent=11 // pred_check
          %p220 = pneg %p116
        $region14: #{_lambda_.14} parent=11 // pred_check_branch
          %222 = sbr.rel (%p220) target = $region16
        $region15: #{_lambda_.14} parent=11 // pred_region
          _
        $region16: #{_lambda_.14} parent=11 // pred_fallthru
          _
        // Predicated region
        $region17: #{_lambda_.14} parent=11 // pred_check
          %p223 = pneg %p137
        $region18: #{_lambda_.14} parent=11 // pred_check_branch
          %225 = sbr.rel (%p223) target = $region20
        $region19: #{_lambda_.14} parent=11 // pred_region
          _
        $region20: #{_lambda_.14} parent=11 // pred_fallthru
          _
        // Predicated region
        $region21: #{_lambda_.14} parent=11 // pred_check
          %p226 = pneg %p158
        $region22: #{_lambda_.14} parent=11 // pred_check_branch
          %228 = sbr.rel (%p226) target = $region24
        $region23: #{_lambda_.14} parent=11 // pred_region
          _
        $region24: #{_lambda_.14} parent=11 // pred_fallthru
          _
        // Predicated region
        $region25: #{_lambda_.14} parent=11 // pred_check
          %p229 = pneg %p179
        $region26: #{_lambda_.14} parent=11 // pred_check_branch
          %231 = sbr.rel (%p229) target = $region28
        $region27: #{_lambda_.14} parent=11 // pred_region
          _
        $region28: #{_lambda_.14} parent=11 // pred_fallthru
          _
      $region12: #{_lambda_.14} parent=5 // pred_fallthru
        _
      %p232 = scmp.lt.s32.totalorder %s13, 2
      // Predicated region
      $region29: #{_lambda_.14} parent=5 // pred_check
        %p233 = pneg %p232
      $region30: #{_lambda_.14} parent=5 // pred_check_branch
        %235 = sbr.rel (%p233) target = $region32
      $region31: #{_lambda_.14} parent=5 // pred_region
        // Predicated region
        $region33: #{_lambda_.14} parent=31 // pred_check
          %p236 = pneg %p33
        $region34: #{_lambda_.14} parent=31 // pred_check_branch
          %238 = sbr.rel (%p236) target = $region36
        $region35: #{_lambda_.14} parent=31 // pred_region
          %s239 = sand.u32 %s23, 1
          %s240 = sand.u32 %s23, 1
          %s241 = smul.addr %s240, 8
          %s242 = scalar_lea.vmem [#allocation4], %s241
          %s243 = smul.addr %s13, 4
          %s244 = scalar_lea.vmem %s0, %s243
          // Predicated region
          $region37: #{_lambda_.14} parent=35 // pred_check
            _
          $region38: #{_lambda_.14} parent=35 // pred_check_branch
            %246 = sbr.rel (0) target = $region40
          $region39: #{_lambda_.14} parent=35 // pred_region
            // Predicated region
            $region41: #{_lambda_.14} parent=39 // pred_check
              _
            $region42: #{_lambda_.14} parent=39 // pred_check_branch
              %248 = sbr.rel target = $region44
            $region43: #{_lambda_.14} parent=39 // pred_region
              // Predicated region
              $region56: #{_lambda_.14} parent=43 // pred_check
                _
              $region57: #{_lambda_.14} parent=43 // pred_check_branch
                %266 = sbr.rel (0) target = $region59
              $region58: #{_lambda_.14} parent=43 // pred_region
                loop: start=0, step=1, limit=1
                $region60: #{_lambda_.14} parent=58 // loop_pre_header
                  _
                $region61: #{_lambda_.14} parent=58 // loop_header
                  %s268 = sphi 0, %s272
                  %p269 = scmp.ge.s32.totalorder %s268, 1
                  %s273 = sphi %s244, %s244
                  %s274 = sphi %s242, %s242
                $region62: #{_lambda_.14} parent=58 // loop_header_branch
                  %271 = sbr.rel (%p269) target = $region66
                $region63: #{_lambda_.14} parent=58 // loop_body
                  _
                $region64: #{_lambda_.14} parent=58 // loop_footer
                  %s272 = sadd.s32 1, %s268
                $region65: #{_lambda_.14} parent=58 // loop_footer_branch
                  %267 = sbr.rel target = $region61
                $region66: #{_lambda_.14} parent=58 // loop_exit
                  _
                %s276 = ssub.s32 16, 1
                loop: start=0, step=1, limit=1
                $region67: #{_lambda_.14} parent=58 // loop_pre_header
                  _
                $region68: #{_lambda_.14} parent=58 // loop_header
                  %s278 = sphi 0, %s282
                  %p279 = scmp.ge.s32.totalorder %s278, 1
                  %s283 = sphi %s244, %s244
                  %s284 = sphi %s242, %s242
                $region69: #{_lambda_.14} parent=58 // loop_header_branch
                  %281 = sbr.rel (%p279) target = $region73
                $region70: #{_lambda_.14} parent=58 // loop_body
                  %v285 = vld [vmem:[%s283] sm:%s276]
                  %286 = vst [vmem:[%s284] sm:%s276] %v285
                  %v287 = vld [vmem:[%s283 + $0x10] sm:%s276]
                  %288 = vst [vmem:[%s284 + $0x4] sm:%s276] %v287
                $region71: #{_lambda_.14} parent=58 // loop_footer
                  %s282 = sadd.s32 1, %s278
                $region72: #{_lambda_.14} parent=58 // loop_footer_branch
                  %277 = sbr.rel target = $region68
                $region73: #{_lambda_.14} parent=58 // loop_exit
                  _
              $region59: #{_lambda_.14} parent=43 // pred_fallthru
                _
            $region44: #{_lambda_.14} parent=39 // pred_fallthru
              _
            // Predicated region
            $region45: #{_lambda_.14} parent=39 // pred_check
              _
            $region46: #{_lambda_.14} parent=39 // pred_check_branch
              %250 = sbr.rel (0) target = $region48
            $region47: #{_lambda_.14} parent=39 // pred_region
              %s252 = ssub.s32 16, 1
              loop: start=0, step=1, limit=1
              $region49: #{_lambda_.14} parent=47 // loop_pre_header
                _
              $region50: #{_lambda_.14} parent=47 // loop_header
                %s254 = sphi 0, %s258
                %p255 = scmp.ge.s32.totalorder %s254, 1
                %s259 = sphi %s244, %s244
                %s260 = sphi %s242, %s242
              $region51: #{_lambda_.14} parent=47 // loop_header_branch
                %257 = sbr.rel (%p255) target = $region55
              $region52: #{_lambda_.14} parent=47 // loop_body
                %v261 = vld [vmem:[%s259] sm:%s252]
                %262 = vst [vmem:[%s260] sm:%s252] %v261
                %v263 = vld [vmem:[%s259 + $0x10] sm:%s252]
                %264 = vst [vmem:[%s260 + $0x4] sm:%s252] %v263
              $region53: #{_lambda_.14} parent=47 // loop_footer
                %s258 = sadd.s32 1, %s254
              $region54: #{_lambda_.14} parent=47 // loop_footer_branch
                %253 = sbr.rel target = $region50
              $region55: #{_lambda_.14} parent=47 // loop_exit
                _
            $region48: #{_lambda_.14} parent=39 // pred_fallthru
              _
          $region40: #{_lambda_.14} parent=35 // pred_fallthru
            _
          %289 = vnop
        $region36: #{_lambda_.14} parent=31 // pred_fallthru
          _
        // Predicated region
        $region74: #{_lambda_.14} parent=31 // pred_check
          %p290 = pneg %p61
        $region75: #{_lambda_.14} parent=31 // pred_check_branch
          %292 = sbr.rel (%p290) target = $region77
        $region76: #{_lambda_.14} parent=31 // pred_region
          %s293 = sand.u32 %s51, 1
          %s294 = sand.u32 %s51, 1
          %s295 = smul.addr %s294, 8
          %s296 = scalar_lea.vmem [#allocation5], %s295
          %s297 = sadd.s32 %s13, 1
          %s298 = smul.addr %s297, 4
          %s299 = scalar_lea.vmem %s1, %s298
          // Predicated region
          $region78: #{_lambda_.14} parent=76 // pred_check
            _
          $region79: #{_lambda_.14} parent=76 // pred_check_branch
            %301 = sbr.rel (0) target = $region81
          $region80: #{_lambda_.14} parent=76 // pred_region
            // Predicated region
            $region82: #{_lambda_.14} parent=80 // pred_check
              _
            $region83: #{_lambda_.14} parent=80 // pred_check_branch
              %303 = sbr.rel target = $region85
            $region84: #{_lambda_.14} parent=80 // pred_region
              // Predicated region
              $region97: #{_lambda_.14} parent=84 // pred_check
                _
              $region98: #{_lambda_.14} parent=84 // pred_check_branch
                %321 = sbr.rel (0) target = $region100
              $region99: #{_lambda_.14} parent=84 // pred_region
                loop: start=0, step=1, limit=1
                $region101: #{_lambda_.14} parent=99 // loop_pre_header
                  _
                $region102: #{_lambda_.14} parent=99 // loop_header
                  %s323 = sphi 0, %s327
                  %p324 = scmp.ge.s32.totalorder %s323, 1
                  %s328 = sphi %s299, %s299
                  %s329 = sphi %s296, %s296
                $region103: #{_lambda_.14} parent=99 // loop_header_branch
                  %326 = sbr.rel (%p324) target = $region107
                $region104: #{_lambda_.14} parent=99 // loop_body
                  _
                $region105: #{_lambda_.14} parent=99 // loop_footer
                  %s327 = sadd.s32 1, %s323
                $region106: #{_lambda_.14} parent=99 // loop_footer_branch
                  %322 = sbr.rel target = $region102
                $region107: #{_lambda_.14} parent=99 // loop_exit
                  _
                %s331 = ssub.s32 16, 1
                loop: start=0, step=1, limit=1
                $region108: #{_lambda_.14} parent=99 // loop_pre_header
                  _
                $region109: #{_lambda_.14} parent=99 // loop_header
                  %s333 = sphi 0, %s337
                  %p334 = scmp.ge.s32.totalorder %s333, 1
                  %s338 = sphi %s299, %s299
                  %s339 = sphi %s296, %s296
                $region110: #{_lambda_.14} parent=99 // loop_header_branch
                  %336 = sbr.rel (%p334) target = $region114
                $region111: #{_lambda_.14} parent=99 // loop_body
                  %v340 = vld [vmem:[%s338] sm:%s331]
                  %341 = vst [vmem:[%s339] sm:%s331] %v340
                  %v342 = vld [vmem:[%s338 + $0x10] sm:%s331]
                  %343 = vst [vmem:[%s339 + $0x4] sm:%s331] %v342
                $region112: #{_lambda_.14} parent=99 // loop_footer
                  %s337 = sadd.s32 1, %s333
                $region113: #{_lambda_.14} parent=99 // loop_footer_branch
                  %332 = sbr.rel target = $region109
                $region114: #{_lambda_.14} parent=99 // loop_exit
                  _
              $region100: #{_lambda_.14} parent=84 // pred_fallthru
                _
            $region85: #{_lambda_.14} parent=80 // pred_fallthru
              _
            // Predicated region
            $region86: #{_lambda_.14} parent=80 // pred_check
              _
            $region87: #{_lambda_.14} parent=80 // pred_check_branch
              %305 = sbr.rel (0) target = $region89
            $region88: #{_lambda_.14} parent=80 // pred_region
              %s307 = ssub.s32 16, 1
              loop: start=0, step=1, limit=1
              $region90: #{_lambda_.14} parent=88 // loop_pre_header
                _
              $region91: #{_lambda_.14} parent=88 // loop_header
                %s309 = sphi 0, %s313
                %p310 = scmp.ge.s32.totalorder %s309, 1
                %s314 = sphi %s299, %s299
                %s315 = sphi %s296, %s296
              $region92: #{_lambda_.14} parent=88 // loop_header_branch
                %312 = sbr.rel (%p310) target = $region96
              $region93: #{_lambda_.14} parent=88 // loop_body
                %v316 = vld [vmem:[%s314] sm:%s307]
                %317 = vst [vmem:[%s315] sm:%s307] %v316
                %v318 = vld [vmem:[%s314 + $0x10] sm:%s307]
                %319 = vst [vmem:[%s315 + $0x4] sm:%s307] %v318
              $region94: #{_lambda_.14} parent=88 // loop_footer
                %s313 = sadd.s32 1, %s309
              $region95: #{_lambda_.14} parent=88 // loop_footer_branch
                %308 = sbr.rel target = $region91
              $region96: #{_lambda_.14} parent=88 // loop_exit
                _
            $region89: #{_lambda_.14} parent=80 // pred_fallthru
              _
          $region81: #{_lambda_.14} parent=76 // pred_fallthru
            _
          %344 = vnop
        $region77: #{_lambda_.14} parent=31 // pred_fallthru
          _
        // Predicated region
        $region115: #{_lambda_.14} parent=31 // pred_check
          %p345 = pneg %p89
        $region116: #{_lambda_.14} parent=31 // pred_check_branch
          %347 = sbr.rel (%p345) target = $region118
        $region117: #{_lambda_.14} parent=31 // pred_region
          %s348 = sand.u32 %s79, 1
          %s349 = sand.u32 %s79, 1
          %s350 = smul.addr %s349, 8
          %s351 = scalar_lea.vmem [#allocation6], %s350
          %s352 = sadd.s32 %s13, 2
          %s353 = smul.addr %s352, 4
          %s354 = scalar_lea.vmem %s2, %s353
          // Predicated region
          $region119: #{_lambda_.14} parent=117 // pred_check
            _
          $region120: #{_lambda_.14} parent=117 // pred_check_branch
            %356 = sbr.rel (0) target = $region122
          $region121: #{_lambda_.14} parent=117 // pred_region
            // Predicated region
            $region123: #{_lambda_.14} parent=121 // pred_check
              _
            $region124: #{_lambda_.14} parent=121 // pred_check_branch
              %358 = sbr.rel target = $region126
            $region125: #{_lambda_.14} parent=121 // pred_region
              // Predicated region
              $region138: #{_lambda_.14} parent=125 // pred_check
                _
              $region139: #{_lambda_.14} parent=125 // pred_check_branch
                %376 = sbr.rel (0) target = $region141
              $region140: #{_lambda_.14} parent=125 // pred_region
                loop: start=0, step=1, limit=1
                $region142: #{_lambda_.14} parent=140 // loop_pre_header
                  _
                $region143: #{_lambda_.14} parent=140 // loop_header
                  %s378 = sphi 0, %s382
                  %p379 = scmp.ge.s32.totalorder %s378, 1
                  %s383 = sphi %s354, %s354
                  %s384 = sphi %s351, %s351
                $region144: #{_lambda_.14} parent=140 // loop_header_branch
                  %381 = sbr.rel (%p379) target = $region148
                $region145: #{_lambda_.14} parent=140 // loop_body
                  _
                $region146: #{_lambda_.14} parent=140 // loop_footer
                  %s382 = sadd.s32 1, %s378
                $region147: #{_lambda_.14} parent=140 // loop_footer_branch
                  %377 = sbr.rel target = $region143
                $region148: #{_lambda_.14} parent=140 // loop_exit
                  _
                %s386 = ssub.s32 16, 1
                loop: start=0, step=1, limit=1
                $region149: #{_lambda_.14} parent=140 // loop_pre_header
                  _
                $region150: #{_lambda_.14} parent=140 // loop_header
                  %s388 = sphi 0, %s392
                  %p389 = scmp.ge.s32.totalorder %s388, 1
                  %s393 = sphi %s354, %s354
                  %s394 = sphi %s351, %s351
                $region151: #{_lambda_.14} parent=140 // loop_header_branch
                  %391 = sbr.rel (%p389) target = $region155
                $region152: #{_lambda_.14} parent=140 // loop_body
                  %v395 = vld [vmem:[%s393] sm:%s386]
                  %396 = vst [vmem:[%s394] sm:%s386] %v395
                  %v397 = vld [vmem:[%s393 + $0x10] sm:%s386]
                  %398 = vst [vmem:[%s394 + $0x4] sm:%s386] %v397
                $region153: #{_lambda_.14} parent=140 // loop_footer
                  %s392 = sadd.s32 1, %s388
                $region154: #{_lambda_.14} parent=140 // loop_footer_branch
                  %387 = sbr.rel target = $region150
                $region155: #{_lambda_.14} parent=140 // loop_exit
                  _
              $region141: #{_lambda_.14} parent=125 // pred_fallthru
                _
            $region126: #{_lambda_.14} parent=121 // pred_fallthru
              _
            // Predicated region
            $region127: #{_lambda_.14} parent=121 // pred_check
              _
            $region128: #{_lambda_.14} parent=121 // pred_check_branch
              %360 = sbr.rel (0) target = $region130
            $region129: #{_lambda_.14} parent=121 // pred_region
              %s362 = ssub.s32 16, 1
              loop: start=0, step=1, limit=1
              $region131: #{_lambda_.14} parent=129 // loop_pre_header
                _
              $region132: #{_lambda_.14} parent=129 // loop_header
                %s364 = sphi 0, %s368
                %p365 = scmp.ge.s32.totalorder %s364, 1
                %s369 = sphi %s354, %s354
                %s370 = sphi %s351, %s351
              $region133: #{_lambda_.14} parent=129 // loop_header_branch
                %367 = sbr.rel (%p365) target = $region137
              $region134: #{_lambda_.14} parent=129 // loop_body
                %v371 = vld [vmem:[%s369] sm:%s362]
                %372 = vst [vmem:[%s370] sm:%s362] %v371
                %v373 = vld [vmem:[%s369 + $0x10] sm:%s362]
                %374 = vst [vmem:[%s370 + $0x4] sm:%s362] %v373
              $region135: #{_lambda_.14} parent=129 // loop_footer
                %s368 = sadd.s32 1, %s364
              $region136: #{_lambda_.14} parent=129 // loop_footer_branch
                %363 = sbr.rel target = $region132
              $region137: #{_lambda_.14} parent=129 // loop_exit
                _
            $region130: #{_lambda_.14} parent=121 // pred_fallthru
              _
          $region122: #{_lambda_.14} parent=117 // pred_fallthru
            _
          %399 = vnop
        $region118: #{_lambda_.14} parent=31 // pred_fallthru
          _
      $region32: #{_lambda_.14} parent=5 // pred_fallthru
        _
      %p400 = scmp.le.s32.totalorder 1, %s13
      %p401 = scmp.lt.s32.totalorder %s13, 3
      %p402 = pnand %p400, %p401
      %p403 = pneg %p402
      // Predicated region
      $region156: #{_lambda_.14} parent=5 // pred_check
        _
      $region157: #{_lambda_.14} parent=5 // pred_check_branch
        %405 = sbr.rel (%p402) target = $region159
      $region158: #{_lambda_.14} parent=5 // pred_region
        %s406 = ssub.s32 %s13, 1
        %s407 = sand.u32 %s26, 1
        %s408 = sand.u32 %s26, 1
        %s409 = smul.addr %s408, 8
        %s410 = scalar_lea.vmem [#allocation4], %s409
        // Predicated region
        $region160: #{_lambda_.14} parent=158 // pred_check
          %p411 = pneg %p39
        $region161: #{_lambda_.14} parent=158 // pred_check_branch
          %413 = sbr.rel (%p411) target = $region163
        $region162: #{_lambda_.14} parent=158 // pred_region
          _
        $region163: #{_lambda_.14} parent=158 // pred_fallthru
          _
        %s414 = sand.u32 %s54, 1
        %s415 = sand.u32 %s54, 1
        %s416 = smul.addr %s415, 8
        %s417 = scalar_lea.vmem [#allocation5], %s416
        // Predicated region
        $region164: #{_lambda_.14} parent=158 // pred_check
          %p418 = pneg %p67
        $region165: #{_lambda_.14} parent=158 // pred_check_branch
          %420 = sbr.rel (%p418) target = $region167
        $region166: #{_lambda_.14} parent=158 // pred_region
          _
        $region167: #{_lambda_.14} parent=158 // pred_fallthru
          _
        %s421 = sand.u32 %s82, 1
        %s422 = sand.u32 %s82, 1
        %s423 = smul.addr %s422, 8
        %s424 = scalar_lea.vmem [#allocation6], %s423
        // Predicated region
        $region168: #{_lambda_.14} parent=158 // pred_check
          %p425 = pneg %p95
        $region169: #{_lambda_.14} parent=158 // pred_check_branch
          %427 = sbr.rel (%p425) target = $region171
        $region170: #{_lambda_.14} parent=158 // pred_region
          _
        $region171: #{_lambda_.14} parent=158 // pred_fallthru
          _
        %s428 = sand.u32 %s26, 1
        %s429 = sand.u32 %s26, 1
        %s430 = smul.addr %s429, 8
        %s431 = scalar_lea.vmem [#allocation4], %s430
        %p432 = pneg %p39
        %p433 = pneg %p36
        %s434 = sand.u32 %s54, 1
        %s435 = sand.u32 %s54, 1
        %s436 = smul.addr %s435, 8
        %s437 = scalar_lea.vmem [#allocation5], %s436
        %p438 = pneg %p67
        %p439 = pneg %p64
        %s440 = sand.u32 %s82, 1
        %s441 = sand.u32 %s82, 1
        %s442 = smul.addr %s441, 8
        %s443 = scalar_lea.vmem [#allocation6], %s442
        %p444 = pneg %p95
        %p445 = pneg %p92
        %p446 = pneg %p116
        %p447 = pneg %p113
        %p448 = pneg %p137
        %p449 = pneg %p134
        %p450 = pneg %p158
        %p451 = pneg %p155
        %p452 = pneg %p179
        %p453 = pneg %p176
        %p454 = pneg %p205
        %p455 = pneg %p202
        %s456 = sand.u32 %s192, 1
        %s457 = sand.u32 %s192, 1
        %s458 = smul.addr %s457, 16
        %s459 = scalar_lea.vmem [#allocation7], %s458
        %s460 = sadd.s32 %s18, 1
        %s461 = sadd.s32 %s18, 2
        %v462 = vld [vmem:[%s410] sm:$0xf]
        %v463 = vld [vmem:[%s410 + $0x4] sm:$0xf]
        %v464 = vunpack.c.l.bf16 %v462
        %v465 = vunpack.c.l.bf16 %v463
        %466 = vst [vmem:[#allocation2] sm:$0xff] %v464
        %467 = vst [vmem:[#allocation2 + $0x18] sm:$0xff] %v465
        %v468 = vld [vmem:[%s417] sm:$0xf]
        %v469 = vld [vmem:[%s417 + $0x4] sm:$0xf]
        %v470 = vunpack.c.l.bf16 %v468
        %v471 = vunpack.c.l.bf16 %v469
        %472 = vst [vmem:[#allocation2 + $0x8] sm:$0xff] %v470
        %473 = vst [vmem:[#allocation2 + $0x20] sm:$0xff] %v471
        %v474 = vld [vmem:[%s424] sm:$0xf]
        %v475 = vld [vmem:[%s424 + $0x4] sm:$0xf]
        %v476 = vunpack.c.l.bf16 %v474
        %v477 = vunpack.c.l.bf16 %v475
        %478 = vst [vmem:[#allocation2 + $0x10] sm:$0xff] %v476
        %479 = vst [vmem:[#allocation2 + $0x28] sm:$0xff] %v477
        %v480 = vld [vmem:[#allocation2] sm:$0xff]
        %v481 = vld [vmem:[#allocation2 + $0x8] sm:$0xff]
        %v482 = vld [vmem:[#allocation2 + $0x18] sm:$0xff]
        %v483 = vld [vmem:[#allocation2 + $0x20] sm:$0xff]
        %488 = vrot.lane.b32.xlu0 %v480, 11
        %v489 = vpop.permute.xlu0 %488
        %490 = vrot.lane.b32.xlu0 %v481, 11
        %v491 = vpop.permute.xlu0 %490
        %492 = vrot.lane.b32.xlu0 %v482, 11
        %v493 = vpop.permute.xlu0 %492
        %494 = vrot.lane.b32.xlu0 %v483, 11
        %v495 = vpop.permute.xlu0 %494
        %vm496 = vcmask 89088
        %v497 = vsel %vm496, %v489, %v491
        %v498 = vsel %vm496, %v493, %v495
        %501 = vst [vmem:[#allocation3] sm:$0xff] %v497
        %502 = vst [vmem:[#allocation3 + $0x8] sm:$0xff] %v498
        %v503 = vld [vmem:[#allocation2] sm:$0xff]
        %v504 = vld [vmem:[#allocation2 + $0x8] sm:$0xff]
        %v505 = vld [vmem:[#allocation2 + $0x18] sm:$0xff]
        %v506 = vld [vmem:[#allocation2 + $0x20] sm:$0xff]
        %511 = vrot.lane.b32.xlu0 %v503, 10
        %v512 = vpop.permute.xlu0 %511
        %513 = vrot.lane.b32.xlu0 %v504, 10
        %v514 = vpop.permute.xlu0 %513
        %515 = vrot.lane.b32.xlu0 %v505, 10
        %v516 = vpop.permute.xlu0 %515
        %517 = vrot.lane.b32.xlu0 %v506, 10
        %v518 = vpop.permute.xlu0 %517
        %vm519 = vcmask 80896
        %v520 = vsel %vm519, %v512, %v514
        %v521 = vsel %vm519, %v516, %v518
        %524 = vst [vmem:[#allocation3 + $0x10] sm:$0xff] %v520
        %525 = vst [vmem:[#allocation3 + $0x18] sm:$0xff] %v521
        %v526 = vld [vmem:[#allocation2] sm:$0xff]
        %v527 = vld [vmem:[#allocation2 + $0x8] sm:$0xff]
        %v528 = vld [vmem:[#allocation2 + $0x18] sm:$0xff]
        %v529 = vld [vmem:[#allocation2 + $0x20] sm:$0xff]
        %534 = vrot.lane.b32.xlu0 %v526, 9
        %v535 = vpop.permute.xlu0 %534
        %536 = vrot.lane.b32.xlu0 %v527, 9
        %v537 = vpop.permute.xlu0 %536
        %538 = vrot.lane.b32.xlu0 %v528, 9
        %v539 = vpop.permute.xlu0 %538
        %540 = vrot.lane.b32.xlu0 %v529, 9
        %v541 = vpop.permute.xlu0 %540
        %vm542 = vcmask 72704
        %v543 = vsel %vm542, %v535, %v537
        %v544 = vsel %vm542, %v539, %v541
        %547 = vst [vmem:[#allocation3 + $0x20] sm:$0xff] %v543
        %548 = vst [vmem:[#allocation3 + $0x28] sm:$0xff] %v544
        %v549 = vld [vmem:[#allocation2] sm:$0xff]
        %v550 = vld [vmem:[#allocation2 + $0x8] sm:$0xff]
        %v551 = vld [vmem:[#allocation2 + $0x18] sm:$0xff]
        %v552 = vld [vmem:[#allocation2 + $0x20] sm:$0xff]
        %557 = vrot.lane.b32.xlu0 %v549, 1
        %v558 = vpop.permute.xlu0 %557
        %559 = vrot.lane.b32.xlu0 %v550, 1
        %v560 = vpop.permute.xlu0 %559
        %561 = vrot.lane.b32.xlu0 %v551, 1
        %v562 = vpop.permute.xlu0 %561
        %563 = vrot.lane.b32.xlu0 %v552, 1
        %v564 = vpop.permute.xlu0 %563
        %vm565 = vcmask 7168
        %v566 = vsel %vm565, %v558, %v560
        %v567 = vsel %vm565, %v562, %v564
        %570 = vst [vmem:[#allocation3 + $0x30] sm:$0xff] %v566
        %571 = vst [vmem:[#allocation3 + $0x38] sm:$0xff] %v567
        %v572 = vld [vmem:[#allocation2 + $0x8] sm:$0xff]
        %v573 = vld [vmem:[#allocation2 + $0x20] sm:$0xff]
        %574 = vst [vmem:[#allocation3 + $0x40] sm:$0xff] %v572
        %575 = vst [vmem:[#allocation3 + $0x48] sm:$0xff] %v573
        %v576 = vld [vmem:[#allocation2 + $0x8] sm:$0xff]
        %v577 = vld [vmem:[#allocation2 + $0x10] sm:$0xff]
        %v578 = vld [vmem:[#allocation2 + $0x20] sm:$0xff]
        %v579 = vld [vmem:[#allocation2 + $0x28] sm:$0xff]
        %584 = vrot.lane.b32.xlu0 %v576, 127
        %v585 = vpop.permute.xlu0 %584
        %586 = vrot.lane.b32.xlu0 %v577, 127
        %v587 = vpop.permute.xlu0 %586
        %588 = vrot.lane.b32.xlu0 %v578, 127
        %v589 = vpop.permute.xlu0 %588
        %590 = vrot.lane.b32.xlu0 %v579, 127
        %v591 = vpop.permute.xlu0 %590
        %vm592 = vcmask 1039360
        %v593 = vsel %vm592, %v585, %v587
        %v594 = vsel %vm592, %v589, %v591
        %597 = vst [vmem:[#allocation3 + $0x50] sm:$0xff] %v593
        %598 = vst [vmem:[#allocation3 + $0x58] sm:$0xff] %v594
        %v599 = vld [vmem:[#allocation2 + $0x8] sm:$0xff]
        %v600 = vld [vmem:[#allocation2 + $0x10] sm:$0xff]
        %v601 = vld [vmem:[#allocation2 + $0x20] sm:$0xff]
        %v602 = vld [vmem:[#allocation2 + $0x28] sm:$0xff]
        %607 = vrot.lane.b32.xlu0 %v599, 119
        %v608 = vpop.permute.xlu0 %607
        %609 = vrot.lane.b32.xlu0 %v600, 119
        %v610 = vpop.permute.xlu0 %609
        %611 = vrot.lane.b32.xlu0 %v601, 119
        %v612 = vpop.permute.xlu0 %611
        %613 = vrot.lane.b32.xlu0 %v602, 119
        %v614 = vpop.permute.xlu0 %613
        %vm615 = vcmask 973824
        %v616 = vsel %vm615, %v608, %v610
        %v617 = vsel %vm615, %v612, %v614
        %620 = vst [vmem:[#allocation3 + $0x60] sm:$0xff] %v616
        %621 = vst [vmem:[#allocation3 + $0x68] sm:$0xff] %v617
        %v622 = vld [vmem:[#allocation2 + $0x8] sm:$0xff]
        %v623 = vld [vmem:[#allocation2 + $0x10] sm:$0xff]
        %v624 = vld [vmem:[#allocation2 + $0x20] sm:$0xff]
        %v625 = vld [vmem:[#allocation2 + $0x28] sm:$0xff]
        %630 = vrot.lane.b32.xlu0 %v622, 118
        %v631 = vpop.permute.xlu0 %630
        %632 = vrot.lane.b32.xlu0 %v623, 118
        %v633 = vpop.permute.xlu0 %632
        %634 = vrot.lane.b32.xlu0 %v624, 118
        %v635 = vpop.permute.xlu0 %634
        %636 = vrot.lane.b32.xlu0 %v625, 118
        %v637 = vpop.permute.xlu0 %636
        %vm638 = vcmask 965632
        %v639 = vsel %vm638, %v631, %v633
        %v640 = vsel %vm638, %v635, %v637
        %643 = vst [vmem:[#allocation3 + $0x70] sm:$0xff] %v639
        %644 = vst [vmem:[#allocation3 + $0x78] sm:$0xff] %v640
        %v645 = vld [vmem:[#allocation2 + $0x8] sm:$0xff]
        %v646 = vld [vmem:[#allocation2 + $0x10] sm:$0xff]
        %v647 = vld [vmem:[#allocation2 + $0x20] sm:$0xff]
        %v648 = vld [vmem:[#allocation2 + $0x28] sm:$0xff]
        %653 = vrot.lane.b32.xlu0 %v645, 117
        %v654 = vpop.permute.xlu0 %653
        %655 = vrot.lane.b32.xlu0 %v646, 117
        %v656 = vpop.permute.xlu0 %655
        %657 = vrot.lane.b32.xlu0 %v647, 117
        %v658 = vpop.permute.xlu0 %657
        %659 = vrot.lane.b32.xlu0 %v648, 117
        %v660 = vpop.permute.xlu0 %659
        %vm661 = vcmask 957440
        %v662 = vsel %vm661, %v654, %v656
        %v663 = vsel %vm661, %v658, %v660
        %666 = vst [vmem:[#allocation3 + $0x80] sm:$0xff] %v662
        %667 = vst [vmem:[#allocation3 + $0x88] sm:$0xff] %v663
        %v668 = vld [vmem:[%s3] sm:$0xff]
        %v669 = vld [vmem:[%s3 + $0x8] sm:$0xff]
        %v670 = vld [vmem:[%s3 + $0x10] sm:$0xff]
        %v671 = vld [vmem:[%s3 + $0x18] sm:$0xff]
        %v672 = vld [vmem:[%s3 + $0x20] sm:$0xff]
        %v673 = vld [vmem:[%s3 + $0x28] sm:$0xff]
        %v674 = vld [vmem:[%s3 + $0x30] sm:$0xff]
        %v675 = vld [vmem:[%s3 + $0x38] sm:$0xff]
        %v676 = vld [vmem:[#allocation3] sm:$0xff]
        %v677 = vld [vmem:[#allocation3 + $0x8] sm:$0xff]
        %v678 = vld [vmem:[#allocation3 + $0x10] sm:$0xff]
        %v679 = vld [vmem:[#allocation3 + $0x18] sm:$0xff]
        %v680 = vld [vmem:[#allocation3 + $0x20] sm:$0xff]
        %v681 = vld [vmem:[#allocation3 + $0x28] sm:$0xff]
        %v682 = vld [vmem:[#allocation3 + $0x30] sm:$0xff]
        %v683 = vld [vmem:[#allocation3 + $0x38] sm:$0xff]
        %v684 = vld [vmem:[#allocation3 + $0x40] sm:$0xff]
        %v685 = vld [vmem:[#allocation3 + $0x48] sm:$0xff]
        %v686 = vld [vmem:[#allocation3 + $0x50] sm:$0xff]
        %v687 = vld [vmem:[#allocation3 + $0x58] sm:$0xff]
        %v688 = vld [vmem:[#allocation3 + $0x60] sm:$0xff]
        %v689 = vld [vmem:[#allocation3 + $0x68] sm:$0xff]
        %v690 = vld [vmem:[#allocation3 + $0x70] sm:$0xff]
        %v691 = vld [vmem:[#allocation3 + $0x78] sm:$0xff]
        %v692 = vld [vmem:[#allocation3 + $0x80] sm:$0xff]
        %v693 = vld [vmem:[#allocation3 + $0x88] sm:$0xff]
        %v694 = vld [vmem:[%s4] sm:$0xff]
        %v695 = vld [vmem:[%s4 + $0x8] sm:$0xff]
        %v696 = vld [vmem:[%s4 + $0x10] sm:$0xff]
        %v697 = vld [vmem:[%s4 + $0x18] sm:$0xff]
        %699 = vset.pattern.permute.xlu0 0
        %700 = vperm.xlu0 %699, %v694
        %v701 = vpop.permute.xlu0 %700
        %704 = vset.pattern.permute.xlu0 0
        %705 = vperm.xlu0 %704, %v695
        %v706 = vpop.permute.xlu0 %705
        %709 = vset.pattern.permute.xlu0 0
        %710 = vperm.xlu0 %709, %v696
        %v711 = vpop.permute.xlu0 %710
        %714 = vset.pattern.permute.xlu0 0
        %715 = vperm.xlu0 %714, %v697
        %v716 = vpop.permute.xlu0 %715
        %vm718 = vcmask 130048
        %v720 = vsel %vm718, %v669, 0
        %v723 = vsel %vm718, %v671, 0
        %v726 = vsel %vm718, %v673, 0
        %v729 = vsel %vm718, %v675, 0
        %731 = vmatpush.msra.mxu0 %v691
        %732 = vmatpush.msra.mxu0 %v690
        %733 = vmatpush.msra.mxu0 %v689
        %734 = vmatpush.msra.mxu0 %v688
        %735 = vmatpush.msra.mxu0 %v687
        %736 = vmatpush.msra.mxu0 %v686
        %737 = vmatpush.msra.mxu0 %v685
        %738 = vmatpush.msra.mxu0 %v684
        %739 = vmatpush.msra.mxu0 %v683
        %740 = vmatpush.msra.mxu0 %v682
        %741 = vmatpush.msra.mxu0 %v681
        %742 = vmatpush.msra.mxu0 %v680
        %743 = vmatpush.msra.mxu0 %v679
        %744 = vmatpush.msra.mxu0 %v678
        %745 = vmatpush.msra.mxu0 %v677
        %746 = vmatpush.msra.mxu0 %v676
        %747 = vmatmul.f32.gmra.mxu0 %v668
        %v748 = vpop.f32.mrf.mxu0
        %v749 = vadd.f32 %v701, %v748
        %750 = vmatmul.f32.gmra.mxu0 %v670
        %v751 = vpop.f32.mrf.mxu0
        %v752 = vadd.f32 %v706, %v751
        %753 = vmatmul.f32.gmra.mxu0 %v672
        %v754 = vpop.f32.mrf.mxu0
        %v755 = vadd.f32 %v711, %v754
        %756 = vmatmul.f32.gmra.mxu0 %v674
        %v757 = vpop.f32.mrf.mxu0
        %v758 = vadd.f32 %v716, %v757
        %759 = vdwg.mxu0
        %760 = vmatpush.msra.mxu0 0.0
        %761 = vmatpush.msra.mxu0 0.0
        %762 = vmatpush.msra.mxu0 0.0
        %763 = vmatpush.msra.mxu0 0.0
        %764 = vmatpush.msra.mxu0 0.0
        %765 = vmatpush.msra.mxu0 0.0
        %766 = vmatpush.msra.mxu0 0.0
        %767 = vmatpush.msra.mxu0 0.0
        %768 = vmatpush.msra.mxu0 0.0
        %769 = vmatpush.msra.mxu0 0.0
        %770 = vmatpush.msra.mxu0 0.0
        %771 = vmatpush.msra.mxu0 0.0
        %772 = vmatpush.msra.mxu0 0.0
        %773 = vmatpush.msra.mxu0 0.0
        %774 = vmatpush.msra.mxu0 %v693
        %775 = vmatpush.msra.mxu0 %v692
        %776 = vmatmul.f32.gmra.mxu0 %v720
        %v777 = vpop.f32.mrf.mxu0
        %v778 = vadd.f32 %v749, %v777
        %779 = vmatmul.f32.gmra.mxu0 %v723
        %v780 = vpop.f32.mrf.mxu0
        %v781 = vadd.f32 %v752, %v780
        %782 = vmatmul.f32.gmra.mxu0 %v726
        %v783 = vpop.f32.mrf.mxu0
        %v784 = vadd.f32 %v755, %v783
        %785 = vmatmul.f32.gmra.mxu0 %v729
        %v786 = vpop.f32.mrf.mxu0
        %v787 = vadd.f32 %v758, %v786
        %788 = vdwg.mxu0
        %v789 = vld [vmem:[%s5] sm:$0xff]
        %v790 = vld [vmem:[%s5 + $0x8] sm:$0xff]
        %v791 = vld [vmem:[%s5 + $0x10] sm:$0xff]
        %v792 = vld [vmem:[%s5 + $0x18] sm:$0xff]
        %v793 = vmul.f32 %v778, %v778
        %v794 = vmul.f32 %v781, %v781
        %v795 = vmul.f32 %v784, %v784
        %v796 = vmul.f32 %v787, %v787
        %v797 = vld [vmem:[%s6] sm:$0xff]
        %v798 = vld [vmem:[%s6 + $0x8] sm:$0xff]
        %v799 = vld [vmem:[%s6 + $0x10] sm:$0xff]
        %v800 = vld [vmem:[%s6 + $0x18] sm:$0xff]
        %802 = vset.pattern.permute.xlu0 0
        %803 = vperm.xlu0 %802, %v797
        %v804 = vpop.permute.xlu0 %803
        %807 = vset.pattern.permute.xlu0 0
        %808 = vperm.xlu0 %807, %v798
        %v809 = vpop.permute.xlu0 %808
        %812 = vset.pattern.permute.xlu0 0
        %813 = vperm.xlu0 %812, %v799
        %v814 = vpop.permute.xlu0 %813
        %817 = vset.pattern.permute.xlu0 0
        %818 = vperm.xlu0 %817, %v800
        %v819 = vpop.permute.xlu0 %818
        %vm821 = vcmask 261120
        %v823 = vsel %vm821, %v789, 0
        %v826 = vsel %vm821, %v790, 0
        %v829 = vsel %vm821, %v791, 0
        %v832 = vsel %vm821, %v792, 0
        %834 = vmatpush.msra.mxu0 0.0
        %835 = vmatpush.msra.mxu0 0.0
        %836 = vmatpush.msra.mxu0 0.0
        %837 = vmatpush.msra.mxu0 0.0
        %838 = vmatpush.msra.mxu0 0.0
        %839 = vmatpush.msra.mxu0 0.0
        %840 = vmatpush.msra.mxu0 0.0
        %841 = vmatpush.msra.mxu0 0.0
        %842 = vmatpush.msra.mxu0 0.0
        %843 = vmatpush.msra.mxu0 0.0
        %844 = vmatpush.msra.mxu0 0.0
        %845 = vmatpush.msra.mxu0 0.0
        %846 = vmatpush.msra.mxu0 %v796
        %847 = vmatpush.msra.mxu0 %v795
        %848 = vmatpush.msra.mxu0 %v794
        %849 = vmatpush.msra.mxu0 %v793
        %850 = vmatmul.f32.gmra.mxu0 %v823
        %v851 = vpop.f32.mrf.mxu0
        %v852 = vadd.f32 %v804, %v851
        %853 = vmatmul.f32.gmra.mxu0 %v826
        %v854 = vpop.f32.mrf.mxu0
        %v855 = vadd.f32 %v809, %v854
        %856 = vmatmul.f32.gmra.mxu0 %v829
        %v857 = vpop.f32.mrf.mxu0
        %v858 = vadd.f32 %v814, %v857
        %859 = vmatmul.f32.gmra.mxu0 %v832
        %v860 = vpop.f32.mrf.mxu0
        %v861 = vadd.f32 %v819, %v860
        %862 = vdwg.mxu0
        %v863 = vmax.f32 %v852, 1e-10
        %v864 = vmax.f32 %v855, 1e-10
        %v865 = vmax.f32 %v858, 1e-10
        %v866 = vmax.f32 %v861, 1e-10
        %v867 = vrsqrt.pop %v863
        %v868 = vmul.f32 %v867, %v863
        %v869 = vmul.f32 %v868, %v867
        %v870 = vmul.f32 0.5, %v869
        %v871 = vsub.f32 1.5, %v870
        %v872 = vmul.f32 %v867, %v871
        %v873 = vmul.f32 %v863, %v872
        %vm874 = vcmp.eq.f32.partialorder %v863, inf
        %v875 = vsel %vm874, %v863, %v873
        %vm876 = vcmp.eq.f32.partialorder %v863, 0.0
        %v877 = vand.u32 %v863, 2147483648
        %v878 = vsel %vm876, %v877, %v875
        %v879 = vrsqrt.pop %v864
        %v880 = vmul.f32 %v879, %v864
        %v881 = vmul.f32 %v880, %v879
        %v882 = vmul.f32 0.5, %v881
        %v883 = vsub.f32 1.5, %v882
        %v884 = vmul.f32 %v879, %v883
        %v885 = vmul.f32 %v864, %v884
        %vm886 = vcmp.eq.f32.partialorder %v864, inf
        %v887 = vsel %vm886, %v864, %v885
        %vm888 = vcmp.eq.f32.partialorder %v864, 0.0
        %v889 = vand.u32 %v864, 2147483648
        %v890 = vsel %vm888, %v889, %v887
        %v891 = vrsqrt.pop %v865
        %v892 = vmul.f32 %v891, %v865
        %v893 = vmul.f32 %v892, %v891
        %v894 = vmul.f32 0.5, %v893
        %v895 = vsub.f32 1.5, %v894
        %v896 = vmul.f32 %v891, %v895
        %v897 = vmul.f32 %v865, %v896
        %vm898 = vcmp.eq.f32.partialorder %v865, inf
        %v899 = vsel %vm898, %v865, %v897
        %vm900 = vcmp.eq.f32.partialorder %v865, 0.0
        %v901 = vand.u32 %v865, 2147483648
        %v902 = vsel %vm900, %v901, %v899
        %v903 = vrsqrt.pop %v866
        %v904 = vmul.f32 %v903, %v866
        %v905 = vmul.f32 %v904, %v903
        %v906 = vmul.f32 0.5, %v905
        %v907 = vsub.f32 1.5, %v906
        %v908 = vmul.f32 %v903, %v907
        %v909 = vmul.f32 %v866, %v908
        %vm910 = vcmp.eq.f32.partialorder %v866, inf
        %v911 = vsel %vm910, %v866, %v909
        %vm912 = vcmp.eq.f32.partialorder %v866, 0.0
        %v913 = vand.u32 %v866, 2147483648
        %v914 = vsel %vm912, %v913, %v911
        %v915 = vmul.f32 %v778, %v878
        %v916 = vmul.f32 %v781, %v890
        %v917 = vmul.f32 %v784, %v902
        %v918 = vmul.f32 %v787, %v914
        %v919 = vpack.c.bf16 %v915, %v915
        %v920 = vpack.c.bf16 %v916, %v916
        %v921 = vpack.c.bf16 %v917, %v917
        %v922 = vpack.c.bf16 %v918, %v918
        %923 = vst [vmem:[%s459] sm:$0xf] %v919
        %924 = vst [vmem:[%s459 + $0x4] sm:$0xf] %v920
        %925 = vst [vmem:[%s459 + $0x8] sm:$0xf] %v921
        %926 = vst [vmem:[%s459 + $0xc] sm:$0xf] %v922
        %s927 = sand.u32 %s192, 1
        %s928 = sand.u32 %s192, 1
        %s929 = smul.addr %s928, 16
        %s930 = scalar_lea.vmem [#allocation7], %s929
        // Predicated region
        $region172: #{_lambda_.14} parent=158 // pred_check
          %p931 = pneg %p202
        $region173: #{_lambda_.14} parent=158 // pred_check_branch
          %933 = sbr.rel (%p931) target = $region175
        $region174: #{_lambda_.14} parent=158 // pred_region
          %s934 = smul.addr %s18, 4
          %s935 = scalar_lea.vmem %s7, %s934
          // Predicated region
          $region176: #{_lambda_.14} parent=174 // pred_check
            _
          $region177: #{_lambda_.14} parent=174 // pred_check_branch
            %937 = sbr.rel (0) target = $region179
          $region178: #{_lambda_.14} parent=174 // pred_region
            // Predicated region
            $region180: #{_lambda_.14} parent=178 // pred_check
              _
            $region181: #{_lambda_.14} parent=178 // pred_check_branch
              %939 = sbr.rel target = $region183
            $region182: #{_lambda_.14} parent=178 // pred_region
              // Predicated region
              $region195: #{_lambda_.14} parent=182 // pred_check
                _
              $region196: #{_lambda_.14} parent=182 // pred_check_branch
                %961 = sbr.rel (0) target = $region198
              $region197: #{_lambda_.14} parent=182 // pred_region
                loop: start=0, step=1, limit=1
                $region199: #{_lambda_.14} parent=197 // loop_pre_header
                  _
                $region200: #{_lambda_.14} parent=197 // loop_header
                  %s963 = sphi 0, %s967
                  %p964 = scmp.ge.s32.totalorder %s963, 1
                  %s968 = sphi %s930, %s930
                  %s969 = sphi %s935, %s935
                $region201: #{_lambda_.14} parent=197 // loop_header_branch
                  %966 = sbr.rel (%p964) target = $region205
                $region202: #{_lambda_.14} parent=197 // loop_body
                  _
                $region203: #{_lambda_.14} parent=197 // loop_footer
                  %s967 = sadd.s32 1, %s963
                $region204: #{_lambda_.14} parent=197 // loop_footer_branch
                  %962 = sbr.rel target = $region200
                $region205: #{_lambda_.14} parent=197 // loop_exit
                  _
                %s971 = ssub.s32 16, 1
                loop: start=0, step=1, limit=1
                $region206: #{_lambda_.14} parent=197 // loop_pre_header
                  _
                $region207: #{_lambda_.14} parent=197 // loop_header
                  %s973 = sphi 0, %s977
                  %p974 = scmp.ge.s32.totalorder %s973, 1
                  %s978 = sphi %s930, %s930
                  %s979 = sphi %s935, %s935
                $region208: #{_lambda_.14} parent=197 // loop_header_branch
                  %976 = sbr.rel (%p974) target = $region212
                $region209: #{_lambda_.14} parent=197 // loop_body
                  %v980 = vld [vmem:[%s978] sm:%s971]
                  %981 = vst [vmem:[%s979] sm:%s971] %v980
                  %v982 = vld [vmem:[%s978 + $0x4] sm:%s971]
                  %983 = vst [vmem:[%s979 + $0x8] sm:%s971] %v982
                  %v984 = vld [vmem:[%s978 + $0x8] sm:%s971]
                  %985 = vst [vmem:[%s979 + $0x10] sm:%s971] %v984
                  %v986 = vld [vmem:[%s978 + $0xc] sm:%s971]
                  %987 = vst [vmem:[%s979 + $0x18] sm:%s971] %v986
                $region210: #{_lambda_.14} parent=197 // loop_footer
                  %s977 = sadd.s32 1, %s973
                $region211: #{_lambda_.14} parent=197 // loop_footer_branch
                  %972 = sbr.rel target = $region207
                $region212: #{_lambda_.14} parent=197 // loop_exit
                  _
              $region198: #{_lambda_.14} parent=182 // pred_fallthru
                _
            $region183: #{_lambda_.14} parent=178 // pred_fallthru
              _
            // Predicated region
            $region184: #{_lambda_.14} parent=178 // pred_check
              _
            $region185: #{_lambda_.14} parent=178 // pred_check_branch
              %941 = sbr.rel (0) target = $region187
            $region186: #{_lambda_.14} parent=178 // pred_region
              %s943 = ssub.s32 16, 1
              loop: start=0, step=1, limit=1
              $region188: #{_lambda_.14} parent=186 // loop_pre_header
                _
              $region189: #{_lambda_.14} parent=186 // loop_header
                %s945 = sphi 0, %s949
                %p946 = scmp.ge.s32.totalorder %s945, 1
                %s950 = sphi %s930, %s930
                %s951 = sphi %s935, %s935
              $region190: #{_lambda_.14} parent=186 // loop_header_branch
                %948 = sbr.rel (%p946) target = $region194
              $region191: #{_lambda_.14} parent=186 // loop_body
                %v952 = vld [vmem:[%s950] sm:%s943]
                %953 = vst [vmem:[%s951] sm:%s943] %v952
                %v954 = vld [vmem:[%s950 + $0x4] sm:%s943]
                %955 = vst [vmem:[%s951 + $0x8] sm:%s943] %v954
                %v956 = vld [vmem:[%s950 + $0x8] sm:%s943]
                %957 = vst [vmem:[%s951 + $0x10] sm:%s943] %v956
                %v958 = vld [vmem:[%s950 + $0xc] sm:%s943]
                %959 = vst [vmem:[%s951 + $0x18] sm:%s943] %v958
              $region192: #{_lambda_.14} parent=186 // loop_footer
                %s949 = sadd.s32 1, %s945
              $region193: #{_lambda_.14} parent=186 // loop_footer_branch
                %944 = sbr.rel target = $region189
              $region194: #{_lambda_.14} parent=186 // loop_exit
                _
            $region187: #{_lambda_.14} parent=178 // pred_fallthru
              _
          $region179: #{_lambda_.14} parent=174 // pred_fallthru
            _
          %988 = vnop
        $region175: #{_lambda_.14} parent=158 // pred_fallthru
          _
      $region159: #{_lambda_.14} parent=5 // pred_fallthru
        _
      %p989 = scmp.le.s32.totalorder 2, %s13
      // Predicated region
      $region213: #{_lambda_.14} parent=5 // pred_check
        %p990 = pneg %p989
      $region214: #{_lambda_.14} parent=5 // pred_check_branch
        %992 = sbr.rel (%p990) target = $region216
      $region215: #{_lambda_.14} parent=5 // pred_region
        %s993 = ssub.s32 %s13, 2
        // Predicated region
        $region217: #{_lambda_.14} parent=215 // pred_check
          %p994 = pneg %p208
        $region218: #{_lambda_.14} parent=215 // pred_check_branch
          %996 = sbr.rel (%p994) target = $region220
        $region219: #{_lambda_.14} parent=215 // pred_region
          %s997 = sand.u32 %s193, 1
          %s998 = sand.u32 %s193, 1
          %s999 = smul.addr %s998, 16
          %s1000 = scalar_lea.vmem [#allocation7], %s999
        $region220: #{_lambda_.14} parent=215 // pred_fallthru
          _
      $region216: #{_lambda_.14} parent=5 // pred_fallthru
        _
    $region6: #{_lambda_.14} parent=1 // loop_footer
      %s17 = sadd.s32 1, %s13
    $region7: #{_lambda_.14} parent=1 // loop_footer_branch
      %12 = sbr.rel target = $region3
    $region8: #{_lambda_.14} parent=1 // loop_exit
      _

// kernel: _lambda_.15
$region0: #{_lambda_.15}
  #allocation0 [shape = 'u32[]', space=smem, size = 0x4, offset = 0x4, fixed_abs, tag = 'smem constant byte address 0x4 - core index']
  #allocation1 [shape = 'u32[72,128]{1,0:T(1,128)}', space=vmem, size = 0x9000, scoped, tag = 'internal scratch']
  #allocation2 [shape = 'f32[16,512]{1,0:T(8,128)}', space=vmem, size = 0x8000, scoped, tag = 'scratch operand']
  #allocation3 [shape = 'f32[144,256]{1,0:T(8,128)}', space=vmem, size = 0x24000, scoped, tag = 'scratch operand']
  %s0 = inlined_call_operand.vmem [shape: bf16[16,1280], index: 0, kind: input, shape index: {}, may-alias: {0,1,2}]
  %s1 = inlined_call_operand.vmem [shape: bf16[16,1280], index: 1, kind: input, shape index: {}, may-alias: {0,1,2}]
  %s2 = inlined_call_operand.vmem [shape: bf16[16,1280], index: 2, kind: input, shape index: {}, may-alias: {0,1,2}]
  %s3 = inlined_call_operand.vmem [shape: f32[12,144], index: 3, kind: input, shape index: {}]
  %s4 = inlined_call_operand.vmem [shape: f32[12,1], index: 4, kind: input, shape index: {}]
  %s5 = inlined_call_operand.vmem [shape: f32[12,768], index: 5, kind: output, shape index: {}]
  %s6 = sld [smem:[#allocation0]]
  $region192: #{_lambda_.15} parent=0
    _
  %s8 = ssub.s32 1, %s6
  %s9 = scalar_select 0, %s8, %s6
  $region1: #{_lambda_.15} parent=0
    #allocation4 [shape = 'u8[8192]{0}', space=vmem, size = 0x2000, scoped, tag = 'input window, operand 0']
    #allocation5 [shape = 'u8[16384]{0}', space=vmem, size = 0x4000, scoped, tag = 'input window, operand 1']
    #allocation6 [shape = 'u8[8192]{0}', space=vmem, size = 0x2000, scoped, tag = 'input window, operand 2']
    #allocation7 [shape = 'u8[32768]{0}', space=vmem, size = 0x8000, scoped, tag = 'output window, operand 0']
    loop: start=0, step=1, limit=5
    $region2: #{_lambda_.15} parent=1 // loop_pre_header
      _
    $region3: #{_lambda_.15} parent=1 // loop_header
      %s11 = sphi 0, %s15
      %p12 = scmp.ge.s32.totalorder %s11, 5
      %s27 = sphi 0, %s29
      %s30 = sphi 0, %s27
      %s31 = sphi 0, %s30
      %s47 = sphi 0, %s31
      %s55 = sphi 0, %s57
      %s58 = sphi 0, %s55
      %s59 = sphi 0, %s58
      %s75 = sphi 0, %s59
      %s85 = sphi 0, %s87
      %s88 = sphi 0, %s85
      %s89 = sphi 0, %s88
      %s105 = sphi 0, %s89
      %s109 = sphi 0, %s109
      %s111 = sphi 0, %s109
      %s112 = sphi 0, %s111
      %s126 = sphi 0, %s112
      %s130 = sphi 0, %s130
      %s132 = sphi 0, %s130
      %s133 = sphi 0, %s132
      %s147 = sphi 0, %s133
      %s153 = sphi 0, %s155
      %s156 = sphi 0, %s153
      %s157 = sphi 0, %s156
      %s173 = sphi 0, %s157
    $region4: #{_lambda_.15} parent=1 // loop_header_branch
      %14 = sbr.rel (%p12) target = $region8
    $region5: #{_lambda_.15} parent=1 // loop_body
      %s16 = ssub.s32 %s11, 1
      %s17 = ssub.s32 %s11, 2
      %s18 = sadd.s32 %s11, 1
      %s19 = sadd.s32 %s11, 1
      %s20 = smul.u32 %s19, 2
      %s21 = ssub.s32 %s20, 1
      %s22 = sadd.s32 %s18, 1
      %s23 = smul.u32 %s22, 2
      %s24 = ssub.s32 %s23, 1
      %s25 = ssub.s32 %s21, %s24
      %p26 = scmp.eq.s32.totalorder %s25, 0
      %s28 = sadd.s32 %s27, 1
      %s29 = scalar_select %p26, %s27, %s28
      %p32 = pneg %p26
      %p33 = scmp.eq.s32.totalorder %s11, 2
      %p34 = por %p32, %p33
      %p35 = scmp.ne.s32.totalorder %s27, %s30
      %p36 = scmp.eq.s32.totalorder %s11, 0
      %p37 = por %p35, %p36
      %p38 = scmp.ne.s32.totalorder %s27, %s30
      %p39 = scmp.eq.s32.totalorder %s16, 2
      %p40 = por %p38, %p39
      %p41 = scmp.ne.s32.totalorder %s30, %s31
      %p42 = scmp.eq.s32.totalorder %s16, 0
      %p43 = por %p41, %p42
      %p44 = scmp.ne.s32.totalorder %s30, %s31
      %p45 = scmp.eq.s32.totalorder %s17, 2
      %p46 = por %p44, %p45
      %p48 = scmp.ne.s32.totalorder %s31, %s47
      %p49 = scmp.eq.s32.totalorder %s17, 0
      %p50 = por %p48, %p49
      %s51 = sadd.s32 %s11, 1
      %s52 = sadd.s32 %s18, 1
      %s53 = ssub.s32 %s51, %s52
      %p54 = scmp.eq.s32.totalorder %s53, 0
      %s56 = sadd.s32 %s55, 1
      %s57 = scalar_select %p54, %s55, %s56
      %p60 = pneg %p54
      %p61 = scmp.eq.s32.totalorder %s11, 2
      %p62 = por %p60, %p61
      %p63 = scmp.ne.s32.totalorder %s55, %s58
      %p64 = scmp.eq.s32.totalorder %s11, 0
      %p65 = por %p63, %p64
      %p66 = scmp.ne.s32.totalorder %s55, %s58
      %p67 = scmp.eq.s32.totalorder %s16, 2
      %p68 = por %p66, %p67
      %p69 = scmp.ne.s32.totalorder %s58, %s59
      %p70 = scmp.eq.s32.totalorder %s16, 0
      %p71 = por %p69, %p70
      %p72 = scmp.ne.s32.totalorder %s58, %s59
      %p73 = scmp.eq.s32.totalorder %s17, 2
      %p74 = por %p72, %p73
      %p76 = scmp.ne.s32.totalorder %s59, %s75
      %p77 = scmp.eq.s32.totalorder %s17, 0
      %p78 = por %p76, %p77
      %s79 = sadd.s32 %s11, 2
      %s80 = smul.u32 %s79, 2
      %s81 = sadd.s32 %s18, 2
      %s82 = smul.u32 %s81, 2
      %s83 = ssub.s32 %s80, %s82
      %p84 = scmp.eq.s32.totalorder %s83, 0
      %s86 = sadd.s32 %s85, 1
      %s87 = scalar_select %p84, %s85, %s86
      %p90 = pneg %p84
      %p91 = scmp.eq.s32.totalorder %s11, 2
      %p92 = por %p90, %p91
      %p93 = scmp.ne.s32.totalorder %s85, %s88
      %p94 = scmp.eq.s32.totalorder %s11, 0
      %p95 = por %p93, %p94
      %p96 = scmp.ne.s32.totalorder %s85, %s88
      %p97 = scmp.eq.s32.totalorder %s16, 2
      %p98 = por %p96, %p97
      %p99 = scmp.ne.s32.totalorder %s88, %s89
      %p100 = scmp.eq.s32.totalorder %s16, 0
      %p101 = por %p99, %p100
      %p102 = scmp.ne.s32.totalorder %s88, %s89
      %p103 = scmp.eq.s32.totalorder %s17, 2
      %p104 = por %p102, %p103
      %p106 = scmp.ne.s32.totalorder %s89, %s105
      %p107 = scmp.eq.s32.totalorder %s17, 0
      %p108 = por %p106, %p107
      %s110 = sadd.s32 %s109, 1
      %p113 = scmp.eq.s32.totalorder %s11, 2
      %p114 = scmp.ne.s32.totalorder %s109, %s111
      %p115 = scmp.eq.s32.totalorder %s11, 0
      %p116 = por %p114, %p115
      %p117 = scmp.ne.s32.totalorder %s109, %s111
      %p118 = scmp.eq.s32.totalorder %s16, 2
      %p119 = por %p117, %p118
      %p120 = scmp.ne.s32.totalorder %s111, %s112
      %p121 = scmp.eq.s32.totalorder %s16, 0
      %p122 = por %p120, %p121
      %p123 = scmp.ne.s32.totalorder %s111, %s112
      %p124 = scmp.eq.s32.totalorder %s17, 2
      %p125 = por %p123, %p124
      %p127 = scmp.ne.s32.totalorder %s112, %s126
      %p128 = scmp.eq.s32.totalorder %s17, 0
      %p129 = por %p127, %p128
      %s131 = sadd.s32 %s130, 1
      %p134 = scmp.eq.s32.totalorder %s11, 2
      %p135 = scmp.ne.s32.totalorder %s130, %s132
      %p136 = scmp.eq.s32.totalorder %s11, 0
      %p137 = por %p135, %p136
      %p138 = scmp.ne.s32.totalorder %s130, %s132
      %p139 = scmp.eq.s32.totalorder %s16, 2
      %p140 = por %p138, %p139
      %p141 = scmp.ne.s32.totalorder %s132, %s133
      %p142 = scmp.eq.s32.totalorder %s16, 0
      %p143 = por %p141, %p142
      %p144 = scmp.ne.s32.totalorder %s132, %s133
      %p145 = scmp.eq.s32.totalorder %s17, 2
      %p146 = por %p144, %p145
      %p148 = scmp.ne.s32.totalorder %s133, %s147
      %p149 = scmp.eq.s32.totalorder %s17, 0
      %p150 = por %p148, %p149
      %s151 = ssub.s32 %s11, %s18
      %p152 = scmp.eq.s32.totalorder %s151, 0
      %s154 = sadd.s32 %s153, 1
      %s155 = scalar_select %p152, %s153, %s154
      %p158 = pneg %p152
      %p159 = scmp.eq.s32.totalorder %s11, 2
      %p160 = por %p158, %p159
      %p161 = scmp.ne.s32.totalorder %s153, %s156
      %p162 = scmp.eq.s32.totalorder %s11, 0
      %p163 = por %p161, %p162
      %p164 = scmp.ne.s32.totalorder %s153, %s156
      %p165 = scmp.eq.s32.totalorder %s16, 2
      %p166 = por %p164, %p165
      %p167 = scmp.ne.s32.totalorder %s156, %s157
      %p168 = scmp.eq.s32.totalorder %s16, 0
      %p169 = por %p167, %p168
      %p170 = scmp.ne.s32.totalorder %s156, %s157
      %p171 = scmp.eq.s32.totalorder %s17, 2
      %p172 = por %p170, %p171
      %p174 = scmp.ne.s32.totalorder %s157, %s173
      %p175 = scmp.eq.s32.totalorder %s17, 0
      %p176 = por %p174, %p175
      %p177 = scmp.le.s32.totalorder 1, %s11
      %p178 = scmp.lt.s32.totalorder %s11, 4
      %p179 = pnand %p177, %p178
      %p180 = pneg %p179
      // Predicated region
      $region9: #{_lambda_.15} parent=5 // pred_check
        _
      $region10: #{_lambda_.15} parent=5 // pred_check_branch
        %182 = sbr.rel (%p179) target = $region12
      $region11: #{_lambda_.15} parent=5 // pred_region
        %s183 = ssub.s32 %s11, 1
        // Predicated region
        $region13: #{_lambda_.15} parent=11 // pred_check
          %p184 = pneg %p122
        $region14: #{_lambda_.15} parent=11 // pred_check_branch
          %186 = sbr.rel (%p184) target = $region16
        $region15: #{_lambda_.15} parent=11 // pred_region
          _
        $region16: #{_lambda_.15} parent=11 // pred_fallthru
          _
        // Predicated region
        $region17: #{_lambda_.15} parent=11 // pred_check
          %p187 = pneg %p143
        $region18: #{_lambda_.15} parent=11 // pred_check_branch
          %189 = sbr.rel (%p187) target = $region20
        $region19: #{_lambda_.15} parent=11 // pred_region
          _
        $region20: #{_lambda_.15} parent=11 // pred_fallthru
          _
      $region12: #{_lambda_.15} parent=5 // pred_fallthru
        _
      %p190 = scmp.lt.s32.totalorder %s11, 3
      // Predicated region
      $region21: #{_lambda_.15} parent=5 // pred_check
        %p191 = pneg %p190
      $region22: #{_lambda_.15} parent=5 // pred_check_branch
        %193 = sbr.rel (%p191) target = $region24
      $region23: #{_lambda_.15} parent=5 // pred_region
        // Predicated region
        $region25: #{_lambda_.15} parent=23 // pred_check
          %p194 = pneg %p37
        $region26: #{_lambda_.15} parent=23 // pred_check_branch
          %196 = sbr.rel (%p194) target = $region28
        $region27: #{_lambda_.15} parent=23 // pred_region
          %s197 = sand.u32 %s27, 1
          %s198 = sand.u32 %s27, 1
          %s199 = smul.addr %s198, 8
          %s200 = scalar_lea.vmem [#allocation4], %s199
          %s201 = sadd.s32 %s11, 1
          %s202 = smul.u32 %s201, 2
          %s203 = ssub.s32 %s202, 1
          %s204 = smul.addr %s203, 4
          %s205 = scalar_lea.vmem %s0, %s204
          // Predicated region
          $region29: #{_lambda_.15} parent=27 // pred_check
            _
          $region30: #{_lambda_.15} parent=27 // pred_check_branch
            %207 = sbr.rel (0) target = $region32
          $region31: #{_lambda_.15} parent=27 // pred_region
            // Predicated region
            $region33: #{_lambda_.15} parent=31 // pred_check
              _
            $region34: #{_lambda_.15} parent=31 // pred_check_branch
              %209 = sbr.rel target = $region36
            $region35: #{_lambda_.15} parent=31 // pred_region
              // Predicated region
              $region48: #{_lambda_.15} parent=35 // pred_check
                _
              $region49: #{_lambda_.15} parent=35 // pred_check_branch
                %227 = sbr.rel (0) target = $region51
              $region50: #{_lambda_.15} parent=35 // pred_region
                loop: start=0, step=1, limit=1
                $region52: #{_lambda_.15} parent=50 // loop_pre_header
                  _
                $region53: #{_lambda_.15} parent=50 // loop_header
                  %s229 = sphi 0, %s233
                  %p230 = scmp.ge.s32.totalorder %s229, 1
                  %s234 = sphi %s205, %s205
                  %s235 = sphi %s200, %s200
                $region54: #{_lambda_.15} parent=50 // loop_header_branch
                  %232 = sbr.rel (%p230) target = $region58
                $region55: #{_lambda_.15} parent=50 // loop_body
                  _
                $region56: #{_lambda_.15} parent=50 // loop_footer
                  %s233 = sadd.s32 1, %s229
                $region57: #{_lambda_.15} parent=50 // loop_footer_branch
                  %228 = sbr.rel target = $region53
                $region58: #{_lambda_.15} parent=50 // loop_exit
                  _
                %s237 = ssub.s32 16, 1
                loop: start=0, step=1, limit=1
                $region59: #{_lambda_.15} parent=50 // loop_pre_header
                  _
                $region60: #{_lambda_.15} parent=50 // loop_header
                  %s239 = sphi 0, %s243
                  %p240 = scmp.ge.s32.totalorder %s239, 1
                  %s244 = sphi %s205, %s205
                  %s245 = sphi %s200, %s200
                $region61: #{_lambda_.15} parent=50 // loop_header_branch
                  %242 = sbr.rel (%p240) target = $region65
                $region62: #{_lambda_.15} parent=50 // loop_body
                  %v246 = vld [vmem:[%s244] sm:%s237]
                  %247 = vst [vmem:[%s245] sm:%s237] %v246
                  %v248 = vld [vmem:[%s244 + $0x28] sm:%s237]
                  %249 = vst [vmem:[%s245 + $0x4] sm:%s237] %v248
                $region63: #{_lambda_.15} parent=50 // loop_footer
                  %s243 = sadd.s32 1, %s239
                $region64: #{_lambda_.15} parent=50 // loop_footer_branch
                  %238 = sbr.rel target = $region60
                $region65: #{_lambda_.15} parent=50 // loop_exit
                  _
              $region51: #{_lambda_.15} parent=35 // pred_fallthru
                _
            $region36: #{_lambda_.15} parent=31 // pred_fallthru
              _
            // Predicated region
            $region37: #{_lambda_.15} parent=31 // pred_check
              _
            $region38: #{_lambda_.15} parent=31 // pred_check_branch
              %211 = sbr.rel (0) target = $region40
            $region39: #{_lambda_.15} parent=31 // pred_region
              %s213 = ssub.s32 16, 1
              loop: start=0, step=1, limit=1
              $region41: #{_lambda_.15} parent=39 // loop_pre_header
                _
              $region42: #{_lambda_.15} parent=39 // loop_header
                %s215 = sphi 0, %s219
                %p216 = scmp.ge.s32.totalorder %s215, 1
                %s220 = sphi %s205, %s205
                %s221 = sphi %s200, %s200
              $region43: #{_lambda_.15} parent=39 // loop_header_branch
                %218 = sbr.rel (%p216) target = $region47
              $region44: #{_lambda_.15} parent=39 // loop_body
                %v222 = vld [vmem:[%s220] sm:%s213]
                %223 = vst [vmem:[%s221] sm:%s213] %v222
                %v224 = vld [vmem:[%s220 + $0x28] sm:%s213]
                %225 = vst [vmem:[%s221 + $0x4] sm:%s213] %v224
              $region45: #{_lambda_.15} parent=39 // loop_footer
                %s219 = sadd.s32 1, %s215
              $region46: #{_lambda_.15} parent=39 // loop_footer_branch
                %214 = sbr.rel target = $region42
              $region47: #{_lambda_.15} parent=39 // loop_exit
                _
            $region40: #{_lambda_.15} parent=31 // pred_fallthru
              _
          $region32: #{_lambda_.15} parent=27 // pred_fallthru
            _
          %250 = vnop
        $region28: #{_lambda_.15} parent=23 // pred_fallthru
          _
        // Predicated region
        $region66: #{_lambda_.15} parent=23 // pred_check
          %p251 = pneg %p65
        $region67: #{_lambda_.15} parent=23 // pred_check_branch
          %253 = sbr.rel (%p251) target = $region69
        $region68: #{_lambda_.15} parent=23 // pred_region
          %s254 = sand.u32 %s55, 1
          %s255 = sand.u32 %s55, 1
          %s256 = smul.addr %s255, 16
          %s257 = scalar_lea.vmem [#allocation5], %s256
          %s258 = sadd.s32 %s11, 1
          %s259 = smul.u32 2, %s258
          %s260 = smul.addr %s259, 4
          %s261 = scalar_lea.vmem %s1, %s260
          // Predicated region
          $region70: #{_lambda_.15} parent=68 // pred_check
            _
          $region71: #{_lambda_.15} parent=68 // pred_check_branch
            %263 = sbr.rel (0) target = $region73
          $region72: #{_lambda_.15} parent=68 // pred_region
            // Predicated region
            $region74: #{_lambda_.15} parent=72 // pred_check
              _
            $region75: #{_lambda_.15} parent=72 // pred_check_branch
              %265 = sbr.rel (0) target = $region77
            $region76: #{_lambda_.15} parent=72 // pred_region
              // Predicated region
              $region89: #{_lambda_.15} parent=76 // pred_check
                _
              $region90: #{_lambda_.15} parent=76 // pred_check_branch
                %283 = sbr.rel (0) target = $region92
              $region91: #{_lambda_.15} parent=76 // pred_region
                loop: start=0, step=1, limit=1
                $region93: #{_lambda_.15} parent=91 // loop_pre_header
                  _
                $region94: #{_lambda_.15} parent=91 // loop_header
                  %s285 = sphi 0, %s289
                  %p286 = scmp.ge.s32.totalorder %s285, 1
                  %s290 = sphi %s261, %s261
                  %s291 = sphi %s257, %s257
                $region95: #{_lambda_.15} parent=91 // loop_header_branch
                  %288 = sbr.rel (%p286) target = $region99
                $region96: #{_lambda_.15} parent=91 // loop_body
                  %v292 = vld [vmem:[%s290] sm:$0xff]
                  %293 = vst [vmem:[%s291] sm:$0xff] %v292
                  %v294 = vld [vmem:[%s290 + $0x28] sm:$0xff]
                  %295 = vst [vmem:[%s291 + $0x8] sm:$0xff] %v294
                $region97: #{_lambda_.15} parent=91 // loop_footer
                  %s289 = sadd.s32 1, %s285
                $region98: #{_lambda_.15} parent=91 // loop_footer_branch
                  %284 = sbr.rel target = $region94
                $region99: #{_lambda_.15} parent=91 // loop_exit
                  _
              $region92: #{_lambda_.15} parent=76 // pred_fallthru
                _
              // Predicated region
              $region100: #{_lambda_.15} parent=76 // pred_check
                _
              $region101: #{_lambda_.15} parent=76 // pred_check_branch
                %297 = sbr.rel target = $region103
              $region102: #{_lambda_.15} parent=76 // pred_region
                _
              $region103: #{_lambda_.15} parent=76 // pred_fallthru
                _
            $region77: #{_lambda_.15} parent=72 // pred_fallthru
              _
            // Predicated region
            $region78: #{_lambda_.15} parent=72 // pred_check
              _
            $region79: #{_lambda_.15} parent=72 // pred_check_branch
              %267 = sbr.rel target = $region81
            $region80: #{_lambda_.15} parent=72 // pred_region
              %s269 = ssub.s32 256, 1
              loop: start=0, step=1, limit=1
              $region82: #{_lambda_.15} parent=80 // loop_pre_header
                _
              $region83: #{_lambda_.15} parent=80 // loop_header
                %s271 = sphi 0, %s275
                %p272 = scmp.ge.s32.totalorder %s271, 1
                %s276 = sphi %s261, %s261
                %s277 = sphi %s257, %s257
              $region84: #{_lambda_.15} parent=80 // loop_header_branch
                %274 = sbr.rel (%p272) target = $region88
              $region85: #{_lambda_.15} parent=80 // loop_body
                %v278 = vld [vmem:[%s276] sm:%s269]
                %279 = vst [vmem:[%s277] sm:%s269] %v278
                %v280 = vld [vmem:[%s276 + $0x28] sm:%s269]
                %281 = vst [vmem:[%s277 + $0x8] sm:%s269] %v280
              $region86: #{_lambda_.15} parent=80 // loop_footer
                %s275 = sadd.s32 1, %s271
              $region87: #{_lambda_.15} parent=80 // loop_footer_branch
                %270 = sbr.rel target = $region83
              $region88: #{_lambda_.15} parent=80 // loop_exit
                _
            $region81: #{_lambda_.15} parent=72 // pred_fallthru
              _
          $region73: #{_lambda_.15} parent=68 // pred_fallthru
            _
          %298 = vnop
        $region69: #{_lambda_.15} parent=23 // pred_fallthru
          _
        // Predicated region
        $region104: #{_lambda_.15} parent=23 // pred_check
          %p299 = pneg %p95
        $region105: #{_lambda_.15} parent=23 // pred_check_branch
          %301 = sbr.rel (%p299) target = $region107
        $region106: #{_lambda_.15} parent=23 // pred_region
          %s302 = sand.u32 %s85, 1
          %s303 = sand.u32 %s85, 1
          %s304 = smul.addr %s303, 8
          %s305 = scalar_lea.vmem [#allocation6], %s304
          %s306 = sadd.s32 %s11, 2
          %s307 = smul.u32 %s306, 2
          %s308 = smul.addr %s307, 4
          %s309 = scalar_lea.vmem %s2, %s308
          // Predicated region
          $region108: #{_lambda_.15} parent=106 // pred_check
            _
          $region109: #{_lambda_.15} parent=106 // pred_check_branch
            %311 = sbr.rel (0) target = $region111
          $region110: #{_lambda_.15} parent=106 // pred_region
            // Predicated region
            $region112: #{_lambda_.15} parent=110 // pred_check
              _
            $region113: #{_lambda_.15} parent=110 // pred_check_branch
              %313 = sbr.rel target = $region115
            $region114: #{_lambda_.15} parent=110 // pred_region
              // Predicated region
              $region127: #{_lambda_.15} parent=114 // pred_check
                _
              $region128: #{_lambda_.15} parent=114 // pred_check_branch
                %331 = sbr.rel (0) target = $region130
              $region129: #{_lambda_.15} parent=114 // pred_region
                loop: start=0, step=1, limit=1
                $region131: #{_lambda_.15} parent=129 // loop_pre_header
                  _
                $region132: #{_lambda_.15} parent=129 // loop_header
                  %s333 = sphi 0, %s337
                  %p334 = scmp.ge.s32.totalorder %s333, 1
                  %s338 = sphi %s309, %s309
                  %s339 = sphi %s305, %s305
                $region133: #{_lambda_.15} parent=129 // loop_header_branch
                  %336 = sbr.rel (%p334) target = $region137
                $region134: #{_lambda_.15} parent=129 // loop_body
                  _
                $region135: #{_lambda_.15} parent=129 // loop_footer
                  %s337 = sadd.s32 1, %s333
                $region136: #{_lambda_.15} parent=129 // loop_footer_branch
                  %332 = sbr.rel target = $region132
                $region137: #{_lambda_.15} parent=129 // loop_exit
                  _
                %s341 = ssub.s32 16, 1
                loop: start=0, step=1, limit=1
                $region138: #{_lambda_.15} parent=129 // loop_pre_header
                  _
                $region139: #{_lambda_.15} parent=129 // loop_header
                  %s343 = sphi 0, %s347
                  %p344 = scmp.ge.s32.totalorder %s343, 1
                  %s348 = sphi %s309, %s309
                  %s349 = sphi %s305, %s305
                $region140: #{_lambda_.15} parent=129 // loop_header_branch
                  %346 = sbr.rel (%p344) target = $region144
                $region141: #{_lambda_.15} parent=129 // loop_body
                  %v350 = vld [vmem:[%s348] sm:%s341]
                  %351 = vst [vmem:[%s349] sm:%s341] %v350
                  %v352 = vld [vmem:[%s348 + $0x28] sm:%s341]
                  %353 = vst [vmem:[%s349 + $0x4] sm:%s341] %v352
                $region142: #{_lambda_.15} parent=129 // loop_footer
                  %s347 = sadd.s32 1, %s343
                $region143: #{_lambda_.15} parent=129 // loop_footer_branch
                  %342 = sbr.rel target = $region139
                $region144: #{_lambda_.15} parent=129 // loop_exit
                  _
              $region130: #{_lambda_.15} parent=114 // pred_fallthru
                _
            $region115: #{_lambda_.15} parent=110 // pred_fallthru
              _
            // Predicated region
            $region116: #{_lambda_.15} parent=110 // pred_check
              _
            $region117: #{_lambda_.15} parent=110 // pred_check_branch
              %315 = sbr.rel (0) target = $region119
            $region118: #{_lambda_.15} parent=110 // pred_region
              %s317 = ssub.s32 16, 1
              loop: start=0, step=1, limit=1
              $region120: #{_lambda_.15} parent=118 // loop_pre_header
                _
              $region121: #{_lambda_.15} parent=118 // loop_header
                %s319 = sphi 0, %s323
                %p320 = scmp.ge.s32.totalorder %s319, 1
                %s324 = sphi %s309, %s309
                %s325 = sphi %s305, %s305
              $region122: #{_lambda_.15} parent=118 // loop_header_branch
                %322 = sbr.rel (%p320) target = $region126
              $region123: #{_lambda_.15} parent=118 // loop_body
                %v326 = vld [vmem:[%s324] sm:%s317]
                %327 = vst [vmem:[%s325] sm:%s317] %v326
                %v328 = vld [vmem:[%s324 + $0x28] sm:%s317]
                %329 = vst [vmem:[%s325 + $0x4] sm:%s317] %v328
              $region124: #{_lambda_.15} parent=118 // loop_footer
                %s323 = sadd.s32 1, %s319
              $region125: #{_lambda_.15} parent=118 // loop_footer_branch
                %318 = sbr.rel target = $region121
              $region126: #{_lambda_.15} parent=118 // loop_exit
                _
            $region119: #{_lambda_.15} parent=110 // pred_fallthru
              _
          $region111: #{_lambda_.15} parent=106 // pred_fallthru
            _
          %354 = vnop
        $region107: #{_lambda_.15} parent=23 // pred_fallthru
          _
      $region24: #{_lambda_.15} parent=5 // pred_fallthru
        _
      %p355 = scmp.le.s32.totalorder 1, %s11
      %p356 = scmp.lt.s32.totalorder %s11, 4
      %p357 = pnand %p355, %p356
      %p358 = pneg %p357
      // Predicated region
      $region145: #{_lambda_.15} parent=5 // pred_check
        _
      $region146: #{_lambda_.15} parent=5 // pred_check_branch
        %360 = sbr.rel (%p357) target = $region148
      $region147: #{_lambda_.15} parent=5 // pred_region
        %s361 = ssub.s32 %s11, 1
        %s362 = sand.u32 %s30, 1
        %s363 = sand.u32 %s30, 1
        %s364 = smul.addr %s363, 8
        %s365 = scalar_lea.vmem [#allocation4], %s364
        // Predicated region
        $region149: #{_lambda_.15} parent=147 // pred_check
          %p366 = pneg %p43
        $region150: #{_lambda_.15} parent=147 // pred_check_branch
          %368 = sbr.rel (%p366) target = $region152
        $region151: #{_lambda_.15} parent=147 // pred_region
          _
        $region152: #{_lambda_.15} parent=147 // pred_fallthru
          _
        %s369 = sand.u32 %s58, 1
        %s370 = sand.u32 %s58, 1
        %s371 = smul.addr %s370, 16
        %s372 = scalar_lea.vmem [#allocation5], %s371
        // Predicated region
        $region153: #{_lambda_.15} parent=147 // pred_check
          %p373 = pneg %p71
        $region154: #{_lambda_.15} parent=147 // pred_check_branch
          %375 = sbr.rel (%p373) target = $region156
        $region155: #{_lambda_.15} parent=147 // pred_region
          _
        $region156: #{_lambda_.15} parent=147 // pred_fallthru
          _
        %s376 = sand.u32 %s88, 1
        %s377 = sand.u32 %s88, 1
        %s378 = smul.addr %s377, 8
        %s379 = scalar_lea.vmem [#allocation6], %s378
        // Predicated region
        $region157: #{_lambda_.15} parent=147 // pred_check
          %p380 = pneg %p101
        $region158: #{_lambda_.15} parent=147 // pred_check_branch
          %382 = sbr.rel (%p380) target = $region160
        $region159: #{_lambda_.15} parent=147 // pred_region
          _
        $region160: #{_lambda_.15} parent=147 // pred_fallthru
          _
        %s383 = sand.u32 %s30, 1
        %s384 = sand.u32 %s30, 1
        %s385 = smul.addr %s384, 8
        %s386 = scalar_lea.vmem [#allocation4], %s385
        %p387 = pneg %p43
        %p388 = pneg %p40
        %s389 = sand.u32 %s58, 1
        %s390 = sand.u32 %s58, 1
        %s391 = smul.addr %s390, 16
        %s392 = scalar_lea.vmem [#allocation5], %s391
        %p393 = pneg %p71
        %p394 = pneg %p68
        %s395 = sand.u32 %s88, 1
        %s396 = sand.u32 %s88, 1
        %s397 = smul.addr %s396, 8
        %s398 = scalar_lea.vmem [#allocation6], %s397
        %p399 = pneg %p101
        %p400 = pneg %p98
        %p401 = pneg %p122
        %p402 = pneg %p119
        %p403 = pneg %p143
        %p404 = pneg %p140
        %p405 = pneg %p169
        %p406 = pneg %p166
        %s407 = sand.u32 %s156, 1
        %s408 = sand.u32 %s156, 1
        %s409 = smul.addr %s408, 32
        %s410 = scalar_lea.vmem [#allocation7], %s409
        %s411 = sadd.s32 %s16, 1
        %s412 = smul.u32 %s411, 2
        %s413 = ssub.s32 %s412, 1
        %s414 = sadd.s32 %s16, 1
        %s415 = smul.u32 2, %s414
        %s416 = sadd.s32 %s16, 2
        %s417 = smul.u32 %s416, 2
        %s418 = smul.u32 2, %s16
        %v419 = vld [vmem:[%s365] sm:$0xf]
        %v420 = vld [vmem:[%s365 + $0x4] sm:$0xf]
        %v421 = vunpack.c.l.bf16 %v419
        %v422 = vunpack.c.l.bf16 %v420
        %423 = vst [vmem:[#allocation2] sm:$0xff] %v421
        %424 = vst [vmem:[#allocation2 + $0x20] sm:$0xff] %v422
        %v425 = vld [vmem:[%s372] sm:$0xff]
        %v426 = vld [vmem:[%s372 + $0x8] sm:$0xff]
        %v427 = vunpack.c.l.bf16 %v425
        %v428 = vunpack.c.h.bf16 %v425
        %v429 = vunpack.c.l.bf16 %v426
        %v430 = vunpack.c.h.bf16 %v426
        %431 = vst [vmem:[#allocation2 + $0x8] sm:$0xff] %v427
        %432 = vst [vmem:[#allocation2 + $0x10] sm:$0xff] %v428
        %433 = vst [vmem:[#allocation2 + $0x28] sm:$0xff] %v429
        %434 = vst [vmem:[#allocation2 + $0x30] sm:$0xff] %v430
        %v435 = vld [vmem:[%s379] sm:$0xf]
        %v436 = vld [vmem:[%s379 + $0x4] sm:$0xf]
        %v437 = vunpack.c.l.bf16 %v435
        %v438 = vunpack.c.l.bf16 %v436
        %439 = vst [vmem:[#allocation2 + $0x18] sm:$0xff] %v437
        %440 = vst [vmem:[#allocation2 + $0x38] sm:$0xff] %v438
        %v441 = vld [vmem:[#allocation2] sm:$0xff]
        %v442 = vld [vmem:[#allocation2 + $0x8] sm:$0xff]
        %v443 = vld [vmem:[#allocation2 + $0x10] sm:$0xff]
        %v444 = vld [vmem:[#allocation2 + $0x20] sm:$0xff]
        %v445 = vld [vmem:[#allocation2 + $0x28] sm:$0xff]
        %v446 = vld [vmem:[#allocation2 + $0x30] sm:$0xff]
        %453 = vrot.lane.b32.xlu0 %v441, 19
        %v454 = vpop.permute.xlu0 %453
        %455 = vrot.lane.b32.xlu0 %v442, 19
        %v456 = vpop.permute.xlu0 %455
        %457 = vrot.lane.b32.xlu0 %v443, 19
        %v458 = vpop.permute.xlu0 %457
        %459 = vrot.lane.b32.xlu0 %v444, 19
        %v460 = vpop.permute.xlu0 %459
        %461 = vrot.lane.b32.xlu0 %v445, 19
        %v462 = vpop.permute.xlu0 %461
        %463 = vrot.lane.b32.xlu0 %v446, 19
        %v464 = vpop.permute.xlu0 %463
        %vm465 = vcmask 154624
        %v466 = vsel %vm465, %v454, %v456
        %v467 = vsel %vm465, %v456, %v458
        %v468 = vsel %vm465, %v460, %v462
        %v469 = vsel %vm465, %v462, %v464
        %474 = vst [vmem:[#allocation3] sm:$0xff] %v466
        %475 = vst [vmem:[#allocation3 + $0x8] sm:$0xff] %v467
        %476 = vst [vmem:[#allocation3 + $0x10] sm:$0xff] %v468
        %477 = vst [vmem:[#allocation3 + $0x18] sm:$0xff] %v469
        %v478 = vld [vmem:[#allocation2] sm:$0xff]
        %v479 = vld [vmem:[#allocation2 + $0x8] sm:$0xff]
        %v480 = vld [vmem:[#allocation2 + $0x10] sm:$0xff]
        %v481 = vld [vmem:[#allocation2 + $0x20] sm:$0xff]
        %v482 = vld [vmem:[#allocation2 + $0x28] sm:$0xff]
        %v483 = vld [vmem:[#allocation2 + $0x30] sm:$0xff]
        %490 = vrot.lane.b32.xlu0 %v478, 18
        %v491 = vpop.permute.xlu0 %490
        %492 = vrot.lane.b32.xlu0 %v479, 18
        %v493 = vpop.permute.xlu0 %492
        %494 = vrot.lane.b32.xlu0 %v480, 18
        %v495 = vpop.permute.xlu0 %494
        %496 = vrot.lane.b32.xlu0 %v481, 18
        %v497 = vpop.permute.xlu0 %496
        %498 = vrot.lane.b32.xlu0 %v482, 18
        %v499 = vpop.permute.xlu0 %498
        %500 = vrot.lane.b32.xlu0 %v483, 18
        %v501 = vpop.permute.xlu0 %500
        %vm502 = vcmask 146432
        %v503 = vsel %vm502, %v491, %v493
        %v504 = vsel %vm502, %v493, %v495
        %v505 = vsel %vm502, %v497, %v499
        %v506 = vsel %vm502, %v499, %v501
        %511 = vst [vmem:[#allocation3 + $0x20] sm:$0xff] %v503
        %512 = vst [vmem:[#allocation3 + $0x28] sm:$0xff] %v504
        %513 = vst [vmem:[#allocation3 + $0x30] sm:$0xff] %v505
        %514 = vst [vmem:[#allocation3 + $0x38] sm:$0xff] %v506
        %v515 = vld [vmem:[#allocation2] sm:$0xff]
        %v516 = vld [vmem:[#allocation2 + $0x8] sm:$0xff]
        %v517 = vld [vmem:[#allocation2 + $0x10] sm:$0xff]
        %v518 = vld [vmem:[#allocation2 + $0x20] sm:$0xff]
        %v519 = vld [vmem:[#allocation2 + $0x28] sm:$0xff]
        %v520 = vld [vmem:[#allocation2 + $0x30] sm:$0xff]
        %527 = vrot.lane.b32.xlu0 %v515, 17
        %v528 = vpop.permute.xlu0 %527
        %529 = vrot.lane.b32.xlu0 %v516, 17
        %v530 = vpop.permute.xlu0 %529
        %531 = vrot.lane.b32.xlu0 %v517, 17
        %v532 = vpop.permute.xlu0 %531
        %533 = vrot.lane.b32.xlu0 %v518, 17
        %v534 = vpop.permute.xlu0 %533
        %535 = vrot.lane.b32.xlu0 %v519, 17
        %v536 = vpop.permute.xlu0 %535
        %537 = vrot.lane.b32.xlu0 %v520, 17
        %v538 = vpop.permute.xlu0 %537
        %vm539 = vcmask 138240
        %v540 = vsel %vm539, %v528, %v530
        %v541 = vsel %vm539, %v530, %v532
        %v542 = vsel %vm539, %v534, %v536
        %v543 = vsel %vm539, %v536, %v538
        %548 = vst [vmem:[#allocation3 + $0x40] sm:$0xff] %v540
        %549 = vst [vmem:[#allocation3 + $0x48] sm:$0xff] %v541
        %550 = vst [vmem:[#allocation3 + $0x50] sm:$0xff] %v542
        %551 = vst [vmem:[#allocation3 + $0x58] sm:$0xff] %v543
        %v552 = vld [vmem:[#allocation2] sm:$0xff]
        %v553 = vld [vmem:[#allocation2 + $0x8] sm:$0xff]
        %v554 = vld [vmem:[#allocation2 + $0x10] sm:$0xff]
        %v555 = vld [vmem:[#allocation2 + $0x20] sm:$0xff]
        %v556 = vld [vmem:[#allocation2 + $0x28] sm:$0xff]
        %v557 = vld [vmem:[#allocation2 + $0x30] sm:$0xff]
        %564 = vrot.lane.b32.xlu0 %v552, 1
        %v565 = vpop.permute.xlu0 %564
        %566 = vrot.lane.b32.xlu0 %v553, 1
        %v567 = vpop.permute.xlu0 %566
        %568 = vrot.lane.b32.xlu0 %v554, 1
        %v569 = vpop.permute.xlu0 %568
        %570 = vrot.lane.b32.xlu0 %v555, 1
        %v571 = vpop.permute.xlu0 %570
        %572 = vrot.lane.b32.xlu0 %v556, 1
        %v573 = vpop.permute.xlu0 %572
        %574 = vrot.lane.b32.xlu0 %v557, 1
        %v575 = vpop.permute.xlu0 %574
        %vm576 = vcmask 7168
        %v577 = vsel %vm576, %v565, %v567
        %v578 = vsel %vm576, %v567, %v569
        %v579 = vsel %vm576, %v571, %v573
        %v580 = vsel %vm576, %v573, %v575
        %585 = vst [vmem:[#allocation3 + $0x60] sm:$0xff] %v577
        %586 = vst [vmem:[#allocation3 + $0x68] sm:$0xff] %v578
        %587 = vst [vmem:[#allocation3 + $0x70] sm:$0xff] %v579
        %588 = vst [vmem:[#allocation3 + $0x78] sm:$0xff] %v580
        %v589 = vld [vmem:[#allocation2 + $0x8] sm:$0xff]
        %v590 = vld [vmem:[#allocation2 + $0x10] sm:$0xff]
        %v591 = vld [vmem:[#allocation2 + $0x28] sm:$0xff]
        %v592 = vld [vmem:[#allocation2 + $0x30] sm:$0xff]
        %593 = vst [vmem:[#allocation3 + $0x80] sm:$0xff] %v589
        %594 = vst [vmem:[#allocation3 + $0x88] sm:$0xff] %v590
        %595 = vst [vmem:[#allocation3 + $0x90] sm:$0xff] %v591
        %596 = vst [vmem:[#allocation3 + $0x98] sm:$0xff] %v592
        %v597 = vld [vmem:[#allocation2 + $0x8] sm:$0xff]
        %v598 = vld [vmem:[#allocation2 + $0x10] sm:$0xff]
        %v599 = vld [vmem:[#allocation2 + $0x18] sm:$0xff]
        %v600 = vld [vmem:[#allocation2 + $0x28] sm:$0xff]
        %v601 = vld [vmem:[#allocation2 + $0x30] sm:$0xff]
        %v602 = vld [vmem:[#allocation2 + $0x38] sm:$0xff]
        %609 = vrot.lane.b32.xlu0 %v597, 127
        %v610 = vpop.permute.xlu0 %609
        %611 = vrot.lane.b32.xlu0 %v598, 127
        %v612 = vpop.permute.xlu0 %611
        %613 = vrot.lane.b32.xlu0 %v599, 127
        %v614 = vpop.permute.xlu0 %613
        %615 = vrot.lane.b32.xlu0 %v600, 127
        %v616 = vpop.permute.xlu0 %615
        %617 = vrot.lane.b32.xlu0 %v601, 127
        %v618 = vpop.permute.xlu0 %617
        %619 = vrot.lane.b32.xlu0 %v602, 127
        %v620 = vpop.permute.xlu0 %619
        %vm621 = vcmask 1039360
        %v622 = vsel %vm621, %v610, %v612
        %v623 = vsel %vm621, %v612, %v614
        %v624 = vsel %vm621, %v616, %v618
        %v625 = vsel %vm621, %v618, %v620
        %630 = vst [vmem:[#allocation3 + $0xa0] sm:$0xff] %v622
        %631 = vst [vmem:[#allocation3 + $0xa8] sm:$0xff] %v623
        %632 = vst [vmem:[#allocation3 + $0xb0] sm:$0xff] %v624
        %633 = vst [vmem:[#allocation3 + $0xb8] sm:$0xff] %v625
        %v634 = vld [vmem:[#allocation2 + $0x8] sm:$0xff]
        %v635 = vld [vmem:[#allocation2 + $0x10] sm:$0xff]
        %v636 = vld [vmem:[#allocation2 + $0x18] sm:$0xff]
        %v637 = vld [vmem:[#allocation2 + $0x28] sm:$0xff]
        %v638 = vld [vmem:[#allocation2 + $0x30] sm:$0xff]
        %v639 = vld [vmem:[#allocation2 + $0x38] sm:$0xff]
        %646 = vrot.lane.b32.xlu0 %v634, 111
        %v647 = vpop.permute.xlu0 %646
        %648 = vrot.lane.b32.xlu0 %v635, 111
        %v649 = vpop.permute.xlu0 %648
        %650 = vrot.lane.b32.xlu0 %v636, 111
        %v651 = vpop.permute.xlu0 %650
        %652 = vrot.lane.b32.xlu0 %v637, 111
        %v653 = vpop.permute.xlu0 %652
        %654 = vrot.lane.b32.xlu0 %v638, 111
        %v655 = vpop.permute.xlu0 %654
        %656 = vrot.lane.b32.xlu0 %v639, 111
        %v657 = vpop.permute.xlu0 %656
        %vm658 = vcmask 908288
        %v659 = vsel %vm658, %v647, %v649
        %v660 = vsel %vm658, %v649, %v651
        %v661 = vsel %vm658, %v653, %v655
        %v662 = vsel %vm658, %v655, %v657
        %667 = vst [vmem:[#allocation3 + $0xc0] sm:$0xff] %v659
        %668 = vst [vmem:[#allocation3 + $0xc8] sm:$0xff] %v660
        %669 = vst [vmem:[#allocation3 + $0xd0] sm:$0xff] %v661
        %670 = vst [vmem:[#allocation3 + $0xd8] sm:$0xff] %v662
        %v671 = vld [vmem:[#allocation2 + $0x8] sm:$0xff]
        %v672 = vld [vmem:[#allocation2 + $0x10] sm:$0xff]
        %v673 = vld [vmem:[#allocation2 + $0x18] sm:$0xff]
        %v674 = vld [vmem:[#allocation2 + $0x28] sm:$0xff]
        %v675 = vld [vmem:[#allocation2 + $0x30] sm:$0xff]
        %v676 = vld [vmem:[#allocation2 + $0x38] sm:$0xff]
        %683 = vrot.lane.b32.xlu0 %v671, 110
        %v684 = vpop.permute.xlu0 %683
        %685 = vrot.lane.b32.xlu0 %v672, 110
        %v686 = vpop.permute.xlu0 %685
        %687 = vrot.lane.b32.xlu0 %v673, 110
        %v688 = vpop.permute.xlu0 %687
        %689 = vrot.lane.b32.xlu0 %v674, 110
        %v690 = vpop.permute.xlu0 %689
        %691 = vrot.lane.b32.xlu0 %v675, 110
        %v692 = vpop.permute.xlu0 %691
        %693 = vrot.lane.b32.xlu0 %v676, 110
        %v694 = vpop.permute.xlu0 %693
        %vm695 = vcmask 900096
        %v696 = vsel %vm695, %v684, %v686
        %v697 = vsel %vm695, %v686, %v688
        %v698 = vsel %vm695, %v690, %v692
        %v699 = vsel %vm695, %v692, %v694
        %704 = vst [vmem:[#allocation3 + $0xe0] sm:$0xff] %v696
        %705 = vst [vmem:[#allocation3 + $0xe8] sm:$0xff] %v697
        %706 = vst [vmem:[#allocation3 + $0xf0] sm:$0xff] %v698
        %707 = vst [vmem:[#allocation3 + $0xf8] sm:$0xff] %v699
        %v708 = vld [vmem:[#allocation2 + $0x8] sm:$0xff]
        %v709 = vld [vmem:[#allocation2 + $0x10] sm:$0xff]
        %v710 = vld [vmem:[#allocation2 + $0x18] sm:$0xff]
        %v711 = vld [vmem:[#allocation2 + $0x28] sm:$0xff]
        %v712 = vld [vmem:[#allocation2 + $0x30] sm:$0xff]
        %v713 = vld [vmem:[#allocation2 + $0x38] sm:$0xff]
        %720 = vrot.lane.b32.xlu0 %v708, 109
        %v721 = vpop.permute.xlu0 %720
        %722 = vrot.lane.b32.xlu0 %v709, 109
        %v723 = vpop.permute.xlu0 %722
        %724 = vrot.lane.b32.xlu0 %v710, 109
        %v725 = vpop.permute.xlu0 %724
        %726 = vrot.lane.b32.xlu0 %v711, 109
        %v727 = vpop.permute.xlu0 %726
        %728 = vrot.lane.b32.xlu0 %v712, 109
        %v729 = vpop.permute.xlu0 %728
        %730 = vrot.lane.b32.xlu0 %v713, 109
        %v731 = vpop.permute.xlu0 %730
        %vm732 = vcmask 891904
        %v733 = vsel %vm732, %v721, %v723
        %v734 = vsel %vm732, %v723, %v725
        %v735 = vsel %vm732, %v727, %v729
        %v736 = vsel %vm732, %v729, %v731
        %741 = vst [vmem:[#allocation3 + $0x100] sm:$0xff] %v733
        %742 = vst [vmem:[#allocation3 + $0x108] sm:$0xff] %v734
        %743 = vst [vmem:[#allocation3 + $0x110] sm:$0xff] %v735
        %744 = vst [vmem:[#allocation3 + $0x118] sm:$0xff] %v736
        %v745 = vld [vmem:[%s3] sm:$0xff]
        %v746 = vld [vmem:[%s3 + $0x8] sm:$0xff]
        %v747 = vld [vmem:[%s3 + $0x10] sm:$0xf]
        %v748 = vld [vmem:[%s3 + $0x18] sm:$0xf]
        %v749 = vld [vmem:[#allocation3] sm:$0xff]
        %v750 = vld [vmem:[#allocation3 + $0x8] sm:$0xff]
        %v751 = vld [vmem:[#allocation3 + $0x10] sm:$0xff]
        %v752 = vld [vmem:[#allocation3 + $0x18] sm:$0xff]
        %v753 = vld [vmem:[#allocation3 + $0x20] sm:$0xff]
        %v754 = vld [vmem:[#allocation3 + $0x28] sm:$0xff]
        %v755 = vld [vmem:[#allocation3 + $0x30] sm:$0xff]
        %v756 = vld [vmem:[#allocation3 + $0x38] sm:$0xff]
        %v757 = vld [vmem:[#allocation3 + $0x40] sm:$0xff]
        %v758 = vld [vmem:[#allocation3 + $0x48] sm:$0xff]
        %v759 = vld [vmem:[#allocation3 + $0x50] sm:$0xff]
        %v760 = vld [vmem:[#allocation3 + $0x58] sm:$0xff]
        %v761 = vld [vmem:[#allocation3 + $0x60] sm:$0xff]
        %v762 = vld [vmem:[#allocation3 + $0x68] sm:$0xff]
        %v763 = vld [vmem:[#allocation3 + $0x70] sm:$0xff]
        %v764 = vld [vmem:[#allocation3 + $0x78] sm:$0xff]
        %v765 = vld [vmem:[#allocation3 + $0x80] sm:$0xff]
        %v766 = vld [vmem:[#allocation3 + $0x88] sm:$0xff]
        %v767 = vld [vmem:[#allocation3 + $0x90] sm:$0xff]
        %v768 = vld [vmem:[#allocation3 + $0x98] sm:$0xff]
        %v769 = vld [vmem:[#allocation3 + $0xa0] sm:$0xff]
        %v770 = vld [vmem:[#allocation3 + $0xa8] sm:$0xff]
        %v771 = vld [vmem:[#allocation3 + $0xb0] sm:$0xff]
        %v772 = vld [vmem:[#allocation3 + $0xb8] sm:$0xff]
        %v773 = vld [vmem:[#allocation3 + $0xc0] sm:$0xff]
        %v774 = vld [vmem:[#allocation3 + $0xc8] sm:$0xff]
        %v775 = vld [vmem:[#allocation3 + $0xd0] sm:$0xff]
        %v776 = vld [vmem:[#allocation3 + $0xd8] sm:$0xff]
        %v777 = vld [vmem:[#allocation3 + $0xe0] sm:$0xff]
        %v778 = vld [vmem:[#allocation3 + $0xe8] sm:$0xff]
        %v779 = vld [vmem:[#allocation3 + $0xf0] sm:$0xff]
        %v780 = vld [vmem:[#allocation3 + $0xf8] sm:$0xff]
        %v781 = vld [vmem:[#allocation3 + $0x100] sm:$0xff]
        %v782 = vld [vmem:[#allocation3 + $0x108] sm:$0xff]
        %v783 = vld [vmem:[#allocation3 + $0x110] sm:$0xff]
        %v784 = vld [vmem:[#allocation3 + $0x118] sm:$0xff]
        %v785 = vld [vmem:[%s4] sm:$0xff]
        %v786 = vld [vmem:[%s4 + $0x8] sm:$0xf]
        %788 = vset.pattern.permute.xlu0 0
        %789 = vperm.xlu0 %788, %v785
        %v790 = vpop.permute.xlu0 %789
        %793 = vset.pattern.permute.xlu0 0
        %794 = vperm.xlu0 %793, %v786
        %v795 = vpop.permute.xlu0 %794
        %vm797 = vcmask 130048
        %v799 = vsel %vm797, %v746, 0
        %v802 = vsel %vm797, %v748, 0
        %804 = vmatpush.msra.mxu0 %v779
        %805 = vmatpush.msra.mxu0 %v777
        %806 = vmatpush.msra.mxu0 %v775
        %807 = vmatpush.msra.mxu0 %v773
        %808 = vmatpush.msra.mxu0 %v771
        %809 = vmatpush.msra.mxu0 %v769
        %810 = vmatpush.msra.mxu0 %v767
        %811 = vmatpush.msra.mxu0 %v765
        %812 = vmatpush.msra.mxu0 %v763
        %813 = vmatpush.msra.mxu0 %v761
        %814 = vmatpush.msra.mxu0 %v759
        %815 = vmatpush.msra.mxu0 %v757
        %816 = vmatpush.msra.mxu0 %v755
        %817 = vmatpush.msra.mxu0 %v753
        %818 = vmatpush.msra.mxu0 %v751
        %819 = vmatpush.msra.mxu0 %v749
        %820 = vmatmul.f32.gmra.mxu0 %v745
        %v821 = vpop.f32.mrf.mxu0
        %v822 = vadd.f32 %v790, %v821
        %823 = vmatmul.f32.gmra.mxu0 %v747
        %v824 = vpop.f32.mrf.mxu0
        %v825 = vadd.f32 %v795, %v824
        %826 = vdwg.mxu0
        %827 = vmatpush.msra.mxu0 0.0
        %828 = vmatpush.msra.mxu0 0.0
        %829 = vmatpush.msra.mxu0 0.0
        %830 = vmatpush.msra.mxu0 0.0
        %831 = vmatpush.msra.mxu0 0.0
        %832 = vmatpush.msra.mxu0 0.0
        %833 = vmatpush.msra.mxu0 0.0
        %834 = vmatpush.msra.mxu0 0.0
        %835 = vmatpush.msra.mxu0 0.0
        %836 = vmatpush.msra.mxu0 0.0
        %837 = vmatpush.msra.mxu0 0.0
        %838 = vmatpush.msra.mxu0 0.0
        %839 = vmatpush.msra.mxu0 0.0
        %840 = vmatpush.msra.mxu0 0.0
        %841 = vmatpush.msra.mxu0 %v783
        %842 = vmatpush.msra.mxu0 %v781
        %843 = vmatmul.f32.gmra.mxu0 %v799
        %v844 = vpop.f32.mrf.mxu0
        %v845 = vadd.f32 %v822, %v844
        %846 = vmatmul.f32.gmra.mxu0 %v802
        %v847 = vpop.f32.mrf.mxu0
        %v848 = vadd.f32 %v825, %v847
        %849 = vdwg.mxu0
        %850 = vmatpush.msra.mxu0 %v780
        %851 = vmatpush.msra.mxu0 %v778
        %852 = vmatpush.msra.mxu0 %v776
        %853 = vmatpush.msra.mxu0 %v774
        %854 = vmatpush.msra.mxu0 %v772
        %855 = vmatpush.msra.mxu0 %v770
        %856 = vmatpush.msra.mxu0 %v768
        %857 = vmatpush.msra.mxu0 %v766
        %858 = vmatpush.msra.mxu0 %v764
        %859 = vmatpush.msra.mxu0 %v762
        %860 = vmatpush.msra.mxu0 %v760
        %861 = vmatpush.msra.mxu0 %v758
        %862 = vmatpush.msra.mxu0 %v756
        %863 = vmatpush.msra.mxu0 %v754
        %864 = vmatpush.msra.mxu0 %v752
        %865 = vmatpush.msra.mxu0 %v750
        %866 = vmatmul.f32.gmra.mxu0 %v745
        %v867 = vpop.f32.mrf.mxu0
        %v868 = vadd.f32 %v790, %v867
        %869 = vmatmul.f32.gmra.mxu0 %v747
        %v870 = vpop.f32.mrf.mxu0
        %v871 = vadd.f32 %v795, %v870
        %872 = vdwg.mxu0
        %873 = vmatpush.msra.mxu0 0.0
        %874 = vmatpush.msra.mxu0 0.0
        %875 = vmatpush.msra.mxu0 0.0
        %876 = vmatpush.msra.mxu0 0.0
        %877 = vmatpush.msra.mxu0 0.0
        %878 = vmatpush.msra.mxu0 0.0
        %879 = vmatpush.msra.mxu0 0.0
        %880 = vmatpush.msra.mxu0 0.0
        %881 = vmatpush.msra.mxu0 0.0
        %882 = vmatpush.msra.mxu0 0.0
        %883 = vmatpush.msra.mxu0 0.0
        %884 = vmatpush.msra.mxu0 0.0
        %885 = vmatpush.msra.mxu0 0.0
        %886 = vmatpush.msra.mxu0 0.0
        %887 = vmatpush.msra.mxu0 %v784
        %888 = vmatpush.msra.mxu0 %v782
        %889 = vmatmul.f32.gmra.mxu0 %v799
        %v890 = vpop.f32.mrf.mxu0
        %v891 = vadd.f32 %v868, %v890
        %892 = vmatmul.f32.gmra.mxu0 %v802
        %v893 = vpop.f32.mrf.mxu0
        %v894 = vadd.f32 %v871, %v893
        %895 = vdwg.mxu0
        %896 = vst [vmem:[%s410] sm:$0xff] %v845
        %897 = vst [vmem:[%s410 + $0x8] sm:$0xff] %v891
        %898 = vst [vmem:[%s410 + $0x10] sm:$0xf] %v848
        %899 = vst [vmem:[%s410 + $0x18] sm:$0xf] %v894
        %s900 = sand.u32 %s156, 1
        %s901 = sand.u32 %s156, 1
        %s902 = smul.addr %s901, 32
        %s903 = scalar_lea.vmem [#allocation7], %s902
        // Predicated region
        $region161: #{_lambda_.15} parent=147 // pred_check
          %p904 = pneg %p166
        $region162: #{_lambda_.15} parent=147 // pred_check_branch
          %906 = sbr.rel (%p904) target = $region164
        $region163: #{_lambda_.15} parent=147 // pred_region
          %s907 = smul.u32 2, %s16
          %s908 = smul.addr %s907, 8
          %s909 = scalar_lea.vmem %s5, %s908
          // Predicated region
          $region165: #{_lambda_.15} parent=163 // pred_check
            _
          $region166: #{_lambda_.15} parent=163 // pred_check_branch
            %911 = sbr.rel (0) target = $region168
          $region167: #{_lambda_.15} parent=163 // pred_region
            // Predicated region
            $region169: #{_lambda_.15} parent=167 // pred_check
              _
            $region170: #{_lambda_.15} parent=167 // pred_check_branch
              %913 = sbr.rel (0) target = $region172
            $region171: #{_lambda_.15} parent=167 // pred_region
              loop: start=0, step=1, limit=1
              $region173: #{_lambda_.15} parent=171 // loop_pre_header
                _
              $region174: #{_lambda_.15} parent=171 // loop_header
                %s915 = sphi 0, %s919
                %p916 = scmp.ge.s32.totalorder %s915, 1
                %s920 = sphi %s903, %s903
                %s921 = sphi %s909, %s909
              $region175: #{_lambda_.15} parent=171 // loop_header_branch
                %918 = sbr.rel (%p916) target = $region179
              $region176: #{_lambda_.15} parent=171 // loop_body
                %v922 = vld [vmem:[%s920] sm:$0xff]
                %923 = vst [vmem:[%s921] sm:$0xff] %v922
                %v924 = vld [vmem:[%s920 + $0x8] sm:$0xff]
                %925 = vst [vmem:[%s921 + $0x8] sm:$0xff] %v924
                %v926 = vld [vmem:[%s920 + $0x10] sm:$0xff]
                %927 = vst [vmem:[%s921 + $0x30] sm:$0xff] %v926
                %v928 = vld [vmem:[%s920 + $0x18] sm:$0xff]
                %929 = vst [vmem:[%s921 + $0x38] sm:$0xff] %v928
              $region177: #{_lambda_.15} parent=171 // loop_footer
                %s919 = sadd.s32 1, %s915
              $region178: #{_lambda_.15} parent=171 // loop_footer_branch
                %914 = sbr.rel target = $region174
              $region179: #{_lambda_.15} parent=171 // loop_exit
                _
            $region172: #{_lambda_.15} parent=167 // pred_fallthru
              _
            // Predicated region
            $region180: #{_lambda_.15} parent=167 // pred_check
              _
            $region181: #{_lambda_.15} parent=167 // pred_check_branch
              %931 = sbr.rel target = $region183
            $region182: #{_lambda_.15} parent=167 // pred_region
              _
            $region183: #{_lambda_.15} parent=167 // pred_fallthru
              _
          $region168: #{_lambda_.15} parent=163 // pred_fallthru
            _
          %932 = vnop
        $region164: #{_lambda_.15} parent=147 // pred_fallthru
          _
      $region148: #{_lambda_.15} parent=5 // pred_fallthru
        _
      %p933 = scmp.le.s32.totalorder 2, %s11
      // Predicated region
      $region184: #{_lambda_.15} parent=5 // pred_check
        %p934 = pneg %p933
      $region185: #{_lambda_.15} parent=5 // pred_check_branch
        %936 = sbr.rel (%p934) target = $region187
      $region186: #{_lambda_.15} parent=5 // pred_region
        %s937 = ssub.s32 %s11, 2
        // Predicated region
        $region188: #{_lambda_.15} parent=186 // pred_check
          %p938 = pneg %p172
        $region189: #{_lambda_.15} parent=186 // pred_check_branch
          %940 = sbr.rel (%p938) target = $region191
        $region190: #{_lambda_.15} parent=186 // pred_region
          %s941 = sand.u32 %s157, 1
          %s942 = sand.u32 %s157, 1
          %s943 = smul.addr %s942, 32
          %s944 = scalar_lea.vmem [#allocation7], %s943
        $region191: #{_lambda_.15} parent=186 // pred_fallthru
          _
      $region187: #{_lambda_.15} parent=5 // pred_fallthru
        _
    $region6: #{_lambda_.15} parent=1 // loop_footer
      %s15 = sadd.s32 1, %s11
    $region7: #{_lambda_.15} parent=1 // loop_footer_branch
      %10 = sbr.rel target = $region3
    $region8: #{_lambda_.15} parent=1 // loop_exit
      _

</llo_original>
